<compile_context>
chip_gen: v7x
topology: tpu7x:2x2x1
jax: 0.10.0
libtpu: 0.0.40
codegen_flags: <defaults>
</compile_context>

<pallas_src>
import functools

import jax
import jax.numpy as jnp
from jax.experimental import pallas as pl
from jax.experimental.pallas import tpu as pltpu

LRN_SIZE, LRN_ALPHA, LRN_BETA, LRN_K = 4, 1e-4, 0.75, 1.0


# ------------------------------ fused kernel --------------------------------

def _cifar_kernel(dims, x_ref, w1_ref, b1_ref, w2_ref, b2_ref,
                  fw1_ref, fb1_ref, fw2_ref, fb2_ref, fw3_ref, fb3_ref,
                  o_ref, pat1, vp1, p1, buf1, pat2, a2, buf2):
    (cin, k1, f1, ch1, cw1, hp1, wp1, k2, f2, ch2, cw2, hp2, wp2) = dims

    def lrn3(x, buf):
        # PyTorch LocalResponseNorm(size): channel window [c-size//2, c+(size-1)//2],
        # zero padded, sum always divided by `size`.  Implemented with a
        # zero-padded VMEM buffer + LRN_SIZE shifted adds (VPU/EUP only).
        # buf.shape == x.shape[:-1] + (C + LRN_SIZE - 1,)
        c = x.shape[-1]
        lo = LRN_SIZE // 2
        buf[...] = jnp.zeros_like(buf)
        buf[:, :, lo:lo + c] = x * x
        s = buf[:, :, 0:c]
        for t in range(1, LRN_SIZE):
            s = s + buf[:, :, t:t + c]
        div = LRN_K + (LRN_ALPHA / LRN_SIZE) * s
        return x * jnp.exp(-LRN_BETA * jnp.log(div))     # div >= k = 1 > 0

    # ---------------- block 1: conv1 -> relu -> maxpool2 -> LRN ----------------
    # In-kernel im2col, restricted to the (ch1, cw1) region the pool consumes.
    for i in range(k1):
        for j in range(k1):
            c0 = (i * k1 + j) * cin
            pat1[:, :, c0:c0 + cin] = x_ref[0, i:i + ch1, j:j + cw1, :]
    w1 = w1_ref[...]                                     # (k1*k1*cin, f1)
    b1 = b1_ref[...]                                     # (1, f1)
    # conv row -> relu; vertical 2x max fused into the row loop (row pairs
    # never round-trip through an extra VMEM activation buffer).
    for ho in range(ch1):
        row = jnp.maximum(
            jnp.dot(pat1[ho], w1, preferred_element_type=jnp.float32) + b1, 0.0)
        if ho % 2 == 0:
            even_row = row
        else:
            vp1[ho // 2] = jnp.maximum(even_row, row)    # (cw1, f1)
    # horizontal 2x max: one op per pooled column, all rows at once.
    for pw in range(wp1):
        p1[:, pw:pw + 1, :] = jnp.max(vp1[:, 2 * pw:2 * pw + 2, :],
                                      axis=1, keepdims=True)
    # single batched LRN over the whole pooled block-1 activation.
    p1[...] = lrn3(p1[...], buf1)

    # ---------------- block 2: conv2 -> relu -> LRN -> maxpool2 ----------------
    for i in range(k2):
        for j in range(k2):
            c0 = (i * k2 + j) * f1
            pat2[:, :, c0:c0 + f1] = p1[i:i + ch2, j:j + cw2, :]
    w2 = w2_ref[...]                                     # (k2*k2*f1, f2)
    b2 = b2_ref[...]                                     # (1, f2)
    for ho in range(ch2):
        a2[ho] = jnp.maximum(
            jnp.dot(pat2[ho], w2, preferred_element_type=jnp.float32) + b2, 0.0)
    # single batched LRN over the whole conv2 activation (pre-pool, as in torch).
    a2[...] = lrn3(a2[...], buf2)

    # ---- maxpool2 + flatten + fc1 (flatten fused into the fc1 accumulation) ----
    # fc1 weight rows were pre-permuted (outside, once) so the NHWC-flat order
    # here matches PyTorch's NCHW .view(B, -1).  nn.Dropout == identity (eval).
    h = fb1_ref[...]                                     # (1, fc_1)
    for ph in range(hp2):
        hmax = jnp.maximum(a2[2 * ph], a2[2 * ph + 1])   # (cw2, f2)
        for pw in range(wp2):
            v = jnp.max(hmax[2 * pw:2 * pw + 2, :], axis=0, keepdims=True)
            r0 = (ph * wp2 + pw) * f2
            h = h + jnp.dot(v, fw1_ref[r0:r0 + f2, :],
                            preferred_element_type=jnp.float32)
    h = jnp.maximum(h, 0.0)

    # -------------------- fc2 -> relu -> fc3 -> log_softmax --------------------
    h = jnp.maximum(
        jnp.dot(h, fw2_ref[...], preferred_element_type=jnp.float32)
        + fb2_ref[...], 0.0)
    z = (jnp.dot(h, fw3_ref[...], preferred_element_type=jnp.float32)
         + fb3_ref[...])
    m = jnp.max(z, axis=-1, keepdims=True)
    lse = jnp.log(jnp.sum(jnp.exp(z - m), axis=-1, keepdims=True)) + m
    o_ref[0] = z - lse                                   # log_softmax, dim=-1


# ------------------------------- model wrapper -------------------------------

def cifar100net_forward(x_nchw, p):
    b, cin, img, _ = x_nchw.shape
    k1, _, _, f1 = p['w1'].shape
    k2, _, _, f2 = p['w2'].shape
    ho1 = img - k1 + 1                                   # conv1 (VALID)
    hp1 = wp1 = ho1 // 2                                 # maxpool 2x2
    ho2 = hp1 - k2 + 1                                   # conv2 (VALID)
    hp2 = wp2 = ho2 // 2                                 # maxpool 2x2
    ch1, cw1 = 2 * hp1, 2 * wp1                          # conv1 region the pool uses
    ch2, cw2 = 2 * hp2, 2 * wp2                          # conv2 region the pool uses
    fc1 = p['fw1'].shape[1]
    fc2 = p['fw2'].shape[1]
    ncls = p['fw3'].shape[1]
    flat = hp2 * wp2 * f2
    assert p['fw1'].shape[0] == flat

    # One-time (per call, tiny) layout prep in plain JAX:
    x_nhwc = jnp.transpose(x_nchw, (0, 2, 3, 1))         # NCHW -> NHWC
    w1m = p['w1'].reshape(k1 * k1 * cin, f1)             # matches (i, j, ci) im2col
    w2m = p['w2'].reshape(k2 * k2 * f1, f2)
    # Permute fc1 rows so the kernel's NHWC-flat order equals PyTorch's NCHW
    # view(B, -1) flatten (removes the runtime transpose before the flatten).
    perm = jnp.transpose(jnp.arange(flat).reshape(f2, hp2, wp2), (1, 2, 0)).reshape(-1)
    fw1n = p['fw1'][perm, :]

    dims = (cin, k1, f1, ch1, cw1, hp1, wp1, k2, f2, ch2, cw2, hp2, wp2)
    kernel = functools.partial(_cifar_kernel, dims)

    def full(shape):
        return pl.BlockSpec(shape, lambda i: (0,) * len(shape))

    out = pl.pallas_call(
        kernel,
        out_shape=jax.ShapeDtypeStruct((b, 1, ncls), jnp.float32),
        grid=(b,),
        in_specs=[
            pl.BlockSpec((1, img, img, cin), lambda i: (i, 0, 0, 0)),
            full((k1 * k1 * cin, f1)), full((1, f1)),
            full((k2 * k2 * f1, f2)), full((1, f2)),
            full((flat, fc1)), full((1, fc1)),
            full((fc1, fc2)), full((1, fc2)),
            full((fc2, ncls)), full((1, ncls)),
        ],
        out_specs=pl.BlockSpec((1, 1, ncls), lambda i: (i, 0, 0)),
        scratch_shapes=[
            pltpu.VMEM((ch1, cw1, k1 * k1 * cin), jnp.float32),     # conv1 im2col
            pltpu.VMEM((hp1, cw1, f1), jnp.float32),                # vertical 2x max
            pltpu.VMEM((hp1, wp1, f1), jnp.float32),                # pool1 + LRN out
            pltpu.VMEM((hp1, wp1, f1 + LRN_SIZE - 1), jnp.float32), # LRN pad buf 1
            pltpu.VMEM((ch2, cw2, k2 * k2 * f1), jnp.float32),      # conv2 im2col
            pltpu.VMEM((ch2, cw2, f2), jnp.float32),                # conv2 + LRN out
            pltpu.VMEM((ch2, cw2, f2 + LRN_SIZE - 1), jnp.float32), # LRN pad buf 2
        ],
        compiler_params=pltpu.CompilerParams(
            dimension_semantics=("parallel",)),                     # 2x on v7x (2 TCs)
    )(x_nhwc, w1m, p['b1'].reshape(1, f1), w2m, p['b2'].reshape(1, f2),
      fw1n, p['fb1'].reshape(1, fc1), p['fw2'], p['fb2'].reshape(1, fc2),
      p['fw3'], p['fb3'].reshape(1, ncls))
    return out.reshape(b, ncls)


# ----------------------------- pure-JAX reference ----------------------------

def reference_forward(x_nchw, p):
    x = jnp.transpose(x_nchw, (0, 2, 3, 1))

    def conv(x, w, b):
        y = jax.lax.conv_general_dilated(x, w, (1, 1), 'VALID',
                                         dimension_numbers=('NHWC', 'HWIO', 'NHWC'))
        return jax.nn.relu(y + b)

    def mp(x):
        b, h, w, c = x.shape
        return x.reshape(b, h // 2, 2, w // 2, 2, c).max(axis=(2, 4))

    def lrn_ref(x):
        c = x.shape[-1]
        sq = jnp.pad(x * x, ((0, 0), (0, 0), (0, 0),
                             (LRN_SIZE // 2, (LRN_SIZE - 1) // 2)))
        s = sum(sq[..., t:t + c] for t in range(LRN_SIZE))
        return x / (LRN_K + (LRN_ALPHA / LRN_SIZE) * s) ** LRN_BETA

    x = lrn_ref(mp(conv(x, p['w1'], p['b1'])))
    x = mp(lrn_ref(conv(x, p['w2'], p['b2'])))
    b = x.shape[0]
    x = jnp.transpose(x, (0, 3, 1, 2)).reshape(b, -1)
    h = jax.nn.relu(x @ p['fw1'] + p['fb1'])
    h = jax.nn.relu(h @ p['fw2'] + p['fb2'])
    z = h @ p['fw3'] + p['fb3']
    return jax.nn.log_softmax(z, axis=-1)


# ------------------------------- params / main -------------------------------

def init_params(key, cin, k1, f1, k2, f2, flat, fc1, fc2, ncls):
    ks = jax.random.split(key, 10)
    w = lambda k, s, sc=0.1: (sc * jax.random.normal(k, s)).astype(jnp.float32)
    return dict(
        w1=w(ks[0], (k1, k1, cin, f1)), b1=w(ks[1], (f1,)),
        w2=w(ks[2], (k2, k2, f1, f2)), b2=w(ks[3], (f2,)),
        fw1=w(ks[4], (flat, fc1)), fb1=w(ks[5], (fc1,)),
        fw2=w(ks[6], (fc1, fc2)), fb2=w(ks[7], (fc2,)),
        fw3=w(ks[8], (fc2, ncls)), fb3=w(ks[9], (ncls,)),
    )


if __name__ == "__main__":
    # Small config consistent with the module's constructor arguments.
    B, CIN, IMG = 2, 3, 16
    F1, K1, F2, K2_REQ = 8, 5, 8, 3
    FC1, FC2, NCLS = 32, 16, 20

    b1_out = (IMG - K1 + 1) // 2            # conv(valid) + maxpool2  -> 6
    K2 = min(K2_REQ, b1_out)                # kernel_2 = min(kernel_2, block1_output)
    b2_out = (b1_out - K2 + 1) // 2         # -> 2
    flat = b2_out * b2_out * F2             # flat_shape = block2_output**2 * filters_2

    key = jax.random.PRNGKey(0)
    kx, kp = jax.random.split(key)
    x = jax.random.normal(kx, (B, CIN, IMG, IMG), dtype=jnp.float32)   # NCHW like PyTorch
    params = init_params(kp, CIN, K1, F1, K2, F2, flat, FC1, FC2, NCLS)

    fwd = jax.jit(cifar100net_forward)
    out = jax.block_until_ready(fwd(x, params))
    ref = jax.block_until_ready(reference_forward(x, params))

    assert out.shape == (B, NCLS), out.shape
    assert jnp.allclose(out, ref, atol=1e-4, rtol=1e-4), float(jnp.max(jnp.abs(out - ref)))
    print("KERNEL_OK")
</pallas_src>

<mosaic_0001>
module attributes {stable_mosaic.version = 11 : i64} {
  func.func @_cifar_kernel(%arg0: i32, %arg1: memref<1x16x16x3xf32, #tpu.memory_space<vmem>>, %arg2: memref<75x8xf32, #tpu.memory_space<vmem>>, %arg3: memref<1x8xf32, #tpu.memory_space<vmem>>, %arg4: memref<72x8xf32, #tpu.memory_space<vmem>>, %arg5: memref<1x8xf32, #tpu.memory_space<vmem>>, %arg6: memref<32x32xf32, #tpu.memory_space<vmem>>, %arg7: memref<1x32xf32, #tpu.memory_space<vmem>>, %arg8: memref<32x16xf32, #tpu.memory_space<vmem>>, %arg9: memref<1x16xf32, #tpu.memory_space<vmem>>, %arg10: memref<16x20xf32, #tpu.memory_space<vmem>>, %arg11: memref<1x20xf32, #tpu.memory_space<vmem>>, %arg12: memref<1x1x20xf32, #tpu.memory_space<vmem>>, %arg13: memref<12x12x75xf32, #tpu.memory_space<vmem>>, %arg14: memref<6x12x8xf32, #tpu.memory_space<vmem>>, %arg15: memref<6x6x8xf32, #tpu.memory_space<vmem>>, %arg16: memref<6x6x11xf32, #tpu.memory_space<vmem>>, %arg17: memref<4x4x72xf32, #tpu.memory_space<vmem>>, %arg18: memref<4x4x8xf32, #tpu.memory_space<vmem>>, %arg19: memref<4x4x11xf32, #tpu.memory_space<vmem>>) attributes {dimension_semantics = [#tpu.dimension_semantics<parallel>], iteration_bounds = array<i64: 2>, scalar_prefetch = 0 : i64, scratch_operands = 7 : i64, tpu.core_type = #tpu.core_type<tc>, window_params = [{transform_indices = @transform_0, window_bounds = array<i64: 1, 16, 16, 3>}, {pipeline_mode = #tpu.pipeline_mode<synchronous>, transform_indices = @transform_1, window_bounds = array<i64: 75, 8>}, {pipeline_mode = #tpu.pipeline_mode<synchronous>, transform_indices = @transform_2, window_bounds = array<i64: 1, 8>}, {pipeline_mode = #tpu.pipeline_mode<synchronous>, transform_indices = @transform_3, window_bounds = array<i64: 72, 8>}, {pipeline_mode = #tpu.pipeline_mode<synchronous>, transform_indices = @transform_4, window_bounds = array<i64: 1, 8>}, {pipeline_mode = #tpu.pipeline_mode<synchronous>, transform_indices = @transform_5, window_bounds = array<i64: 32, 32>}, {pipeline_mode = #tpu.pipeline_mode<synchronous>, transform_indices = @transform_6, window_bounds = array<i64: 1, 32>}, {pipeline_mode = #tpu.pipeline_mode<synchronous>, transform_indices = @transform_7, window_bounds = array<i64: 32, 16>}, {pipeline_mode = #tpu.pipeline_mode<synchronous>, transform_indices = @transform_8, window_bounds = array<i64: 1, 16>}, {pipeline_mode = #tpu.pipeline_mode<synchronous>, transform_indices = @transform_9, window_bounds = array<i64: 16, 20>}, {pipeline_mode = #tpu.pipeline_mode<synchronous>, transform_indices = @transform_10, window_bounds = array<i64: 1, 20>}, {transform_indices = @transform_11, window_bounds = array<i64: 1, 1, 20>}]} {
    %c0 = arith.constant 0 : index
    %c0_0 = arith.constant 0 : index
    %c0_1 = arith.constant 0 : index
    %c0_2 = arith.constant 0 : index
    %0 = vector.load %arg1[%c0, %c0_0, %c0_1, %c0_2] : memref<1x16x16x3xf32, #tpu.memory_space<vmem>>, vector<1x12x12x3xf32>
    %1 = vector.shape_cast %0 : vector<1x12x12x3xf32> to vector<12x12x3xf32>
    %c0_3 = arith.constant 0 : index
    %c0_4 = arith.constant 0 : index
    %c0_5 = arith.constant 0 : index
    %2 = vector.load %arg13[%c0_3, %c0_4, %c0_5] : memref<12x12x75xf32, #tpu.memory_space<vmem>>, vector<12x12x3xf32>
    tpu.vector_store %arg13[%c0_3, %c0_4, %c0_5], %1 {strides = array<i32>} : memref<12x12x75xf32, #tpu.memory_space<vmem>>, vector<12x12x3xf32>,
    %c0_6 = arith.constant 0 : index
    %c0_7 = arith.constant 0 : index
    %c1 = arith.constant 1 : index
    %c0_8 = arith.constant 0 : index
    %3 = vector.load %arg1[%c0_6, %c0_7, %c1, %c0_8] : memref<1x16x16x3xf32, #tpu.memory_space<vmem>>, vector<1x12x12x3xf32>
    %4 = vector.shape_cast %3 : vector<1x12x12x3xf32> to vector<12x12x3xf32>
    %c0_9 = arith.constant 0 : index
    %c0_10 = arith.constant 0 : index
    %c3 = arith.constant 3 : index
    %5 = vector.load %arg13[%c0_9, %c0_10, %c3] : memref<12x12x75xf32, #tpu.memory_space<vmem>>, vector<12x12x3xf32>
    tpu.vector_store %arg13[%c0_9, %c0_10, %c3], %4 {strides = array<i32>} : memref<12x12x75xf32, #tpu.memory_space<vmem>>, vector<12x12x3xf32>,
    %c0_11 = arith.constant 0 : index
    %c0_12 = arith.constant 0 : index
    %c2 = arith.constant 2 : index
    %c0_13 = arith.constant 0 : index
    %6 = vector.load %arg1[%c0_11, %c0_12, %c2, %c0_13] : memref<1x16x16x3xf32, #tpu.memory_space<vmem>>, vector<1x12x12x3xf32>
    %7 = vector.shape_cast %6 : vector<1x12x12x3xf32> to vector<12x12x3xf32>
    %c0_14 = arith.constant 0 : index
    %c0_15 = arith.constant 0 : index
    %c6 = arith.constant 6 : index
    %8 = vector.load %arg13[%c0_14, %c0_15, %c6] : memref<12x12x75xf32, #tpu.memory_space<vmem>>, vector<12x12x3xf32>
    tpu.vector_store %arg13[%c0_14, %c0_15, %c6], %7 {strides = array<i32>} : memref<12x12x75xf32, #tpu.memory_space<vmem>>, vector<12x12x3xf32>,
    %c0_16 = arith.constant 0 : index
    %c0_17 = arith.constant 0 : index
    %c3_18 = arith.constant 3 : index
    %c0_19 = arith.constant 0 : index
    %9 = vector.load %arg1[%c0_16, %c0_17, %c3_18, %c0_19] : memref<1x16x16x3xf32, #tpu.memory_space<vmem>>, vector<1x12x12x3xf32>
    %10 = vector.shape_cast %9 : vector<1x12x12x3xf32> to vector<12x12x3xf32>
    %c0_20 = arith.constant 0 : index
    %c0_21 = arith.constant 0 : index
    %c9 = arith.constant 9 : index
    %11 = vector.load %arg13[%c0_20, %c0_21, %c9] : memref<12x12x75xf32, #tpu.memory_space<vmem>>, vector<12x12x3xf32>
    tpu.vector_store %arg13[%c0_20, %c0_21, %c9], %10 {strides = array<i32>} : memref<12x12x75xf32, #tpu.memory_space<vmem>>, vector<12x12x3xf32>,
    %c0_22 = arith.constant 0 : index
    %c0_23 = arith.constant 0 : index
    %c4 = arith.constant 4 : index
    %c0_24 = arith.constant 0 : index
    %12 = vector.load %arg1[%c0_22, %c0_23, %c4, %c0_24] : memref<1x16x16x3xf32, #tpu.memory_space<vmem>>, vector<1x12x12x3xf32>
    %13 = vector.shape_cast %12 : vector<1x12x12x3xf32> to vector<12x12x3xf32>
    %c0_25 = arith.constant 0 : index
    %c0_26 = arith.constant 0 : index
    %c12 = arith.constant 12 : index
    %14 = vector.load %arg13[%c0_25, %c0_26, %c12] : memref<12x12x75xf32, #tpu.memory_space<vmem>>, vector<12x12x3xf32>
    tpu.vector_store %arg13[%c0_25, %c0_26, %c12], %13 {strides = array<i32>} : memref<12x12x75xf32, #tpu.memory_space<vmem>>, vector<12x12x3xf32>,
    %c0_27 = arith.constant 0 : index
    %c1_28 = arith.constant 1 : index
    %c0_29 = arith.constant 0 : index
    %c0_30 = arith.constant 0 : index
    %15 = vector.load %arg1[%c0_27, %c1_28, %c0_29, %c0_30] : memref<1x16x16x3xf32, #tpu.memory_space<vmem>>, vector<1x12x12x3xf32>
    %16 = vector.shape_cast %15 : vector<1x12x12x3xf32> to vector<12x12x3xf32>
    %c0_31 = arith.constant 0 : index
    %c0_32 = arith.constant 0 : index
    %c15 = arith.constant 15 : index
    %17 = vector.load %arg13[%c0_31, %c0_32, %c15] : memref<12x12x75xf32, #tpu.memory_space<vmem>>, vector<12x12x3xf32>
    tpu.vector_store %arg13[%c0_31, %c0_32, %c15], %16 {strides = array<i32>} : memref<12x12x75xf32, #tpu.memory_space<vmem>>, vector<12x12x3xf32>,
    %c0_33 = arith.constant 0 : index
    %c1_34 = arith.constant 1 : index
    %c1_35 = arith.constant 1 : index
    %c0_36 = arith.constant 0 : index
    %18 = vector.load %arg1[%c0_33, %c1_34, %c1_35, %c0_36] : memref<1x16x16x3xf32, #tpu.memory_space<vmem>>, vector<1x12x12x3xf32>
    %19 = vector.shape_cast %18 : vector<1x12x12x3xf32> to vector<12x12x3xf32>
    %c0_37 = arith.constant 0 : index
    %c0_38 = arith.constant 0 : index
    %c18 = arith.constant 18 : index
    %20 = vector.load %arg13[%c0_37, %c0_38, %c18] : memref<12x12x75xf32, #tpu.memory_space<vmem>>, vector<12x12x3xf32>
    tpu.vector_store %arg13[%c0_37, %c0_38, %c18], %19 {strides = array<i32>} : memref<12x12x75xf32, #tpu.memory_space<vmem>>, vector<12x12x3xf32>,
    %c0_39 = arith.constant 0 : index
    %c1_40 = arith.constant 1 : index
    %c2_41 = arith.constant 2 : index
    %c0_42 = arith.constant 0 : index
    %21 = vector.load %arg1[%c0_39, %c1_40, %c2_41, %c0_42] : memref<1x16x16x3xf32, #tpu.memory_space<vmem>>, vector<1x12x12x3xf32>
    %22 = vector.shape_cast %21 : vector<1x12x12x3xf32> to vector<12x12x3xf32>
    %c0_43 = arith.constant 0 : index
    %c0_44 = arith.constant 0 : index
    %c21 = arith.constant 21 : index
    %23 = vector.load %arg13[%c0_43, %c0_44, %c21] : memref<12x12x75xf32, #tpu.memory_space<vmem>>, vector<12x12x3xf32>
    tpu.vector_store %arg13[%c0_43, %c0_44, %c21], %22 {strides = array<i32>} : memref<12x12x75xf32, #tpu.memory_space<vmem>>, vector<12x12x3xf32>,
    %c0_45 = arith.constant 0 : index
    %c1_46 = arith.constant 1 : index
    %c3_47 = arith.constant 3 : index
    %c0_48 = arith.constant 0 : index
    %24 = vector.load %arg1[%c0_45, %c1_46, %c3_47, %c0_48] : memref<1x16x16x3xf32, #tpu.memory_space<vmem>>, vector<1x12x12x3xf32>
    %25 = vector.shape_cast %24 : vector<1x12x12x3xf32> to vector<12x12x3xf32>
    %c0_49 = arith.constant 0 : index
    %c0_50 = arith.constant 0 : index
    %c24 = arith.constant 24 : index
    %26 = vector.load %arg13[%c0_49, %c0_50, %c24] : memref<12x12x75xf32, #tpu.memory_space<vmem>>, vector<12x12x3xf32>
    tpu.vector_store %arg13[%c0_49, %c0_50, %c24], %25 {strides = array<i32>} : memref<12x12x75xf32, #tpu.memory_space<vmem>>, vector<12x12x3xf32>,
    %c0_51 = arith.constant 0 : index
    %c1_52 = arith.constant 1 : index
    %c4_53 = arith.constant 4 : index
    %c0_54 = arith.constant 0 : index
    %27 = vector.load %arg1[%c0_51, %c1_52, %c4_53, %c0_54] : memref<1x16x16x3xf32, #tpu.memory_space<vmem>>, vector<1x12x12x3xf32>
    %28 = vector.shape_cast %27 : vector<1x12x12x3xf32> to vector<12x12x3xf32>
    %c0_55 = arith.constant 0 : index
    %c0_56 = arith.constant 0 : index
    %c27 = arith.constant 27 : index
    %29 = vector.load %arg13[%c0_55, %c0_56, %c27] : memref<12x12x75xf32, #tpu.memory_space<vmem>>, vector<12x12x3xf32>
    tpu.vector_store %arg13[%c0_55, %c0_56, %c27], %28 {strides = array<i32>} : memref<12x12x75xf32, #tpu.memory_space<vmem>>, vector<12x12x3xf32>,
    %c0_57 = arith.constant 0 : index
    %c2_58 = arith.constant 2 : index
    %c0_59 = arith.constant 0 : index
    %c0_60 = arith.constant 0 : index
    %30 = vector.load %arg1[%c0_57, %c2_58, %c0_59, %c0_60] : memref<1x16x16x3xf32, #tpu.memory_space<vmem>>, vector<1x12x12x3xf32>
    %31 = vector.shape_cast %30 : vector<1x12x12x3xf32> to vector<12x12x3xf32>
    %c0_61 = arith.constant 0 : index
    %c0_62 = arith.constant 0 : index
    %c30 = arith.constant 30 : index
    %32 = vector.load %arg13[%c0_61, %c0_62, %c30] : memref<12x12x75xf32, #tpu.memory_space<vmem>>, vector<12x12x3xf32>
    tpu.vector_store %arg13[%c0_61, %c0_62, %c30], %31 {strides = array<i32>} : memref<12x12x75xf32, #tpu.memory_space<vmem>>, vector<12x12x3xf32>,
    %c0_63 = arith.constant 0 : index
    %c2_64 = arith.constant 2 : index
    %c1_65 = arith.constant 1 : index
    %c0_66 = arith.constant 0 : index
    %33 = vector.load %arg1[%c0_63, %c2_64, %c1_65, %c0_66] : memref<1x16x16x3xf32, #tpu.memory_space<vmem>>, vector<1x12x12x3xf32>
    %34 = vector.shape_cast %33 : vector<1x12x12x3xf32> to vector<12x12x3xf32>
    %c0_67 = arith.constant 0 : index
    %c0_68 = arith.constant 0 : index
    %c33 = arith.constant 33 : index
    %35 = vector.load %arg13[%c0_67, %c0_68, %c33] : memref<12x12x75xf32, #tpu.memory_space<vmem>>, vector<12x12x3xf32>
    tpu.vector_store %arg13[%c0_67, %c0_68, %c33], %34 {strides = array<i32>} : memref<12x12x75xf32, #tpu.memory_space<vmem>>, vector<12x12x3xf32>,
    %c0_69 = arith.constant 0 : index
    %c2_70 = arith.constant 2 : index
    %c2_71 = arith.constant 2 : index
    %c0_72 = arith.constant 0 : index
    %36 = vector.load %arg1[%c0_69, %c2_70, %c2_71, %c0_72] : memref<1x16x16x3xf32, #tpu.memory_space<vmem>>, vector<1x12x12x3xf32>
    %37 = vector.shape_cast %36 : vector<1x12x12x3xf32> to vector<12x12x3xf32>
    %c0_73 = arith.constant 0 : index
    %c0_74 = arith.constant 0 : index
    %c36 = arith.constant 36 : index
    %38 = vector.load %arg13[%c0_73, %c0_74, %c36] : memref<12x12x75xf32, #tpu.memory_space<vmem>>, vector<12x12x3xf32>
    tpu.vector_store %arg13[%c0_73, %c0_74, %c36], %37 {strides = array<i32>} : memref<12x12x75xf32, #tpu.memory_space<vmem>>, vector<12x12x3xf32>,
    %c0_75 = arith.constant 0 : index
    %c2_76 = arith.constant 2 : index
    %c3_77 = arith.constant 3 : index
    %c0_78 = arith.constant 0 : index
    %39 = vector.load %arg1[%c0_75, %c2_76, %c3_77, %c0_78] : memref<1x16x16x3xf32, #tpu.memory_space<vmem>>, vector<1x12x12x3xf32>
    %40 = vector.shape_cast %39 : vector<1x12x12x3xf32> to vector<12x12x3xf32>
    %c0_79 = arith.constant 0 : index
    %c0_80 = arith.constant 0 : index
    %c39 = arith.constant 39 : index
    %41 = vector.load %arg13[%c0_79, %c0_80, %c39] : memref<12x12x75xf32, #tpu.memory_space<vmem>>, vector<12x12x3xf32>
    tpu.vector_store %arg13[%c0_79, %c0_80, %c39], %40 {strides = array<i32>} : memref<12x12x75xf32, #tpu.memory_space<vmem>>, vector<12x12x3xf32>,
    %c0_81 = arith.constant 0 : index
    %c2_82 = arith.constant 2 : index
    %c4_83 = arith.constant 4 : index
    %c0_84 = arith.constant 0 : index
    %42 = vector.load %arg1[%c0_81, %c2_82, %c4_83, %c0_84] : memref<1x16x16x3xf32, #tpu.memory_space<vmem>>, vector<1x12x12x3xf32>
    %43 = vector.shape_cast %42 : vector<1x12x12x3xf32> to vector<12x12x3xf32>
    %c0_85 = arith.constant 0 : index
    %c0_86 = arith.constant 0 : index
    %c42 = arith.constant 42 : index
    %44 = vector.load %arg13[%c0_85, %c0_86, %c42] : memref<12x12x75xf32, #tpu.memory_space<vmem>>, vector<12x12x3xf32>
    tpu.vector_store %arg13[%c0_85, %c0_86, %c42], %43 {strides = array<i32>} : memref<12x12x75xf32, #tpu.memory_space<vmem>>, vector<12x12x3xf32>,
    %c0_87 = arith.constant 0 : index
    %c3_88 = arith.constant 3 : index
    %c0_89 = arith.constant 0 : index
    %c0_90 = arith.constant 0 : index
    %45 = vector.load %arg1[%c0_87, %c3_88, %c0_89, %c0_90] : memref<1x16x16x3xf32, #tpu.memory_space<vmem>>, vector<1x12x12x3xf32>
    %46 = vector.shape_cast %45 : vector<1x12x12x3xf32> to vector<12x12x3xf32>
    %c0_91 = arith.constant 0 : index
    %c0_92 = arith.constant 0 : index
    %c45 = arith.constant 45 : index
    %47 = vector.load %arg13[%c0_91, %c0_92, %c45] : memref<12x12x75xf32, #tpu.memory_space<vmem>>, vector<12x12x3xf32>
    tpu.vector_store %arg13[%c0_91, %c0_92, %c45], %46 {strides = array<i32>} : memref<12x12x75xf32, #tpu.memory_space<vmem>>, vector<12x12x3xf32>,
    %c0_93 = arith.constant 0 : index
    %c3_94 = arith.constant 3 : index
    %c1_95 = arith.constant 1 : index
    %c0_96 = arith.constant 0 : index
    %48 = vector.load %arg1[%c0_93, %c3_94, %c1_95, %c0_96] : memref<1x16x16x3xf32, #tpu.memory_space<vmem>>, vector<1x12x12x3xf32>
    %49 = vector.shape_cast %48 : vector<1x12x12x3xf32> to vector<12x12x3xf32>
    %c0_97 = arith.constant 0 : index
    %c0_98 = arith.constant 0 : index
    %c48 = arith.constant 48 : index
    %50 = vector.load %arg13[%c0_97, %c0_98, %c48] : memref<12x12x75xf32, #tpu.memory_space<vmem>>, vector<12x12x3xf32>
    tpu.vector_store %arg13[%c0_97, %c0_98, %c48], %49 {strides = array<i32>} : memref<12x12x75xf32, #tpu.memory_space<vmem>>, vector<12x12x3xf32>,
    %c0_99 = arith.constant 0 : index
    %c3_100 = arith.constant 3 : index
    %c2_101 = arith.constant 2 : index
    %c0_102 = arith.constant 0 : index
    %51 = vector.load %arg1[%c0_99, %c3_100, %c2_101, %c0_102] : memref<1x16x16x3xf32, #tpu.memory_space<vmem>>, vector<1x12x12x3xf32>
    %52 = vector.shape_cast %51 : vector<1x12x12x3xf32> to vector<12x12x3xf32>
    %c0_103 = arith.constant 0 : index
    %c0_104 = arith.constant 0 : index
    %c51 = arith.constant 51 : index
    %53 = vector.load %arg13[%c0_103, %c0_104, %c51] : memref<12x12x75xf32, #tpu.memory_space<vmem>>, vector<12x12x3xf32>
    tpu.vector_store %arg13[%c0_103, %c0_104, %c51], %52 {strides = array<i32>} : memref<12x12x75xf32, #tpu.memory_space<vmem>>, vector<12x12x3xf32>,
    %c0_105 = arith.constant 0 : index
    %c3_106 = arith.constant 3 : index
    %c3_107 = arith.constant 3 : index
    %c0_108 = arith.constant 0 : index
    %54 = vector.load %arg1[%c0_105, %c3_106, %c3_107, %c0_108] : memref<1x16x16x3xf32, #tpu.memory_space<vmem>>, vector<1x12x12x3xf32>
    %55 = vector.shape_cast %54 : vector<1x12x12x3xf32> to vector<12x12x3xf32>
    %c0_109 = arith.constant 0 : index
    %c0_110 = arith.constant 0 : index
    %c54 = arith.constant 54 : index
    %56 = vector.load %arg13[%c0_109, %c0_110, %c54] : memref<12x12x75xf32, #tpu.memory_space<vmem>>, vector<12x12x3xf32>
    tpu.vector_store %arg13[%c0_109, %c0_110, %c54], %55 {strides = array<i32>} : memref<12x12x75xf32, #tpu.memory_space<vmem>>, vector<12x12x3xf32>,
    %c0_111 = arith.constant 0 : index
    %c3_112 = arith.constant 3 : index
    %c4_113 = arith.constant 4 : index
    %c0_114 = arith.constant 0 : index
    %57 = vector.load %arg1[%c0_111, %c3_112, %c4_113, %c0_114] : memref<1x16x16x3xf32, #tpu.memory_space<vmem>>, vector<1x12x12x3xf32>
    %58 = vector.shape_cast %57 : vector<1x12x12x3xf32> to vector<12x12x3xf32>
    %c0_115 = arith.constant 0 : index
    %c0_116 = arith.constant 0 : index
    %c57 = arith.constant 57 : index
    %59 = vector.load %arg13[%c0_115, %c0_116, %c57] : memref<12x12x75xf32, #tpu.memory_space<vmem>>, vector<12x12x3xf32>
    tpu.vector_store %arg13[%c0_115, %c0_116, %c57], %58 {strides = array<i32>} : memref<12x12x75xf32, #tpu.memory_space<vmem>>, vector<12x12x3xf32>,
    %c0_117 = arith.constant 0 : index
    %c4_118 = arith.constant 4 : index
    %c0_119 = arith.constant 0 : index
    %c0_120 = arith.constant 0 : index
    %60 = vector.load %arg1[%c0_117, %c4_118, %c0_119, %c0_120] : memref<1x16x16x3xf32, #tpu.memory_space<vmem>>, vector<1x12x12x3xf32>
    %61 = vector.shape_cast %60 : vector<1x12x12x3xf32> to vector<12x12x3xf32>
    %c0_121 = arith.constant 0 : index
    %c0_122 = arith.constant 0 : index
    %c60 = arith.constant 60 : index
    %62 = vector.load %arg13[%c0_121, %c0_122, %c60] : memref<12x12x75xf32, #tpu.memory_space<vmem>>, vector<12x12x3xf32>
    tpu.vector_store %arg13[%c0_121, %c0_122, %c60], %61 {strides = array<i32>} : memref<12x12x75xf32, #tpu.memory_space<vmem>>, vector<12x12x3xf32>,
    %c0_123 = arith.constant 0 : index
    %c4_124 = arith.constant 4 : index
    %c1_125 = arith.constant 1 : index
    %c0_126 = arith.constant 0 : index
    %63 = vector.load %arg1[%c0_123, %c4_124, %c1_125, %c0_126] : memref<1x16x16x3xf32, #tpu.memory_space<vmem>>, vector<1x12x12x3xf32>
    %64 = vector.shape_cast %63 : vector<1x12x12x3xf32> to vector<12x12x3xf32>
    %c0_127 = arith.constant 0 : index
    %c0_128 = arith.constant 0 : index
    %c63 = arith.constant 63 : index
    %65 = vector.load %arg13[%c0_127, %c0_128, %c63] : memref<12x12x75xf32, #tpu.memory_space<vmem>>, vector<12x12x3xf32>
    tpu.vector_store %arg13[%c0_127, %c0_128, %c63], %64 {strides = array<i32>} : memref<12x12x75xf32, #tpu.memory_space<vmem>>, vector<12x12x3xf32>,
    %c0_129 = arith.constant 0 : index
    %c4_130 = arith.constant 4 : index
    %c2_131 = arith.constant 2 : index
    %c0_132 = arith.constant 0 : index
    %66 = vector.load %arg1[%c0_129, %c4_130, %c2_131, %c0_132] : memref<1x16x16x3xf32, #tpu.memory_space<vmem>>, vector<1x12x12x3xf32>
    %67 = vector.shape_cast %66 : vector<1x12x12x3xf32> to vector<12x12x3xf32>
    %c0_133 = arith.constant 0 : index
    %c0_134 = arith.constant 0 : index
    %c66 = arith.constant 66 : index
    %68 = vector.load %arg13[%c0_133, %c0_134, %c66] : memref<12x12x75xf32, #tpu.memory_space<vmem>>, vector<12x12x3xf32>
    tpu.vector_store %arg13[%c0_133, %c0_134, %c66], %67 {strides = array<i32>} : memref<12x12x75xf32, #tpu.memory_space<vmem>>, vector<12x12x3xf32>,
    %c0_135 = arith.constant 0 : index
    %c4_136 = arith.constant 4 : index
    %c3_137 = arith.constant 3 : index
    %c0_138 = arith.constant 0 : index
    %69 = vector.load %arg1[%c0_135, %c4_136, %c3_137, %c0_138] : memref<1x16x16x3xf32, #tpu.memory_space<vmem>>, vector<1x12x12x3xf32>
    %70 = vector.shape_cast %69 : vector<1x12x12x3xf32> to vector<12x12x3xf32>
    %c0_139 = arith.constant 0 : index
    %c0_140 = arith.constant 0 : index
    %c69 = arith.constant 69 : index
    %71 = vector.load %arg13[%c0_139, %c0_140, %c69] : memref<12x12x75xf32, #tpu.memory_space<vmem>>, vector<12x12x3xf32>
    tpu.vector_store %arg13[%c0_139, %c0_140, %c69], %70 {strides = array<i32>} : memref<12x12x75xf32, #tpu.memory_space<vmem>>, vector<12x12x3xf32>,
    %c0_141 = arith.constant 0 : index
    %c4_142 = arith.constant 4 : index
    %c4_143 = arith.constant 4 : index
    %c0_144 = arith.constant 0 : index
    %72 = vector.load %arg1[%c0_141, %c4_142, %c4_143, %c0_144] : memref<1x16x16x3xf32, #tpu.memory_space<vmem>>, vector<1x12x12x3xf32>
    %73 = vector.shape_cast %72 : vector<1x12x12x3xf32> to vector<12x12x3xf32>
    %c0_145 = arith.constant 0 : index
    %c0_146 = arith.constant 0 : index
    %c72 = arith.constant 72 : index
    %74 = vector.load %arg13[%c0_145, %c0_146, %c72] : memref<12x12x75xf32, #tpu.memory_space<vmem>>, vector<12x12x3xf32>
    tpu.vector_store %arg13[%c0_145, %c0_146, %c72], %73 {strides = array<i32>} : memref<12x12x75xf32, #tpu.memory_space<vmem>>, vector<12x12x3xf32>,
    %c0_147 = arith.constant 0 : index
    %c0_148 = arith.constant 0 : index
    %75 = vector.load %arg2[%c0_147, %c0_148] : memref<75x8xf32, #tpu.memory_space<vmem>>, vector<75x8xf32>
    %c0_149 = arith.constant 0 : index
    %c0_150 = arith.constant 0 : index
    %76 = vector.load %arg3[%c0_149, %c0_150] : memref<1x8xf32, #tpu.memory_space<vmem>>, vector<1x8xf32>
    %c0_151 = arith.constant 0 : index
    %c0_152 = arith.constant 0 : index
    %c0_153 = arith.constant 0 : index
    %77 = vector.load %arg13[%c0_151, %c0_152, %c0_153] : memref<12x12x75xf32, #tpu.memory_space<vmem>>, vector<1x12x75xf32>
    %78 = vector.shape_cast %77 : vector<1x12x75xf32> to vector<12x75xf32>
    %cst = arith.constant dense<0.000000e+00> : vector<12x8xf32>
    %79 = tpu.matmul %78, %75, %cst {dimension_numbers = #tpu.dot_dimension_numbers<[1], [0], [0], [1], [0, 0, 1, 1], [], []>} : vector<12x75xf32>, vector<75x8xf32>, vector<12x8xf32> -> vector<12x8xf32>
    %80 = vector.broadcast %76 : vector<1x8xf32> to vector<12x8xf32>
    %81 = arith.addf %79, %80 : vector<12x8xf32>
    %cst_154 = arith.constant 0.000000e+00 : f32
    %82 = vector.broadcast %cst_154 : f32 to vector<12x8xf32>
    %83 = arith.maximumf %81, %82 : vector<12x8xf32>
    %c1_155 = arith.constant 1 : index
    %c0_156 = arith.constant 0 : index
    %c0_157 = arith.constant 0 : index
    %84 = vector.load %arg13[%c1_155, %c0_156, %c0_157] : memref<12x12x75xf32, #tpu.memory_space<vmem>>, vector<1x12x75xf32>
    %85 = vector.shape_cast %84 : vector<1x12x75xf32> to vector<12x75xf32>
    %cst_158 = arith.constant dense<0.000000e+00> : vector<12x8xf32>
    %86 = tpu.matmul %85, %75, %cst_158 {dimension_numbers = #tpu.dot_dimension_numbers<[1], [0], [0], [1], [0, 0, 1, 1], [], []>} : vector<12x75xf32>, vector<75x8xf32>, vector<12x8xf32> -> vector<12x8xf32>
    %87 = vector.broadcast %76 : vector<1x8xf32> to vector<12x8xf32>
    %88 = arith.addf %86, %87 : vector<12x8xf32>
    %cst_159 = arith.constant 0.000000e+00 : f32
    %89 = vector.broadcast %cst_159 : f32 to vector<12x8xf32>
    %90 = arith.maximumf %88, %89 : vector<12x8xf32>
    %91 = arith.maximumf %83, %90 : vector<12x8xf32>
    %c0_160 = arith.constant 0 : index
    %c0_161 = arith.constant 0 : index
    %c0_162 = arith.constant 0 : index
    %92 = vector.load %arg14[%c0_160, %c0_161, %c0_162] : memref<6x12x8xf32, #tpu.memory_space<vmem>>, vector<1x12x8xf32>
    %93 = vector.shape_cast %92 : vector<1x12x8xf32> to vector<12x8xf32>
    %94 = vector.shape_cast %91 : vector<12x8xf32> to vector<1x12x8xf32>
    tpu.vector_store %arg14[%c0_160, %c0_161, %c0_162], %94 {strides = array<i32>} : memref<6x12x8xf32, #tpu.memory_space<vmem>>, vector<1x12x8xf32>,
    %c2_163 = arith.constant 2 : index
    %c0_164 = arith.constant 0 : index
    %c0_165 = arith.constant 0 : index
    %95 = vector.load %arg13[%c2_163, %c0_164, %c0_165] : memref<12x12x75xf32, #tpu.memory_space<vmem>>, vector<1x12x75xf32>
    %96 = vector.shape_cast %95 : vector<1x12x75xf32> to vector<12x75xf32>
    %cst_166 = arith.constant dense<0.000000e+00> : vector<12x8xf32>
    %97 = tpu.matmul %96, %75, %cst_166 {dimension_numbers = #tpu.dot_dimension_numbers<[1], [0], [0], [1], [0, 0, 1, 1], [], []>} : vector<12x75xf32>, vector<75x8xf32>, vector<12x8xf32> -> vector<12x8xf32>
    %98 = vector.broadcast %76 : vector<1x8xf32> to vector<12x8xf32>
    %99 = arith.addf %97, %98 : vector<12x8xf32>
    %cst_167 = arith.constant 0.000000e+00 : f32
    %100 = vector.broadcast %cst_167 : f32 to vector<12x8xf32>
    %101 = arith.maximumf %99, %100 : vector<12x8xf32>
    %c3_168 = arith.constant 3 : index
    %c0_169 = arith.constant 0 : index
    %c0_170 = arith.constant 0 : index
    %102 = vector.load %arg13[%c3_168, %c0_169, %c0_170] : memref<12x12x75xf32, #tpu.memory_space<vmem>>, vector<1x12x75xf32>
    %103 = vector.shape_cast %102 : vector<1x12x75xf32> to vector<12x75xf32>
    %cst_171 = arith.constant dense<0.000000e+00> : vector<12x8xf32>
    %104 = tpu.matmul %103, %75, %cst_171 {dimension_numbers = #tpu.dot_dimension_numbers<[1], [0], [0], [1], [0, 0, 1, 1], [], []>} : vector<12x75xf32>, vector<75x8xf32>, vector<12x8xf32> -> vector<12x8xf32>
    %105 = vector.broadcast %76 : vector<1x8xf32> to vector<12x8xf32>
    %106 = arith.addf %104, %105 : vector<12x8xf32>
    %cst_172 = arith.constant 0.000000e+00 : f32
    %107 = vector.broadcast %cst_172 : f32 to vector<12x8xf32>
    %108 = arith.maximumf %106, %107 : vector<12x8xf32>
    %109 = arith.maximumf %101, %108 : vector<12x8xf32>
    %c1_173 = arith.constant 1 : index
    %c0_174 = arith.constant 0 : index
    %c0_175 = arith.constant 0 : index
    %110 = vector.load %arg14[%c1_173, %c0_174, %c0_175] : memref<6x12x8xf32, #tpu.memory_space<vmem>>, vector<1x12x8xf32>
    %111 = vector.shape_cast %110 : vector<1x12x8xf32> to vector<12x8xf32>
    %112 = vector.shape_cast %109 : vector<12x8xf32> to vector<1x12x8xf32>
    tpu.vector_store %arg14[%c1_173, %c0_174, %c0_175], %112 {strides = array<i32>} : memref<6x12x8xf32, #tpu.memory_space<vmem>>, vector<1x12x8xf32>,
    %c4_176 = arith.constant 4 : index
    %c0_177 = arith.constant 0 : index
    %c0_178 = arith.constant 0 : index
    %113 = vector.load %arg13[%c4_176, %c0_177, %c0_178] : memref<12x12x75xf32, #tpu.memory_space<vmem>>, vector<1x12x75xf32>
    %114 = vector.shape_cast %113 : vector<1x12x75xf32> to vector<12x75xf32>
    %cst_179 = arith.constant dense<0.000000e+00> : vector<12x8xf32>
    %115 = tpu.matmul %114, %75, %cst_179 {dimension_numbers = #tpu.dot_dimension_numbers<[1], [0], [0], [1], [0, 0, 1, 1], [], []>} : vector<12x75xf32>, vector<75x8xf32>, vector<12x8xf32> -> vector<12x8xf32>
    %116 = vector.broadcast %76 : vector<1x8xf32> to vector<12x8xf32>
    %117 = arith.addf %115, %116 : vector<12x8xf32>
    %cst_180 = arith.constant 0.000000e+00 : f32
    %118 = vector.broadcast %cst_180 : f32 to vector<12x8xf32>
    %119 = arith.maximumf %117, %118 : vector<12x8xf32>
    %c5 = arith.constant 5 : index
    %c0_181 = arith.constant 0 : index
    %c0_182 = arith.constant 0 : index
    %120 = vector.load %arg13[%c5, %c0_181, %c0_182] : memref<12x12x75xf32, #tpu.memory_space<vmem>>, vector<1x12x75xf32>
    %121 = vector.shape_cast %120 : vector<1x12x75xf32> to vector<12x75xf32>
    %cst_183 = arith.constant dense<0.000000e+00> : vector<12x8xf32>
    %122 = tpu.matmul %121, %75, %cst_183 {dimension_numbers = #tpu.dot_dimension_numbers<[1], [0], [0], [1], [0, 0, 1, 1], [], []>} : vector<12x75xf32>, vector<75x8xf32>, vector<12x8xf32> -> vector<12x8xf32>
    %123 = vector.broadcast %76 : vector<1x8xf32> to vector<12x8xf32>
    %124 = arith.addf %122, %123 : vector<12x8xf32>
    %cst_184 = arith.constant 0.000000e+00 : f32
    %125 = vector.broadcast %cst_184 : f32 to vector<12x8xf32>
    %126 = arith.maximumf %124, %125 : vector<12x8xf32>
    %127 = arith.maximumf %119, %126 : vector<12x8xf32>
    %c2_185 = arith.constant 2 : index
    %c0_186 = arith.constant 0 : index
    %c0_187 = arith.constant 0 : index
    %128 = vector.load %arg14[%c2_185, %c0_186, %c0_187] : memref<6x12x8xf32, #tpu.memory_space<vmem>>, vector<1x12x8xf32>
    %129 = vector.shape_cast %128 : vector<1x12x8xf32> to vector<12x8xf32>
    %130 = vector.shape_cast %127 : vector<12x8xf32> to vector<1x12x8xf32>
    tpu.vector_store %arg14[%c2_185, %c0_186, %c0_187], %130 {strides = array<i32>} : memref<6x12x8xf32, #tpu.memory_space<vmem>>, vector<1x12x8xf32>,
    %c6_188 = arith.constant 6 : index
    %c0_189 = arith.constant 0 : index
    %c0_190 = arith.constant 0 : index
    %131 = vector.load %arg13[%c6_188, %c0_189, %c0_190] : memref<12x12x75xf32, #tpu.memory_space<vmem>>, vector<1x12x75xf32>
    %132 = vector.shape_cast %131 : vector<1x12x75xf32> to vector<12x75xf32>
    %cst_191 = arith.constant dense<0.000000e+00> : vector<12x8xf32>
    %133 = tpu.matmul %132, %75, %cst_191 {dimension_numbers = #tpu.dot_dimension_numbers<[1], [0], [0], [1], [0, 0, 1, 1], [], []>} : vector<12x75xf32>, vector<75x8xf32>, vector<12x8xf32> -> vector<12x8xf32>
    %134 = vector.broadcast %76 : vector<1x8xf32> to vector<12x8xf32>
    %135 = arith.addf %133, %134 : vector<12x8xf32>
    %cst_192 = arith.constant 0.000000e+00 : f32
    %136 = vector.broadcast %cst_192 : f32 to vector<12x8xf32>
    %137 = arith.maximumf %135, %136 : vector<12x8xf32>
    %c7 = arith.constant 7 : index
    %c0_193 = arith.constant 0 : index
    %c0_194 = arith.constant 0 : index
    %138 = vector.load %arg13[%c7, %c0_193, %c0_194] : memref<12x12x75xf32, #tpu.memory_space<vmem>>, vector<1x12x75xf32>
    %139 = vector.shape_cast %138 : vector<1x12x75xf32> to vector<12x75xf32>
    %cst_195 = arith.constant dense<0.000000e+00> : vector<12x8xf32>
    %140 = tpu.matmul %139, %75, %cst_195 {dimension_numbers = #tpu.dot_dimension_numbers<[1], [0], [0], [1], [0, 0, 1, 1], [], []>} : vector<12x75xf32>, vector<75x8xf32>, vector<12x8xf32> -> vector<12x8xf32>
    %141 = vector.broadcast %76 : vector<1x8xf32> to vector<12x8xf32>
    %142 = arith.addf %140, %141 : vector<12x8xf32>
    %cst_196 = arith.constant 0.000000e+00 : f32
    %143 = vector.broadcast %cst_196 : f32 to vector<12x8xf32>
    %144 = arith.maximumf %142, %143 : vector<12x8xf32>
    %145 = arith.maximumf %137, %144 : vector<12x8xf32>
    %c3_197 = arith.constant 3 : index
    %c0_198 = arith.constant 0 : index
    %c0_199 = arith.constant 0 : index
    %146 = vector.load %arg14[%c3_197, %c0_198, %c0_199] : memref<6x12x8xf32, #tpu.memory_space<vmem>>, vector<1x12x8xf32>
    %147 = vector.shape_cast %146 : vector<1x12x8xf32> to vector<12x8xf32>
    %148 = vector.shape_cast %145 : vector<12x8xf32> to vector<1x12x8xf32>
    tpu.vector_store %arg14[%c3_197, %c0_198, %c0_199], %148 {strides = array<i32>} : memref<6x12x8xf32, #tpu.memory_space<vmem>>, vector<1x12x8xf32>,
    %c8 = arith.constant 8 : index
    %c0_200 = arith.constant 0 : index
    %c0_201 = arith.constant 0 : index
    %149 = vector.load %arg13[%c8, %c0_200, %c0_201] : memref<12x12x75xf32, #tpu.memory_space<vmem>>, vector<1x12x75xf32>
    %150 = vector.shape_cast %149 : vector<1x12x75xf32> to vector<12x75xf32>
    %cst_202 = arith.constant dense<0.000000e+00> : vector<12x8xf32>
    %151 = tpu.matmul %150, %75, %cst_202 {dimension_numbers = #tpu.dot_dimension_numbers<[1], [0], [0], [1], [0, 0, 1, 1], [], []>} : vector<12x75xf32>, vector<75x8xf32>, vector<12x8xf32> -> vector<12x8xf32>
    %152 = vector.broadcast %76 : vector<1x8xf32> to vector<12x8xf32>
    %153 = arith.addf %151, %152 : vector<12x8xf32>
    %cst_203 = arith.constant 0.000000e+00 : f32
    %154 = vector.broadcast %cst_203 : f32 to vector<12x8xf32>
    %155 = arith.maximumf %153, %154 : vector<12x8xf32>
    %c9_204 = arith.constant 9 : index
    %c0_205 = arith.constant 0 : index
    %c0_206 = arith.constant 0 : index
    %156 = vector.load %arg13[%c9_204, %c0_205, %c0_206] : memref<12x12x75xf32, #tpu.memory_space<vmem>>, vector<1x12x75xf32>
    %157 = vector.shape_cast %156 : vector<1x12x75xf32> to vector<12x75xf32>
    %cst_207 = arith.constant dense<0.000000e+00> : vector<12x8xf32>
    %158 = tpu.matmul %157, %75, %cst_207 {dimension_numbers = #tpu.dot_dimension_numbers<[1], [0], [0], [1], [0, 0, 1, 1], [], []>} : vector<12x75xf32>, vector<75x8xf32>, vector<12x8xf32> -> vector<12x8xf32>
    %159 = vector.broadcast %76 : vector<1x8xf32> to vector<12x8xf32>
    %160 = arith.addf %158, %159 : vector<12x8xf32>
    %cst_208 = arith.constant 0.000000e+00 : f32
    %161 = vector.broadcast %cst_208 : f32 to vector<12x8xf32>
    %162 = arith.maximumf %160, %161 : vector<12x8xf32>
    %163 = arith.maximumf %155, %162 : vector<12x8xf32>
    %c4_209 = arith.constant 4 : index
    %c0_210 = arith.constant 0 : index
    %c0_211 = arith.constant 0 : index
    %164 = vector.load %arg14[%c4_209, %c0_210, %c0_211] : memref<6x12x8xf32, #tpu.memory_space<vmem>>, vector<1x12x8xf32>
    %165 = vector.shape_cast %164 : vector<1x12x8xf32> to vector<12x8xf32>
    %166 = vector.shape_cast %163 : vector<12x8xf32> to vector<1x12x8xf32>
    tpu.vector_store %arg14[%c4_209, %c0_210, %c0_211], %166 {strides = array<i32>} : memref<6x12x8xf32, #tpu.memory_space<vmem>>, vector<1x12x8xf32>,
    %c10 = arith.constant 10 : index
    %c0_212 = arith.constant 0 : index
    %c0_213 = arith.constant 0 : index
    %167 = vector.load %arg13[%c10, %c0_212, %c0_213] : memref<12x12x75xf32, #tpu.memory_space<vmem>>, vector<1x12x75xf32>
    %168 = vector.shape_cast %167 : vector<1x12x75xf32> to vector<12x75xf32>
    %cst_214 = arith.constant dense<0.000000e+00> : vector<12x8xf32>
    %169 = tpu.matmul %168, %75, %cst_214 {dimension_numbers = #tpu.dot_dimension_numbers<[1], [0], [0], [1], [0, 0, 1, 1], [], []>} : vector<12x75xf32>, vector<75x8xf32>, vector<12x8xf32> -> vector<12x8xf32>
    %170 = vector.broadcast %76 : vector<1x8xf32> to vector<12x8xf32>
    %171 = arith.addf %169, %170 : vector<12x8xf32>
    %cst_215 = arith.constant 0.000000e+00 : f32
    %172 = vector.broadcast %cst_215 : f32 to vector<12x8xf32>
    %173 = arith.maximumf %171, %172 : vector<12x8xf32>
    %c11 = arith.constant 11 : index
    %c0_216 = arith.constant 0 : index
    %c0_217 = arith.constant 0 : index
    %174 = vector.load %arg13[%c11, %c0_216, %c0_217] : memref<12x12x75xf32, #tpu.memory_space<vmem>>, vector<1x12x75xf32>
    %175 = vector.shape_cast %174 : vector<1x12x75xf32> to vector<12x75xf32>
    %cst_218 = arith.constant dense<0.000000e+00> : vector<12x8xf32>
    %176 = tpu.matmul %175, %75, %cst_218 {dimension_numbers = #tpu.dot_dimension_numbers<[1], [0], [0], [1], [0, 0, 1, 1], [], []>} : vector<12x75xf32>, vector<75x8xf32>, vector<12x8xf32> -> vector<12x8xf32>
    %177 = vector.broadcast %76 : vector<1x8xf32> to vector<12x8xf32>
    %178 = arith.addf %176, %177 : vector<12x8xf32>
    %cst_219 = arith.constant 0.000000e+00 : f32
    %179 = vector.broadcast %cst_219 : f32 to vector<12x8xf32>
    %180 = arith.maximumf %178, %179 : vector<12x8xf32>
    %181 = arith.maximumf %173, %180 : vector<12x8xf32>
    %c5_220 = arith.constant 5 : index
    %c0_221 = arith.constant 0 : index
    %c0_222 = arith.constant 0 : index
    %182 = vector.load %arg14[%c5_220, %c0_221, %c0_222] : memref<6x12x8xf32, #tpu.memory_space<vmem>>, vector<1x12x8xf32>
    %183 = vector.shape_cast %182 : vector<1x12x8xf32> to vector<12x8xf32>
    %184 = vector.shape_cast %181 : vector<12x8xf32> to vector<1x12x8xf32>
    tpu.vector_store %arg14[%c5_220, %c0_221, %c0_222], %184 {strides = array<i32>} : memref<6x12x8xf32, #tpu.memory_space<vmem>>, vector<1x12x8xf32>,
    %c0_223 = arith.constant 0 : index
    %c0_224 = arith.constant 0 : index
    %c0_225 = arith.constant 0 : index
    %185 = vector.load %arg14[%c0_223, %c0_224, %c0_225] : memref<6x12x8xf32, #tpu.memory_space<vmem>>, vector<6x2x8xf32>
    %cst_226 = arith.constant dense<0xFF800000> : vector<6x8xf32>
    %186 = vector.multi_reduction <maximumf>, %185, %cst_226 [1] : vector<6x2x8xf32> to vector<6x8xf32>
    %187 = vector.shape_cast %186 : vector<6x8xf32> to vector<6x1x8xf32>
    %c0_227 = arith.constant 0 : index
    %c0_228 = arith.constant 0 : index
    %c0_229 = arith.constant 0 : index
    %188 = vector.load %arg15[%c0_227, %c0_228, %c0_229] : memref<6x6x8xf32, #tpu.memory_space<vmem>>, vector<6x1x8xf32>
    tpu.vector_store %arg15[%c0_227, %c0_228, %c0_229], %187 {strides = array<i32>} : memref<6x6x8xf32, #tpu.memory_space<vmem>>, vector<6x1x8xf32>,
    %c0_230 = arith.constant 0 : index
    %c2_231 = arith.constant 2 : index
    %c0_232 = arith.constant 0 : index
    %189 = vector.load %arg14[%c0_230, %c2_231, %c0_232] : memref<6x12x8xf32, #tpu.memory_space<vmem>>, vector<6x2x8xf32>
    %cst_233 = arith.constant dense<0xFF800000> : vector<6x8xf32>
    %190 = vector.multi_reduction <maximumf>, %189, %cst_233 [1] : vector<6x2x8xf32> to vector<6x8xf32>
    %191 = vector.shape_cast %190 : vector<6x8xf32> to vector<6x1x8xf32>
    %c0_234 = arith.constant 0 : index
    %c1_235 = arith.constant 1 : index
    %c0_236 = arith.constant 0 : index
    %192 = vector.load %arg15[%c0_234, %c1_235, %c0_236] : memref<6x6x8xf32, #tpu.memory_space<vmem>>, vector<6x1x8xf32>
    tpu.vector_store %arg15[%c0_234, %c1_235, %c0_236], %191 {strides = array<i32>} : memref<6x6x8xf32, #tpu.memory_space<vmem>>, vector<6x1x8xf32>,
    %c0_237 = arith.constant 0 : index
    %c4_238 = arith.constant 4 : index
    %c0_239 = arith.constant 0 : index
    %193 = vector.load %arg14[%c0_237, %c4_238, %c0_239] : memref<6x12x8xf32, #tpu.memory_space<vmem>>, vector<6x2x8xf32>
    %cst_240 = arith.constant dense<0xFF800000> : vector<6x8xf32>
    %194 = vector.multi_reduction <maximumf>, %193, %cst_240 [1] : vector<6x2x8xf32> to vector<6x8xf32>
    %195 = vector.shape_cast %194 : vector<6x8xf32> to vector<6x1x8xf32>
    %c0_241 = arith.constant 0 : index
    %c2_242 = arith.constant 2 : index
    %c0_243 = arith.constant 0 : index
    %196 = vector.load %arg15[%c0_241, %c2_242, %c0_243] : memref<6x6x8xf32, #tpu.memory_space<vmem>>, vector<6x1x8xf32>
    tpu.vector_store %arg15[%c0_241, %c2_242, %c0_243], %195 {strides = array<i32>} : memref<6x6x8xf32, #tpu.memory_space<vmem>>, vector<6x1x8xf32>,
    %c0_244 = arith.constant 0 : index
    %c6_245 = arith.constant 6 : index
    %c0_246 = arith.constant 0 : index
    %197 = vector.load %arg14[%c0_244, %c6_245, %c0_246] : memref<6x12x8xf32, #tpu.memory_space<vmem>>, vector<6x2x8xf32>
    %cst_247 = arith.constant dense<0xFF800000> : vector<6x8xf32>
    %198 = vector.multi_reduction <maximumf>, %197, %cst_247 [1] : vector<6x2x8xf32> to vector<6x8xf32>
    %199 = vector.shape_cast %198 : vector<6x8xf32> to vector<6x1x8xf32>
    %c0_248 = arith.constant 0 : index
    %c3_249 = arith.constant 3 : index
    %c0_250 = arith.constant 0 : index
    %200 = vector.load %arg15[%c0_248, %c3_249, %c0_250] : memref<6x6x8xf32, #tpu.memory_space<vmem>>, vector<6x1x8xf32>
    tpu.vector_store %arg15[%c0_248, %c3_249, %c0_250], %199 {strides = array<i32>} : memref<6x6x8xf32, #tpu.memory_space<vmem>>, vector<6x1x8xf32>,
    %c0_251 = arith.constant 0 : index
    %c8_252 = arith.constant 8 : index
    %c0_253 = arith.constant 0 : index
    %201 = vector.load %arg14[%c0_251, %c8_252, %c0_253] : memref<6x12x8xf32, #tpu.memory_space<vmem>>, vector<6x2x8xf32>
    %cst_254 = arith.constant dense<0xFF800000> : vector<6x8xf32>
    %202 = vector.multi_reduction <maximumf>, %201, %cst_254 [1] : vector<6x2x8xf32> to vector<6x8xf32>
    %203 = vector.shape_cast %202 : vector<6x8xf32> to vector<6x1x8xf32>
    %c0_255 = arith.constant 0 : index
    %c4_256 = arith.constant 4 : index
    %c0_257 = arith.constant 0 : index
    %204 = vector.load %arg15[%c0_255, %c4_256, %c0_257] : memref<6x6x8xf32, #tpu.memory_space<vmem>>, vector<6x1x8xf32>
    tpu.vector_store %arg15[%c0_255, %c4_256, %c0_257], %203 {strides = array<i32>} : memref<6x6x8xf32, #tpu.memory_space<vmem>>, vector<6x1x8xf32>,
    %c0_258 = arith.constant 0 : index
    %c10_259 = arith.constant 10 : index
    %c0_260 = arith.constant 0 : index
    %205 = vector.load %arg14[%c0_258, %c10_259, %c0_260] : memref<6x12x8xf32, #tpu.memory_space<vmem>>, vector<6x2x8xf32>
    %cst_261 = arith.constant dense<0xFF800000> : vector<6x8xf32>
    %206 = vector.multi_reduction <maximumf>, %205, %cst_261 [1] : vector<6x2x8xf32> to vector<6x8xf32>
    %207 = vector.shape_cast %206 : vector<6x8xf32> to vector<6x1x8xf32>
    %c0_262 = arith.constant 0 : index
    %c5_263 = arith.constant 5 : index
    %c0_264 = arith.constant 0 : index
    %208 = vector.load %arg15[%c0_262, %c5_263, %c0_264] : memref<6x6x8xf32, #tpu.memory_space<vmem>>, vector<6x1x8xf32>
    tpu.vector_store %arg15[%c0_262, %c5_263, %c0_264], %207 {strides = array<i32>} : memref<6x6x8xf32, #tpu.memory_space<vmem>>, vector<6x1x8xf32>,
    %c0_265 = arith.constant 0 : index
    %c0_266 = arith.constant 0 : index
    %c0_267 = arith.constant 0 : index
    %209 = vector.load %arg15[%c0_265, %c0_266, %c0_267] : memref<6x6x8xf32, #tpu.memory_space<vmem>>, vector<6x6x8xf32>
    %cst_268 = arith.constant 0.000000e+00 : f32
    %210 = vector.broadcast %cst_268 : f32 to vector<6x6x11xf32>
    %c0_269 = arith.constant 0 : index
    %c0_270 = arith.constant 0 : index
    %c0_271 = arith.constant 0 : index
    %211 = vector.load %arg16[%c0_269, %c0_270, %c0_271] : memref<6x6x11xf32, #tpu.memory_space<vmem>>, vector<6x6x11xf32>
    tpu.vector_store %arg16[%c0_269, %c0_270, %c0_271], %210 {strides = array<i32>} : memref<6x6x11xf32, #tpu.memory_space<vmem>>, vector<6x6x11xf32>,
    %212 = arith.mulf %209, %209 : vector<6x6x8xf32>
    %c0_272 = arith.constant 0 : index
    %c0_273 = arith.constant 0 : index
    %c2_274 = arith.constant 2 : index
    %213 = vector.load %arg16[%c0_272, %c0_273, %c2_274] : memref<6x6x11xf32, #tpu.memory_space<vmem>>, vector<6x6x8xf32>
    tpu.vector_store %arg16[%c0_272, %c0_273, %c2_274], %212 {strides = array<i32>} : memref<6x6x11xf32, #tpu.memory_space<vmem>>, vector<6x6x8xf32>,
    %c0_275 = arith.constant 0 : index
    %c0_276 = arith.constant 0 : index
    %c0_277 = arith.constant 0 : index
    %214 = vector.load %arg16[%c0_275, %c0_276, %c0_277] : memref<6x6x11xf32, #tpu.memory_space<vmem>>, vector<6x6x8xf32>
    %c0_278 = arith.constant 0 : index
    %c0_279 = arith.constant 0 : index
    %c1_280 = arith.constant 1 : index
    %215 = vector.load %arg16[%c0_278, %c0_279, %c1_280] : memref<6x6x11xf32, #tpu.memory_space<vmem>>, vector<6x6x8xf32>
    %216 = arith.addf %214, %215 : vector<6x6x8xf32>
    %c0_281 = arith.constant 0 : index
    %c0_282 = arith.constant 0 : index
    %c2_283 = arith.constant 2 : index
    %217 = vector.load %arg16[%c0_281, %c0_282, %c2_283] : memref<6x6x11xf32, #tpu.memory_space<vmem>>, vector<6x6x8xf32>
    %218 = arith.addf %216, %217 : vector<6x6x8xf32>
    %c0_284 = arith.constant 0 : index
    %c0_285 = arith.constant 0 : index
    %c3_286 = arith.constant 3 : index
    %219 = vector.load %arg16[%c0_284, %c0_285, %c3_286] : memref<6x6x11xf32, #tpu.memory_space<vmem>>, vector<6x6x8xf32>
    %220 = arith.addf %218, %219 : vector<6x6x8xf32>
    %cst_287 = arith.constant 2.500000e-05 : f32
    %221 = vector.broadcast %cst_287 : f32 to vector<6x6x8xf32>
    %222 = arith.mulf %221, %220 : vector<6x6x8xf32>
    %cst_288 = arith.constant 1.000000e+00 : f32
    %223 = vector.broadcast %cst_288 : f32 to vector<6x6x8xf32>
    %224 = arith.addf %223, %222 : vector<6x6x8xf32>
    %225 = math.log %224 : vector<6x6x8xf32>
    %cst_289 = arith.constant -7.500000e-01 : f32
    %226 = vector.broadcast %cst_289 : f32 to vector<6x6x8xf32>
    %227 = arith.mulf %226, %225 : vector<6x6x8xf32>
    %228 = math.exp %227 : vector<6x6x8xf32>
    %229 = arith.mulf %209, %228 : vector<6x6x8xf32>
    %c0_290 = arith.constant 0 : index
    %c0_291 = arith.constant 0 : index
    %c0_292 = arith.constant 0 : index
    %230 = vector.load %arg15[%c0_290, %c0_291, %c0_292] : memref<6x6x8xf32, #tpu.memory_space<vmem>>, vector<6x6x8xf32>
    tpu.vector_store %arg15[%c0_290, %c0_291, %c0_292], %229 {strides = array<i32>} : memref<6x6x8xf32, #tpu.memory_space<vmem>>, vector<6x6x8xf32>,
    %c0_293 = arith.constant 0 : index
    %c0_294 = arith.constant 0 : index
    %c0_295 = arith.constant 0 : index
    %231 = vector.load %arg15[%c0_293, %c0_294, %c0_295] : memref<6x6x8xf32, #tpu.memory_space<vmem>>, vector<4x4x8xf32>
    %c0_296 = arith.constant 0 : index
    %c0_297 = arith.constant 0 : index
    %c0_298 = arith.constant 0 : index
    %232 = vector.load %arg17[%c0_296, %c0_297, %c0_298] : memref<4x4x72xf32, #tpu.memory_space<vmem>>, vector<4x4x8xf32>
    tpu.vector_store %arg17[%c0_296, %c0_297, %c0_298], %231 {strides = array<i32>} : memref<4x4x72xf32, #tpu.memory_space<vmem>>, vector<4x4x8xf32>,
    %c0_299 = arith.constant 0 : index
    %c1_300 = arith.constant 1 : index
    %c0_301 = arith.constant 0 : index
    %233 = vector.load %arg15[%c0_299, %c1_300, %c0_301] : memref<6x6x8xf32, #tpu.memory_space<vmem>>, vector<4x4x8xf32>
    %c0_302 = arith.constant 0 : index
    %c0_303 = arith.constant 0 : index
    %c8_304 = arith.constant 8 : index
    %234 = vector.load %arg17[%c0_302, %c0_303, %c8_304] : memref<4x4x72xf32, #tpu.memory_space<vmem>>, vector<4x4x8xf32>
    tpu.vector_store %arg17[%c0_302, %c0_303, %c8_304], %233 {strides = array<i32>} : memref<4x4x72xf32, #tpu.memory_space<vmem>>, vector<4x4x8xf32>,
    %c0_305 = arith.constant 0 : index
    %c2_306 = arith.constant 2 : index
    %c0_307 = arith.constant 0 : index
    %235 = vector.load %arg15[%c0_305, %c2_306, %c0_307] : memref<6x6x8xf32, #tpu.memory_space<vmem>>, vector<4x4x8xf32>
    %c0_308 = arith.constant 0 : index
    %c0_309 = arith.constant 0 : index
    %c16 = arith.constant 16 : index
    %236 = vector.load %arg17[%c0_308, %c0_309, %c16] : memref<4x4x72xf32, #tpu.memory_space<vmem>>, vector<4x4x8xf32>
    tpu.vector_store %arg17[%c0_308, %c0_309, %c16], %235 {strides = array<i32>} : memref<4x4x72xf32, #tpu.memory_space<vmem>>, vector<4x4x8xf32>,
    %c1_310 = arith.constant 1 : index
    %c0_311 = arith.constant 0 : index
    %c0_312 = arith.constant 0 : index
    %237 = vector.load %arg15[%c1_310, %c0_311, %c0_312] : memref<6x6x8xf32, #tpu.memory_space<vmem>>, vector<4x4x8xf32>
    %c0_313 = arith.constant 0 : index
    %c0_314 = arith.constant 0 : index
    %c24_315 = arith.constant 24 : index
    %238 = vector.load %arg17[%c0_313, %c0_314, %c24_315] : memref<4x4x72xf32, #tpu.memory_space<vmem>>, vector<4x4x8xf32>
    tpu.vector_store %arg17[%c0_313, %c0_314, %c24_315], %237 {strides = array<i32>} : memref<4x4x72xf32, #tpu.memory_space<vmem>>, vector<4x4x8xf32>,
    %c1_316 = arith.constant 1 : index
    %c1_317 = arith.constant 1 : index
    %c0_318 = arith.constant 0 : index
    %239 = vector.load %arg15[%c1_316, %c1_317, %c0_318] : memref<6x6x8xf32, #tpu.memory_space<vmem>>, vector<4x4x8xf32>
    %c0_319 = arith.constant 0 : index
    %c0_320 = arith.constant 0 : index
    %c32 = arith.constant 32 : index
    %240 = vector.load %arg17[%c0_319, %c0_320, %c32] : memref<4x4x72xf32, #tpu.memory_space<vmem>>, vector<4x4x8xf32>
    tpu.vector_store %arg17[%c0_319, %c0_320, %c32], %239 {strides = array<i32>} : memref<4x4x72xf32, #tpu.memory_space<vmem>>, vector<4x4x8xf32>,
    %c1_321 = arith.constant 1 : index
    %c2_322 = arith.constant 2 : index
    %c0_323 = arith.constant 0 : index
    %241 = vector.load %arg15[%c1_321, %c2_322, %c0_323] : memref<6x6x8xf32, #tpu.memory_space<vmem>>, vector<4x4x8xf32>
    %c0_324 = arith.constant 0 : index
    %c0_325 = arith.constant 0 : index
    %c40 = arith.constant 40 : index
    %242 = vector.load %arg17[%c0_324, %c0_325, %c40] : memref<4x4x72xf32, #tpu.memory_space<vmem>>, vector<4x4x8xf32>
    tpu.vector_store %arg17[%c0_324, %c0_325, %c40], %241 {strides = array<i32>} : memref<4x4x72xf32, #tpu.memory_space<vmem>>, vector<4x4x8xf32>,
    %c2_326 = arith.constant 2 : index
    %c0_327 = arith.constant 0 : index
    %c0_328 = arith.constant 0 : index
    %243 = vector.load %arg15[%c2_326, %c0_327, %c0_328] : memref<6x6x8xf32, #tpu.memory_space<vmem>>, vector<4x4x8xf32>
    %c0_329 = arith.constant 0 : index
    %c0_330 = arith.constant 0 : index
    %c48_331 = arith.constant 48 : index
    %244 = vector.load %arg17[%c0_329, %c0_330, %c48_331] : memref<4x4x72xf32, #tpu.memory_space<vmem>>, vector<4x4x8xf32>
    tpu.vector_store %arg17[%c0_329, %c0_330, %c48_331], %243 {strides = array<i32>} : memref<4x4x72xf32, #tpu.memory_space<vmem>>, vector<4x4x8xf32>,
    %c2_332 = arith.constant 2 : index
    %c1_333 = arith.constant 1 : index
    %c0_334 = arith.constant 0 : index
    %245 = vector.load %arg15[%c2_332, %c1_333, %c0_334] : memref<6x6x8xf32, #tpu.memory_space<vmem>>, vector<4x4x8xf32>
    %c0_335 = arith.constant 0 : index
    %c0_336 = arith.constant 0 : index
    %c56 = arith.constant 56 : index
    %246 = vector.load %arg17[%c0_335, %c0_336, %c56] : memref<4x4x72xf32, #tpu.memory_space<vmem>>, vector<4x4x8xf32>
    tpu.vector_store %arg17[%c0_335, %c0_336, %c56], %245 {strides = array<i32>} : memref<4x4x72xf32, #tpu.memory_space<vmem>>, vector<4x4x8xf32>,
    %c2_337 = arith.constant 2 : index
    %c2_338 = arith.constant 2 : index
    %c0_339 = arith.constant 0 : index
    %247 = vector.load %arg15[%c2_337, %c2_338, %c0_339] : memref<6x6x8xf32, #tpu.memory_space<vmem>>, vector<4x4x8xf32>
    %c0_340 = arith.constant 0 : index
    %c0_341 = arith.constant 0 : index
    %c64 = arith.constant 64 : index
    %248 = vector.load %arg17[%c0_340, %c0_341, %c64] : memref<4x4x72xf32, #tpu.memory_space<vmem>>, vector<4x4x8xf32>
    tpu.vector_store %arg17[%c0_340, %c0_341, %c64], %247 {strides = array<i32>} : memref<4x4x72xf32, #tpu.memory_space<vmem>>, vector<4x4x8xf32>,
    %c0_342 = arith.constant 0 : index
    %c0_343 = arith.constant 0 : index
    %249 = vector.load %arg4[%c0_342, %c0_343] : memref<72x8xf32, #tpu.memory_space<vmem>>, vector<72x8xf32>
    %c0_344 = arith.constant 0 : index
    %c0_345 = arith.constant 0 : index
    %250 = vector.load %arg5[%c0_344, %c0_345] : memref<1x8xf32, #tpu.memory_space<vmem>>, vector<1x8xf32>
    %c0_346 = arith.constant 0 : index
    %c0_347 = arith.constant 0 : index
    %c0_348 = arith.constant 0 : index
    %251 = vector.load %arg17[%c0_346, %c0_347, %c0_348] : memref<4x4x72xf32, #tpu.memory_space<vmem>>, vector<1x4x72xf32>
    %252 = vector.shape_cast %251 : vector<1x4x72xf32> to vector<4x72xf32>
    %cst_349 = arith.constant dense<0.000000e+00> : vector<4x8xf32>
    %253 = tpu.matmul %252, %249, %cst_349 {dimension_numbers = #tpu.dot_dimension_numbers<[1], [0], [0], [1], [0, 0, 1, 1], [], []>} : vector<4x72xf32>, vector<72x8xf32>, vector<4x8xf32> -> vector<4x8xf32>
    %254 = vector.broadcast %250 : vector<1x8xf32> to vector<4x8xf32>
    %255 = arith.addf %253, %254 : vector<4x8xf32>
    %cst_350 = arith.constant 0.000000e+00 : f32
    %256 = vector.broadcast %cst_350 : f32 to vector<4x8xf32>
    %257 = arith.maximumf %255, %256 : vector<4x8xf32>
    %c0_351 = arith.constant 0 : index
    %c0_352 = arith.constant 0 : index
    %c0_353 = arith.constant 0 : index
    %258 = vector.load %arg18[%c0_351, %c0_352, %c0_353] : memref<4x4x8xf32, #tpu.memory_space<vmem>>, vector<1x4x8xf32>
    %259 = vector.shape_cast %258 : vector<1x4x8xf32> to vector<4x8xf32>
    %260 = vector.shape_cast %257 : vector<4x8xf32> to vector<1x4x8xf32>
    tpu.vector_store %arg18[%c0_351, %c0_352, %c0_353], %260 {strides = array<i32>} : memref<4x4x8xf32, #tpu.memory_space<vmem>>, vector<1x4x8xf32>,
    %c1_354 = arith.constant 1 : index
    %c0_355 = arith.constant 0 : index
    %c0_356 = arith.constant 0 : index
    %261 = vector.load %arg17[%c1_354, %c0_355, %c0_356] : memref<4x4x72xf32, #tpu.memory_space<vmem>>, vector<1x4x72xf32>
    %262 = vector.shape_cast %261 : vector<1x4x72xf32> to vector<4x72xf32>
    %cst_357 = arith.constant dense<0.000000e+00> : vector<4x8xf32>
    %263 = tpu.matmul %262, %249, %cst_357 {dimension_numbers = #tpu.dot_dimension_numbers<[1], [0], [0], [1], [0, 0, 1, 1], [], []>} : vector<4x72xf32>, vector<72x8xf32>, vector<4x8xf32> -> vector<4x8xf32>
    %264 = vector.broadcast %250 : vector<1x8xf32> to vector<4x8xf32>
    %265 = arith.addf %263, %264 : vector<4x8xf32>
    %cst_358 = arith.constant 0.000000e+00 : f32
    %266 = vector.broadcast %cst_358 : f32 to vector<4x8xf32>
    %267 = arith.maximumf %265, %266 : vector<4x8xf32>
    %c1_359 = arith.constant 1 : index
    %c0_360 = arith.constant 0 : index
    %c0_361 = arith.constant 0 : index
    %268 = vector.load %arg18[%c1_359, %c0_360, %c0_361] : memref<4x4x8xf32, #tpu.memory_space<vmem>>, vector<1x4x8xf32>
    %269 = vector.shape_cast %268 : vector<1x4x8xf32> to vector<4x8xf32>
    %270 = vector.shape_cast %267 : vector<4x8xf32> to vector<1x4x8xf32>
    tpu.vector_store %arg18[%c1_359, %c0_360, %c0_361], %270 {strides = array<i32>} : memref<4x4x8xf32, #tpu.memory_space<vmem>>, vector<1x4x8xf32>,
    %c2_362 = arith.constant 2 : index
    %c0_363 = arith.constant 0 : index
    %c0_364 = arith.constant 0 : index
    %271 = vector.load %arg17[%c2_362, %c0_363, %c0_364] : memref<4x4x72xf32, #tpu.memory_space<vmem>>, vector<1x4x72xf32>
    %272 = vector.shape_cast %271 : vector<1x4x72xf32> to vector<4x72xf32>
    %cst_365 = arith.constant dense<0.000000e+00> : vector<4x8xf32>
    %273 = tpu.matmul %272, %249, %cst_365 {dimension_numbers = #tpu.dot_dimension_numbers<[1], [0], [0], [1], [0, 0, 1, 1], [], []>} : vector<4x72xf32>, vector<72x8xf32>, vector<4x8xf32> -> vector<4x8xf32>
    %274 = vector.broadcast %250 : vector<1x8xf32> to vector<4x8xf32>
    %275 = arith.addf %273, %274 : vector<4x8xf32>
    %cst_366 = arith.constant 0.000000e+00 : f32
    %276 = vector.broadcast %cst_366 : f32 to vector<4x8xf32>
    %277 = arith.maximumf %275, %276 : vector<4x8xf32>
    %c2_367 = arith.constant 2 : index
    %c0_368 = arith.constant 0 : index
    %c0_369 = arith.constant 0 : index
    %278 = vector.load %arg18[%c2_367, %c0_368, %c0_369] : memref<4x4x8xf32, #tpu.memory_space<vmem>>, vector<1x4x8xf32>
    %279 = vector.shape_cast %278 : vector<1x4x8xf32> to vector<4x8xf32>
    %280 = vector.shape_cast %277 : vector<4x8xf32> to vector<1x4x8xf32>
    tpu.vector_store %arg18[%c2_367, %c0_368, %c0_369], %280 {strides = array<i32>} : memref<4x4x8xf32, #tpu.memory_space<vmem>>, vector<1x4x8xf32>,
    %c3_370 = arith.constant 3 : index
    %c0_371 = arith.constant 0 : index
    %c0_372 = arith.constant 0 : index
    %281 = vector.load %arg17[%c3_370, %c0_371, %c0_372] : memref<4x4x72xf32, #tpu.memory_space<vmem>>, vector<1x4x72xf32>
    %282 = vector.shape_cast %281 : vector<1x4x72xf32> to vector<4x72xf32>
    %cst_373 = arith.constant dense<0.000000e+00> : vector<4x8xf32>
    %283 = tpu.matmul %282, %249, %cst_373 {dimension_numbers = #tpu.dot_dimension_numbers<[1], [0], [0], [1], [0, 0, 1, 1], [], []>} : vector<4x72xf32>, vector<72x8xf32>, vector<4x8xf32> -> vector<4x8xf32>
    %284 = vector.broadcast %250 : vector<1x8xf32> to vector<4x8xf32>
    %285 = arith.addf %283, %284 : vector<4x8xf32>
    %cst_374 = arith.constant 0.000000e+00 : f32
    %286 = vector.broadcast %cst_374 : f32 to vector<4x8xf32>
    %287 = arith.maximumf %285, %286 : vector<4x8xf32>
    %c3_375 = arith.constant 3 : index
    %c0_376 = arith.constant 0 : index
    %c0_377 = arith.constant 0 : index
    %288 = vector.load %arg18[%c3_375, %c0_376, %c0_377] : memref<4x4x8xf32, #tpu.memory_space<vmem>>, vector<1x4x8xf32>
    %289 = vector.shape_cast %288 : vector<1x4x8xf32> to vector<4x8xf32>
    %290 = vector.shape_cast %287 : vector<4x8xf32> to vector<1x4x8xf32>
    tpu.vector_store %arg18[%c3_375, %c0_376, %c0_377], %290 {strides = array<i32>} : memref<4x4x8xf32, #tpu.memory_space<vmem>>, vector<1x4x8xf32>,
    %c0_378 = arith.constant 0 : index
    %c0_379 = arith.constant 0 : index
    %c0_380 = arith.constant 0 : index
    %291 = vector.load %arg18[%c0_378, %c0_379, %c0_380] : memref<4x4x8xf32, #tpu.memory_space<vmem>>, vector<4x4x8xf32>
    %cst_381 = arith.constant 0.000000e+00 : f32
    %292 = vector.broadcast %cst_381 : f32 to vector<4x4x11xf32>
    %c0_382 = arith.constant 0 : index
    %c0_383 = arith.constant 0 : index
    %c0_384 = arith.constant 0 : index
    %293 = vector.load %arg19[%c0_382, %c0_383, %c0_384] : memref<4x4x11xf32, #tpu.memory_space<vmem>>, vector<4x4x11xf32>
    tpu.vector_store %arg19[%c0_382, %c0_383, %c0_384], %292 {strides = array<i32>} : memref<4x4x11xf32, #tpu.memory_space<vmem>>, vector<4x4x11xf32>,
    %294 = arith.mulf %291, %291 : vector<4x4x8xf32>
    %c0_385 = arith.constant 0 : index
    %c0_386 = arith.constant 0 : index
    %c2_387 = arith.constant 2 : index
    %295 = vector.load %arg19[%c0_385, %c0_386, %c2_387] : memref<4x4x11xf32, #tpu.memory_space<vmem>>, vector<4x4x8xf32>
    tpu.vector_store %arg19[%c0_385, %c0_386, %c2_387], %294 {strides = array<i32>} : memref<4x4x11xf32, #tpu.memory_space<vmem>>, vector<4x4x8xf32>,
    %c0_388 = arith.constant 0 : index
    %c0_389 = arith.constant 0 : index
    %c0_390 = arith.constant 0 : index
    %296 = vector.load %arg19[%c0_388, %c0_389, %c0_390] : memref<4x4x11xf32, #tpu.memory_space<vmem>>, vector<4x4x8xf32>
    %c0_391 = arith.constant 0 : index
    %c0_392 = arith.constant 0 : index
    %c1_393 = arith.constant 1 : index
    %297 = vector.load %arg19[%c0_391, %c0_392, %c1_393] : memref<4x4x11xf32, #tpu.memory_space<vmem>>, vector<4x4x8xf32>
    %298 = arith.addf %296, %297 : vector<4x4x8xf32>
    %c0_394 = arith.constant 0 : index
    %c0_395 = arith.constant 0 : index
    %c2_396 = arith.constant 2 : index
    %299 = vector.load %arg19[%c0_394, %c0_395, %c2_396] : memref<4x4x11xf32, #tpu.memory_space<vmem>>, vector<4x4x8xf32>
    %300 = arith.addf %298, %299 : vector<4x4x8xf32>
    %c0_397 = arith.constant 0 : index
    %c0_398 = arith.constant 0 : index
    %c3_399 = arith.constant 3 : index
    %301 = vector.load %arg19[%c0_397, %c0_398, %c3_399] : memref<4x4x11xf32, #tpu.memory_space<vmem>>, vector<4x4x8xf32>
    %302 = arith.addf %300, %301 : vector<4x4x8xf32>
    %cst_400 = arith.constant 2.500000e-05 : f32
    %303 = vector.broadcast %cst_400 : f32 to vector<4x4x8xf32>
    %304 = arith.mulf %303, %302 : vector<4x4x8xf32>
    %cst_401 = arith.constant 1.000000e+00 : f32
    %305 = vector.broadcast %cst_401 : f32 to vector<4x4x8xf32>
    %306 = arith.addf %305, %304 : vector<4x4x8xf32>
    %307 = math.log %306 : vector<4x4x8xf32>
    %cst_402 = arith.constant -7.500000e-01 : f32
    %308 = vector.broadcast %cst_402 : f32 to vector<4x4x8xf32>
    %309 = arith.mulf %308, %307 : vector<4x4x8xf32>
    %310 = math.exp %309 : vector<4x4x8xf32>
    %311 = arith.mulf %291, %310 : vector<4x4x8xf32>
    %c0_403 = arith.constant 0 : index
    %c0_404 = arith.constant 0 : index
    %c0_405 = arith.constant 0 : index
    %312 = vector.load %arg18[%c0_403, %c0_404, %c0_405] : memref<4x4x8xf32, #tpu.memory_space<vmem>>, vector<4x4x8xf32>
    tpu.vector_store %arg18[%c0_403, %c0_404, %c0_405], %311 {strides = array<i32>} : memref<4x4x8xf32, #tpu.memory_space<vmem>>, vector<4x4x8xf32>,
    %c0_406 = arith.constant 0 : index
    %c0_407 = arith.constant 0 : index
    %313 = vector.load %arg7[%c0_406, %c0_407] : memref<1x32xf32, #tpu.memory_space<vmem>>, vector<1x32xf32>
    %c0_408 = arith.constant 0 : index
    %c0_409 = arith.constant 0 : index
    %c0_410 = arith.constant 0 : index
    %314 = vector.load %arg18[%c0_408, %c0_409, %c0_410] : memref<4x4x8xf32, #tpu.memory_space<vmem>>, vector<1x4x8xf32>
    %315 = vector.shape_cast %314 : vector<1x4x8xf32> to vector<4x8xf32>
    %c1_411 = arith.constant 1 : index
    %c0_412 = arith.constant 0 : index
    %c0_413 = arith.constant 0 : index
    %316 = vector.load %arg18[%c1_411, %c0_412, %c0_413] : memref<4x4x8xf32, #tpu.memory_space<vmem>>, vector<1x4x8xf32>
    %317 = vector.shape_cast %316 : vector<1x4x8xf32> to vector<4x8xf32>
    %318 = arith.maximumf %315, %317 : vector<4x8xf32>
    %319 = vector.extract_strided_slice %318 {offsets = [0, 0], sizes = [2, 8], strides = [1, 1]} : vector<4x8xf32> to vector<2x8xf32>
    %cst_414 = arith.constant dense<0xFF800000> : vector<8xf32>
    %320 = vector.multi_reduction <maximumf>, %319, %cst_414 [0] : vector<2x8xf32> to vector<8xf32>
    %321 = vector.shape_cast %320 : vector<8xf32> to vector<1x8xf32>
    %c0_415 = arith.constant 0 : index
    %c0_416 = arith.constant 0 : index
    %322 = vector.load %arg6[%c0_415, %c0_416] : memref<32x32xf32, #tpu.memory_space<vmem>>, vector<8x32xf32>
    %cst_417 = arith.constant dense<0.000000e+00> : vector<1x32xf32>
    %323 = tpu.matmul %321, %322, %cst_417 {dimension_numbers = #tpu.dot_dimension_numbers<[1], [0], [0], [1], [0, 0, 1, 1], [], []>} : vector<1x8xf32>, vector<8x32xf32>, vector<1x32xf32> -> vector<1x32xf32>
    %324 = arith.addf %313, %323 : vector<1x32xf32>
    %325 = vector.extract_strided_slice %318 {offsets = [2, 0], sizes = [2, 8], strides = [1, 1]} : vector<4x8xf32> to vector<2x8xf32>
    %cst_418 = arith.constant dense<0xFF800000> : vector<8xf32>
    %326 = vector.multi_reduction <maximumf>, %325, %cst_418 [0] : vector<2x8xf32> to vector<8xf32>
    %327 = vector.shape_cast %326 : vector<8xf32> to vector<1x8xf32>
    %c8_419 = arith.constant 8 : index
    %c0_420 = arith.constant 0 : index
    %328 = vector.load %arg6[%c8_419, %c0_420] : memref<32x32xf32, #tpu.memory_space<vmem>>, vector<8x32xf32>
    %cst_421 = arith.constant dense<0.000000e+00> : vector<1x32xf32>
    %329 = tpu.matmul %327, %328, %cst_421 {dimension_numbers = #tpu.dot_dimension_numbers<[1], [0], [0], [1], [0, 0, 1, 1], [], []>} : vector<1x8xf32>, vector<8x32xf32>, vector<1x32xf32> -> vector<1x32xf32>
    %330 = arith.addf %324, %329 : vector<1x32xf32>
    %c2_422 = arith.constant 2 : index
    %c0_423 = arith.constant 0 : index
    %c0_424 = arith.constant 0 : index
    %331 = vector.load %arg18[%c2_422, %c0_423, %c0_424] : memref<4x4x8xf32, #tpu.memory_space<vmem>>, vector<1x4x8xf32>
    %332 = vector.shape_cast %331 : vector<1x4x8xf32> to vector<4x8xf32>
    %c3_425 = arith.constant 3 : index
    %c0_426 = arith.constant 0 : index
    %c0_427 = arith.constant 0 : index
    %333 = vector.load %arg18[%c3_425, %c0_426, %c0_427] : memref<4x4x8xf32, #tpu.memory_space<vmem>>, vector<1x4x8xf32>
    %334 = vector.shape_cast %333 : vector<1x4x8xf32> to vector<4x8xf32>
    %335 = arith.maximumf %332, %334 : vector<4x8xf32>
    %336 = vector.extract_strided_slice %335 {offsets = [0, 0], sizes = [2, 8], strides = [1, 1]} : vector<4x8xf32> to vector<2x8xf32>
    %cst_428 = arith.constant dense<0xFF800000> : vector<8xf32>
    %337 = vector.multi_reduction <maximumf>, %336, %cst_428 [0] : vector<2x8xf32> to vector<8xf32>
    %338 = vector.shape_cast %337 : vector<8xf32> to vector<1x8xf32>
    %c16_429 = arith.constant 16 : index
    %c0_430 = arith.constant 0 : index
    %339 = vector.load %arg6[%c16_429, %c0_430] : memref<32x32xf32, #tpu.memory_space<vmem>>, vector<8x32xf32>
    %cst_431 = arith.constant dense<0.000000e+00> : vector<1x32xf32>
    %340 = tpu.matmul %338, %339, %cst_431 {dimension_numbers = #tpu.dot_dimension_numbers<[1], [0], [0], [1], [0, 0, 1, 1], [], []>} : vector<1x8xf32>, vector<8x32xf32>, vector<1x32xf32> -> vector<1x32xf32>
    %341 = arith.addf %330, %340 : vector<1x32xf32>
    %342 = vector.extract_strided_slice %335 {offsets = [2, 0], sizes = [2, 8], strides = [1, 1]} : vector<4x8xf32> to vector<2x8xf32>
    %cst_432 = arith.constant dense<0xFF800000> : vector<8xf32>
    %343 = vector.multi_reduction <maximumf>, %342, %cst_432 [0] : vector<2x8xf32> to vector<8xf32>
    %344 = vector.shape_cast %343 : vector<8xf32> to vector<1x8xf32>
    %c24_433 = arith.constant 24 : index
    %c0_434 = arith.constant 0 : index
    %345 = vector.load %arg6[%c24_433, %c0_434] : memref<32x32xf32, #tpu.memory_space<vmem>>, vector<8x32xf32>
    %cst_435 = arith.constant dense<0.000000e+00> : vector<1x32xf32>
    %346 = tpu.matmul %344, %345, %cst_435 {dimension_numbers = #tpu.dot_dimension_numbers<[1], [0], [0], [1], [0, 0, 1, 1], [], []>} : vector<1x8xf32>, vector<8x32xf32>, vector<1x32xf32> -> vector<1x32xf32>
    %347 = arith.addf %341, %346 : vector<1x32xf32>
    %cst_436 = arith.constant 0.000000e+00 : f32
    %348 = vector.broadcast %cst_436 : f32 to vector<1x32xf32>
    %349 = arith.maximumf %347, %348 : vector<1x32xf32>
    %c0_437 = arith.constant 0 : index
    %c0_438 = arith.constant 0 : index
    %350 = vector.load %arg8[%c0_437, %c0_438] : memref<32x16xf32, #tpu.memory_space<vmem>>, vector<32x16xf32>
    %cst_439 = arith.constant dense<0.000000e+00> : vector<1x16xf32>
    %351 = tpu.matmul %349, %350, %cst_439 {dimension_numbers = #tpu.dot_dimension_numbers<[1], [0], [0], [1], [0, 0, 1, 1], [], []>} : vector<1x32xf32>, vector<32x16xf32>, vector<1x16xf32> -> vector<1x16xf32>
    %c0_440 = arith.constant 0 : index
    %c0_441 = arith.constant 0 : index
    %352 = vector.load %arg9[%c0_440, %c0_441] : memref<1x16xf32, #tpu.memory_space<vmem>>, vector<1x16xf32>
    %353 = arith.addf %351, %352 : vector<1x16xf32>
    %cst_442 = arith.constant 0.000000e+00 : f32
    %354 = vector.broadcast %cst_442 : f32 to vector<1x16xf32>
    %355 = arith.maximumf %353, %354 : vector<1x16xf32>
    %c0_443 = arith.constant 0 : index
    %c0_444 = arith.constant 0 : index
    %356 = vector.load %arg10[%c0_443, %c0_444] : memref<16x20xf32, #tpu.memory_space<vmem>>, vector<16x20xf32>
    %cst_445 = arith.constant dense<0.000000e+00> : vector<1x20xf32>
    %357 = tpu.matmul %355, %356, %cst_445 {dimension_numbers = #tpu.dot_dimension_numbers<[1], [0], [0], [1], [0, 0, 1, 1], [], []>} : vector<1x16xf32>, vector<16x20xf32>, vector<1x20xf32> -> vector<1x20xf32>
    %c0_446 = arith.constant 0 : index
    %c0_447 = arith.constant 0 : index
    %358 = vector.load %arg11[%c0_446, %c0_447] : memref<1x20xf32, #tpu.memory_space<vmem>>, vector<1x20xf32>
    %359 = arith.addf %357, %358 : vector<1x20xf32>
    %cst_448 = arith.constant dense<0xFF800000> : vector<1xf32>
    %360 = vector.multi_reduction <maximumf>, %359, %cst_448 [1] : vector<1x20xf32> to vector<1xf32>
    %361 = vector.shape_cast %360 : vector<1xf32> to vector<1x1xf32>
    %362 = vector.broadcast %361 : vector<1x1xf32> to vector<1x20xf32>
    %363 = arith.subf %359, %362 : vector<1x20xf32>
    %364 = math.exp %363 : vector<1x20xf32>
    %cst_449 = arith.constant dense<0.000000e+00> : vector<1xf32>
    %365 = vector.multi_reduction <add>, %364, %cst_449 [1] : vector<1x20xf32> to vector<1xf32>
    %366 = vector.shape_cast %365 : vector<1xf32> to vector<1x1xf32>
    %367 = math.log %366 : vector<1x1xf32>
    %368 = arith.addf %367, %361 : vector<1x1xf32>
    %369 = vector.broadcast %368 : vector<1x1xf32> to vector<1x20xf32>
    %370 = arith.subf %359, %369 : vector<1x20xf32>
    %c0_450 = arith.constant 0 : index
    %c0_451 = arith.constant 0 : index
    %c0_452 = arith.constant 0 : index
    %371 = vector.load %arg12[%c0_450, %c0_451, %c0_452] : memref<1x1x20xf32, #tpu.memory_space<vmem>>, vector<1x1x20xf32>
    %372 = vector.shape_cast %371 : vector<1x1x20xf32> to vector<1x20xf32>
    %373 = vector.shape_cast %370 : vector<1x20xf32> to vector<1x1x20xf32>
    tpu.vector_store %arg12[%c0_450, %c0_451, %c0_452], %373 {strides = array<i32>} : memref<1x1x20xf32, #tpu.memory_space<vmem>>, vector<1x1x20xf32>,
    return
  }
  func.func @transform_0(%arg0: i32) -> (i32, i32, i32, i32) {
    %c0_i32 = arith.constant 0 : i32
    %c0_i32_0 = arith.constant 0 : i32
    %c0_i32_1 = arith.constant 0 : i32
    %c0_i32_2 = arith.constant 0 : i32
    return %arg0, %c0_i32, %c0_i32_0, %c0_i32_1 : i32, i32, i32, i32
  }
  func.func @transform_1(%arg0: i32) -> (i32, i32) {
    %c0_i32 = arith.constant 0 : i32
    %c0_i32_0 = arith.constant 0 : i32
    %c0_i32_1 = arith.constant 0 : i32
    return %c0_i32, %c0_i32_0 : i32, i32
  }
  func.func @transform_2(%arg0: i32) -> (i32, i32) {
    %c0_i32 = arith.constant 0 : i32
    %c0_i32_0 = arith.constant 0 : i32
    %c0_i32_1 = arith.constant 0 : i32
    return %c0_i32, %c0_i32_0 : i32, i32
  }
  func.func @transform_3(%arg0: i32) -> (i32, i32) {
    %c0_i32 = arith.constant 0 : i32
    %c0_i32_0 = arith.constant 0 : i32
    %c0_i32_1 = arith.constant 0 : i32
    return %c0_i32, %c0_i32_0 : i32, i32
  }
  func.func @transform_4(%arg0: i32) -> (i32, i32) {
    %c0_i32 = arith.constant 0 : i32
    %c0_i32_0 = arith.constant 0 : i32
    %c0_i32_1 = arith.constant 0 : i32
    return %c0_i32, %c0_i32_0 : i32, i32
  }
  func.func @transform_5(%arg0: i32) -> (i32, i32) {
    %c0_i32 = arith.constant 0 : i32
    %c0_i32_0 = arith.constant 0 : i32
    %c0_i32_1 = arith.constant 0 : i32
    return %c0_i32, %c0_i32_0 : i32, i32
  }
  func.func @transform_6(%arg0: i32) -> (i32, i32) {
    %c0_i32 = arith.constant 0 : i32
    %c0_i32_0 = arith.constant 0 : i32
    %c0_i32_1 = arith.constant 0 : i32
    return %c0_i32, %c0_i32_0 : i32, i32
  }
  func.func @transform_7(%arg0: i32) -> (i32, i32) {
    %c0_i32 = arith.constant 0 : i32
    %c0_i32_0 = arith.constant 0 : i32
    %c0_i32_1 = arith.constant 0 : i32
    return %c0_i32, %c0_i32_0 : i32, i32
  }
  func.func @transform_8(%arg0: i32) -> (i32, i32) {
    %c0_i32 = arith.constant 0 : i32
    %c0_i32_0 = arith.constant 0 : i32
    %c0_i32_1 = arith.constant 0 : i32
    return %c0_i32, %c0_i32_0 : i32, i32
  }
  func.func @transform_9(%arg0: i32) -> (i32, i32) {
    %c0_i32 = arith.constant 0 : i32
    %c0_i32_0 = arith.constant 0 : i32
    %c0_i32_1 = arith.constant 0 : i32
    return %c0_i32, %c0_i32_0 : i32, i32
  }
  func.func @transform_10(%arg0: i32) -> (i32, i32) {
    %c0_i32 = arith.constant 0 : i32
    %c0_i32_0 = arith.constant 0 : i32
    %c0_i32_1 = arith.constant 0 : i32
    return %c0_i32, %c0_i32_0 : i32, i32
  }
  func.func @transform_11(%arg0: i32) -> (i32, i32, i32) {
    %c0_i32 = arith.constant 0 : i32
    %c0_i32_0 = arith.constant 0 : i32
    %c0_i32_1 = arith.constant 0 : i32
    return %arg0, %c0_i32, %c0_i32_0 : i32, i32, i32
  }
}

</mosaic_0001>

<llo_original>
// kernel: cifar100net_forward.1
$region0: #{cifar100net_forward.1}
  #allocation0 [shape = 'u32[]', space=smem, size = 0x4, offset = 0x4, fixed_abs, tag = 'smem constant byte address 0x4 - core index']
  #allocation1 [shape = 'u32[144,128]{1,0:T(1,128)}', space=vmem, size = 0x12000, scoped, tag = 'internal scratch']
  #allocation2 [shape = 'f32[12,12,75]{2,1,0:T(8,128)}', space=vmem, size = 0x18000, scoped, tag = 'scratch operand']
  #allocation3 [shape = 'f32[6,12,8]{2,1,0:T(8,128)}', space=vmem, size = 0xc000, scoped, tag = 'scratch operand']
  #allocation4 [shape = 'f32[6,6,8]{2,1,0:T(8,128)}', space=vmem, size = 0x6000, scoped, tag = 'scratch operand']
  #allocation5 [shape = 'f32[6,6,11]{2,1,0:T(8,128)}', space=vmem, size = 0x6000, scoped, tag = 'scratch operand']
  #allocation6 [shape = 'f32[4,4,72]{2,1,0:T(4,128)}', space=vmem, size = 0x2000, scoped, tag = 'scratch operand']
  #allocation7 [shape = 'f32[4,4,8]{2,1,0:T(4,128)}', space=vmem, size = 0x2000, scoped, tag = 'scratch operand']
  #allocation8 [shape = 'f32[4,4,11]{2,1,0:T(4,128)}', space=vmem, size = 0x2000, scoped, tag = 'scratch operand']
  %s0 = inlined_call_operand.vmem [shape: f32[2,16,16,3], index: 0, kind: input, shape index: {}]
  %s1 = inlined_call_operand.vmem [shape: f32[75,8], index: 1, kind: input, shape index: {}]
  %s2 = inlined_call_operand.vmem [shape: f32[1,8], index: 2, kind: input, shape index: {}]
  %s3 = inlined_call_operand.vmem [shape: f32[72,8], index: 3, kind: input, shape index: {}]
  %s4 = inlined_call_operand.vmem [shape: f32[1,8], index: 4, kind: input, shape index: {}]
  %s5 = inlined_call_operand.vmem [shape: f32[32,32], index: 5, kind: input, shape index: {}]
  %s6 = inlined_call_operand.vmem [shape: f32[1,32], index: 6, kind: input, shape index: {}]
  %s7 = inlined_call_operand.vmem [shape: f32[32,16], index: 7, kind: input, shape index: {}]
  %s8 = inlined_call_operand.vmem [shape: f32[1,16], index: 8, kind: input, shape index: {}]
  %s9 = inlined_call_operand.vmem [shape: f32[16,20], index: 9, kind: input, shape index: {}]
  %s10 = inlined_call_operand.vmem [shape: f32[1,20], index: 10, kind: input, shape index: {}]
  %s11 = inlined_call_operand.hbm [shape: f32[2,1,20], index: 11, kind: output, shape index: {}]
  %s12 = sld [smem:[#allocation0]]
  $region77: #{cifar100net_forward.1} parent=0
    _
  %s14 = ssub.s32 1, %s12
  %s15 = scalar_select 0, %s14, %s12
  $region1: #{cifar100net_forward.1} parent=0
    #allocation9 [shape = 'u8[1024]{0}', space=vmem, size = 0x400, scoped, tag = 'output window, operand 0']
    #allocation10 [shape = 's32[2]{0}', space=sflag, size = 0x8, scoped, tag = 'scoped memory for cifar100net_forward.1']
    %16 = vsyncpa [#allocation10], 0
    %s17 = scalar_lea.sflag [#allocation10], 1
    %18 = vsyncpa %s17, 0
    loop: start=0, step=1, limit=4
    $region2: #{cifar100net_forward.1} parent=1 // loop_pre_header
      _
    $region3: #{cifar100net_forward.1} parent=1 // loop_header
      %s20 = sphi 0, %s24
      %p21 = scmp.ge.s32.totalorder %s20, 4
      %s30 = sphi 0, %s32
      %s33 = sphi 0, %s30
      %s34 = sphi 0, %s33
      %s50 = sphi 0, %s34
      %s54 = sphi 0, %s54
      %s56 = sphi 0, %s54
      %s57 = sphi 0, %s56
      %s71 = sphi 0, %s57
      %s75 = sphi 0, %s75
      %s77 = sphi 0, %s75
      %s78 = sphi 0, %s77
      %s92 = sphi 0, %s78
      %s96 = sphi 0, %s96
      %s98 = sphi 0, %s96
      %s99 = sphi 0, %s98
      %s113 = sphi 0, %s99
      %s117 = sphi 0, %s117
      %s119 = sphi 0, %s117
      %s120 = sphi 0, %s119
      %s134 = sphi 0, %s120
      %s138 = sphi 0, %s138
      %s140 = sphi 0, %s138
      %s141 = sphi 0, %s140
      %s155 = sphi 0, %s141
      %s159 = sphi 0, %s159
      %s161 = sphi 0, %s159
      %s162 = sphi 0, %s161
      %s176 = sphi 0, %s162
      %s180 = sphi 0, %s180
      %s182 = sphi 0, %s180
      %s183 = sphi 0, %s182
      %s197 = sphi 0, %s183
      %s201 = sphi 0, %s201
      %s203 = sphi 0, %s201
      %s204 = sphi 0, %s203
      %s218 = sphi 0, %s204
      %s222 = sphi 0, %s222
      %s224 = sphi 0, %s222
      %s225 = sphi 0, %s224
      %s239 = sphi 0, %s225
      %s243 = sphi 0, %s243
      %s245 = sphi 0, %s243
      %s246 = sphi 0, %s245
      %s260 = sphi 0, %s246
      %s266 = sphi 0, %s268
      %s269 = sphi 0, %s266
      %s270 = sphi 0, %s269
      %s286 = sphi 0, %s270
    $region4: #{cifar100net_forward.1} parent=1 // loop_header_branch
      %23 = sbr.rel (%p21) target = $region8
    $region5: #{cifar100net_forward.1} parent=1 // loop_body
      %s25 = ssub.s32 %s20, 1
      %s26 = ssub.s32 %s20, 2
      %s27 = sadd.s32 %s20, 1
      %s28 = ssub.s32 %s20, %s27
      %p29 = scmp.eq.s32.totalorder %s28, 0
      %s31 = sadd.s32 %s30, 1
      %s32 = scalar_select %p29, %s30, %s31
      %p35 = pneg %p29
      %p36 = scmp.eq.s32.totalorder %s20, 1
      %p37 = por %p35, %p36
      %p38 = scmp.ne.s32.totalorder %s30, %s33
      %p39 = scmp.eq.s32.totalorder %s20, 0
      %p40 = por %p38, %p39
      %p41 = scmp.ne.s32.totalorder %s30, %s33
      %p42 = scmp.eq.s32.totalorder %s25, 1
      %p43 = por %p41, %p42
      %p44 = scmp.ne.s32.totalorder %s33, %s34
      %p45 = scmp.eq.s32.totalorder %s25, 0
      %p46 = por %p44, %p45
      %p47 = scmp.ne.s32.totalorder %s33, %s34
      %p48 = scmp.eq.s32.totalorder %s26, 1
      %p49 = por %p47, %p48
      %p51 = scmp.ne.s32.totalorder %s34, %s50
      %p52 = scmp.eq.s32.totalorder %s26, 0
      %p53 = por %p51, %p52
      %s55 = sadd.s32 %s54, 1
      %p58 = scmp.eq.s32.totalorder %s20, 1
      %p59 = scmp.ne.s32.totalorder %s54, %s56
      %p60 = scmp.eq.s32.totalorder %s20, 0
      %p61 = por %p59, %p60
      %p62 = scmp.ne.s32.totalorder %s54, %s56
      %p63 = scmp.eq.s32.totalorder %s25, 1
      %p64 = por %p62, %p63
      %p65 = scmp.ne.s32.totalorder %s56, %s57
      %p66 = scmp.eq.s32.totalorder %s25, 0
      %p67 = por %p65, %p66
      %p68 = scmp.ne.s32.totalorder %s56, %s57
      %p69 = scmp.eq.s32.totalorder %s26, 1
      %p70 = por %p68, %p69
      %p72 = scmp.ne.s32.totalorder %s57, %s71
      %p73 = scmp.eq.s32.totalorder %s26, 0
      %p74 = por %p72, %p73
      %s76 = sadd.s32 %s75, 1
      %p79 = scmp.eq.s32.totalorder %s20, 1
      %p80 = scmp.ne.s32.totalorder %s75, %s77
      %p81 = scmp.eq.s32.totalorder %s20, 0
      %p82 = por %p80, %p81
      %p83 = scmp.ne.s32.totalorder %s75, %s77
      %p84 = scmp.eq.s32.totalorder %s25, 1
      %p85 = por %p83, %p84
      %p86 = scmp.ne.s32.totalorder %s77, %s78
      %p87 = scmp.eq.s32.totalorder %s25, 0
      %p88 = por %p86, %p87
      %p89 = scmp.ne.s32.totalorder %s77, %s78
      %p90 = scmp.eq.s32.totalorder %s26, 1
      %p91 = por %p89, %p90
      %p93 = scmp.ne.s32.totalorder %s78, %s92
      %p94 = scmp.eq.s32.totalorder %s26, 0
      %p95 = por %p93, %p94
      %s97 = sadd.s32 %s96, 1
      %p100 = scmp.eq.s32.totalorder %s20, 1
      %p101 = scmp.ne.s32.totalorder %s96, %s98
      %p102 = scmp.eq.s32.totalorder %s20, 0
      %p103 = por %p101, %p102
      %p104 = scmp.ne.s32.totalorder %s96, %s98
      %p105 = scmp.eq.s32.totalorder %s25, 1
      %p106 = por %p104, %p105
      %p107 = scmp.ne.s32.totalorder %s98, %s99
      %p108 = scmp.eq.s32.totalorder %s25, 0
      %p109 = por %p107, %p108
      %p110 = scmp.ne.s32.totalorder %s98, %s99
      %p111 = scmp.eq.s32.totalorder %s26, 1
      %p112 = por %p110, %p111
      %p114 = scmp.ne.s32.totalorder %s99, %s113
      %p115 = scmp.eq.s32.totalorder %s26, 0
      %p116 = por %p114, %p115
      %s118 = sadd.s32 %s117, 1
      %p121 = scmp.eq.s32.totalorder %s20, 1
      %p122 = scmp.ne.s32.totalorder %s117, %s119
      %p123 = scmp.eq.s32.totalorder %s20, 0
      %p124 = por %p122, %p123
      %p125 = scmp.ne.s32.totalorder %s117, %s119
      %p126 = scmp.eq.s32.totalorder %s25, 1
      %p127 = por %p125, %p126
      %p128 = scmp.ne.s32.totalorder %s119, %s120
      %p129 = scmp.eq.s32.totalorder %s25, 0
      %p130 = por %p128, %p129
      %p131 = scmp.ne.s32.totalorder %s119, %s120
      %p132 = scmp.eq.s32.totalorder %s26, 1
      %p133 = por %p131, %p132
      %p135 = scmp.ne.s32.totalorder %s120, %s134
      %p136 = scmp.eq.s32.totalorder %s26, 0
      %p137 = por %p135, %p136
      %s139 = sadd.s32 %s138, 1
      %p142 = scmp.eq.s32.totalorder %s20, 1
      %p143 = scmp.ne.s32.totalorder %s138, %s140
      %p144 = scmp.eq.s32.totalorder %s20, 0
      %p145 = por %p143, %p144
      %p146 = scmp.ne.s32.totalorder %s138, %s140
      %p147 = scmp.eq.s32.totalorder %s25, 1
      %p148 = por %p146, %p147
      %p149 = scmp.ne.s32.totalorder %s140, %s141
      %p150 = scmp.eq.s32.totalorder %s25, 0
      %p151 = por %p149, %p150
      %p152 = scmp.ne.s32.totalorder %s140, %s141
      %p153 = scmp.eq.s32.totalorder %s26, 1
      %p154 = por %p152, %p153
      %p156 = scmp.ne.s32.totalorder %s141, %s155
      %p157 = scmp.eq.s32.totalorder %s26, 0
      %p158 = por %p156, %p157
      %s160 = sadd.s32 %s159, 1
      %p163 = scmp.eq.s32.totalorder %s20, 1
      %p164 = scmp.ne.s32.totalorder %s159, %s161
      %p165 = scmp.eq.s32.totalorder %s20, 0
      %p166 = por %p164, %p165
      %p167 = scmp.ne.s32.totalorder %s159, %s161
      %p168 = scmp.eq.s32.totalorder %s25, 1
      %p169 = por %p167, %p168
      %p170 = scmp.ne.s32.totalorder %s161, %s162
      %p171 = scmp.eq.s32.totalorder %s25, 0
      %p172 = por %p170, %p171
      %p173 = scmp.ne.s32.totalorder %s161, %s162
      %p174 = scmp.eq.s32.totalorder %s26, 1
      %p175 = por %p173, %p174
      %p177 = scmp.ne.s32.totalorder %s162, %s176
      %p178 = scmp.eq.s32.totalorder %s26, 0
      %p179 = por %p177, %p178
      %s181 = sadd.s32 %s180, 1
      %p184 = scmp.eq.s32.totalorder %s20, 1
      %p185 = scmp.ne.s32.totalorder %s180, %s182
      %p186 = scmp.eq.s32.totalorder %s20, 0
      %p187 = por %p185, %p186
      %p188 = scmp.ne.s32.totalorder %s180, %s182
      %p189 = scmp.eq.s32.totalorder %s25, 1
      %p190 = por %p188, %p189
      %p191 = scmp.ne.s32.totalorder %s182, %s183
      %p192 = scmp.eq.s32.totalorder %s25, 0
      %p193 = por %p191, %p192
      %p194 = scmp.ne.s32.totalorder %s182, %s183
      %p195 = scmp.eq.s32.totalorder %s26, 1
      %p196 = por %p194, %p195
      %p198 = scmp.ne.s32.totalorder %s183, %s197
      %p199 = scmp.eq.s32.totalorder %s26, 0
      %p200 = por %p198, %p199
      %s202 = sadd.s32 %s201, 1
      %p205 = scmp.eq.s32.totalorder %s20, 1
      %p206 = scmp.ne.s32.totalorder %s201, %s203
      %p207 = scmp.eq.s32.totalorder %s20, 0
      %p208 = por %p206, %p207
      %p209 = scmp.ne.s32.totalorder %s201, %s203
      %p210 = scmp.eq.s32.totalorder %s25, 1
      %p211 = por %p209, %p210
      %p212 = scmp.ne.s32.totalorder %s203, %s204
      %p213 = scmp.eq.s32.totalorder %s25, 0
      %p214 = por %p212, %p213
      %p215 = scmp.ne.s32.totalorder %s203, %s204
      %p216 = scmp.eq.s32.totalorder %s26, 1
      %p217 = por %p215, %p216
      %p219 = scmp.ne.s32.totalorder %s204, %s218
      %p220 = scmp.eq.s32.totalorder %s26, 0
      %p221 = por %p219, %p220
      %s223 = sadd.s32 %s222, 1
      %p226 = scmp.eq.s32.totalorder %s20, 1
      %p227 = scmp.ne.s32.totalorder %s222, %s224
      %p228 = scmp.eq.s32.totalorder %s20, 0
      %p229 = por %p227, %p228
      %p230 = scmp.ne.s32.totalorder %s222, %s224
      %p231 = scmp.eq.s32.totalorder %s25, 1
      %p232 = por %p230, %p231
      %p233 = scmp.ne.s32.totalorder %s224, %s225
      %p234 = scmp.eq.s32.totalorder %s25, 0
      %p235 = por %p233, %p234
      %p236 = scmp.ne.s32.totalorder %s224, %s225
      %p237 = scmp.eq.s32.totalorder %s26, 1
      %p238 = por %p236, %p237
      %p240 = scmp.ne.s32.totalorder %s225, %s239
      %p241 = scmp.eq.s32.totalorder %s26, 0
      %p242 = por %p240, %p241
      %s244 = sadd.s32 %s243, 1
      %p247 = scmp.eq.s32.totalorder %s20, 1
      %p248 = scmp.ne.s32.totalorder %s243, %s245
      %p249 = scmp.eq.s32.totalorder %s20, 0
      %p250 = por %p248, %p249
      %p251 = scmp.ne.s32.totalorder %s243, %s245
      %p252 = scmp.eq.s32.totalorder %s25, 1
      %p253 = por %p251, %p252
      %p254 = scmp.ne.s32.totalorder %s245, %s246
      %p255 = scmp.eq.s32.totalorder %s25, 0
      %p256 = por %p254, %p255
      %p257 = scmp.ne.s32.totalorder %s245, %s246
      %p258 = scmp.eq.s32.totalorder %s26, 1
      %p259 = por %p257, %p258
      %p261 = scmp.ne.s32.totalorder %s246, %s260
      %p262 = scmp.eq.s32.totalorder %s26, 0
      %p263 = por %p261, %p262
      %s264 = ssub.s32 %s20, %s27
      %p265 = scmp.eq.s32.totalorder %s264, 0
      %s267 = sadd.s32 %s266, 1
      %s268 = scalar_select %p265, %s266, %s267
      %p271 = pneg %p265
      %p272 = scmp.eq.s32.totalorder %s20, 1
      %p273 = por %p271, %p272
      %p274 = scmp.ne.s32.totalorder %s266, %s269
      %p275 = scmp.eq.s32.totalorder %s20, 0
      %p276 = por %p274, %p275
      %p277 = scmp.ne.s32.totalorder %s266, %s269
      %p278 = scmp.eq.s32.totalorder %s25, 1
      %p279 = por %p277, %p278
      %p280 = scmp.ne.s32.totalorder %s269, %s270
      %p281 = scmp.eq.s32.totalorder %s25, 0
      %p282 = por %p280, %p281
      %p283 = scmp.ne.s32.totalorder %s269, %s270
      %p284 = scmp.eq.s32.totalorder %s26, 1
      %p285 = por %p283, %p284
      %p287 = scmp.ne.s32.totalorder %s270, %s286
      %p288 = scmp.eq.s32.totalorder %s26, 0
      %p289 = por %p287, %p288
      %p290 = scmp.le.s32.totalorder 1, %s20
      %p291 = scmp.lt.s32.totalorder %s20, 3
      %p292 = pnand %p290, %p291
      %p293 = pneg %p292
      // Predicated region
      $region9: #{cifar100net_forward.1} parent=5 // pred_check
        _
      $region10: #{cifar100net_forward.1} parent=5 // pred_check_branch
        %295 = sbr.rel (%p292) target = $region12
      $region11: #{cifar100net_forward.1} parent=5 // pred_region
        %s296 = ssub.s32 %s20, 1
        // Predicated region
        $region13: #{cifar100net_forward.1} parent=11 // pred_check
          %p297 = pneg %p67
        $region14: #{cifar100net_forward.1} parent=11 // pred_check_branch
          %299 = sbr.rel (%p297) target = $region16
        $region15: #{cifar100net_forward.1} parent=11 // pred_region
          _
        $region16: #{cifar100net_forward.1} parent=11 // pred_fallthru
          _
        // Predicated region
        $region17: #{cifar100net_forward.1} parent=11 // pred_check
          %p300 = pneg %p88
        $region18: #{cifar100net_forward.1} parent=11 // pred_check_branch
          %302 = sbr.rel (%p300) target = $region20
        $region19: #{cifar100net_forward.1} parent=11 // pred_region
          _
        $region20: #{cifar100net_forward.1} parent=11 // pred_fallthru
          _
        // Predicated region
        $region21: #{cifar100net_forward.1} parent=11 // pred_check
          %p303 = pneg %p109
        $region22: #{cifar100net_forward.1} parent=11 // pred_check_branch
          %305 = sbr.rel (%p303) target = $region24
        $region23: #{cifar100net_forward.1} parent=11 // pred_region
          _
        $region24: #{cifar100net_forward.1} parent=11 // pred_fallthru
          _
        // Predicated region
        $region25: #{cifar100net_forward.1} parent=11 // pred_check
          %p306 = pneg %p130
        $region26: #{cifar100net_forward.1} parent=11 // pred_check_branch
          %308 = sbr.rel (%p306) target = $region28
        $region27: #{cifar100net_forward.1} parent=11 // pred_region
          _
        $region28: #{cifar100net_forward.1} parent=11 // pred_fallthru
          _
        // Predicated region
        $region29: #{cifar100net_forward.1} parent=11 // pred_check
          %p309 = pneg %p151
        $region30: #{cifar100net_forward.1} parent=11 // pred_check_branch
          %311 = sbr.rel (%p309) target = $region32
        $region31: #{cifar100net_forward.1} parent=11 // pred_region
          _
        $region32: #{cifar100net_forward.1} parent=11 // pred_fallthru
          _
        // Predicated region
        $region33: #{cifar100net_forward.1} parent=11 // pred_check
          %p312 = pneg %p172
        $region34: #{cifar100net_forward.1} parent=11 // pred_check_branch
          %314 = sbr.rel (%p312) target = $region36
        $region35: #{cifar100net_forward.1} parent=11 // pred_region
          _
        $region36: #{cifar100net_forward.1} parent=11 // pred_fallthru
          _
        // Predicated region
        $region37: #{cifar100net_forward.1} parent=11 // pred_check
          %p315 = pneg %p193
        $region38: #{cifar100net_forward.1} parent=11 // pred_check_branch
          %317 = sbr.rel (%p315) target = $region40
        $region39: #{cifar100net_forward.1} parent=11 // pred_region
          _
        $region40: #{cifar100net_forward.1} parent=11 // pred_fallthru
          _
        // Predicated region
        $region41: #{cifar100net_forward.1} parent=11 // pred_check
          %p318 = pneg %p214
        $region42: #{cifar100net_forward.1} parent=11 // pred_check_branch
          %320 = sbr.rel (%p318) target = $region44
        $region43: #{cifar100net_forward.1} parent=11 // pred_region
          _
        $region44: #{cifar100net_forward.1} parent=11 // pred_fallthru
          _
        // Predicated region
        $region45: #{cifar100net_forward.1} parent=11 // pred_check
          %p321 = pneg %p235
        $region46: #{cifar100net_forward.1} parent=11 // pred_check_branch
          %323 = sbr.rel (%p321) target = $region48
        $region47: #{cifar100net_forward.1} parent=11 // pred_region
          _
        $region48: #{cifar100net_forward.1} parent=11 // pred_fallthru
          _
        // Predicated region
        $region49: #{cifar100net_forward.1} parent=11 // pred_check
          %p324 = pneg %p256
        $region50: #{cifar100net_forward.1} parent=11 // pred_check_branch
          %326 = sbr.rel (%p324) target = $region52
        $region51: #{cifar100net_forward.1} parent=11 // pred_region
          _
        $region52: #{cifar100net_forward.1} parent=11 // pred_fallthru
          _
      $region12: #{cifar100net_forward.1} parent=5 // pred_fallthru
        _
      %p327 = scmp.lt.s32.totalorder %s20, 2
      // Predicated region
      $region53: #{cifar100net_forward.1} parent=5 // pred_check
        %p328 = pneg %p327
      $region54: #{cifar100net_forward.1} parent=5 // pred_check_branch
        %330 = sbr.rel (%p328) target = $region56
      $region55: #{cifar100net_forward.1} parent=5 // pred_region
        // Predicated region
        $region57: #{cifar100net_forward.1} parent=55 // pred_check
          %p331 = pneg %p40
        $region58: #{cifar100net_forward.1} parent=55 // pred_check_branch
          %333 = sbr.rel (%p331) target = $region60
        $region59: #{cifar100net_forward.1} parent=55 // pred_region
          %p334 = scmp.lt.s32.totalorder %s20, 1
          %s335 = scalar_select %p334, %s20, 1
          %s336 = smul.addr %s335, 32
          %s337 = smul.addr %s336, 8
          %s338 = scalar_lea.vmem %s0, %s337
        $region60: #{cifar100net_forward.1} parent=55 // pred_fallthru
          _
      $region56: #{cifar100net_forward.1} parent=5 // pred_fallthru
        _
      %p339 = scmp.le.s32.totalorder 1, %s20
      %p340 = scmp.lt.s32.totalorder %s20, 3
      %p341 = pnand %p339, %p340
      %p342 = pneg %p341
      // Predicated region
      $region61: #{cifar100net_forward.1} parent=5 // pred_check
        _
      $region62: #{cifar100net_forward.1} parent=5 // pred_check_branch
        %344 = sbr.rel (%p341) target = $region64
      $region63: #{cifar100net_forward.1} parent=5 // pred_region
        %s345 = ssub.s32 %s20, 1
        %p346 = scmp.lt.s32.totalorder %s25, 1
        %s347 = scalar_select %p346, %s25, 1
        %s348 = smul.addr %s347, 32
        %s349 = smul.addr %s348, 8
        %s350 = scalar_lea.vmem %s0, %s349
        %p351 = pneg %p46
        %p352 = pneg %p43
        %p353 = pneg %p67
        %p354 = pneg %p64
        %p355 = pneg %p88
        %p356 = pneg %p85
        %p357 = pneg %p109
        %p358 = pneg %p106
        %p359 = pneg %p130
        %p360 = pneg %p127
        %p361 = pneg %p151
        %p362 = pneg %p148
        %p363 = pneg %p172
        %p364 = pneg %p169
        %p365 = pneg %p193
        %p366 = pneg %p190
        %p367 = pneg %p214
        %p368 = pneg %p211
        %p369 = pneg %p235
        %p370 = pneg %p232
        %p371 = pneg %p256
        %p372 = pneg %p253
        %p373 = pneg %p282
        %p374 = pneg %p279
        %s375 = sand.u32 %s269, 1
        %s376 = scalar_lea.sflag [#allocation10], %s375
        %s377 = sand.u32 %s269, 1
        %s378 = scalar_lea.vmem [#allocation9], %s377
        %p379 = scmp.lt.s32.totalorder %s25, 1
        %s380 = scalar_select %p379, %s25, 1
        %s381 = smul.addr %s380, 32
        %s382 = smul.addr %s381, 8
        %s383 = scalar_lea.vmem %s0, %s382
        %v384 = vld [vmem:[%s383] sm:$0xff]
        %v385 = vld [vmem:[%s383 + $0x8] sm:$0xf]
        %v386 = vld [vmem:[%s383 + $0x10] sm:$0xff]
        %v387 = vld [vmem:[%s383 + $0x18] sm:$0xf]
        %v388 = vld [vmem:[%s383 + $0x20] sm:$0xff]
        %v389 = vld [vmem:[%s383 + $0x28] sm:$0xf]
        %v390 = vld [vmem:[%s383 + $0x30] sm:$0xff]
        %v391 = vld [vmem:[%s383 + $0x38] sm:$0xf]
        %v392 = vld [vmem:[%s383 + $0x40] sm:$0xff]
        %v393 = vld [vmem:[%s383 + $0x48] sm:$0xf]
        %v394 = vld [vmem:[%s383 + $0x50] sm:$0xff]
        %v395 = vld [vmem:[%s383 + $0x58] sm:$0xf]
        %v396 = vld [vmem:[%s383 + $0x60] sm:$0xff]
        %v397 = vld [vmem:[%s383 + $0x68] sm:$0xf]
        %v398 = vld [vmem:[%s383 + $0x70] sm:$0xff]
        %v399 = vld [vmem:[%s383 + $0x78] sm:$0xf]
        %v400 = vld [vmem:[%s383 + $0x80] sm:$0xff]
        %v401 = vld [vmem:[%s383 + $0x88] sm:$0xf]
        %v402 = vld [vmem:[%s383 + $0x90] sm:$0xff]
        %v403 = vld [vmem:[%s383 + $0x98] sm:$0xf]
        %v404 = vld [vmem:[%s383 + $0xa0] sm:$0xff]
        %v405 = vld [vmem:[%s383 + $0xa8] sm:$0xf]
        %v406 = vld [vmem:[%s383 + $0xb0] sm:$0xff]
        %v407 = vld [vmem:[%s383 + $0xb8] sm:$0xf]
        %vm408 = vcmask 23552
        %409 = vst.msk [vmem:[#allocation2] sm:$0xff] %vm408, %v384
        %vm410 = vcmask 19456
        %411 = vst.msk [vmem:[#allocation2 + $0x8] sm:$0xf] %vm410, %v385
        %412 = vst.msk [vmem:[#allocation2 + $0x10] sm:$0xff] %vm408, %v386
        %413 = vst.msk [vmem:[#allocation2 + $0x18] sm:$0xf] %vm410, %v387
        %414 = vst.msk [vmem:[#allocation2 + $0x20] sm:$0xff] %vm408, %v388
        %415 = vst.msk [vmem:[#allocation2 + $0x28] sm:$0xf] %vm410, %v389
        %416 = vst.msk [vmem:[#allocation2 + $0x30] sm:$0xff] %vm408, %v390
        %417 = vst.msk [vmem:[#allocation2 + $0x38] sm:$0xf] %vm410, %v391
        %418 = vst.msk [vmem:[#allocation2 + $0x40] sm:$0xff] %vm408, %v392
        %419 = vst.msk [vmem:[#allocation2 + $0x48] sm:$0xf] %vm410, %v393
        %420 = vst.msk [vmem:[#allocation2 + $0x50] sm:$0xff] %vm408, %v394
        %421 = vst.msk [vmem:[#allocation2 + $0x58] sm:$0xf] %vm410, %v395
        %422 = vst.msk [vmem:[#allocation2 + $0x60] sm:$0xff] %vm408, %v396
        %423 = vst.msk [vmem:[#allocation2 + $0x68] sm:$0xf] %vm410, %v397
        %424 = vst.msk [vmem:[#allocation2 + $0x70] sm:$0xff] %vm408, %v398
        %425 = vst.msk [vmem:[#allocation2 + $0x78] sm:$0xf] %vm410, %v399
        %426 = vst.msk [vmem:[#allocation2 + $0x80] sm:$0xff] %vm408, %v400
        %427 = vst.msk [vmem:[#allocation2 + $0x88] sm:$0xf] %vm410, %v401
        %428 = vst.msk [vmem:[#allocation2 + $0x90] sm:$0xff] %vm408, %v402
        %429 = vst.msk [vmem:[#allocation2 + $0x98] sm:$0xf] %vm410, %v403
        %430 = vst.msk [vmem:[#allocation2 + $0xa0] sm:$0xff] %vm408, %v404
        %431 = vst.msk [vmem:[#allocation2 + $0xa8] sm:$0xf] %vm410, %v405
        %432 = vst.msk [vmem:[#allocation2 + $0xb0] sm:$0xff] %vm408, %v406
        %433 = vst.msk [vmem:[#allocation2 + $0xb8] sm:$0xf] %vm410, %v407
        %v434 = vld [vmem:[%s383 + $0x1] sm:$0xff]
        %v435 = vld [vmem:[%s383 + $0x9] sm:$0xf]
        %v436 = vld [vmem:[%s383 + $0x11] sm:$0xff]
        %v437 = vld [vmem:[%s383 + $0x19] sm:$0xf]
        %v438 = vld [vmem:[%s383 + $0x21] sm:$0xff]
        %v439 = vld [vmem:[%s383 + $0x29] sm:$0xf]
        %v440 = vld [vmem:[%s383 + $0x31] sm:$0xff]
        %v441 = vld [vmem:[%s383 + $0x39] sm:$0xf]
        %v442 = vld [vmem:[%s383 + $0x41] sm:$0xff]
        %v443 = vld [vmem:[%s383 + $0x49] sm:$0xf]
        %v444 = vld [vmem:[%s383 + $0x51] sm:$0xff]
        %v445 = vld [vmem:[%s383 + $0x59] sm:$0xf]
        %v446 = vld [vmem:[%s383 + $0x61] sm:$0xff]
        %v447 = vld [vmem:[%s383 + $0x69] sm:$0xf]
        %v448 = vld [vmem:[%s383 + $0x71] sm:$0xff]
        %v449 = vld [vmem:[%s383 + $0x79] sm:$0xf]
        %v450 = vld [vmem:[%s383 + $0x81] sm:$0xff]
        %v451 = vld [vmem:[%s383 + $0x89] sm:$0xf]
        %v452 = vld [vmem:[%s383 + $0x91] sm:$0xff]
        %v453 = vld [vmem:[%s383 + $0x99] sm:$0xf]
        %v454 = vld [vmem:[%s383 + $0xa1] sm:$0xff]
        %v455 = vld [vmem:[%s383 + $0xa9] sm:$0xf]
        %v456 = vld [vmem:[%s383 + $0xb1] sm:$0xff]
        %v457 = vld [vmem:[%s383 + $0xb9] sm:$0xf]
        %482 = vrot.lane.b32.xlu0 %v434, 3
        %v483 = vpop.permute.xlu0 %482
        %484 = vrot.lane.b32.xlu0 %v435, 3
        %v485 = vpop.permute.xlu0 %484
        %486 = vrot.lane.b32.xlu0 %v436, 3
        %v487 = vpop.permute.xlu0 %486
        %488 = vrot.lane.b32.xlu0 %v437, 3
        %v489 = vpop.permute.xlu0 %488
        %490 = vrot.lane.b32.xlu0 %v438, 3
        %v491 = vpop.permute.xlu0 %490
        %492 = vrot.lane.b32.xlu0 %v439, 3
        %v493 = vpop.permute.xlu0 %492
        %494 = vrot.lane.b32.xlu0 %v440, 3
        %v495 = vpop.permute.xlu0 %494
        %496 = vrot.lane.b32.xlu0 %v441, 3
        %v497 = vpop.permute.xlu0 %496
        %498 = vrot.lane.b32.xlu0 %v442, 3
        %v499 = vpop.permute.xlu0 %498
        %500 = vrot.lane.b32.xlu0 %v443, 3
        %v501 = vpop.permute.xlu0 %500
        %502 = vrot.lane.b32.xlu0 %v444, 3
        %v503 = vpop.permute.xlu0 %502
        %504 = vrot.lane.b32.xlu0 %v445, 3
        %v505 = vpop.permute.xlu0 %504
        %506 = vrot.lane.b32.xlu0 %v446, 3
        %v507 = vpop.permute.xlu0 %506
        %508 = vrot.lane.b32.xlu0 %v447, 3
        %v509 = vpop.permute.xlu0 %508
        %510 = vrot.lane.b32.xlu0 %v448, 3
        %v511 = vpop.permute.xlu0 %510
        %512 = vrot.lane.b32.xlu0 %v449, 3
        %v513 = vpop.permute.xlu0 %512
        %514 = vrot.lane.b32.xlu0 %v450, 3
        %v515 = vpop.permute.xlu0 %514
        %516 = vrot.lane.b32.xlu0 %v451, 3
        %v517 = vpop.permute.xlu0 %516
        %518 = vrot.lane.b32.xlu0 %v452, 3
        %v519 = vpop.permute.xlu0 %518
        %520 = vrot.lane.b32.xlu0 %v453, 3
        %v521 = vpop.permute.xlu0 %520
        %522 = vrot.lane.b32.xlu0 %v454, 3
        %v523 = vpop.permute.xlu0 %522
        %524 = vrot.lane.b32.xlu0 %v455, 3
        %v525 = vpop.permute.xlu0 %524
        %526 = vrot.lane.b32.xlu0 %v456, 3
        %v527 = vpop.permute.xlu0 %526
        %528 = vrot.lane.b32.xlu0 %v457, 3
        %v529 = vpop.permute.xlu0 %528
        %vm554 = vcmask 48152
        %555 = vst.msk [vmem:[#allocation2] sm:$0xff] %vm554, %v483
        %vm556 = vcmask 44056
        %557 = vst.msk [vmem:[#allocation2 + $0x8] sm:$0xf] %vm556, %v485
        %558 = vst.msk [vmem:[#allocation2 + $0x10] sm:$0xff] %vm554, %v487
        %559 = vst.msk [vmem:[#allocation2 + $0x18] sm:$0xf] %vm556, %v489
        %560 = vst.msk [vmem:[#allocation2 + $0x20] sm:$0xff] %vm554, %v491
        %561 = vst.msk [vmem:[#allocation2 + $0x28] sm:$0xf] %vm556, %v493
        %562 = vst.msk [vmem:[#allocation2 + $0x30] sm:$0xff] %vm554, %v495
        %563 = vst.msk [vmem:[#allocation2 + $0x38] sm:$0xf] %vm556, %v497
        %564 = vst.msk [vmem:[#allocation2 + $0x40] sm:$0xff] %vm554, %v499
        %565 = vst.msk [vmem:[#allocation2 + $0x48] sm:$0xf] %vm556, %v501
        %566 = vst.msk [vmem:[#allocation2 + $0x50] sm:$0xff] %vm554, %v503
        %567 = vst.msk [vmem:[#allocation2 + $0x58] sm:$0xf] %vm556, %v505
        %568 = vst.msk [vmem:[#allocation2 + $0x60] sm:$0xff] %vm554, %v507
        %569 = vst.msk [vmem:[#allocation2 + $0x68] sm:$0xf] %vm556, %v509
        %570 = vst.msk [vmem:[#allocation2 + $0x70] sm:$0xff] %vm554, %v511
        %571 = vst.msk [vmem:[#allocation2 + $0x78] sm:$0xf] %vm556, %v513
        %572 = vst.msk [vmem:[#allocation2 + $0x80] sm:$0xff] %vm554, %v515
        %573 = vst.msk [vmem:[#allocation2 + $0x88] sm:$0xf] %vm556, %v517
        %574 = vst.msk [vmem:[#allocation2 + $0x90] sm:$0xff] %vm554, %v519
        %575 = vst.msk [vmem:[#allocation2 + $0x98] sm:$0xf] %vm556, %v521
        %576 = vst.msk [vmem:[#allocation2 + $0xa0] sm:$0xff] %vm554, %v523
        %577 = vst.msk [vmem:[#allocation2 + $0xa8] sm:$0xf] %vm556, %v525
        %578 = vst.msk [vmem:[#allocation2 + $0xb0] sm:$0xff] %vm554, %v527
        %579 = vst.msk [vmem:[#allocation2 + $0xb8] sm:$0xf] %vm556, %v529
        %v580 = vld [vmem:[%s383 + $0x2] sm:$0xff]
        %v581 = vld [vmem:[%s383 + $0xa] sm:$0xf]
        %v582 = vld [vmem:[%s383 + $0x12] sm:$0xff]
        %v583 = vld [vmem:[%s383 + $0x1a] sm:$0xf]
        %v584 = vld [vmem:[%s383 + $0x22] sm:$0xff]
        %v585 = vld [vmem:[%s383 + $0x2a] sm:$0xf]
        %v586 = vld [vmem:[%s383 + $0x32] sm:$0xff]
        %v587 = vld [vmem:[%s383 + $0x3a] sm:$0xf]
        %v588 = vld [vmem:[%s383 + $0x42] sm:$0xff]
        %v589 = vld [vmem:[%s383 + $0x4a] sm:$0xf]
        %v590 = vld [vmem:[%s383 + $0x52] sm:$0xff]
        %v591 = vld [vmem:[%s383 + $0x5a] sm:$0xf]
        %v592 = vld [vmem:[%s383 + $0x62] sm:$0xff]
        %v593 = vld [vmem:[%s383 + $0x6a] sm:$0xf]
        %v594 = vld [vmem:[%s383 + $0x72] sm:$0xff]
        %v595 = vld [vmem:[%s383 + $0x7a] sm:$0xf]
        %v596 = vld [vmem:[%s383 + $0x82] sm:$0xff]
        %v597 = vld [vmem:[%s383 + $0x8a] sm:$0xf]
        %v598 = vld [vmem:[%s383 + $0x92] sm:$0xff]
        %v599 = vld [vmem:[%s383 + $0x9a] sm:$0xf]
        %v600 = vld [vmem:[%s383 + $0xa2] sm:$0xff]
        %v601 = vld [vmem:[%s383 + $0xaa] sm:$0xf]
        %v602 = vld [vmem:[%s383 + $0xb2] sm:$0xff]
        %v603 = vld [vmem:[%s383 + $0xba] sm:$0xf]
        %628 = vrot.lane.b32.xlu0 %v580, 6
        %v629 = vpop.permute.xlu0 %628
        %630 = vrot.lane.b32.xlu0 %v581, 6
        %v631 = vpop.permute.xlu0 %630
        %632 = vrot.lane.b32.xlu0 %v582, 6
        %v633 = vpop.permute.xlu0 %632
        %634 = vrot.lane.b32.xlu0 %v583, 6
        %v635 = vpop.permute.xlu0 %634
        %636 = vrot.lane.b32.xlu0 %v584, 6
        %v637 = vpop.permute.xlu0 %636
        %638 = vrot.lane.b32.xlu0 %v585, 6
        %v639 = vpop.permute.xlu0 %638
        %640 = vrot.lane.b32.xlu0 %v586, 6
        %v641 = vpop.permute.xlu0 %640
        %642 = vrot.lane.b32.xlu0 %v587, 6
        %v643 = vpop.permute.xlu0 %642
        %644 = vrot.lane.b32.xlu0 %v588, 6
        %v645 = vpop.permute.xlu0 %644
        %646 = vrot.lane.b32.xlu0 %v589, 6
        %v647 = vpop.permute.xlu0 %646
        %648 = vrot.lane.b32.xlu0 %v590, 6
        %v649 = vpop.permute.xlu0 %648
        %650 = vrot.lane.b32.xlu0 %v591, 6
        %v651 = vpop.permute.xlu0 %650
        %652 = vrot.lane.b32.xlu0 %v592, 6
        %v653 = vpop.permute.xlu0 %652
        %654 = vrot.lane.b32.xlu0 %v593, 6
        %v655 = vpop.permute.xlu0 %654
        %656 = vrot.lane.b32.xlu0 %v594, 6
        %v657 = vpop.permute.xlu0 %656
        %658 = vrot.lane.b32.xlu0 %v595, 6
        %v659 = vpop.permute.xlu0 %658
        %660 = vrot.lane.b32.xlu0 %v596, 6
        %v661 = vpop.permute.xlu0 %660
        %662 = vrot.lane.b32.xlu0 %v597, 6
        %v663 = vpop.permute.xlu0 %662
        %664 = vrot.lane.b32.xlu0 %v598, 6
        %v665 = vpop.permute.xlu0 %664
        %666 = vrot.lane.b32.xlu0 %v599, 6
        %v667 = vpop.permute.xlu0 %666
        %668 = vrot.lane.b32.xlu0 %v600, 6
        %v669 = vpop.permute.xlu0 %668
        %670 = vrot.lane.b32.xlu0 %v601, 6
        %v671 = vpop.permute.xlu0 %670
        %672 = vrot.lane.b32.xlu0 %v602, 6
        %v673 = vpop.permute.xlu0 %672
        %674 = vrot.lane.b32.xlu0 %v603, 6
        %v675 = vpop.permute.xlu0 %674
        %vm700 = vcmask 72752
        %701 = vst.msk [vmem:[#allocation2] sm:$0xff] %vm700, %v629
        %vm702 = vcmask 68656
        %703 = vst.msk [vmem:[#allocation2 + $0x8] sm:$0xf] %vm702, %v631
        %704 = vst.msk [vmem:[#allocation2 + $0x10] sm:$0xff] %vm700, %v633
        %705 = vst.msk [vmem:[#allocation2 + $0x18] sm:$0xf] %vm702, %v635
        %706 = vst.msk [vmem:[#allocation2 + $0x20] sm:$0xff] %vm700, %v637
        %707 = vst.msk [vmem:[#allocation2 + $0x28] sm:$0xf] %vm702, %v639
        %708 = vst.msk [vmem:[#allocation2 + $0x30] sm:$0xff] %vm700, %v641
        %709 = vst.msk [vmem:[#allocation2 + $0x38] sm:$0xf] %vm702, %v643
        %710 = vst.msk [vmem:[#allocation2 + $0x40] sm:$0xff] %vm700, %v645
        %711 = vst.msk [vmem:[#allocation2 + $0x48] sm:$0xf] %vm702, %v647
        %712 = vst.msk [vmem:[#allocation2 + $0x50] sm:$0xff] %vm700, %v649
        %713 = vst.msk [vmem:[#allocation2 + $0x58] sm:$0xf] %vm702, %v651
        %714 = vst.msk [vmem:[#allocation2 + $0x60] sm:$0xff] %vm700, %v653
        %715 = vst.msk [vmem:[#allocation2 + $0x68] sm:$0xf] %vm702, %v655
        %716 = vst.msk [vmem:[#allocation2 + $0x70] sm:$0xff] %vm700, %v657
        %717 = vst.msk [vmem:[#allocation2 + $0x78] sm:$0xf] %vm702, %v659
        %718 = vst.msk [vmem:[#allocation2 + $0x80] sm:$0xff] %vm700, %v661
        %719 = vst.msk [vmem:[#allocation2 + $0x88] sm:$0xf] %vm702, %v663
        %720 = vst.msk [vmem:[#allocation2 + $0x90] sm:$0xff] %vm700, %v665
        %721 = vst.msk [vmem:[#allocation2 + $0x98] sm:$0xf] %vm702, %v667
        %722 = vst.msk [vmem:[#allocation2 + $0xa0] sm:$0xff] %vm700, %v669
        %723 = vst.msk [vmem:[#allocation2 + $0xa8] sm:$0xf] %vm702, %v671
        %724 = vst.msk [vmem:[#allocation2 + $0xb0] sm:$0xff] %vm700, %v673
        %725 = vst.msk [vmem:[#allocation2 + $0xb8] sm:$0xf] %vm702, %v675
        %v726 = vld [vmem:[%s383 + $0x3] sm:$0xff]
        %v727 = vld [vmem:[%s383 + $0xb] sm:$0xf]
        %v728 = vld [vmem:[%s383 + $0x13] sm:$0xff]
        %v729 = vld [vmem:[%s383 + $0x1b] sm:$0xf]
        %v730 = vld [vmem:[%s383 + $0x23] sm:$0xff]
        %v731 = vld [vmem:[%s383 + $0x2b] sm:$0xf]
        %v732 = vld [vmem:[%s383 + $0x33] sm:$0xff]
        %v733 = vld [vmem:[%s383 + $0x3b] sm:$0xf]
        %v734 = vld [vmem:[%s383 + $0x43] sm:$0xff]
        %v735 = vld [vmem:[%s383 + $0x4b] sm:$0xf]
        %v736 = vld [vmem:[%s383 + $0x53] sm:$0xff]
        %v737 = vld [vmem:[%s383 + $0x5b] sm:$0xf]
        %v738 = vld [vmem:[%s383 + $0x63] sm:$0xff]
        %v739 = vld [vmem:[%s383 + $0x6b] sm:$0xf]
        %v740 = vld [vmem:[%s383 + $0x73] sm:$0xff]
        %v741 = vld [vmem:[%s383 + $0x7b] sm:$0xf]
        %v742 = vld [vmem:[%s383 + $0x83] sm:$0xff]
        %v743 = vld [vmem:[%s383 + $0x8b] sm:$0xf]
        %v744 = vld [vmem:[%s383 + $0x93] sm:$0xff]
        %v745 = vld [vmem:[%s383 + $0x9b] sm:$0xf]
        %v746 = vld [vmem:[%s383 + $0xa3] sm:$0xff]
        %v747 = vld [vmem:[%s383 + $0xab] sm:$0xf]
        %v748 = vld [vmem:[%s383 + $0xb3] sm:$0xff]
        %v749 = vld [vmem:[%s383 + $0xbb] sm:$0xf]
        %774 = vrot.lane.b32.xlu0 %v726, 9
        %v775 = vpop.permute.xlu0 %774
        %776 = vrot.lane.b32.xlu0 %v727, 9
        %v777 = vpop.permute.xlu0 %776
        %778 = vrot.lane.b32.xlu0 %v728, 9
        %v779 = vpop.permute.xlu0 %778
        %780 = vrot.lane.b32.xlu0 %v729, 9
        %v781 = vpop.permute.xlu0 %780
        %782 = vrot.lane.b32.xlu0 %v730, 9
        %v783 = vpop.permute.xlu0 %782
        %784 = vrot.lane.b32.xlu0 %v731, 9
        %v785 = vpop.permute.xlu0 %784
        %786 = vrot.lane.b32.xlu0 %v732, 9
        %v787 = vpop.permute.xlu0 %786
        %788 = vrot.lane.b32.xlu0 %v733, 9
        %v789 = vpop.permute.xlu0 %788
        %790 = vrot.lane.b32.xlu0 %v734, 9
        %v791 = vpop.permute.xlu0 %790
        %792 = vrot.lane.b32.xlu0 %v735, 9
        %v793 = vpop.permute.xlu0 %792
        %794 = vrot.lane.b32.xlu0 %v736, 9
        %v795 = vpop.permute.xlu0 %794
        %796 = vrot.lane.b32.xlu0 %v737, 9
        %v797 = vpop.permute.xlu0 %796
        %798 = vrot.lane.b32.xlu0 %v738, 9
        %v799 = vpop.permute.xlu0 %798
        %800 = vrot.lane.b32.xlu0 %v739, 9
        %v801 = vpop.permute.xlu0 %800
        %802 = vrot.lane.b32.xlu0 %v740, 9
        %v803 = vpop.permute.xlu0 %802
        %804 = vrot.lane.b32.xlu0 %v741, 9
        %v805 = vpop.permute.xlu0 %804
        %806 = vrot.lane.b32.xlu0 %v742, 9
        %v807 = vpop.permute.xlu0 %806
        %808 = vrot.lane.b32.xlu0 %v743, 9
        %v809 = vpop.permute.xlu0 %808
        %810 = vrot.lane.b32.xlu0 %v744, 9
        %v811 = vpop.permute.xlu0 %810
        %812 = vrot.lane.b32.xlu0 %v745, 9
        %v813 = vpop.permute.xlu0 %812
        %814 = vrot.lane.b32.xlu0 %v746, 9
        %v815 = vpop.permute.xlu0 %814
        %816 = vrot.lane.b32.xlu0 %v747, 9
        %v817 = vpop.permute.xlu0 %816
        %818 = vrot.lane.b32.xlu0 %v748, 9
        %v819 = vpop.permute.xlu0 %818
        %820 = vrot.lane.b32.xlu0 %v749, 9
        %v821 = vpop.permute.xlu0 %820
        %vm846 = vcmask 97352
        %847 = vst.msk [vmem:[#allocation2] sm:$0xff] %vm846, %v775
        %vm848 = vcmask 93256
        %849 = vst.msk [vmem:[#allocation2 + $0x8] sm:$0xf] %vm848, %v777
        %850 = vst.msk [vmem:[#allocation2 + $0x10] sm:$0xff] %vm846, %v779
        %851 = vst.msk [vmem:[#allocation2 + $0x18] sm:$0xf] %vm848, %v781
        %852 = vst.msk [vmem:[#allocation2 + $0x20] sm:$0xff] %vm846, %v783
        %853 = vst.msk [vmem:[#allocation2 + $0x28] sm:$0xf] %vm848, %v785
        %854 = vst.msk [vmem:[#allocation2 + $0x30] sm:$0xff] %vm846, %v787
        %855 = vst.msk [vmem:[#allocation2 + $0x38] sm:$0xf] %vm848, %v789
        %856 = vst.msk [vmem:[#allocation2 + $0x40] sm:$0xff] %vm846, %v791
        %857 = vst.msk [vmem:[#allocation2 + $0x48] sm:$0xf] %vm848, %v793
        %858 = vst.msk [vmem:[#allocation2 + $0x50] sm:$0xff] %vm846, %v795
        %859 = vst.msk [vmem:[#allocation2 + $0x58] sm:$0xf] %vm848, %v797
        %860 = vst.msk [vmem:[#allocation2 + $0x60] sm:$0xff] %vm846, %v799
        %861 = vst.msk [vmem:[#allocation2 + $0x68] sm:$0xf] %vm848, %v801
        %862 = vst.msk [vmem:[#allocation2 + $0x70] sm:$0xff] %vm846, %v803
        %863 = vst.msk [vmem:[#allocation2 + $0x78] sm:$0xf] %vm848, %v805
        %864 = vst.msk [vmem:[#allocation2 + $0x80] sm:$0xff] %vm846, %v807
        %865 = vst.msk [vmem:[#allocation2 + $0x88] sm:$0xf] %vm848, %v809
        %866 = vst.msk [vmem:[#allocation2 + $0x90] sm:$0xff] %vm846, %v811
        %867 = vst.msk [vmem:[#allocation2 + $0x98] sm:$0xf] %vm848, %v813
        %868 = vst.msk [vmem:[#allocation2 + $0xa0] sm:$0xff] %vm846, %v815
        %869 = vst.msk [vmem:[#allocation2 + $0xa8] sm:$0xf] %vm848, %v817
        %870 = vst.msk [vmem:[#allocation2 + $0xb0] sm:$0xff] %vm846, %v819
        %871 = vst.msk [vmem:[#allocation2 + $0xb8] sm:$0xf] %vm848, %v821
        %v872 = vld [vmem:[%s383 + $0x4] sm:$0xff]
        %v873 = vld [vmem:[%s383 + $0xc] sm:$0xf]
        %v874 = vld [vmem:[%s383 + $0x14] sm:$0xff]
        %v875 = vld [vmem:[%s383 + $0x1c] sm:$0xf]
        %v876 = vld [vmem:[%s383 + $0x24] sm:$0xff]
        %v877 = vld [vmem:[%s383 + $0x2c] sm:$0xf]
        %v878 = vld [vmem:[%s383 + $0x34] sm:$0xff]
        %v879 = vld [vmem:[%s383 + $0x3c] sm:$0xf]
        %v880 = vld [vmem:[%s383 + $0x44] sm:$0xff]
        %v881 = vld [vmem:[%s383 + $0x4c] sm:$0xf]
        %v882 = vld [vmem:[%s383 + $0x54] sm:$0xff]
        %v883 = vld [vmem:[%s383 + $0x5c] sm:$0xf]
        %v884 = vld [vmem:[%s383 + $0x64] sm:$0xff]
        %v885 = vld [vmem:[%s383 + $0x6c] sm:$0xf]
        %v886 = vld [vmem:[%s383 + $0x74] sm:$0xff]
        %v887 = vld [vmem:[%s383 + $0x7c] sm:$0xf]
        %v888 = vld [vmem:[%s383 + $0x84] sm:$0xff]
        %v889 = vld [vmem:[%s383 + $0x8c] sm:$0xf]
        %v890 = vld [vmem:[%s383 + $0x94] sm:$0xff]
        %v891 = vld [vmem:[%s383 + $0x9c] sm:$0xf]
        %v892 = vld [vmem:[%s383 + $0xa4] sm:$0xff]
        %v893 = vld [vmem:[%s383 + $0xac] sm:$0xf]
        %v894 = vld [vmem:[%s383 + $0xb4] sm:$0xff]
        %v895 = vld [vmem:[%s383 + $0xbc] sm:$0xf]
        %920 = vrot.lane.b32.xlu0 %v872, 12
        %v921 = vpop.permute.xlu0 %920
        %922 = vrot.lane.b32.xlu0 %v873, 12
        %v923 = vpop.permute.xlu0 %922
        %924 = vrot.lane.b32.xlu0 %v874, 12
        %v925 = vpop.permute.xlu0 %924
        %926 = vrot.lane.b32.xlu0 %v875, 12
        %v927 = vpop.permute.xlu0 %926
        %928 = vrot.lane.b32.xlu0 %v876, 12
        %v929 = vpop.permute.xlu0 %928
        %930 = vrot.lane.b32.xlu0 %v877, 12
        %v931 = vpop.permute.xlu0 %930
        %932 = vrot.lane.b32.xlu0 %v878, 12
        %v933 = vpop.permute.xlu0 %932
        %934 = vrot.lane.b32.xlu0 %v879, 12
        %v935 = vpop.permute.xlu0 %934
        %936 = vrot.lane.b32.xlu0 %v880, 12
        %v937 = vpop.permute.xlu0 %936
        %938 = vrot.lane.b32.xlu0 %v881, 12
        %v939 = vpop.permute.xlu0 %938
        %940 = vrot.lane.b32.xlu0 %v882, 12
        %v941 = vpop.permute.xlu0 %940
        %942 = vrot.lane.b32.xlu0 %v883, 12
        %v943 = vpop.permute.xlu0 %942
        %944 = vrot.lane.b32.xlu0 %v884, 12
        %v945 = vpop.permute.xlu0 %944
        %946 = vrot.lane.b32.xlu0 %v885, 12
        %v947 = vpop.permute.xlu0 %946
        %948 = vrot.lane.b32.xlu0 %v886, 12
        %v949 = vpop.permute.xlu0 %948
        %950 = vrot.lane.b32.xlu0 %v887, 12
        %v951 = vpop.permute.xlu0 %950
        %952 = vrot.lane.b32.xlu0 %v888, 12
        %v953 = vpop.permute.xlu0 %952
        %954 = vrot.lane.b32.xlu0 %v889, 12
        %v955 = vpop.permute.xlu0 %954
        %956 = vrot.lane.b32.xlu0 %v890, 12
        %v957 = vpop.permute.xlu0 %956
        %958 = vrot.lane.b32.xlu0 %v891, 12
        %v959 = vpop.permute.xlu0 %958
        %960 = vrot.lane.b32.xlu0 %v892, 12
        %v961 = vpop.permute.xlu0 %960
        %962 = vrot.lane.b32.xlu0 %v893, 12
        %v963 = vpop.permute.xlu0 %962
        %964 = vrot.lane.b32.xlu0 %v894, 12
        %v965 = vpop.permute.xlu0 %964
        %966 = vrot.lane.b32.xlu0 %v895, 12
        %v967 = vpop.permute.xlu0 %966
        %vm992 = vcmask 121952
        %993 = vst.msk [vmem:[#allocation2] sm:$0xff] %vm992, %v921
        %vm994 = vcmask 117856
        %995 = vst.msk [vmem:[#allocation2 + $0x8] sm:$0xf] %vm994, %v923
        %996 = vst.msk [vmem:[#allocation2 + $0x10] sm:$0xff] %vm992, %v925
        %997 = vst.msk [vmem:[#allocation2 + $0x18] sm:$0xf] %vm994, %v927
        %998 = vst.msk [vmem:[#allocation2 + $0x20] sm:$0xff] %vm992, %v929
        %999 = vst.msk [vmem:[#allocation2 + $0x28] sm:$0xf] %vm994, %v931
        %1000 = vst.msk [vmem:[#allocation2 + $0x30] sm:$0xff] %vm992, %v933
        %1001 = vst.msk [vmem:[#allocation2 + $0x38] sm:$0xf] %vm994, %v935
        %1002 = vst.msk [vmem:[#allocation2 + $0x40] sm:$0xff] %vm992, %v937
        %1003 = vst.msk [vmem:[#allocation2 + $0x48] sm:$0xf] %vm994, %v939
        %1004 = vst.msk [vmem:[#allocation2 + $0x50] sm:$0xff] %vm992, %v941
        %1005 = vst.msk [vmem:[#allocation2 + $0x58] sm:$0xf] %vm994, %v943
        %1006 = vst.msk [vmem:[#allocation2 + $0x60] sm:$0xff] %vm992, %v945
        %1007 = vst.msk [vmem:[#allocation2 + $0x68] sm:$0xf] %vm994, %v947
        %1008 = vst.msk [vmem:[#allocation2 + $0x70] sm:$0xff] %vm992, %v949
        %1009 = vst.msk [vmem:[#allocation2 + $0x78] sm:$0xf] %vm994, %v951
        %1010 = vst.msk [vmem:[#allocation2 + $0x80] sm:$0xff] %vm992, %v953
        %1011 = vst.msk [vmem:[#allocation2 + $0x88] sm:$0xf] %vm994, %v955
        %1012 = vst.msk [vmem:[#allocation2 + $0x90] sm:$0xff] %vm992, %v957
        %1013 = vst.msk [vmem:[#allocation2 + $0x98] sm:$0xf] %vm994, %v959
        %1014 = vst.msk [vmem:[#allocation2 + $0xa0] sm:$0xff] %vm992, %v961
        %1015 = vst.msk [vmem:[#allocation2 + $0xa8] sm:$0xf] %vm994, %v963
        %1016 = vst.msk [vmem:[#allocation2 + $0xb0] sm:$0xff] %vm992, %v965
        %1017 = vst.msk [vmem:[#allocation2 + $0xb8] sm:$0xf] %vm994, %v967
        %s1018 = scalar_lea.vmem %s383, 16
        %v1019 = vld [vmem:[%s1018] sm:$0xff]
        %v1020 = vld [vmem:[%s1018 + $0x8] sm:$0xf]
        %v1021 = vld [vmem:[%s1018 + $0x10] sm:$0xff]
        %v1022 = vld [vmem:[%s1018 + $0x18] sm:$0xf]
        %v1023 = vld [vmem:[%s1018 + $0x20] sm:$0xff]
        %v1024 = vld [vmem:[%s1018 + $0x28] sm:$0xf]
        %v1025 = vld [vmem:[%s1018 + $0x30] sm:$0xff]
        %v1026 = vld [vmem:[%s1018 + $0x38] sm:$0xf]
        %v1027 = vld [vmem:[%s1018 + $0x40] sm:$0xff]
        %v1028 = vld [vmem:[%s1018 + $0x48] sm:$0xf]
        %v1029 = vld [vmem:[%s1018 + $0x50] sm:$0xff]
        %v1030 = vld [vmem:[%s1018 + $0x58] sm:$0xf]
        %v1031 = vld [vmem:[%s1018 + $0x60] sm:$0xff]
        %v1032 = vld [vmem:[%s1018 + $0x68] sm:$0xf]
        %v1033 = vld [vmem:[%s1018 + $0x70] sm:$0xff]
        %v1034 = vld [vmem:[%s1018 + $0x78] sm:$0xf]
        %v1035 = vld [vmem:[%s1018 + $0x80] sm:$0xff]
        %v1036 = vld [vmem:[%s1018 + $0x88] sm:$0xf]
        %v1037 = vld [vmem:[%s1018 + $0x90] sm:$0xff]
        %v1038 = vld [vmem:[%s1018 + $0x98] sm:$0xf]
        %v1039 = vld [vmem:[%s1018 + $0xa0] sm:$0xff]
        %v1040 = vld [vmem:[%s1018 + $0xa8] sm:$0xf]
        %v1041 = vld [vmem:[%s1018 + $0xb0] sm:$0xff]
        %v1042 = vld [vmem:[%s1018 + $0xb8] sm:$0xf]
        %1067 = vrot.lane.b32.xlu0 %v1019, 15
        %v1068 = vpop.permute.xlu0 %1067
        %1069 = vrot.lane.b32.xlu0 %v1020, 15
        %v1070 = vpop.permute.xlu0 %1069
        %1071 = vrot.lane.b32.xlu0 %v1021, 15
        %v1072 = vpop.permute.xlu0 %1071
        %1073 = vrot.lane.b32.xlu0 %v1022, 15
        %v1074 = vpop.permute.xlu0 %1073
        %1075 = vrot.lane.b32.xlu0 %v1023, 15
        %v1076 = vpop.permute.xlu0 %1075
        %1077 = vrot.lane.b32.xlu0 %v1024, 15
        %v1078 = vpop.permute.xlu0 %1077
        %1079 = vrot.lane.b32.xlu0 %v1025, 15
        %v1080 = vpop.permute.xlu0 %1079
        %1081 = vrot.lane.b32.xlu0 %v1026, 15
        %v1082 = vpop.permute.xlu0 %1081
        %1083 = vrot.lane.b32.xlu0 %v1027, 15
        %v1084 = vpop.permute.xlu0 %1083
        %1085 = vrot.lane.b32.xlu0 %v1028, 15
        %v1086 = vpop.permute.xlu0 %1085
        %1087 = vrot.lane.b32.xlu0 %v1029, 15
        %v1088 = vpop.permute.xlu0 %1087
        %1089 = vrot.lane.b32.xlu0 %v1030, 15
        %v1090 = vpop.permute.xlu0 %1089
        %1091 = vrot.lane.b32.xlu0 %v1031, 15
        %v1092 = vpop.permute.xlu0 %1091
        %1093 = vrot.lane.b32.xlu0 %v1032, 15
        %v1094 = vpop.permute.xlu0 %1093
        %1095 = vrot.lane.b32.xlu0 %v1033, 15
        %v1096 = vpop.permute.xlu0 %1095
        %1097 = vrot.lane.b32.xlu0 %v1034, 15
        %v1098 = vpop.permute.xlu0 %1097
        %1099 = vrot.lane.b32.xlu0 %v1035, 15
        %v1100 = vpop.permute.xlu0 %1099
        %1101 = vrot.lane.b32.xlu0 %v1036, 15
        %v1102 = vpop.permute.xlu0 %1101
        %1103 = vrot.lane.b32.xlu0 %v1037, 15
        %v1104 = vpop.permute.xlu0 %1103
        %1105 = vrot.lane.b32.xlu0 %v1038, 15
        %v1106 = vpop.permute.xlu0 %1105
        %1107 = vrot.lane.b32.xlu0 %v1039, 15
        %v1108 = vpop.permute.xlu0 %1107
        %1109 = vrot.lane.b32.xlu0 %v1040, 15
        %v1110 = vpop.permute.xlu0 %1109
        %1111 = vrot.lane.b32.xlu0 %v1041, 15
        %v1112 = vpop.permute.xlu0 %1111
        %1113 = vrot.lane.b32.xlu0 %v1042, 15
        %v1114 = vpop.permute.xlu0 %1113
        %vm1139 = vcmask 146552
        %1140 = vst.msk [vmem:[#allocation2] sm:$0xff] %vm1139, %v1068
        %vm1141 = vcmask 142456
        %1142 = vst.msk [vmem:[#allocation2 + $0x8] sm:$0xf] %vm1141, %v1070
        %1143 = vst.msk [vmem:[#allocation2 + $0x10] sm:$0xff] %vm1139, %v1072
        %1144 = vst.msk [vmem:[#allocation2 + $0x18] sm:$0xf] %vm1141, %v1074
        %1145 = vst.msk [vmem:[#allocation2 + $0x20] sm:$0xff] %vm1139, %v1076
        %1146 = vst.msk [vmem:[#allocation2 + $0x28] sm:$0xf] %vm1141, %v1078
        %1147 = vst.msk [vmem:[#allocation2 + $0x30] sm:$0xff] %vm1139, %v1080
        %1148 = vst.msk [vmem:[#allocation2 + $0x38] sm:$0xf] %vm1141, %v1082
        %1149 = vst.msk [vmem:[#allocation2 + $0x40] sm:$0xff] %vm1139, %v1084
        %1150 = vst.msk [vmem:[#allocation2 + $0x48] sm:$0xf] %vm1141, %v1086
        %1151 = vst.msk [vmem:[#allocation2 + $0x50] sm:$0xff] %vm1139, %v1088
        %1152 = vst.msk [vmem:[#allocation2 + $0x58] sm:$0xf] %vm1141, %v1090
        %1153 = vst.msk [vmem:[#allocation2 + $0x60] sm:$0xff] %vm1139, %v1092
        %1154 = vst.msk [vmem:[#allocation2 + $0x68] sm:$0xf] %vm1141, %v1094
        %1155 = vst.msk [vmem:[#allocation2 + $0x70] sm:$0xff] %vm1139, %v1096
        %1156 = vst.msk [vmem:[#allocation2 + $0x78] sm:$0xf] %vm1141, %v1098
        %1157 = vst.msk [vmem:[#allocation2 + $0x80] sm:$0xff] %vm1139, %v1100
        %1158 = vst.msk [vmem:[#allocation2 + $0x88] sm:$0xf] %vm1141, %v1102
        %1159 = vst.msk [vmem:[#allocation2 + $0x90] sm:$0xff] %vm1139, %v1104
        %1160 = vst.msk [vmem:[#allocation2 + $0x98] sm:$0xf] %vm1141, %v1106
        %1161 = vst.msk [vmem:[#allocation2 + $0xa0] sm:$0xff] %vm1139, %v1108
        %1162 = vst.msk [vmem:[#allocation2 + $0xa8] sm:$0xf] %vm1141, %v1110
        %1163 = vst.msk [vmem:[#allocation2 + $0xb0] sm:$0xff] %vm1139, %v1112
        %1164 = vst.msk [vmem:[#allocation2 + $0xb8] sm:$0xf] %vm1141, %v1114
        %v1165 = vld [vmem:[%s1018 + $0x1] sm:$0xff]
        %v1166 = vld [vmem:[%s1018 + $0x9] sm:$0xf]
        %v1167 = vld [vmem:[%s1018 + $0x11] sm:$0xff]
        %v1168 = vld [vmem:[%s1018 + $0x19] sm:$0xf]
        %v1169 = vld [vmem:[%s1018 + $0x21] sm:$0xff]
        %v1170 = vld [vmem:[%s1018 + $0x29] sm:$0xf]
        %v1171 = vld [vmem:[%s1018 + $0x31] sm:$0xff]
        %v1172 = vld [vmem:[%s1018 + $0x39] sm:$0xf]
        %v1173 = vld [vmem:[%s1018 + $0x41] sm:$0xff]
        %v1174 = vld [vmem:[%s1018 + $0x49] sm:$0xf]
        %v1175 = vld [vmem:[%s1018 + $0x51] sm:$0xff]
        %v1176 = vld [vmem:[%s1018 + $0x59] sm:$0xf]
        %v1177 = vld [vmem:[%s1018 + $0x61] sm:$0xff]
        %v1178 = vld [vmem:[%s1018 + $0x69] sm:$0xf]
        %v1179 = vld [vmem:[%s1018 + $0x71] sm:$0xff]
        %v1180 = vld [vmem:[%s1018 + $0x79] sm:$0xf]
        %v1181 = vld [vmem:[%s1018 + $0x81] sm:$0xff]
        %v1182 = vld [vmem:[%s1018 + $0x89] sm:$0xf]
        %v1183 = vld [vmem:[%s1018 + $0x91] sm:$0xff]
        %v1184 = vld [vmem:[%s1018 + $0x99] sm:$0xf]
        %v1185 = vld [vmem:[%s1018 + $0xa1] sm:$0xff]
        %v1186 = vld [vmem:[%s1018 + $0xa9] sm:$0xf]
        %v1187 = vld [vmem:[%s1018 + $0xb1] sm:$0xff]
        %v1188 = vld [vmem:[%s1018 + $0xb9] sm:$0xf]
        %1213 = vrot.lane.b32.xlu0 %v1165, 18
        %v1214 = vpop.permute.xlu0 %1213
        %1215 = vrot.lane.b32.xlu0 %v1166, 18
        %v1216 = vpop.permute.xlu0 %1215
        %1217 = vrot.lane.b32.xlu0 %v1167, 18
        %v1218 = vpop.permute.xlu0 %1217
        %1219 = vrot.lane.b32.xlu0 %v1168, 18
        %v1220 = vpop.permute.xlu0 %1219
        %1221 = vrot.lane.b32.xlu0 %v1169, 18
        %v1222 = vpop.permute.xlu0 %1221
        %1223 = vrot.lane.b32.xlu0 %v1170, 18
        %v1224 = vpop.permute.xlu0 %1223
        %1225 = vrot.lane.b32.xlu0 %v1171, 18
        %v1226 = vpop.permute.xlu0 %1225
        %1227 = vrot.lane.b32.xlu0 %v1172, 18
        %v1228 = vpop.permute.xlu0 %1227
        %1229 = vrot.lane.b32.xlu0 %v1173, 18
        %v1230 = vpop.permute.xlu0 %1229
        %1231 = vrot.lane.b32.xlu0 %v1174, 18
        %v1232 = vpop.permute.xlu0 %1231
        %1233 = vrot.lane.b32.xlu0 %v1175, 18
        %v1234 = vpop.permute.xlu0 %1233
        %1235 = vrot.lane.b32.xlu0 %v1176, 18
        %v1236 = vpop.permute.xlu0 %1235
        %1237 = vrot.lane.b32.xlu0 %v1177, 18
        %v1238 = vpop.permute.xlu0 %1237
        %1239 = vrot.lane.b32.xlu0 %v1178, 18
        %v1240 = vpop.permute.xlu0 %1239
        %1241 = vrot.lane.b32.xlu0 %v1179, 18
        %v1242 = vpop.permute.xlu0 %1241
        %1243 = vrot.lane.b32.xlu0 %v1180, 18
        %v1244 = vpop.permute.xlu0 %1243
        %1245 = vrot.lane.b32.xlu0 %v1181, 18
        %v1246 = vpop.permute.xlu0 %1245
        %1247 = vrot.lane.b32.xlu0 %v1182, 18
        %v1248 = vpop.permute.xlu0 %1247
        %1249 = vrot.lane.b32.xlu0 %v1183, 18
        %v1250 = vpop.permute.xlu0 %1249
        %1251 = vrot.lane.b32.xlu0 %v1184, 18
        %v1252 = vpop.permute.xlu0 %1251
        %1253 = vrot.lane.b32.xlu0 %v1185, 18
        %v1254 = vpop.permute.xlu0 %1253
        %1255 = vrot.lane.b32.xlu0 %v1186, 18
        %v1256 = vpop.permute.xlu0 %1255
        %1257 = vrot.lane.b32.xlu0 %v1187, 18
        %v1258 = vpop.permute.xlu0 %1257
        %1259 = vrot.lane.b32.xlu0 %v1188, 18
        %v1260 = vpop.permute.xlu0 %1259
        %vm1285 = vcmask 171152
        %1286 = vst.msk [vmem:[#allocation2] sm:$0xff] %vm1285, %v1214
        %vm1287 = vcmask 167056
        %1288 = vst.msk [vmem:[#allocation2 + $0x8] sm:$0xf] %vm1287, %v1216
        %1289 = vst.msk [vmem:[#allocation2 + $0x10] sm:$0xff] %vm1285, %v1218
        %1290 = vst.msk [vmem:[#allocation2 + $0x18] sm:$0xf] %vm1287, %v1220
        %1291 = vst.msk [vmem:[#allocation2 + $0x20] sm:$0xff] %vm1285, %v1222
        %1292 = vst.msk [vmem:[#allocation2 + $0x28] sm:$0xf] %vm1287, %v1224
        %1293 = vst.msk [vmem:[#allocation2 + $0x30] sm:$0xff] %vm1285, %v1226
        %1294 = vst.msk [vmem:[#allocation2 + $0x38] sm:$0xf] %vm1287, %v1228
        %1295 = vst.msk [vmem:[#allocation2 + $0x40] sm:$0xff] %vm1285, %v1230
        %1296 = vst.msk [vmem:[#allocation2 + $0x48] sm:$0xf] %vm1287, %v1232
        %1297 = vst.msk [vmem:[#allocation2 + $0x50] sm:$0xff] %vm1285, %v1234
        %1298 = vst.msk [vmem:[#allocation2 + $0x58] sm:$0xf] %vm1287, %v1236
        %1299 = vst.msk [vmem:[#allocation2 + $0x60] sm:$0xff] %vm1285, %v1238
        %1300 = vst.msk [vmem:[#allocation2 + $0x68] sm:$0xf] %vm1287, %v1240
        %1301 = vst.msk [vmem:[#allocation2 + $0x70] sm:$0xff] %vm1285, %v1242
        %1302 = vst.msk [vmem:[#allocation2 + $0x78] sm:$0xf] %vm1287, %v1244
        %1303 = vst.msk [vmem:[#allocation2 + $0x80] sm:$0xff] %vm1285, %v1246
        %1304 = vst.msk [vmem:[#allocation2 + $0x88] sm:$0xf] %vm1287, %v1248
        %1305 = vst.msk [vmem:[#allocation2 + $0x90] sm:$0xff] %vm1285, %v1250
        %1306 = vst.msk [vmem:[#allocation2 + $0x98] sm:$0xf] %vm1287, %v1252
        %1307 = vst.msk [vmem:[#allocation2 + $0xa0] sm:$0xff] %vm1285, %v1254
        %1308 = vst.msk [vmem:[#allocation2 + $0xa8] sm:$0xf] %vm1287, %v1256
        %1309 = vst.msk [vmem:[#allocation2 + $0xb0] sm:$0xff] %vm1285, %v1258
        %1310 = vst.msk [vmem:[#allocation2 + $0xb8] sm:$0xf] %vm1287, %v1260
        %v1311 = vld [vmem:[%s1018 + $0x2] sm:$0xff]
        %v1312 = vld [vmem:[%s1018 + $0xa] sm:$0xf]
        %v1313 = vld [vmem:[%s1018 + $0x12] sm:$0xff]
        %v1314 = vld [vmem:[%s1018 + $0x1a] sm:$0xf]
        %v1315 = vld [vmem:[%s1018 + $0x22] sm:$0xff]
        %v1316 = vld [vmem:[%s1018 + $0x2a] sm:$0xf]
        %v1317 = vld [vmem:[%s1018 + $0x32] sm:$0xff]
        %v1318 = vld [vmem:[%s1018 + $0x3a] sm:$0xf]
        %v1319 = vld [vmem:[%s1018 + $0x42] sm:$0xff]
        %v1320 = vld [vmem:[%s1018 + $0x4a] sm:$0xf]
        %v1321 = vld [vmem:[%s1018 + $0x52] sm:$0xff]
        %v1322 = vld [vmem:[%s1018 + $0x5a] sm:$0xf]
        %v1323 = vld [vmem:[%s1018 + $0x62] sm:$0xff]
        %v1324 = vld [vmem:[%s1018 + $0x6a] sm:$0xf]
        %v1325 = vld [vmem:[%s1018 + $0x72] sm:$0xff]
        %v1326 = vld [vmem:[%s1018 + $0x7a] sm:$0xf]
        %v1327 = vld [vmem:[%s1018 + $0x82] sm:$0xff]
        %v1328 = vld [vmem:[%s1018 + $0x8a] sm:$0xf]
        %v1329 = vld [vmem:[%s1018 + $0x92] sm:$0xff]
        %v1330 = vld [vmem:[%s1018 + $0x9a] sm:$0xf]
        %v1331 = vld [vmem:[%s1018 + $0xa2] sm:$0xff]
        %v1332 = vld [vmem:[%s1018 + $0xaa] sm:$0xf]
        %v1333 = vld [vmem:[%s1018 + $0xb2] sm:$0xff]
        %v1334 = vld [vmem:[%s1018 + $0xba] sm:$0xf]
        %1359 = vrot.lane.b32.xlu0 %v1311, 21
        %v1360 = vpop.permute.xlu0 %1359
        %1361 = vrot.lane.b32.xlu0 %v1312, 21
        %v1362 = vpop.permute.xlu0 %1361
        %1363 = vrot.lane.b32.xlu0 %v1313, 21
        %v1364 = vpop.permute.xlu0 %1363
        %1365 = vrot.lane.b32.xlu0 %v1314, 21
        %v1366 = vpop.permute.xlu0 %1365
        %1367 = vrot.lane.b32.xlu0 %v1315, 21
        %v1368 = vpop.permute.xlu0 %1367
        %1369 = vrot.lane.b32.xlu0 %v1316, 21
        %v1370 = vpop.permute.xlu0 %1369
        %1371 = vrot.lane.b32.xlu0 %v1317, 21
        %v1372 = vpop.permute.xlu0 %1371
        %1373 = vrot.lane.b32.xlu0 %v1318, 21
        %v1374 = vpop.permute.xlu0 %1373
        %1375 = vrot.lane.b32.xlu0 %v1319, 21
        %v1376 = vpop.permute.xlu0 %1375
        %1377 = vrot.lane.b32.xlu0 %v1320, 21
        %v1378 = vpop.permute.xlu0 %1377
        %1379 = vrot.lane.b32.xlu0 %v1321, 21
        %v1380 = vpop.permute.xlu0 %1379
        %1381 = vrot.lane.b32.xlu0 %v1322, 21
        %v1382 = vpop.permute.xlu0 %1381
        %1383 = vrot.lane.b32.xlu0 %v1323, 21
        %v1384 = vpop.permute.xlu0 %1383
        %1385 = vrot.lane.b32.xlu0 %v1324, 21
        %v1386 = vpop.permute.xlu0 %1385
        %1387 = vrot.lane.b32.xlu0 %v1325, 21
        %v1388 = vpop.permute.xlu0 %1387
        %1389 = vrot.lane.b32.xlu0 %v1326, 21
        %v1390 = vpop.permute.xlu0 %1389
        %1391 = vrot.lane.b32.xlu0 %v1327, 21
        %v1392 = vpop.permute.xlu0 %1391
        %1393 = vrot.lane.b32.xlu0 %v1328, 21
        %v1394 = vpop.permute.xlu0 %1393
        %1395 = vrot.lane.b32.xlu0 %v1329, 21
        %v1396 = vpop.permute.xlu0 %1395
        %1397 = vrot.lane.b32.xlu0 %v1330, 21
        %v1398 = vpop.permute.xlu0 %1397
        %1399 = vrot.lane.b32.xlu0 %v1331, 21
        %v1400 = vpop.permute.xlu0 %1399
        %1401 = vrot.lane.b32.xlu0 %v1332, 21
        %v1402 = vpop.permute.xlu0 %1401
        %1403 = vrot.lane.b32.xlu0 %v1333, 21
        %v1404 = vpop.permute.xlu0 %1403
        %1405 = vrot.lane.b32.xlu0 %v1334, 21
        %v1406 = vpop.permute.xlu0 %1405
        %vm1431 = vcmask 195752
        %1432 = vst.msk [vmem:[#allocation2] sm:$0xff] %vm1431, %v1360
        %vm1433 = vcmask 191656
        %1434 = vst.msk [vmem:[#allocation2 + $0x8] sm:$0xf] %vm1433, %v1362
        %1435 = vst.msk [vmem:[#allocation2 + $0x10] sm:$0xff] %vm1431, %v1364
        %1436 = vst.msk [vmem:[#allocation2 + $0x18] sm:$0xf] %vm1433, %v1366
        %1437 = vst.msk [vmem:[#allocation2 + $0x20] sm:$0xff] %vm1431, %v1368
        %1438 = vst.msk [vmem:[#allocation2 + $0x28] sm:$0xf] %vm1433, %v1370
        %1439 = vst.msk [vmem:[#allocation2 + $0x30] sm:$0xff] %vm1431, %v1372
        %1440 = vst.msk [vmem:[#allocation2 + $0x38] sm:$0xf] %vm1433, %v1374
        %1441 = vst.msk [vmem:[#allocation2 + $0x40] sm:$0xff] %vm1431, %v1376
        %1442 = vst.msk [vmem:[#allocation2 + $0x48] sm:$0xf] %vm1433, %v1378
        %1443 = vst.msk [vmem:[#allocation2 + $0x50] sm:$0xff] %vm1431, %v1380
        %1444 = vst.msk [vmem:[#allocation2 + $0x58] sm:$0xf] %vm1433, %v1382
        %1445 = vst.msk [vmem:[#allocation2 + $0x60] sm:$0xff] %vm1431, %v1384
        %1446 = vst.msk [vmem:[#allocation2 + $0x68] sm:$0xf] %vm1433, %v1386
        %1447 = vst.msk [vmem:[#allocation2 + $0x70] sm:$0xff] %vm1431, %v1388
        %1448 = vst.msk [vmem:[#allocation2 + $0x78] sm:$0xf] %vm1433, %v1390
        %1449 = vst.msk [vmem:[#allocation2 + $0x80] sm:$0xff] %vm1431, %v1392
        %1450 = vst.msk [vmem:[#allocation2 + $0x88] sm:$0xf] %vm1433, %v1394
        %1451 = vst.msk [vmem:[#allocation2 + $0x90] sm:$0xff] %vm1431, %v1396
        %1452 = vst.msk [vmem:[#allocation2 + $0x98] sm:$0xf] %vm1433, %v1398
        %1453 = vst.msk [vmem:[#allocation2 + $0xa0] sm:$0xff] %vm1431, %v1400
        %1454 = vst.msk [vmem:[#allocation2 + $0xa8] sm:$0xf] %vm1433, %v1402
        %1455 = vst.msk [vmem:[#allocation2 + $0xb0] sm:$0xff] %vm1431, %v1404
        %1456 = vst.msk [vmem:[#allocation2 + $0xb8] sm:$0xf] %vm1433, %v1406
        %v1457 = vld [vmem:[%s1018 + $0x3] sm:$0xff]
        %v1458 = vld [vmem:[%s1018 + $0xb] sm:$0xf]
        %v1459 = vld [vmem:[%s1018 + $0x13] sm:$0xff]
        %v1460 = vld [vmem:[%s1018 + $0x1b] sm:$0xf]
        %v1461 = vld [vmem:[%s1018 + $0x23] sm:$0xff]
        %v1462 = vld [vmem:[%s1018 + $0x2b] sm:$0xf]
        %v1463 = vld [vmem:[%s1018 + $0x33] sm:$0xff]
        %v1464 = vld [vmem:[%s1018 + $0x3b] sm:$0xf]
        %v1465 = vld [vmem:[%s1018 + $0x43] sm:$0xff]
        %v1466 = vld [vmem:[%s1018 + $0x4b] sm:$0xf]
        %v1467 = vld [vmem:[%s1018 + $0x53] sm:$0xff]
        %v1468 = vld [vmem:[%s1018 + $0x5b] sm:$0xf]
        %v1469 = vld [vmem:[%s1018 + $0x63] sm:$0xff]
        %v1470 = vld [vmem:[%s1018 + $0x6b] sm:$0xf]
        %v1471 = vld [vmem:[%s1018 + $0x73] sm:$0xff]
        %v1472 = vld [vmem:[%s1018 + $0x7b] sm:$0xf]
        %v1473 = vld [vmem:[%s1018 + $0x83] sm:$0xff]
        %v1474 = vld [vmem:[%s1018 + $0x8b] sm:$0xf]
        %v1475 = vld [vmem:[%s1018 + $0x93] sm:$0xff]
        %v1476 = vld [vmem:[%s1018 + $0x9b] sm:$0xf]
        %v1477 = vld [vmem:[%s1018 + $0xa3] sm:$0xff]
        %v1478 = vld [vmem:[%s1018 + $0xab] sm:$0xf]
        %v1479 = vld [vmem:[%s1018 + $0xb3] sm:$0xff]
        %v1480 = vld [vmem:[%s1018 + $0xbb] sm:$0xf]
        %1505 = vrot.lane.b32.xlu0 %v1457, 24
        %v1506 = vpop.permute.xlu0 %1505
        %1507 = vrot.lane.b32.xlu0 %v1458, 24
        %v1508 = vpop.permute.xlu0 %1507
        %1509 = vrot.lane.b32.xlu0 %v1459, 24
        %v1510 = vpop.permute.xlu0 %1509
        %1511 = vrot.lane.b32.xlu0 %v1460, 24
        %v1512 = vpop.permute.xlu0 %1511
        %1513 = vrot.lane.b32.xlu0 %v1461, 24
        %v1514 = vpop.permute.xlu0 %1513
        %1515 = vrot.lane.b32.xlu0 %v1462, 24
        %v1516 = vpop.permute.xlu0 %1515
        %1517 = vrot.lane.b32.xlu0 %v1463, 24
        %v1518 = vpop.permute.xlu0 %1517
        %1519 = vrot.lane.b32.xlu0 %v1464, 24
        %v1520 = vpop.permute.xlu0 %1519
        %1521 = vrot.lane.b32.xlu0 %v1465, 24
        %v1522 = vpop.permute.xlu0 %1521
        %1523 = vrot.lane.b32.xlu0 %v1466, 24
        %v1524 = vpop.permute.xlu0 %1523
        %1525 = vrot.lane.b32.xlu0 %v1467, 24
        %v1526 = vpop.permute.xlu0 %1525
        %1527 = vrot.lane.b32.xlu0 %v1468, 24
        %v1528 = vpop.permute.xlu0 %1527
        %1529 = vrot.lane.b32.xlu0 %v1469, 24
        %v1530 = vpop.permute.xlu0 %1529
        %1531 = vrot.lane.b32.xlu0 %v1470, 24
        %v1532 = vpop.permute.xlu0 %1531
        %1533 = vrot.lane.b32.xlu0 %v1471, 24
        %v1534 = vpop.permute.xlu0 %1533
        %1535 = vrot.lane.b32.xlu0 %v1472, 24
        %v1536 = vpop.permute.xlu0 %1535
        %1537 = vrot.lane.b32.xlu0 %v1473, 24
        %v1538 = vpop.permute.xlu0 %1537
        %1539 = vrot.lane.b32.xlu0 %v1474, 24
        %v1540 = vpop.permute.xlu0 %1539
        %1541 = vrot.lane.b32.xlu0 %v1475, 24
        %v1542 = vpop.permute.xlu0 %1541
        %1543 = vrot.lane.b32.xlu0 %v1476, 24
        %v1544 = vpop.permute.xlu0 %1543
        %1545 = vrot.lane.b32.xlu0 %v1477, 24
        %v1546 = vpop.permute.xlu0 %1545
        %1547 = vrot.lane.b32.xlu0 %v1478, 24
        %v1548 = vpop.permute.xlu0 %1547
        %1549 = vrot.lane.b32.xlu0 %v1479, 24
        %v1550 = vpop.permute.xlu0 %1549
        %1551 = vrot.lane.b32.xlu0 %v1480, 24
        %v1552 = vpop.permute.xlu0 %1551
        %vm1577 = vcmask 220352
        %1578 = vst.msk [vmem:[#allocation2] sm:$0xff] %vm1577, %v1506
        %vm1579 = vcmask 216256
        %1580 = vst.msk [vmem:[#allocation2 + $0x8] sm:$0xf] %vm1579, %v1508
        %1581 = vst.msk [vmem:[#allocation2 + $0x10] sm:$0xff] %vm1577, %v1510
        %1582 = vst.msk [vmem:[#allocation2 + $0x18] sm:$0xf] %vm1579, %v1512
        %1583 = vst.msk [vmem:[#allocation2 + $0x20] sm:$0xff] %vm1577, %v1514
        %1584 = vst.msk [vmem:[#allocation2 + $0x28] sm:$0xf] %vm1579, %v1516
        %1585 = vst.msk [vmem:[#allocation2 + $0x30] sm:$0xff] %vm1577, %v1518
        %1586 = vst.msk [vmem:[#allocation2 + $0x38] sm:$0xf] %vm1579, %v1520
        %1587 = vst.msk [vmem:[#allocation2 + $0x40] sm:$0xff] %vm1577, %v1522
        %1588 = vst.msk [vmem:[#allocation2 + $0x48] sm:$0xf] %vm1579, %v1524
        %1589 = vst.msk [vmem:[#allocation2 + $0x50] sm:$0xff] %vm1577, %v1526
        %1590 = vst.msk [vmem:[#allocation2 + $0x58] sm:$0xf] %vm1579, %v1528
        %1591 = vst.msk [vmem:[#allocation2 + $0x60] sm:$0xff] %vm1577, %v1530
        %1592 = vst.msk [vmem:[#allocation2 + $0x68] sm:$0xf] %vm1579, %v1532
        %1593 = vst.msk [vmem:[#allocation2 + $0x70] sm:$0xff] %vm1577, %v1534
        %1594 = vst.msk [vmem:[#allocation2 + $0x78] sm:$0xf] %vm1579, %v1536
        %1595 = vst.msk [vmem:[#allocation2 + $0x80] sm:$0xff] %vm1577, %v1538
        %1596 = vst.msk [vmem:[#allocation2 + $0x88] sm:$0xf] %vm1579, %v1540
        %1597 = vst.msk [vmem:[#allocation2 + $0x90] sm:$0xff] %vm1577, %v1542
        %1598 = vst.msk [vmem:[#allocation2 + $0x98] sm:$0xf] %vm1579, %v1544
        %1599 = vst.msk [vmem:[#allocation2 + $0xa0] sm:$0xff] %vm1577, %v1546
        %1600 = vst.msk [vmem:[#allocation2 + $0xa8] sm:$0xf] %vm1579, %v1548
        %1601 = vst.msk [vmem:[#allocation2 + $0xb0] sm:$0xff] %vm1577, %v1550
        %1602 = vst.msk [vmem:[#allocation2 + $0xb8] sm:$0xf] %vm1579, %v1552
        %v1603 = vld [vmem:[%s1018 + $0x4] sm:$0xff]
        %v1604 = vld [vmem:[%s1018 + $0xc] sm:$0xf]
        %v1605 = vld [vmem:[%s1018 + $0x14] sm:$0xff]
        %v1606 = vld [vmem:[%s1018 + $0x1c] sm:$0xf]
        %v1607 = vld [vmem:[%s1018 + $0x24] sm:$0xff]
        %v1608 = vld [vmem:[%s1018 + $0x2c] sm:$0xf]
        %v1609 = vld [vmem:[%s1018 + $0x34] sm:$0xff]
        %v1610 = vld [vmem:[%s1018 + $0x3c] sm:$0xf]
        %v1611 = vld [vmem:[%s1018 + $0x44] sm:$0xff]
        %v1612 = vld [vmem:[%s1018 + $0x4c] sm:$0xf]
        %v1613 = vld [vmem:[%s1018 + $0x54] sm:$0xff]
        %v1614 = vld [vmem:[%s1018 + $0x5c] sm:$0xf]
        %v1615 = vld [vmem:[%s1018 + $0x64] sm:$0xff]
        %v1616 = vld [vmem:[%s1018 + $0x6c] sm:$0xf]
        %v1617 = vld [vmem:[%s1018 + $0x74] sm:$0xff]
        %v1618 = vld [vmem:[%s1018 + $0x7c] sm:$0xf]
        %v1619 = vld [vmem:[%s1018 + $0x84] sm:$0xff]
        %v1620 = vld [vmem:[%s1018 + $0x8c] sm:$0xf]
        %v1621 = vld [vmem:[%s1018 + $0x94] sm:$0xff]
        %v1622 = vld [vmem:[%s1018 + $0x9c] sm:$0xf]
        %v1623 = vld [vmem:[%s1018 + $0xa4] sm:$0xff]
        %v1624 = vld [vmem:[%s1018 + $0xac] sm:$0xf]
        %v1625 = vld [vmem:[%s1018 + $0xb4] sm:$0xff]
        %v1626 = vld [vmem:[%s1018 + $0xbc] sm:$0xf]
        %1651 = vrot.lane.b32.xlu0 %v1603, 27
        %v1652 = vpop.permute.xlu0 %1651
        %1653 = vrot.lane.b32.xlu0 %v1604, 27
        %v1654 = vpop.permute.xlu0 %1653
        %1655 = vrot.lane.b32.xlu0 %v1605, 27
        %v1656 = vpop.permute.xlu0 %1655
        %1657 = vrot.lane.b32.xlu0 %v1606, 27
        %v1658 = vpop.permute.xlu0 %1657
        %1659 = vrot.lane.b32.xlu0 %v1607, 27
        %v1660 = vpop.permute.xlu0 %1659
        %1661 = vrot.lane.b32.xlu0 %v1608, 27
        %v1662 = vpop.permute.xlu0 %1661
        %1663 = vrot.lane.b32.xlu0 %v1609, 27
        %v1664 = vpop.permute.xlu0 %1663
        %1665 = vrot.lane.b32.xlu0 %v1610, 27
        %v1666 = vpop.permute.xlu0 %1665
        %1667 = vrot.lane.b32.xlu0 %v1611, 27
        %v1668 = vpop.permute.xlu0 %1667
        %1669 = vrot.lane.b32.xlu0 %v1612, 27
        %v1670 = vpop.permute.xlu0 %1669
        %1671 = vrot.lane.b32.xlu0 %v1613, 27
        %v1672 = vpop.permute.xlu0 %1671
        %1673 = vrot.lane.b32.xlu0 %v1614, 27
        %v1674 = vpop.permute.xlu0 %1673
        %1675 = vrot.lane.b32.xlu0 %v1615, 27
        %v1676 = vpop.permute.xlu0 %1675
        %1677 = vrot.lane.b32.xlu0 %v1616, 27
        %v1678 = vpop.permute.xlu0 %1677
        %1679 = vrot.lane.b32.xlu0 %v1617, 27
        %v1680 = vpop.permute.xlu0 %1679
        %1681 = vrot.lane.b32.xlu0 %v1618, 27
        %v1682 = vpop.permute.xlu0 %1681
        %1683 = vrot.lane.b32.xlu0 %v1619, 27
        %v1684 = vpop.permute.xlu0 %1683
        %1685 = vrot.lane.b32.xlu0 %v1620, 27
        %v1686 = vpop.permute.xlu0 %1685
        %1687 = vrot.lane.b32.xlu0 %v1621, 27
        %v1688 = vpop.permute.xlu0 %1687
        %1689 = vrot.lane.b32.xlu0 %v1622, 27
        %v1690 = vpop.permute.xlu0 %1689
        %1691 = vrot.lane.b32.xlu0 %v1623, 27
        %v1692 = vpop.permute.xlu0 %1691
        %1693 = vrot.lane.b32.xlu0 %v1624, 27
        %v1694 = vpop.permute.xlu0 %1693
        %1695 = vrot.lane.b32.xlu0 %v1625, 27
        %v1696 = vpop.permute.xlu0 %1695
        %1697 = vrot.lane.b32.xlu0 %v1626, 27
        %v1698 = vpop.permute.xlu0 %1697
        %vm1723 = vcmask 244952
        %1724 = vst.msk [vmem:[#allocation2] sm:$0xff] %vm1723, %v1652
        %vm1725 = vcmask 240856
        %1726 = vst.msk [vmem:[#allocation2 + $0x8] sm:$0xf] %vm1725, %v1654
        %1727 = vst.msk [vmem:[#allocation2 + $0x10] sm:$0xff] %vm1723, %v1656
        %1728 = vst.msk [vmem:[#allocation2 + $0x18] sm:$0xf] %vm1725, %v1658
        %1729 = vst.msk [vmem:[#allocation2 + $0x20] sm:$0xff] %vm1723, %v1660
        %1730 = vst.msk [vmem:[#allocation2 + $0x28] sm:$0xf] %vm1725, %v1662
        %1731 = vst.msk [vmem:[#allocation2 + $0x30] sm:$0xff] %vm1723, %v1664
        %1732 = vst.msk [vmem:[#allocation2 + $0x38] sm:$0xf] %vm1725, %v1666
        %1733 = vst.msk [vmem:[#allocation2 + $0x40] sm:$0xff] %vm1723, %v1668
        %1734 = vst.msk [vmem:[#allocation2 + $0x48] sm:$0xf] %vm1725, %v1670
        %1735 = vst.msk [vmem:[#allocation2 + $0x50] sm:$0xff] %vm1723, %v1672
        %1736 = vst.msk [vmem:[#allocation2 + $0x58] sm:$0xf] %vm1725, %v1674
        %1737 = vst.msk [vmem:[#allocation2 + $0x60] sm:$0xff] %vm1723, %v1676
        %1738 = vst.msk [vmem:[#allocation2 + $0x68] sm:$0xf] %vm1725, %v1678
        %1739 = vst.msk [vmem:[#allocation2 + $0x70] sm:$0xff] %vm1723, %v1680
        %1740 = vst.msk [vmem:[#allocation2 + $0x78] sm:$0xf] %vm1725, %v1682
        %1741 = vst.msk [vmem:[#allocation2 + $0x80] sm:$0xff] %vm1723, %v1684
        %1742 = vst.msk [vmem:[#allocation2 + $0x88] sm:$0xf] %vm1725, %v1686
        %1743 = vst.msk [vmem:[#allocation2 + $0x90] sm:$0xff] %vm1723, %v1688
        %1744 = vst.msk [vmem:[#allocation2 + $0x98] sm:$0xf] %vm1725, %v1690
        %1745 = vst.msk [vmem:[#allocation2 + $0xa0] sm:$0xff] %vm1723, %v1692
        %1746 = vst.msk [vmem:[#allocation2 + $0xa8] sm:$0xf] %vm1725, %v1694
        %1747 = vst.msk [vmem:[#allocation2 + $0xb0] sm:$0xff] %vm1723, %v1696
        %1748 = vst.msk [vmem:[#allocation2 + $0xb8] sm:$0xf] %vm1725, %v1698
        %s1749 = scalar_lea.vmem %s383, 32
        %v1750 = vld [vmem:[%s1749] sm:$0xff]
        %v1751 = vld [vmem:[%s1749 + $0x8] sm:$0xf]
        %v1752 = vld [vmem:[%s1749 + $0x10] sm:$0xff]
        %v1753 = vld [vmem:[%s1749 + $0x18] sm:$0xf]
        %v1754 = vld [vmem:[%s1749 + $0x20] sm:$0xff]
        %v1755 = vld [vmem:[%s1749 + $0x28] sm:$0xf]
        %v1756 = vld [vmem:[%s1749 + $0x30] sm:$0xff]
        %v1757 = vld [vmem:[%s1749 + $0x38] sm:$0xf]
        %v1758 = vld [vmem:[%s1749 + $0x40] sm:$0xff]
        %v1759 = vld [vmem:[%s1749 + $0x48] sm:$0xf]
        %v1760 = vld [vmem:[%s1749 + $0x50] sm:$0xff]
        %v1761 = vld [vmem:[%s1749 + $0x58] sm:$0xf]
        %v1762 = vld [vmem:[%s1749 + $0x60] sm:$0xff]
        %v1763 = vld [vmem:[%s1749 + $0x68] sm:$0xf]
        %v1764 = vld [vmem:[%s1749 + $0x70] sm:$0xff]
        %v1765 = vld [vmem:[%s1749 + $0x78] sm:$0xf]
        %v1766 = vld [vmem:[%s1749 + $0x80] sm:$0xff]
        %v1767 = vld [vmem:[%s1749 + $0x88] sm:$0xf]
        %v1768 = vld [vmem:[%s1749 + $0x90] sm:$0xff]
        %v1769 = vld [vmem:[%s1749 + $0x98] sm:$0xf]
        %v1770 = vld [vmem:[%s1749 + $0xa0] sm:$0xff]
        %v1771 = vld [vmem:[%s1749 + $0xa8] sm:$0xf]
        %v1772 = vld [vmem:[%s1749 + $0xb0] sm:$0xff]
        %v1773 = vld [vmem:[%s1749 + $0xb8] sm:$0xf]
        %1798 = vrot.lane.b32.xlu0 %v1750, 30
        %v1799 = vpop.permute.xlu0 %1798
        %1800 = vrot.lane.b32.xlu0 %v1751, 30
        %v1801 = vpop.permute.xlu0 %1800
        %1802 = vrot.lane.b32.xlu0 %v1752, 30
        %v1803 = vpop.permute.xlu0 %1802
        %1804 = vrot.lane.b32.xlu0 %v1753, 30
        %v1805 = vpop.permute.xlu0 %1804
        %1806 = vrot.lane.b32.xlu0 %v1754, 30
        %v1807 = vpop.permute.xlu0 %1806
        %1808 = vrot.lane.b32.xlu0 %v1755, 30
        %v1809 = vpop.permute.xlu0 %1808
        %1810 = vrot.lane.b32.xlu0 %v1756, 30
        %v1811 = vpop.permute.xlu0 %1810
        %1812 = vrot.lane.b32.xlu0 %v1757, 30
        %v1813 = vpop.permute.xlu0 %1812
        %1814 = vrot.lane.b32.xlu0 %v1758, 30
        %v1815 = vpop.permute.xlu0 %1814
        %1816 = vrot.lane.b32.xlu0 %v1759, 30
        %v1817 = vpop.permute.xlu0 %1816
        %1818 = vrot.lane.b32.xlu0 %v1760, 30
        %v1819 = vpop.permute.xlu0 %1818
        %1820 = vrot.lane.b32.xlu0 %v1761, 30
        %v1821 = vpop.permute.xlu0 %1820
        %1822 = vrot.lane.b32.xlu0 %v1762, 30
        %v1823 = vpop.permute.xlu0 %1822
        %1824 = vrot.lane.b32.xlu0 %v1763, 30
        %v1825 = vpop.permute.xlu0 %1824
        %1826 = vrot.lane.b32.xlu0 %v1764, 30
        %v1827 = vpop.permute.xlu0 %1826
        %1828 = vrot.lane.b32.xlu0 %v1765, 30
        %v1829 = vpop.permute.xlu0 %1828
        %1830 = vrot.lane.b32.xlu0 %v1766, 30
        %v1831 = vpop.permute.xlu0 %1830
        %1832 = vrot.lane.b32.xlu0 %v1767, 30
        %v1833 = vpop.permute.xlu0 %1832
        %1834 = vrot.lane.b32.xlu0 %v1768, 30
        %v1835 = vpop.permute.xlu0 %1834
        %1836 = vrot.lane.b32.xlu0 %v1769, 30
        %v1837 = vpop.permute.xlu0 %1836
        %1838 = vrot.lane.b32.xlu0 %v1770, 30
        %v1839 = vpop.permute.xlu0 %1838
        %1840 = vrot.lane.b32.xlu0 %v1771, 30
        %v1841 = vpop.permute.xlu0 %1840
        %1842 = vrot.lane.b32.xlu0 %v1772, 30
        %v1843 = vpop.permute.xlu0 %1842
        %1844 = vrot.lane.b32.xlu0 %v1773, 30
        %v1845 = vpop.permute.xlu0 %1844
        %vm1870 = vcmask 269552
        %1871 = vst.msk [vmem:[#allocation2] sm:$0xff] %vm1870, %v1799
        %vm1872 = vcmask 265456
        %1873 = vst.msk [vmem:[#allocation2 + $0x8] sm:$0xf] %vm1872, %v1801
        %1874 = vst.msk [vmem:[#allocation2 + $0x10] sm:$0xff] %vm1870, %v1803
        %1875 = vst.msk [vmem:[#allocation2 + $0x18] sm:$0xf] %vm1872, %v1805
        %1876 = vst.msk [vmem:[#allocation2 + $0x20] sm:$0xff] %vm1870, %v1807
        %1877 = vst.msk [vmem:[#allocation2 + $0x28] sm:$0xf] %vm1872, %v1809
        %1878 = vst.msk [vmem:[#allocation2 + $0x30] sm:$0xff] %vm1870, %v1811
        %1879 = vst.msk [vmem:[#allocation2 + $0x38] sm:$0xf] %vm1872, %v1813
        %1880 = vst.msk [vmem:[#allocation2 + $0x40] sm:$0xff] %vm1870, %v1815
        %1881 = vst.msk [vmem:[#allocation2 + $0x48] sm:$0xf] %vm1872, %v1817
        %1882 = vst.msk [vmem:[#allocation2 + $0x50] sm:$0xff] %vm1870, %v1819
        %1883 = vst.msk [vmem:[#allocation2 + $0x58] sm:$0xf] %vm1872, %v1821
        %1884 = vst.msk [vmem:[#allocation2 + $0x60] sm:$0xff] %vm1870, %v1823
        %1885 = vst.msk [vmem:[#allocation2 + $0x68] sm:$0xf] %vm1872, %v1825
        %1886 = vst.msk [vmem:[#allocation2 + $0x70] sm:$0xff] %vm1870, %v1827
        %1887 = vst.msk [vmem:[#allocation2 + $0x78] sm:$0xf] %vm1872, %v1829
        %1888 = vst.msk [vmem:[#allocation2 + $0x80] sm:$0xff] %vm1870, %v1831
        %1889 = vst.msk [vmem:[#allocation2 + $0x88] sm:$0xf] %vm1872, %v1833
        %1890 = vst.msk [vmem:[#allocation2 + $0x90] sm:$0xff] %vm1870, %v1835
        %1891 = vst.msk [vmem:[#allocation2 + $0x98] sm:$0xf] %vm1872, %v1837
        %1892 = vst.msk [vmem:[#allocation2 + $0xa0] sm:$0xff] %vm1870, %v1839
        %1893 = vst.msk [vmem:[#allocation2 + $0xa8] sm:$0xf] %vm1872, %v1841
        %1894 = vst.msk [vmem:[#allocation2 + $0xb0] sm:$0xff] %vm1870, %v1843
        %1895 = vst.msk [vmem:[#allocation2 + $0xb8] sm:$0xf] %vm1872, %v1845
        %v1896 = vld [vmem:[%s1749 + $0x1] sm:$0xff]
        %v1897 = vld [vmem:[%s1749 + $0x9] sm:$0xf]
        %v1898 = vld [vmem:[%s1749 + $0x11] sm:$0xff]
        %v1899 = vld [vmem:[%s1749 + $0x19] sm:$0xf]
        %v1900 = vld [vmem:[%s1749 + $0x21] sm:$0xff]
        %v1901 = vld [vmem:[%s1749 + $0x29] sm:$0xf]
        %v1902 = vld [vmem:[%s1749 + $0x31] sm:$0xff]
        %v1903 = vld [vmem:[%s1749 + $0x39] sm:$0xf]
        %v1904 = vld [vmem:[%s1749 + $0x41] sm:$0xff]
        %v1905 = vld [vmem:[%s1749 + $0x49] sm:$0xf]
        %v1906 = vld [vmem:[%s1749 + $0x51] sm:$0xff]
        %v1907 = vld [vmem:[%s1749 + $0x59] sm:$0xf]
        %v1908 = vld [vmem:[%s1749 + $0x61] sm:$0xff]
        %v1909 = vld [vmem:[%s1749 + $0x69] sm:$0xf]
        %v1910 = vld [vmem:[%s1749 + $0x71] sm:$0xff]
        %v1911 = vld [vmem:[%s1749 + $0x79] sm:$0xf]
        %v1912 = vld [vmem:[%s1749 + $0x81] sm:$0xff]
        %v1913 = vld [vmem:[%s1749 + $0x89] sm:$0xf]
        %v1914 = vld [vmem:[%s1749 + $0x91] sm:$0xff]
        %v1915 = vld [vmem:[%s1749 + $0x99] sm:$0xf]
        %v1916 = vld [vmem:[%s1749 + $0xa1] sm:$0xff]
        %v1917 = vld [vmem:[%s1749 + $0xa9] sm:$0xf]
        %v1918 = vld [vmem:[%s1749 + $0xb1] sm:$0xff]
        %v1919 = vld [vmem:[%s1749 + $0xb9] sm:$0xf]
        %1944 = vrot.lane.b32.xlu0 %v1896, 33
        %v1945 = vpop.permute.xlu0 %1944
        %1946 = vrot.lane.b32.xlu0 %v1897, 33
        %v1947 = vpop.permute.xlu0 %1946
        %1948 = vrot.lane.b32.xlu0 %v1898, 33
        %v1949 = vpop.permute.xlu0 %1948
        %1950 = vrot.lane.b32.xlu0 %v1899, 33
        %v1951 = vpop.permute.xlu0 %1950
        %1952 = vrot.lane.b32.xlu0 %v1900, 33
        %v1953 = vpop.permute.xlu0 %1952
        %1954 = vrot.lane.b32.xlu0 %v1901, 33
        %v1955 = vpop.permute.xlu0 %1954
        %1956 = vrot.lane.b32.xlu0 %v1902, 33
        %v1957 = vpop.permute.xlu0 %1956
        %1958 = vrot.lane.b32.xlu0 %v1903, 33
        %v1959 = vpop.permute.xlu0 %1958
        %1960 = vrot.lane.b32.xlu0 %v1904, 33
        %v1961 = vpop.permute.xlu0 %1960
        %1962 = vrot.lane.b32.xlu0 %v1905, 33
        %v1963 = vpop.permute.xlu0 %1962
        %1964 = vrot.lane.b32.xlu0 %v1906, 33
        %v1965 = vpop.permute.xlu0 %1964
        %1966 = vrot.lane.b32.xlu0 %v1907, 33
        %v1967 = vpop.permute.xlu0 %1966
        %1968 = vrot.lane.b32.xlu0 %v1908, 33
        %v1969 = vpop.permute.xlu0 %1968
        %1970 = vrot.lane.b32.xlu0 %v1909, 33
        %v1971 = vpop.permute.xlu0 %1970
        %1972 = vrot.lane.b32.xlu0 %v1910, 33
        %v1973 = vpop.permute.xlu0 %1972
        %1974 = vrot.lane.b32.xlu0 %v1911, 33
        %v1975 = vpop.permute.xlu0 %1974
        %1976 = vrot.lane.b32.xlu0 %v1912, 33
        %v1977 = vpop.permute.xlu0 %1976
        %1978 = vrot.lane.b32.xlu0 %v1913, 33
        %v1979 = vpop.permute.xlu0 %1978
        %1980 = vrot.lane.b32.xlu0 %v1914, 33
        %v1981 = vpop.permute.xlu0 %1980
        %1982 = vrot.lane.b32.xlu0 %v1915, 33
        %v1983 = vpop.permute.xlu0 %1982
        %1984 = vrot.lane.b32.xlu0 %v1916, 33
        %v1985 = vpop.permute.xlu0 %1984
        %1986 = vrot.lane.b32.xlu0 %v1917, 33
        %v1987 = vpop.permute.xlu0 %1986
        %1988 = vrot.lane.b32.xlu0 %v1918, 33
        %v1989 = vpop.permute.xlu0 %1988
        %1990 = vrot.lane.b32.xlu0 %v1919, 33
        %v1991 = vpop.permute.xlu0 %1990
        %vm2016 = vcmask 294152
        %2017 = vst.msk [vmem:[#allocation2] sm:$0xff] %vm2016, %v1945
        %vm2018 = vcmask 290056
        %2019 = vst.msk [vmem:[#allocation2 + $0x8] sm:$0xf] %vm2018, %v1947
        %2020 = vst.msk [vmem:[#allocation2 + $0x10] sm:$0xff] %vm2016, %v1949
        %2021 = vst.msk [vmem:[#allocation2 + $0x18] sm:$0xf] %vm2018, %v1951
        %2022 = vst.msk [vmem:[#allocation2 + $0x20] sm:$0xff] %vm2016, %v1953
        %2023 = vst.msk [vmem:[#allocation2 + $0x28] sm:$0xf] %vm2018, %v1955
        %2024 = vst.msk [vmem:[#allocation2 + $0x30] sm:$0xff] %vm2016, %v1957
        %2025 = vst.msk [vmem:[#allocation2 + $0x38] sm:$0xf] %vm2018, %v1959
        %2026 = vst.msk [vmem:[#allocation2 + $0x40] sm:$0xff] %vm2016, %v1961
        %2027 = vst.msk [vmem:[#allocation2 + $0x48] sm:$0xf] %vm2018, %v1963
        %2028 = vst.msk [vmem:[#allocation2 + $0x50] sm:$0xff] %vm2016, %v1965
        %2029 = vst.msk [vmem:[#allocation2 + $0x58] sm:$0xf] %vm2018, %v1967
        %2030 = vst.msk [vmem:[#allocation2 + $0x60] sm:$0xff] %vm2016, %v1969
        %2031 = vst.msk [vmem:[#allocation2 + $0x68] sm:$0xf] %vm2018, %v1971
        %2032 = vst.msk [vmem:[#allocation2 + $0x70] sm:$0xff] %vm2016, %v1973
        %2033 = vst.msk [vmem:[#allocation2 + $0x78] sm:$0xf] %vm2018, %v1975
        %2034 = vst.msk [vmem:[#allocation2 + $0x80] sm:$0xff] %vm2016, %v1977
        %2035 = vst.msk [vmem:[#allocation2 + $0x88] sm:$0xf] %vm2018, %v1979
        %2036 = vst.msk [vmem:[#allocation2 + $0x90] sm:$0xff] %vm2016, %v1981
        %2037 = vst.msk [vmem:[#allocation2 + $0x98] sm:$0xf] %vm2018, %v1983
        %2038 = vst.msk [vmem:[#allocation2 + $0xa0] sm:$0xff] %vm2016, %v1985
        %2039 = vst.msk [vmem:[#allocation2 + $0xa8] sm:$0xf] %vm2018, %v1987
        %2040 = vst.msk [vmem:[#allocation2 + $0xb0] sm:$0xff] %vm2016, %v1989
        %2041 = vst.msk [vmem:[#allocation2 + $0xb8] sm:$0xf] %vm2018, %v1991
        %v2042 = vld [vmem:[%s1749 + $0x2] sm:$0xff]
        %v2043 = vld [vmem:[%s1749 + $0xa] sm:$0xf]
        %v2044 = vld [vmem:[%s1749 + $0x12] sm:$0xff]
        %v2045 = vld [vmem:[%s1749 + $0x1a] sm:$0xf]
        %v2046 = vld [vmem:[%s1749 + $0x22] sm:$0xff]
        %v2047 = vld [vmem:[%s1749 + $0x2a] sm:$0xf]
        %v2048 = vld [vmem:[%s1749 + $0x32] sm:$0xff]
        %v2049 = vld [vmem:[%s1749 + $0x3a] sm:$0xf]
        %v2050 = vld [vmem:[%s1749 + $0x42] sm:$0xff]
        %v2051 = vld [vmem:[%s1749 + $0x4a] sm:$0xf]
        %v2052 = vld [vmem:[%s1749 + $0x52] sm:$0xff]
        %v2053 = vld [vmem:[%s1749 + $0x5a] sm:$0xf]
        %v2054 = vld [vmem:[%s1749 + $0x62] sm:$0xff]
        %v2055 = vld [vmem:[%s1749 + $0x6a] sm:$0xf]
        %v2056 = vld [vmem:[%s1749 + $0x72] sm:$0xff]
        %v2057 = vld [vmem:[%s1749 + $0x7a] sm:$0xf]
        %v2058 = vld [vmem:[%s1749 + $0x82] sm:$0xff]
        %v2059 = vld [vmem:[%s1749 + $0x8a] sm:$0xf]
        %v2060 = vld [vmem:[%s1749 + $0x92] sm:$0xff]
        %v2061 = vld [vmem:[%s1749 + $0x9a] sm:$0xf]
        %v2062 = vld [vmem:[%s1749 + $0xa2] sm:$0xff]
        %v2063 = vld [vmem:[%s1749 + $0xaa] sm:$0xf]
        %v2064 = vld [vmem:[%s1749 + $0xb2] sm:$0xff]
        %v2065 = vld [vmem:[%s1749 + $0xba] sm:$0xf]
        %2090 = vrot.lane.b32.xlu0 %v2042, 36
        %v2091 = vpop.permute.xlu0 %2090
        %2092 = vrot.lane.b32.xlu0 %v2043, 36
        %v2093 = vpop.permute.xlu0 %2092
        %2094 = vrot.lane.b32.xlu0 %v2044, 36
        %v2095 = vpop.permute.xlu0 %2094
        %2096 = vrot.lane.b32.xlu0 %v2045, 36
        %v2097 = vpop.permute.xlu0 %2096
        %2098 = vrot.lane.b32.xlu0 %v2046, 36
        %v2099 = vpop.permute.xlu0 %2098
        %2100 = vrot.lane.b32.xlu0 %v2047, 36
        %v2101 = vpop.permute.xlu0 %2100
        %2102 = vrot.lane.b32.xlu0 %v2048, 36
        %v2103 = vpop.permute.xlu0 %2102
        %2104 = vrot.lane.b32.xlu0 %v2049, 36
        %v2105 = vpop.permute.xlu0 %2104
        %2106 = vrot.lane.b32.xlu0 %v2050, 36
        %v2107 = vpop.permute.xlu0 %2106
        %2108 = vrot.lane.b32.xlu0 %v2051, 36
        %v2109 = vpop.permute.xlu0 %2108
        %2110 = vrot.lane.b32.xlu0 %v2052, 36
        %v2111 = vpop.permute.xlu0 %2110
        %2112 = vrot.lane.b32.xlu0 %v2053, 36
        %v2113 = vpop.permute.xlu0 %2112
        %2114 = vrot.lane.b32.xlu0 %v2054, 36
        %v2115 = vpop.permute.xlu0 %2114
        %2116 = vrot.lane.b32.xlu0 %v2055, 36
        %v2117 = vpop.permute.xlu0 %2116
        %2118 = vrot.lane.b32.xlu0 %v2056, 36
        %v2119 = vpop.permute.xlu0 %2118
        %2120 = vrot.lane.b32.xlu0 %v2057, 36
        %v2121 = vpop.permute.xlu0 %2120
        %2122 = vrot.lane.b32.xlu0 %v2058, 36
        %v2123 = vpop.permute.xlu0 %2122
        %2124 = vrot.lane.b32.xlu0 %v2059, 36
        %v2125 = vpop.permute.xlu0 %2124
        %2126 = vrot.lane.b32.xlu0 %v2060, 36
        %v2127 = vpop.permute.xlu0 %2126
        %2128 = vrot.lane.b32.xlu0 %v2061, 36
        %v2129 = vpop.permute.xlu0 %2128
        %2130 = vrot.lane.b32.xlu0 %v2062, 36
        %v2131 = vpop.permute.xlu0 %2130
        %2132 = vrot.lane.b32.xlu0 %v2063, 36
        %v2133 = vpop.permute.xlu0 %2132
        %2134 = vrot.lane.b32.xlu0 %v2064, 36
        %v2135 = vpop.permute.xlu0 %2134
        %2136 = vrot.lane.b32.xlu0 %v2065, 36
        %v2137 = vpop.permute.xlu0 %2136
        %vm2162 = vcmask 318752
        %2163 = vst.msk [vmem:[#allocation2] sm:$0xff] %vm2162, %v2091
        %vm2164 = vcmask 314656
        %2165 = vst.msk [vmem:[#allocation2 + $0x8] sm:$0xf] %vm2164, %v2093
        %2166 = vst.msk [vmem:[#allocation2 + $0x10] sm:$0xff] %vm2162, %v2095
        %2167 = vst.msk [vmem:[#allocation2 + $0x18] sm:$0xf] %vm2164, %v2097
        %2168 = vst.msk [vmem:[#allocation2 + $0x20] sm:$0xff] %vm2162, %v2099
        %2169 = vst.msk [vmem:[#allocation2 + $0x28] sm:$0xf] %vm2164, %v2101
        %2170 = vst.msk [vmem:[#allocation2 + $0x30] sm:$0xff] %vm2162, %v2103
        %2171 = vst.msk [vmem:[#allocation2 + $0x38] sm:$0xf] %vm2164, %v2105
        %2172 = vst.msk [vmem:[#allocation2 + $0x40] sm:$0xff] %vm2162, %v2107
        %2173 = vst.msk [vmem:[#allocation2 + $0x48] sm:$0xf] %vm2164, %v2109
        %2174 = vst.msk [vmem:[#allocation2 + $0x50] sm:$0xff] %vm2162, %v2111
        %2175 = vst.msk [vmem:[#allocation2 + $0x58] sm:$0xf] %vm2164, %v2113
        %2176 = vst.msk [vmem:[#allocation2 + $0x60] sm:$0xff] %vm2162, %v2115
        %2177 = vst.msk [vmem:[#allocation2 + $0x68] sm:$0xf] %vm2164, %v2117
        %2178 = vst.msk [vmem:[#allocation2 + $0x70] sm:$0xff] %vm2162, %v2119
        %2179 = vst.msk [vmem:[#allocation2 + $0x78] sm:$0xf] %vm2164, %v2121
        %2180 = vst.msk [vmem:[#allocation2 + $0x80] sm:$0xff] %vm2162, %v2123
        %2181 = vst.msk [vmem:[#allocation2 + $0x88] sm:$0xf] %vm2164, %v2125
        %2182 = vst.msk [vmem:[#allocation2 + $0x90] sm:$0xff] %vm2162, %v2127
        %2183 = vst.msk [vmem:[#allocation2 + $0x98] sm:$0xf] %vm2164, %v2129
        %2184 = vst.msk [vmem:[#allocation2 + $0xa0] sm:$0xff] %vm2162, %v2131
        %2185 = vst.msk [vmem:[#allocation2 + $0xa8] sm:$0xf] %vm2164, %v2133
        %2186 = vst.msk [vmem:[#allocation2 + $0xb0] sm:$0xff] %vm2162, %v2135
        %2187 = vst.msk [vmem:[#allocation2 + $0xb8] sm:$0xf] %vm2164, %v2137
        %v2188 = vld [vmem:[%s1749 + $0x3] sm:$0xff]
        %v2189 = vld [vmem:[%s1749 + $0xb] sm:$0xf]
        %v2190 = vld [vmem:[%s1749 + $0x13] sm:$0xff]
        %v2191 = vld [vmem:[%s1749 + $0x1b] sm:$0xf]
        %v2192 = vld [vmem:[%s1749 + $0x23] sm:$0xff]
        %v2193 = vld [vmem:[%s1749 + $0x2b] sm:$0xf]
        %v2194 = vld [vmem:[%s1749 + $0x33] sm:$0xff]
        %v2195 = vld [vmem:[%s1749 + $0x3b] sm:$0xf]
        %v2196 = vld [vmem:[%s1749 + $0x43] sm:$0xff]
        %v2197 = vld [vmem:[%s1749 + $0x4b] sm:$0xf]
        %v2198 = vld [vmem:[%s1749 + $0x53] sm:$0xff]
        %v2199 = vld [vmem:[%s1749 + $0x5b] sm:$0xf]
        %v2200 = vld [vmem:[%s1749 + $0x63] sm:$0xff]
        %v2201 = vld [vmem:[%s1749 + $0x6b] sm:$0xf]
        %v2202 = vld [vmem:[%s1749 + $0x73] sm:$0xff]
        %v2203 = vld [vmem:[%s1749 + $0x7b] sm:$0xf]
        %v2204 = vld [vmem:[%s1749 + $0x83] sm:$0xff]
        %v2205 = vld [vmem:[%s1749 + $0x8b] sm:$0xf]
        %v2206 = vld [vmem:[%s1749 + $0x93] sm:$0xff]
        %v2207 = vld [vmem:[%s1749 + $0x9b] sm:$0xf]
        %v2208 = vld [vmem:[%s1749 + $0xa3] sm:$0xff]
        %v2209 = vld [vmem:[%s1749 + $0xab] sm:$0xf]
        %v2210 = vld [vmem:[%s1749 + $0xb3] sm:$0xff]
        %v2211 = vld [vmem:[%s1749 + $0xbb] sm:$0xf]
        %2236 = vrot.lane.b32.xlu0 %v2188, 39
        %v2237 = vpop.permute.xlu0 %2236
        %2238 = vrot.lane.b32.xlu0 %v2189, 39
        %v2239 = vpop.permute.xlu0 %2238
        %2240 = vrot.lane.b32.xlu0 %v2190, 39
        %v2241 = vpop.permute.xlu0 %2240
        %2242 = vrot.lane.b32.xlu0 %v2191, 39
        %v2243 = vpop.permute.xlu0 %2242
        %2244 = vrot.lane.b32.xlu0 %v2192, 39
        %v2245 = vpop.permute.xlu0 %2244
        %2246 = vrot.lane.b32.xlu0 %v2193, 39
        %v2247 = vpop.permute.xlu0 %2246
        %2248 = vrot.lane.b32.xlu0 %v2194, 39
        %v2249 = vpop.permute.xlu0 %2248
        %2250 = vrot.lane.b32.xlu0 %v2195, 39
        %v2251 = vpop.permute.xlu0 %2250
        %2252 = vrot.lane.b32.xlu0 %v2196, 39
        %v2253 = vpop.permute.xlu0 %2252
        %2254 = vrot.lane.b32.xlu0 %v2197, 39
        %v2255 = vpop.permute.xlu0 %2254
        %2256 = vrot.lane.b32.xlu0 %v2198, 39
        %v2257 = vpop.permute.xlu0 %2256
        %2258 = vrot.lane.b32.xlu0 %v2199, 39
        %v2259 = vpop.permute.xlu0 %2258
        %2260 = vrot.lane.b32.xlu0 %v2200, 39
        %v2261 = vpop.permute.xlu0 %2260
        %2262 = vrot.lane.b32.xlu0 %v2201, 39
        %v2263 = vpop.permute.xlu0 %2262
        %2264 = vrot.lane.b32.xlu0 %v2202, 39
        %v2265 = vpop.permute.xlu0 %2264
        %2266 = vrot.lane.b32.xlu0 %v2203, 39
        %v2267 = vpop.permute.xlu0 %2266
        %2268 = vrot.lane.b32.xlu0 %v2204, 39
        %v2269 = vpop.permute.xlu0 %2268
        %2270 = vrot.lane.b32.xlu0 %v2205, 39
        %v2271 = vpop.permute.xlu0 %2270
        %2272 = vrot.lane.b32.xlu0 %v2206, 39
        %v2273 = vpop.permute.xlu0 %2272
        %2274 = vrot.lane.b32.xlu0 %v2207, 39
        %v2275 = vpop.permute.xlu0 %2274
        %2276 = vrot.lane.b32.xlu0 %v2208, 39
        %v2277 = vpop.permute.xlu0 %2276
        %2278 = vrot.lane.b32.xlu0 %v2209, 39
        %v2279 = vpop.permute.xlu0 %2278
        %2280 = vrot.lane.b32.xlu0 %v2210, 39
        %v2281 = vpop.permute.xlu0 %2280
        %2282 = vrot.lane.b32.xlu0 %v2211, 39
        %v2283 = vpop.permute.xlu0 %2282
        %vm2308 = vcmask 343352
        %2309 = vst.msk [vmem:[#allocation2] sm:$0xff] %vm2308, %v2237
        %vm2310 = vcmask 339256
        %2311 = vst.msk [vmem:[#allocation2 + $0x8] sm:$0xf] %vm2310, %v2239
        %2312 = vst.msk [vmem:[#allocation2 + $0x10] sm:$0xff] %vm2308, %v2241
        %2313 = vst.msk [vmem:[#allocation2 + $0x18] sm:$0xf] %vm2310, %v2243
        %2314 = vst.msk [vmem:[#allocation2 + $0x20] sm:$0xff] %vm2308, %v2245
        %2315 = vst.msk [vmem:[#allocation2 + $0x28] sm:$0xf] %vm2310, %v2247
        %2316 = vst.msk [vmem:[#allocation2 + $0x30] sm:$0xff] %vm2308, %v2249
        %2317 = vst.msk [vmem:[#allocation2 + $0x38] sm:$0xf] %vm2310, %v2251
        %2318 = vst.msk [vmem:[#allocation2 + $0x40] sm:$0xff] %vm2308, %v2253
        %2319 = vst.msk [vmem:[#allocation2 + $0x48] sm:$0xf] %vm2310, %v2255
        %2320 = vst.msk [vmem:[#allocation2 + $0x50] sm:$0xff] %vm2308, %v2257
        %2321 = vst.msk [vmem:[#allocation2 + $0x58] sm:$0xf] %vm2310, %v2259
        %2322 = vst.msk [vmem:[#allocation2 + $0x60] sm:$0xff] %vm2308, %v2261
        %2323 = vst.msk [vmem:[#allocation2 + $0x68] sm:$0xf] %vm2310, %v2263
        %2324 = vst.msk [vmem:[#allocation2 + $0x70] sm:$0xff] %vm2308, %v2265
        %2325 = vst.msk [vmem:[#allocation2 + $0x78] sm:$0xf] %vm2310, %v2267
        %2326 = vst.msk [vmem:[#allocation2 + $0x80] sm:$0xff] %vm2308, %v2269
        %2327 = vst.msk [vmem:[#allocation2 + $0x88] sm:$0xf] %vm2310, %v2271
        %2328 = vst.msk [vmem:[#allocation2 + $0x90] sm:$0xff] %vm2308, %v2273
        %2329 = vst.msk [vmem:[#allocation2 + $0x98] sm:$0xf] %vm2310, %v2275
        %2330 = vst.msk [vmem:[#allocation2 + $0xa0] sm:$0xff] %vm2308, %v2277
        %2331 = vst.msk [vmem:[#allocation2 + $0xa8] sm:$0xf] %vm2310, %v2279
        %2332 = vst.msk [vmem:[#allocation2 + $0xb0] sm:$0xff] %vm2308, %v2281
        %2333 = vst.msk [vmem:[#allocation2 + $0xb8] sm:$0xf] %vm2310, %v2283
        %v2334 = vld [vmem:[%s1749 + $0x4] sm:$0xff]
        %v2335 = vld [vmem:[%s1749 + $0xc] sm:$0xf]
        %v2336 = vld [vmem:[%s1749 + $0x14] sm:$0xff]
        %v2337 = vld [vmem:[%s1749 + $0x1c] sm:$0xf]
        %v2338 = vld [vmem:[%s1749 + $0x24] sm:$0xff]
        %v2339 = vld [vmem:[%s1749 + $0x2c] sm:$0xf]
        %v2340 = vld [vmem:[%s1749 + $0x34] sm:$0xff]
        %v2341 = vld [vmem:[%s1749 + $0x3c] sm:$0xf]
        %v2342 = vld [vmem:[%s1749 + $0x44] sm:$0xff]
        %v2343 = vld [vmem:[%s1749 + $0x4c] sm:$0xf]
        %v2344 = vld [vmem:[%s1749 + $0x54] sm:$0xff]
        %v2345 = vld [vmem:[%s1749 + $0x5c] sm:$0xf]
        %v2346 = vld [vmem:[%s1749 + $0x64] sm:$0xff]
        %v2347 = vld [vmem:[%s1749 + $0x6c] sm:$0xf]
        %v2348 = vld [vmem:[%s1749 + $0x74] sm:$0xff]
        %v2349 = vld [vmem:[%s1749 + $0x7c] sm:$0xf]
        %v2350 = vld [vmem:[%s1749 + $0x84] sm:$0xff]
        %v2351 = vld [vmem:[%s1749 + $0x8c] sm:$0xf]
        %v2352 = vld [vmem:[%s1749 + $0x94] sm:$0xff]
        %v2353 = vld [vmem:[%s1749 + $0x9c] sm:$0xf]
        %v2354 = vld [vmem:[%s1749 + $0xa4] sm:$0xff]
        %v2355 = vld [vmem:[%s1749 + $0xac] sm:$0xf]
        %v2356 = vld [vmem:[%s1749 + $0xb4] sm:$0xff]
        %v2357 = vld [vmem:[%s1749 + $0xbc] sm:$0xf]
        %2382 = vrot.lane.b32.xlu0 %v2334, 42
        %v2383 = vpop.permute.xlu0 %2382
        %2384 = vrot.lane.b32.xlu0 %v2335, 42
        %v2385 = vpop.permute.xlu0 %2384
        %2386 = vrot.lane.b32.xlu0 %v2336, 42
        %v2387 = vpop.permute.xlu0 %2386
        %2388 = vrot.lane.b32.xlu0 %v2337, 42
        %v2389 = vpop.permute.xlu0 %2388
        %2390 = vrot.lane.b32.xlu0 %v2338, 42
        %v2391 = vpop.permute.xlu0 %2390
        %2392 = vrot.lane.b32.xlu0 %v2339, 42
        %v2393 = vpop.permute.xlu0 %2392
        %2394 = vrot.lane.b32.xlu0 %v2340, 42
        %v2395 = vpop.permute.xlu0 %2394
        %2396 = vrot.lane.b32.xlu0 %v2341, 42
        %v2397 = vpop.permute.xlu0 %2396
        %2398 = vrot.lane.b32.xlu0 %v2342, 42
        %v2399 = vpop.permute.xlu0 %2398
        %2400 = vrot.lane.b32.xlu0 %v2343, 42
        %v2401 = vpop.permute.xlu0 %2400
        %2402 = vrot.lane.b32.xlu0 %v2344, 42
        %v2403 = vpop.permute.xlu0 %2402
        %2404 = vrot.lane.b32.xlu0 %v2345, 42
        %v2405 = vpop.permute.xlu0 %2404
        %2406 = vrot.lane.b32.xlu0 %v2346, 42
        %v2407 = vpop.permute.xlu0 %2406
        %2408 = vrot.lane.b32.xlu0 %v2347, 42
        %v2409 = vpop.permute.xlu0 %2408
        %2410 = vrot.lane.b32.xlu0 %v2348, 42
        %v2411 = vpop.permute.xlu0 %2410
        %2412 = vrot.lane.b32.xlu0 %v2349, 42
        %v2413 = vpop.permute.xlu0 %2412
        %2414 = vrot.lane.b32.xlu0 %v2350, 42
        %v2415 = vpop.permute.xlu0 %2414
        %2416 = vrot.lane.b32.xlu0 %v2351, 42
        %v2417 = vpop.permute.xlu0 %2416
        %2418 = vrot.lane.b32.xlu0 %v2352, 42
        %v2419 = vpop.permute.xlu0 %2418
        %2420 = vrot.lane.b32.xlu0 %v2353, 42
        %v2421 = vpop.permute.xlu0 %2420
        %2422 = vrot.lane.b32.xlu0 %v2354, 42
        %v2423 = vpop.permute.xlu0 %2422
        %2424 = vrot.lane.b32.xlu0 %v2355, 42
        %v2425 = vpop.permute.xlu0 %2424
        %2426 = vrot.lane.b32.xlu0 %v2356, 42
        %v2427 = vpop.permute.xlu0 %2426
        %2428 = vrot.lane.b32.xlu0 %v2357, 42
        %v2429 = vpop.permute.xlu0 %2428
        %vm2454 = vcmask 367952
        %2455 = vst.msk [vmem:[#allocation2] sm:$0xff] %vm2454, %v2383
        %vm2456 = vcmask 363856
        %2457 = vst.msk [vmem:[#allocation2 + $0x8] sm:$0xf] %vm2456, %v2385
        %2458 = vst.msk [vmem:[#allocation2 + $0x10] sm:$0xff] %vm2454, %v2387
        %2459 = vst.msk [vmem:[#allocation2 + $0x18] sm:$0xf] %vm2456, %v2389
        %2460 = vst.msk [vmem:[#allocation2 + $0x20] sm:$0xff] %vm2454, %v2391
        %2461 = vst.msk [vmem:[#allocation2 + $0x28] sm:$0xf] %vm2456, %v2393
        %2462 = vst.msk [vmem:[#allocation2 + $0x30] sm:$0xff] %vm2454, %v2395
        %2463 = vst.msk [vmem:[#allocation2 + $0x38] sm:$0xf] %vm2456, %v2397
        %2464 = vst.msk [vmem:[#allocation2 + $0x40] sm:$0xff] %vm2454, %v2399
        %2465 = vst.msk [vmem:[#allocation2 + $0x48] sm:$0xf] %vm2456, %v2401
        %2466 = vst.msk [vmem:[#allocation2 + $0x50] sm:$0xff] %vm2454, %v2403
        %2467 = vst.msk [vmem:[#allocation2 + $0x58] sm:$0xf] %vm2456, %v2405
        %2468 = vst.msk [vmem:[#allocation2 + $0x60] sm:$0xff] %vm2454, %v2407
        %2469 = vst.msk [vmem:[#allocation2 + $0x68] sm:$0xf] %vm2456, %v2409
        %2470 = vst.msk [vmem:[#allocation2 + $0x70] sm:$0xff] %vm2454, %v2411
        %2471 = vst.msk [vmem:[#allocation2 + $0x78] sm:$0xf] %vm2456, %v2413
        %2472 = vst.msk [vmem:[#allocation2 + $0x80] sm:$0xff] %vm2454, %v2415
        %2473 = vst.msk [vmem:[#allocation2 + $0x88] sm:$0xf] %vm2456, %v2417
        %2474 = vst.msk [vmem:[#allocation2 + $0x90] sm:$0xff] %vm2454, %v2419
        %2475 = vst.msk [vmem:[#allocation2 + $0x98] sm:$0xf] %vm2456, %v2421
        %2476 = vst.msk [vmem:[#allocation2 + $0xa0] sm:$0xff] %vm2454, %v2423
        %2477 = vst.msk [vmem:[#allocation2 + $0xa8] sm:$0xf] %vm2456, %v2425
        %2478 = vst.msk [vmem:[#allocation2 + $0xb0] sm:$0xff] %vm2454, %v2427
        %2479 = vst.msk [vmem:[#allocation2 + $0xb8] sm:$0xf] %vm2456, %v2429
        %s2480 = scalar_lea.vmem %s383, 48
        %v2481 = vld [vmem:[%s2480] sm:$0xff]
        %v2482 = vld [vmem:[%s2480 + $0x8] sm:$0xf]
        %v2483 = vld [vmem:[%s2480 + $0x10] sm:$0xff]
        %v2484 = vld [vmem:[%s2480 + $0x18] sm:$0xf]
        %v2485 = vld [vmem:[%s2480 + $0x20] sm:$0xff]
        %v2486 = vld [vmem:[%s2480 + $0x28] sm:$0xf]
        %v2487 = vld [vmem:[%s2480 + $0x30] sm:$0xff]
        %v2488 = vld [vmem:[%s2480 + $0x38] sm:$0xf]
        %v2489 = vld [vmem:[%s2480 + $0x40] sm:$0xff]
        %v2490 = vld [vmem:[%s2480 + $0x48] sm:$0xf]
        %v2491 = vld [vmem:[%s2480 + $0x50] sm:$0xff]
        %v2492 = vld [vmem:[%s2480 + $0x58] sm:$0xf]
        %v2493 = vld [vmem:[%s2480 + $0x60] sm:$0xff]
        %v2494 = vld [vmem:[%s2480 + $0x68] sm:$0xf]
        %v2495 = vld [vmem:[%s2480 + $0x70] sm:$0xff]
        %v2496 = vld [vmem:[%s2480 + $0x78] sm:$0xf]
        %v2497 = vld [vmem:[%s2480 + $0x80] sm:$0xff]
        %v2498 = vld [vmem:[%s2480 + $0x88] sm:$0xf]
        %v2499 = vld [vmem:[%s2480 + $0x90] sm:$0xff]
        %v2500 = vld [vmem:[%s2480 + $0x98] sm:$0xf]
        %v2501 = vld [vmem:[%s2480 + $0xa0] sm:$0xff]
        %v2502 = vld [vmem:[%s2480 + $0xa8] sm:$0xf]
        %v2503 = vld [vmem:[%s2480 + $0xb0] sm:$0xff]
        %v2504 = vld [vmem:[%s2480 + $0xb8] sm:$0xf]
        %2529 = vrot.lane.b32.xlu0 %v2481, 45
        %v2530 = vpop.permute.xlu0 %2529
        %2531 = vrot.lane.b32.xlu0 %v2482, 45
        %v2532 = vpop.permute.xlu0 %2531
        %2533 = vrot.lane.b32.xlu0 %v2483, 45
        %v2534 = vpop.permute.xlu0 %2533
        %2535 = vrot.lane.b32.xlu0 %v2484, 45
        %v2536 = vpop.permute.xlu0 %2535
        %2537 = vrot.lane.b32.xlu0 %v2485, 45
        %v2538 = vpop.permute.xlu0 %2537
        %2539 = vrot.lane.b32.xlu0 %v2486, 45
        %v2540 = vpop.permute.xlu0 %2539
        %2541 = vrot.lane.b32.xlu0 %v2487, 45
        %v2542 = vpop.permute.xlu0 %2541
        %2543 = vrot.lane.b32.xlu0 %v2488, 45
        %v2544 = vpop.permute.xlu0 %2543
        %2545 = vrot.lane.b32.xlu0 %v2489, 45
        %v2546 = vpop.permute.xlu0 %2545
        %2547 = vrot.lane.b32.xlu0 %v2490, 45
        %v2548 = vpop.permute.xlu0 %2547
        %2549 = vrot.lane.b32.xlu0 %v2491, 45
        %v2550 = vpop.permute.xlu0 %2549
        %2551 = vrot.lane.b32.xlu0 %v2492, 45
        %v2552 = vpop.permute.xlu0 %2551
        %2553 = vrot.lane.b32.xlu0 %v2493, 45
        %v2554 = vpop.permute.xlu0 %2553
        %2555 = vrot.lane.b32.xlu0 %v2494, 45
        %v2556 = vpop.permute.xlu0 %2555
        %2557 = vrot.lane.b32.xlu0 %v2495, 45
        %v2558 = vpop.permute.xlu0 %2557
        %2559 = vrot.lane.b32.xlu0 %v2496, 45
        %v2560 = vpop.permute.xlu0 %2559
        %2561 = vrot.lane.b32.xlu0 %v2497, 45
        %v2562 = vpop.permute.xlu0 %2561
        %2563 = vrot.lane.b32.xlu0 %v2498, 45
        %v2564 = vpop.permute.xlu0 %2563
        %2565 = vrot.lane.b32.xlu0 %v2499, 45
        %v2566 = vpop.permute.xlu0 %2565
        %2567 = vrot.lane.b32.xlu0 %v2500, 45
        %v2568 = vpop.permute.xlu0 %2567
        %2569 = vrot.lane.b32.xlu0 %v2501, 45
        %v2570 = vpop.permute.xlu0 %2569
        %2571 = vrot.lane.b32.xlu0 %v2502, 45
        %v2572 = vpop.permute.xlu0 %2571
        %2573 = vrot.lane.b32.xlu0 %v2503, 45
        %v2574 = vpop.permute.xlu0 %2573
        %2575 = vrot.lane.b32.xlu0 %v2504, 45
        %v2576 = vpop.permute.xlu0 %2575
        %vm2601 = vcmask 392552
        %2602 = vst.msk [vmem:[#allocation2] sm:$0xff] %vm2601, %v2530
        %vm2603 = vcmask 388456
        %2604 = vst.msk [vmem:[#allocation2 + $0x8] sm:$0xf] %vm2603, %v2532
        %2605 = vst.msk [vmem:[#allocation2 + $0x10] sm:$0xff] %vm2601, %v2534
        %2606 = vst.msk [vmem:[#allocation2 + $0x18] sm:$0xf] %vm2603, %v2536
        %2607 = vst.msk [vmem:[#allocation2 + $0x20] sm:$0xff] %vm2601, %v2538
        %2608 = vst.msk [vmem:[#allocation2 + $0x28] sm:$0xf] %vm2603, %v2540
        %2609 = vst.msk [vmem:[#allocation2 + $0x30] sm:$0xff] %vm2601, %v2542
        %2610 = vst.msk [vmem:[#allocation2 + $0x38] sm:$0xf] %vm2603, %v2544
        %2611 = vst.msk [vmem:[#allocation2 + $0x40] sm:$0xff] %vm2601, %v2546
        %2612 = vst.msk [vmem:[#allocation2 + $0x48] sm:$0xf] %vm2603, %v2548
        %2613 = vst.msk [vmem:[#allocation2 + $0x50] sm:$0xff] %vm2601, %v2550
        %2614 = vst.msk [vmem:[#allocation2 + $0x58] sm:$0xf] %vm2603, %v2552
        %2615 = vst.msk [vmem:[#allocation2 + $0x60] sm:$0xff] %vm2601, %v2554
        %2616 = vst.msk [vmem:[#allocation2 + $0x68] sm:$0xf] %vm2603, %v2556
        %2617 = vst.msk [vmem:[#allocation2 + $0x70] sm:$0xff] %vm2601, %v2558
        %2618 = vst.msk [vmem:[#allocation2 + $0x78] sm:$0xf] %vm2603, %v2560
        %2619 = vst.msk [vmem:[#allocation2 + $0x80] sm:$0xff] %vm2601, %v2562
        %2620 = vst.msk [vmem:[#allocation2 + $0x88] sm:$0xf] %vm2603, %v2564
        %2621 = vst.msk [vmem:[#allocation2 + $0x90] sm:$0xff] %vm2601, %v2566
        %2622 = vst.msk [vmem:[#allocation2 + $0x98] sm:$0xf] %vm2603, %v2568
        %2623 = vst.msk [vmem:[#allocation2 + $0xa0] sm:$0xff] %vm2601, %v2570
        %2624 = vst.msk [vmem:[#allocation2 + $0xa8] sm:$0xf] %vm2603, %v2572
        %2625 = vst.msk [vmem:[#allocation2 + $0xb0] sm:$0xff] %vm2601, %v2574
        %2626 = vst.msk [vmem:[#allocation2 + $0xb8] sm:$0xf] %vm2603, %v2576
        %v2627 = vld [vmem:[%s2480 + $0x1] sm:$0xff]
        %v2628 = vld [vmem:[%s2480 + $0x9] sm:$0xf]
        %v2629 = vld [vmem:[%s2480 + $0x11] sm:$0xff]
        %v2630 = vld [vmem:[%s2480 + $0x19] sm:$0xf]
        %v2631 = vld [vmem:[%s2480 + $0x21] sm:$0xff]
        %v2632 = vld [vmem:[%s2480 + $0x29] sm:$0xf]
        %v2633 = vld [vmem:[%s2480 + $0x31] sm:$0xff]
        %v2634 = vld [vmem:[%s2480 + $0x39] sm:$0xf]
        %v2635 = vld [vmem:[%s2480 + $0x41] sm:$0xff]
        %v2636 = vld [vmem:[%s2480 + $0x49] sm:$0xf]
        %v2637 = vld [vmem:[%s2480 + $0x51] sm:$0xff]
        %v2638 = vld [vmem:[%s2480 + $0x59] sm:$0xf]
        %v2639 = vld [vmem:[%s2480 + $0x61] sm:$0xff]
        %v2640 = vld [vmem:[%s2480 + $0x69] sm:$0xf]
        %v2641 = vld [vmem:[%s2480 + $0x71] sm:$0xff]
        %v2642 = vld [vmem:[%s2480 + $0x79] sm:$0xf]
        %v2643 = vld [vmem:[%s2480 + $0x81] sm:$0xff]
        %v2644 = vld [vmem:[%s2480 + $0x89] sm:$0xf]
        %v2645 = vld [vmem:[%s2480 + $0x91] sm:$0xff]
        %v2646 = vld [vmem:[%s2480 + $0x99] sm:$0xf]
        %v2647 = vld [vmem:[%s2480 + $0xa1] sm:$0xff]
        %v2648 = vld [vmem:[%s2480 + $0xa9] sm:$0xf]
        %v2649 = vld [vmem:[%s2480 + $0xb1] sm:$0xff]
        %v2650 = vld [vmem:[%s2480 + $0xb9] sm:$0xf]
        %2675 = vrot.lane.b32.xlu0 %v2627, 48
        %v2676 = vpop.permute.xlu0 %2675
        %2677 = vrot.lane.b32.xlu0 %v2628, 48
        %v2678 = vpop.permute.xlu0 %2677
        %2679 = vrot.lane.b32.xlu0 %v2629, 48
        %v2680 = vpop.permute.xlu0 %2679
        %2681 = vrot.lane.b32.xlu0 %v2630, 48
        %v2682 = vpop.permute.xlu0 %2681
        %2683 = vrot.lane.b32.xlu0 %v2631, 48
        %v2684 = vpop.permute.xlu0 %2683
        %2685 = vrot.lane.b32.xlu0 %v2632, 48
        %v2686 = vpop.permute.xlu0 %2685
        %2687 = vrot.lane.b32.xlu0 %v2633, 48
        %v2688 = vpop.permute.xlu0 %2687
        %2689 = vrot.lane.b32.xlu0 %v2634, 48
        %v2690 = vpop.permute.xlu0 %2689
        %2691 = vrot.lane.b32.xlu0 %v2635, 48
        %v2692 = vpop.permute.xlu0 %2691
        %2693 = vrot.lane.b32.xlu0 %v2636, 48
        %v2694 = vpop.permute.xlu0 %2693
        %2695 = vrot.lane.b32.xlu0 %v2637, 48
        %v2696 = vpop.permute.xlu0 %2695
        %2697 = vrot.lane.b32.xlu0 %v2638, 48
        %v2698 = vpop.permute.xlu0 %2697
        %2699 = vrot.lane.b32.xlu0 %v2639, 48
        %v2700 = vpop.permute.xlu0 %2699
        %2701 = vrot.lane.b32.xlu0 %v2640, 48
        %v2702 = vpop.permute.xlu0 %2701
        %2703 = vrot.lane.b32.xlu0 %v2641, 48
        %v2704 = vpop.permute.xlu0 %2703
        %2705 = vrot.lane.b32.xlu0 %v2642, 48
        %v2706 = vpop.permute.xlu0 %2705
        %2707 = vrot.lane.b32.xlu0 %v2643, 48
        %v2708 = vpop.permute.xlu0 %2707
        %2709 = vrot.lane.b32.xlu0 %v2644, 48
        %v2710 = vpop.permute.xlu0 %2709
        %2711 = vrot.lane.b32.xlu0 %v2645, 48
        %v2712 = vpop.permute.xlu0 %2711
        %2713 = vrot.lane.b32.xlu0 %v2646, 48
        %v2714 = vpop.permute.xlu0 %2713
        %2715 = vrot.lane.b32.xlu0 %v2647, 48
        %v2716 = vpop.permute.xlu0 %2715
        %2717 = vrot.lane.b32.xlu0 %v2648, 48
        %v2718 = vpop.permute.xlu0 %2717
        %2719 = vrot.lane.b32.xlu0 %v2649, 48
        %v2720 = vpop.permute.xlu0 %2719
        %2721 = vrot.lane.b32.xlu0 %v2650, 48
        %v2722 = vpop.permute.xlu0 %2721
        %vm2747 = vcmask 417152
        %2748 = vst.msk [vmem:[#allocation2] sm:$0xff] %vm2747, %v2676
        %vm2749 = vcmask 413056
        %2750 = vst.msk [vmem:[#allocation2 + $0x8] sm:$0xf] %vm2749, %v2678
        %2751 = vst.msk [vmem:[#allocation2 + $0x10] sm:$0xff] %vm2747, %v2680
        %2752 = vst.msk [vmem:[#allocation2 + $0x18] sm:$0xf] %vm2749, %v2682
        %2753 = vst.msk [vmem:[#allocation2 + $0x20] sm:$0xff] %vm2747, %v2684
        %2754 = vst.msk [vmem:[#allocation2 + $0x28] sm:$0xf] %vm2749, %v2686
        %2755 = vst.msk [vmem:[#allocation2 + $0x30] sm:$0xff] %vm2747, %v2688
        %2756 = vst.msk [vmem:[#allocation2 + $0x38] sm:$0xf] %vm2749, %v2690
        %2757 = vst.msk [vmem:[#allocation2 + $0x40] sm:$0xff] %vm2747, %v2692
        %2758 = vst.msk [vmem:[#allocation2 + $0x48] sm:$0xf] %vm2749, %v2694
        %2759 = vst.msk [vmem:[#allocation2 + $0x50] sm:$0xff] %vm2747, %v2696
        %2760 = vst.msk [vmem:[#allocation2 + $0x58] sm:$0xf] %vm2749, %v2698
        %2761 = vst.msk [vmem:[#allocation2 + $0x60] sm:$0xff] %vm2747, %v2700
        %2762 = vst.msk [vmem:[#allocation2 + $0x68] sm:$0xf] %vm2749, %v2702
        %2763 = vst.msk [vmem:[#allocation2 + $0x70] sm:$0xff] %vm2747, %v2704
        %2764 = vst.msk [vmem:[#allocation2 + $0x78] sm:$0xf] %vm2749, %v2706
        %2765 = vst.msk [vmem:[#allocation2 + $0x80] sm:$0xff] %vm2747, %v2708
        %2766 = vst.msk [vmem:[#allocation2 + $0x88] sm:$0xf] %vm2749, %v2710
        %2767 = vst.msk [vmem:[#allocation2 + $0x90] sm:$0xff] %vm2747, %v2712
        %2768 = vst.msk [vmem:[#allocation2 + $0x98] sm:$0xf] %vm2749, %v2714
        %2769 = vst.msk [vmem:[#allocation2 + $0xa0] sm:$0xff] %vm2747, %v2716
        %2770 = vst.msk [vmem:[#allocation2 + $0xa8] sm:$0xf] %vm2749, %v2718
        %2771 = vst.msk [vmem:[#allocation2 + $0xb0] sm:$0xff] %vm2747, %v2720
        %2772 = vst.msk [vmem:[#allocation2 + $0xb8] sm:$0xf] %vm2749, %v2722
        %v2773 = vld [vmem:[%s2480 + $0x2] sm:$0xff]
        %v2774 = vld [vmem:[%s2480 + $0xa] sm:$0xf]
        %v2775 = vld [vmem:[%s2480 + $0x12] sm:$0xff]
        %v2776 = vld [vmem:[%s2480 + $0x1a] sm:$0xf]
        %v2777 = vld [vmem:[%s2480 + $0x22] sm:$0xff]
        %v2778 = vld [vmem:[%s2480 + $0x2a] sm:$0xf]
        %v2779 = vld [vmem:[%s2480 + $0x32] sm:$0xff]
        %v2780 = vld [vmem:[%s2480 + $0x3a] sm:$0xf]
        %v2781 = vld [vmem:[%s2480 + $0x42] sm:$0xff]
        %v2782 = vld [vmem:[%s2480 + $0x4a] sm:$0xf]
        %v2783 = vld [vmem:[%s2480 + $0x52] sm:$0xff]
        %v2784 = vld [vmem:[%s2480 + $0x5a] sm:$0xf]
        %v2785 = vld [vmem:[%s2480 + $0x62] sm:$0xff]
        %v2786 = vld [vmem:[%s2480 + $0x6a] sm:$0xf]
        %v2787 = vld [vmem:[%s2480 + $0x72] sm:$0xff]
        %v2788 = vld [vmem:[%s2480 + $0x7a] sm:$0xf]
        %v2789 = vld [vmem:[%s2480 + $0x82] sm:$0xff]
        %v2790 = vld [vmem:[%s2480 + $0x8a] sm:$0xf]
        %v2791 = vld [vmem:[%s2480 + $0x92] sm:$0xff]
        %v2792 = vld [vmem:[%s2480 + $0x9a] sm:$0xf]
        %v2793 = vld [vmem:[%s2480 + $0xa2] sm:$0xff]
        %v2794 = vld [vmem:[%s2480 + $0xaa] sm:$0xf]
        %v2795 = vld [vmem:[%s2480 + $0xb2] sm:$0xff]
        %v2796 = vld [vmem:[%s2480 + $0xba] sm:$0xf]
        %2821 = vrot.lane.b32.xlu0 %v2773, 51
        %v2822 = vpop.permute.xlu0 %2821
        %2823 = vrot.lane.b32.xlu0 %v2774, 51
        %v2824 = vpop.permute.xlu0 %2823
        %2825 = vrot.lane.b32.xlu0 %v2775, 51
        %v2826 = vpop.permute.xlu0 %2825
        %2827 = vrot.lane.b32.xlu0 %v2776, 51
        %v2828 = vpop.permute.xlu0 %2827
        %2829 = vrot.lane.b32.xlu0 %v2777, 51
        %v2830 = vpop.permute.xlu0 %2829
        %2831 = vrot.lane.b32.xlu0 %v2778, 51
        %v2832 = vpop.permute.xlu0 %2831
        %2833 = vrot.lane.b32.xlu0 %v2779, 51
        %v2834 = vpop.permute.xlu0 %2833
        %2835 = vrot.lane.b32.xlu0 %v2780, 51
        %v2836 = vpop.permute.xlu0 %2835
        %2837 = vrot.lane.b32.xlu0 %v2781, 51
        %v2838 = vpop.permute.xlu0 %2837
        %2839 = vrot.lane.b32.xlu0 %v2782, 51
        %v2840 = vpop.permute.xlu0 %2839
        %2841 = vrot.lane.b32.xlu0 %v2783, 51
        %v2842 = vpop.permute.xlu0 %2841
        %2843 = vrot.lane.b32.xlu0 %v2784, 51
        %v2844 = vpop.permute.xlu0 %2843
        %2845 = vrot.lane.b32.xlu0 %v2785, 51
        %v2846 = vpop.permute.xlu0 %2845
        %2847 = vrot.lane.b32.xlu0 %v2786, 51
        %v2848 = vpop.permute.xlu0 %2847
        %2849 = vrot.lane.b32.xlu0 %v2787, 51
        %v2850 = vpop.permute.xlu0 %2849
        %2851 = vrot.lane.b32.xlu0 %v2788, 51
        %v2852 = vpop.permute.xlu0 %2851
        %2853 = vrot.lane.b32.xlu0 %v2789, 51
        %v2854 = vpop.permute.xlu0 %2853
        %2855 = vrot.lane.b32.xlu0 %v2790, 51
        %v2856 = vpop.permute.xlu0 %2855
        %2857 = vrot.lane.b32.xlu0 %v2791, 51
        %v2858 = vpop.permute.xlu0 %2857
        %2859 = vrot.lane.b32.xlu0 %v2792, 51
        %v2860 = vpop.permute.xlu0 %2859
        %2861 = vrot.lane.b32.xlu0 %v2793, 51
        %v2862 = vpop.permute.xlu0 %2861
        %2863 = vrot.lane.b32.xlu0 %v2794, 51
        %v2864 = vpop.permute.xlu0 %2863
        %2865 = vrot.lane.b32.xlu0 %v2795, 51
        %v2866 = vpop.permute.xlu0 %2865
        %2867 = vrot.lane.b32.xlu0 %v2796, 51
        %v2868 = vpop.permute.xlu0 %2867
        %vm2893 = vcmask 441752
        %2894 = vst.msk [vmem:[#allocation2] sm:$0xff] %vm2893, %v2822
        %vm2895 = vcmask 437656
        %2896 = vst.msk [vmem:[#allocation2 + $0x8] sm:$0xf] %vm2895, %v2824
        %2897 = vst.msk [vmem:[#allocation2 + $0x10] sm:$0xff] %vm2893, %v2826
        %2898 = vst.msk [vmem:[#allocation2 + $0x18] sm:$0xf] %vm2895, %v2828
        %2899 = vst.msk [vmem:[#allocation2 + $0x20] sm:$0xff] %vm2893, %v2830
        %2900 = vst.msk [vmem:[#allocation2 + $0x28] sm:$0xf] %vm2895, %v2832
        %2901 = vst.msk [vmem:[#allocation2 + $0x30] sm:$0xff] %vm2893, %v2834
        %2902 = vst.msk [vmem:[#allocation2 + $0x38] sm:$0xf] %vm2895, %v2836
        %2903 = vst.msk [vmem:[#allocation2 + $0x40] sm:$0xff] %vm2893, %v2838
        %2904 = vst.msk [vmem:[#allocation2 + $0x48] sm:$0xf] %vm2895, %v2840
        %2905 = vst.msk [vmem:[#allocation2 + $0x50] sm:$0xff] %vm2893, %v2842
        %2906 = vst.msk [vmem:[#allocation2 + $0x58] sm:$0xf] %vm2895, %v2844
        %2907 = vst.msk [vmem:[#allocation2 + $0x60] sm:$0xff] %vm2893, %v2846
        %2908 = vst.msk [vmem:[#allocation2 + $0x68] sm:$0xf] %vm2895, %v2848
        %2909 = vst.msk [vmem:[#allocation2 + $0x70] sm:$0xff] %vm2893, %v2850
        %2910 = vst.msk [vmem:[#allocation2 + $0x78] sm:$0xf] %vm2895, %v2852
        %2911 = vst.msk [vmem:[#allocation2 + $0x80] sm:$0xff] %vm2893, %v2854
        %2912 = vst.msk [vmem:[#allocation2 + $0x88] sm:$0xf] %vm2895, %v2856
        %2913 = vst.msk [vmem:[#allocation2 + $0x90] sm:$0xff] %vm2893, %v2858
        %2914 = vst.msk [vmem:[#allocation2 + $0x98] sm:$0xf] %vm2895, %v2860
        %2915 = vst.msk [vmem:[#allocation2 + $0xa0] sm:$0xff] %vm2893, %v2862
        %2916 = vst.msk [vmem:[#allocation2 + $0xa8] sm:$0xf] %vm2895, %v2864
        %2917 = vst.msk [vmem:[#allocation2 + $0xb0] sm:$0xff] %vm2893, %v2866
        %2918 = vst.msk [vmem:[#allocation2 + $0xb8] sm:$0xf] %vm2895, %v2868
        %v2919 = vld [vmem:[%s2480 + $0x3] sm:$0xff]
        %v2920 = vld [vmem:[%s2480 + $0xb] sm:$0xf]
        %v2921 = vld [vmem:[%s2480 + $0x13] sm:$0xff]
        %v2922 = vld [vmem:[%s2480 + $0x1b] sm:$0xf]
        %v2923 = vld [vmem:[%s2480 + $0x23] sm:$0xff]
        %v2924 = vld [vmem:[%s2480 + $0x2b] sm:$0xf]
        %v2925 = vld [vmem:[%s2480 + $0x33] sm:$0xff]
        %v2926 = vld [vmem:[%s2480 + $0x3b] sm:$0xf]
        %v2927 = vld [vmem:[%s2480 + $0x43] sm:$0xff]
        %v2928 = vld [vmem:[%s2480 + $0x4b] sm:$0xf]
        %v2929 = vld [vmem:[%s2480 + $0x53] sm:$0xff]
        %v2930 = vld [vmem:[%s2480 + $0x5b] sm:$0xf]
        %v2931 = vld [vmem:[%s2480 + $0x63] sm:$0xff]
        %v2932 = vld [vmem:[%s2480 + $0x6b] sm:$0xf]
        %v2933 = vld [vmem:[%s2480 + $0x73] sm:$0xff]
        %v2934 = vld [vmem:[%s2480 + $0x7b] sm:$0xf]
        %v2935 = vld [vmem:[%s2480 + $0x83] sm:$0xff]
        %v2936 = vld [vmem:[%s2480 + $0x8b] sm:$0xf]
        %v2937 = vld [vmem:[%s2480 + $0x93] sm:$0xff]
        %v2938 = vld [vmem:[%s2480 + $0x9b] sm:$0xf]
        %v2939 = vld [vmem:[%s2480 + $0xa3] sm:$0xff]
        %v2940 = vld [vmem:[%s2480 + $0xab] sm:$0xf]
        %v2941 = vld [vmem:[%s2480 + $0xb3] sm:$0xff]
        %v2942 = vld [vmem:[%s2480 + $0xbb] sm:$0xf]
        %2967 = vrot.lane.b32.xlu0 %v2919, 54
        %v2968 = vpop.permute.xlu0 %2967
        %2969 = vrot.lane.b32.xlu0 %v2920, 54
        %v2970 = vpop.permute.xlu0 %2969
        %2971 = vrot.lane.b32.xlu0 %v2921, 54
        %v2972 = vpop.permute.xlu0 %2971
        %2973 = vrot.lane.b32.xlu0 %v2922, 54
        %v2974 = vpop.permute.xlu0 %2973
        %2975 = vrot.lane.b32.xlu0 %v2923, 54
        %v2976 = vpop.permute.xlu0 %2975
        %2977 = vrot.lane.b32.xlu0 %v2924, 54
        %v2978 = vpop.permute.xlu0 %2977
        %2979 = vrot.lane.b32.xlu0 %v2925, 54
        %v2980 = vpop.permute.xlu0 %2979
        %2981 = vrot.lane.b32.xlu0 %v2926, 54
        %v2982 = vpop.permute.xlu0 %2981
        %2983 = vrot.lane.b32.xlu0 %v2927, 54
        %v2984 = vpop.permute.xlu0 %2983
        %2985 = vrot.lane.b32.xlu0 %v2928, 54
        %v2986 = vpop.permute.xlu0 %2985
        %2987 = vrot.lane.b32.xlu0 %v2929, 54
        %v2988 = vpop.permute.xlu0 %2987
        %2989 = vrot.lane.b32.xlu0 %v2930, 54
        %v2990 = vpop.permute.xlu0 %2989
        %2991 = vrot.lane.b32.xlu0 %v2931, 54
        %v2992 = vpop.permute.xlu0 %2991
        %2993 = vrot.lane.b32.xlu0 %v2932, 54
        %v2994 = vpop.permute.xlu0 %2993
        %2995 = vrot.lane.b32.xlu0 %v2933, 54
        %v2996 = vpop.permute.xlu0 %2995
        %2997 = vrot.lane.b32.xlu0 %v2934, 54
        %v2998 = vpop.permute.xlu0 %2997
        %2999 = vrot.lane.b32.xlu0 %v2935, 54
        %v3000 = vpop.permute.xlu0 %2999
        %3001 = vrot.lane.b32.xlu0 %v2936, 54
        %v3002 = vpop.permute.xlu0 %3001
        %3003 = vrot.lane.b32.xlu0 %v2937, 54
        %v3004 = vpop.permute.xlu0 %3003
        %3005 = vrot.lane.b32.xlu0 %v2938, 54
        %v3006 = vpop.permute.xlu0 %3005
        %3007 = vrot.lane.b32.xlu0 %v2939, 54
        %v3008 = vpop.permute.xlu0 %3007
        %3009 = vrot.lane.b32.xlu0 %v2940, 54
        %v3010 = vpop.permute.xlu0 %3009
        %3011 = vrot.lane.b32.xlu0 %v2941, 54
        %v3012 = vpop.permute.xlu0 %3011
        %3013 = vrot.lane.b32.xlu0 %v2942, 54
        %v3014 = vpop.permute.xlu0 %3013
        %vm3039 = vcmask 466352
        %3040 = vst.msk [vmem:[#allocation2] sm:$0xff] %vm3039, %v2968
        %vm3041 = vcmask 462256
        %3042 = vst.msk [vmem:[#allocation2 + $0x8] sm:$0xf] %vm3041, %v2970
        %3043 = vst.msk [vmem:[#allocation2 + $0x10] sm:$0xff] %vm3039, %v2972
        %3044 = vst.msk [vmem:[#allocation2 + $0x18] sm:$0xf] %vm3041, %v2974
        %3045 = vst.msk [vmem:[#allocation2 + $0x20] sm:$0xff] %vm3039, %v2976
        %3046 = vst.msk [vmem:[#allocation2 + $0x28] sm:$0xf] %vm3041, %v2978
        %3047 = vst.msk [vmem:[#allocation2 + $0x30] sm:$0xff] %vm3039, %v2980
        %3048 = vst.msk [vmem:[#allocation2 + $0x38] sm:$0xf] %vm3041, %v2982
        %3049 = vst.msk [vmem:[#allocation2 + $0x40] sm:$0xff] %vm3039, %v2984
        %3050 = vst.msk [vmem:[#allocation2 + $0x48] sm:$0xf] %vm3041, %v2986
        %3051 = vst.msk [vmem:[#allocation2 + $0x50] sm:$0xff] %vm3039, %v2988
        %3052 = vst.msk [vmem:[#allocation2 + $0x58] sm:$0xf] %vm3041, %v2990
        %3053 = vst.msk [vmem:[#allocation2 + $0x60] sm:$0xff] %vm3039, %v2992
        %3054 = vst.msk [vmem:[#allocation2 + $0x68] sm:$0xf] %vm3041, %v2994
        %3055 = vst.msk [vmem:[#allocation2 + $0x70] sm:$0xff] %vm3039, %v2996
        %3056 = vst.msk [vmem:[#allocation2 + $0x78] sm:$0xf] %vm3041, %v2998
        %3057 = vst.msk [vmem:[#allocation2 + $0x80] sm:$0xff] %vm3039, %v3000
        %3058 = vst.msk [vmem:[#allocation2 + $0x88] sm:$0xf] %vm3041, %v3002
        %3059 = vst.msk [vmem:[#allocation2 + $0x90] sm:$0xff] %vm3039, %v3004
        %3060 = vst.msk [vmem:[#allocation2 + $0x98] sm:$0xf] %vm3041, %v3006
        %3061 = vst.msk [vmem:[#allocation2 + $0xa0] sm:$0xff] %vm3039, %v3008
        %3062 = vst.msk [vmem:[#allocation2 + $0xa8] sm:$0xf] %vm3041, %v3010
        %3063 = vst.msk [vmem:[#allocation2 + $0xb0] sm:$0xff] %vm3039, %v3012
        %3064 = vst.msk [vmem:[#allocation2 + $0xb8] sm:$0xf] %vm3041, %v3014
        %v3065 = vld [vmem:[%s2480 + $0x4] sm:$0xff]
        %v3066 = vld [vmem:[%s2480 + $0xc] sm:$0xf]
        %v3067 = vld [vmem:[%s2480 + $0x14] sm:$0xff]
        %v3068 = vld [vmem:[%s2480 + $0x1c] sm:$0xf]
        %v3069 = vld [vmem:[%s2480 + $0x24] sm:$0xff]
        %v3070 = vld [vmem:[%s2480 + $0x2c] sm:$0xf]
        %v3071 = vld [vmem:[%s2480 + $0x34] sm:$0xff]
        %v3072 = vld [vmem:[%s2480 + $0x3c] sm:$0xf]
        %v3073 = vld [vmem:[%s2480 + $0x44] sm:$0xff]
        %v3074 = vld [vmem:[%s2480 + $0x4c] sm:$0xf]
        %v3075 = vld [vmem:[%s2480 + $0x54] sm:$0xff]
        %v3076 = vld [vmem:[%s2480 + $0x5c] sm:$0xf]
        %v3077 = vld [vmem:[%s2480 + $0x64] sm:$0xff]
        %v3078 = vld [vmem:[%s2480 + $0x6c] sm:$0xf]
        %v3079 = vld [vmem:[%s2480 + $0x74] sm:$0xff]
        %v3080 = vld [vmem:[%s2480 + $0x7c] sm:$0xf]
        %v3081 = vld [vmem:[%s2480 + $0x84] sm:$0xff]
        %v3082 = vld [vmem:[%s2480 + $0x8c] sm:$0xf]
        %v3083 = vld [vmem:[%s2480 + $0x94] sm:$0xff]
        %v3084 = vld [vmem:[%s2480 + $0x9c] sm:$0xf]
        %v3085 = vld [vmem:[%s2480 + $0xa4] sm:$0xff]
        %v3086 = vld [vmem:[%s2480 + $0xac] sm:$0xf]
        %v3087 = vld [vmem:[%s2480 + $0xb4] sm:$0xff]
        %v3088 = vld [vmem:[%s2480 + $0xbc] sm:$0xf]
        %3113 = vrot.lane.b32.xlu0 %v3065, 57
        %v3114 = vpop.permute.xlu0 %3113
        %3115 = vrot.lane.b32.xlu0 %v3066, 57
        %v3116 = vpop.permute.xlu0 %3115
        %3117 = vrot.lane.b32.xlu0 %v3067, 57
        %v3118 = vpop.permute.xlu0 %3117
        %3119 = vrot.lane.b32.xlu0 %v3068, 57
        %v3120 = vpop.permute.xlu0 %3119
        %3121 = vrot.lane.b32.xlu0 %v3069, 57
        %v3122 = vpop.permute.xlu0 %3121
        %3123 = vrot.lane.b32.xlu0 %v3070, 57
        %v3124 = vpop.permute.xlu0 %3123
        %3125 = vrot.lane.b32.xlu0 %v3071, 57
        %v3126 = vpop.permute.xlu0 %3125
        %3127 = vrot.lane.b32.xlu0 %v3072, 57
        %v3128 = vpop.permute.xlu0 %3127
        %3129 = vrot.lane.b32.xlu0 %v3073, 57
        %v3130 = vpop.permute.xlu0 %3129
        %3131 = vrot.lane.b32.xlu0 %v3074, 57
        %v3132 = vpop.permute.xlu0 %3131
        %3133 = vrot.lane.b32.xlu0 %v3075, 57
        %v3134 = vpop.permute.xlu0 %3133
        %3135 = vrot.lane.b32.xlu0 %v3076, 57
        %v3136 = vpop.permute.xlu0 %3135
        %3137 = vrot.lane.b32.xlu0 %v3077, 57
        %v3138 = vpop.permute.xlu0 %3137
        %3139 = vrot.lane.b32.xlu0 %v3078, 57
        %v3140 = vpop.permute.xlu0 %3139
        %3141 = vrot.lane.b32.xlu0 %v3079, 57
        %v3142 = vpop.permute.xlu0 %3141
        %3143 = vrot.lane.b32.xlu0 %v3080, 57
        %v3144 = vpop.permute.xlu0 %3143
        %3145 = vrot.lane.b32.xlu0 %v3081, 57
        %v3146 = vpop.permute.xlu0 %3145
        %3147 = vrot.lane.b32.xlu0 %v3082, 57
        %v3148 = vpop.permute.xlu0 %3147
        %3149 = vrot.lane.b32.xlu0 %v3083, 57
        %v3150 = vpop.permute.xlu0 %3149
        %3151 = vrot.lane.b32.xlu0 %v3084, 57
        %v3152 = vpop.permute.xlu0 %3151
        %3153 = vrot.lane.b32.xlu0 %v3085, 57
        %v3154 = vpop.permute.xlu0 %3153
        %3155 = vrot.lane.b32.xlu0 %v3086, 57
        %v3156 = vpop.permute.xlu0 %3155
        %3157 = vrot.lane.b32.xlu0 %v3087, 57
        %v3158 = vpop.permute.xlu0 %3157
        %3159 = vrot.lane.b32.xlu0 %v3088, 57
        %v3160 = vpop.permute.xlu0 %3159
        %vm3185 = vcmask 490952
        %3186 = vst.msk [vmem:[#allocation2] sm:$0xff] %vm3185, %v3114
        %vm3187 = vcmask 486856
        %3188 = vst.msk [vmem:[#allocation2 + $0x8] sm:$0xf] %vm3187, %v3116
        %3189 = vst.msk [vmem:[#allocation2 + $0x10] sm:$0xff] %vm3185, %v3118
        %3190 = vst.msk [vmem:[#allocation2 + $0x18] sm:$0xf] %vm3187, %v3120
        %3191 = vst.msk [vmem:[#allocation2 + $0x20] sm:$0xff] %vm3185, %v3122
        %3192 = vst.msk [vmem:[#allocation2 + $0x28] sm:$0xf] %vm3187, %v3124
        %3193 = vst.msk [vmem:[#allocation2 + $0x30] sm:$0xff] %vm3185, %v3126
        %3194 = vst.msk [vmem:[#allocation2 + $0x38] sm:$0xf] %vm3187, %v3128
        %3195 = vst.msk [vmem:[#allocation2 + $0x40] sm:$0xff] %vm3185, %v3130
        %3196 = vst.msk [vmem:[#allocation2 + $0x48] sm:$0xf] %vm3187, %v3132
        %3197 = vst.msk [vmem:[#allocation2 + $0x50] sm:$0xff] %vm3185, %v3134
        %3198 = vst.msk [vmem:[#allocation2 + $0x58] sm:$0xf] %vm3187, %v3136
        %3199 = vst.msk [vmem:[#allocation2 + $0x60] sm:$0xff] %vm3185, %v3138
        %3200 = vst.msk [vmem:[#allocation2 + $0x68] sm:$0xf] %vm3187, %v3140
        %3201 = vst.msk [vmem:[#allocation2 + $0x70] sm:$0xff] %vm3185, %v3142
        %3202 = vst.msk [vmem:[#allocation2 + $0x78] sm:$0xf] %vm3187, %v3144
        %3203 = vst.msk [vmem:[#allocation2 + $0x80] sm:$0xff] %vm3185, %v3146
        %3204 = vst.msk [vmem:[#allocation2 + $0x88] sm:$0xf] %vm3187, %v3148
        %3205 = vst.msk [vmem:[#allocation2 + $0x90] sm:$0xff] %vm3185, %v3150
        %3206 = vst.msk [vmem:[#allocation2 + $0x98] sm:$0xf] %vm3187, %v3152
        %3207 = vst.msk [vmem:[#allocation2 + $0xa0] sm:$0xff] %vm3185, %v3154
        %3208 = vst.msk [vmem:[#allocation2 + $0xa8] sm:$0xf] %vm3187, %v3156
        %3209 = vst.msk [vmem:[#allocation2 + $0xb0] sm:$0xff] %vm3185, %v3158
        %3210 = vst.msk [vmem:[#allocation2 + $0xb8] sm:$0xf] %vm3187, %v3160
        %s3211 = scalar_lea.vmem %s383, 64
        %v3212 = vld [vmem:[%s3211] sm:$0xff]
        %v3213 = vld [vmem:[%s3211 + $0x8] sm:$0xf]
        %v3214 = vld [vmem:[%s3211 + $0x10] sm:$0xff]
        %v3215 = vld [vmem:[%s3211 + $0x18] sm:$0xf]
        %v3216 = vld [vmem:[%s3211 + $0x20] sm:$0xff]
        %v3217 = vld [vmem:[%s3211 + $0x28] sm:$0xf]
        %v3218 = vld [vmem:[%s3211 + $0x30] sm:$0xff]
        %v3219 = vld [vmem:[%s3211 + $0x38] sm:$0xf]
        %v3220 = vld [vmem:[%s3211 + $0x40] sm:$0xff]
        %v3221 = vld [vmem:[%s3211 + $0x48] sm:$0xf]
        %v3222 = vld [vmem:[%s3211 + $0x50] sm:$0xff]
        %v3223 = vld [vmem:[%s3211 + $0x58] sm:$0xf]
        %v3224 = vld [vmem:[%s3211 + $0x60] sm:$0xff]
        %v3225 = vld [vmem:[%s3211 + $0x68] sm:$0xf]
        %v3226 = vld [vmem:[%s3211 + $0x70] sm:$0xff]
        %v3227 = vld [vmem:[%s3211 + $0x78] sm:$0xf]
        %v3228 = vld [vmem:[%s3211 + $0x80] sm:$0xff]
        %v3229 = vld [vmem:[%s3211 + $0x88] sm:$0xf]
        %v3230 = vld [vmem:[%s3211 + $0x90] sm:$0xff]
        %v3231 = vld [vmem:[%s3211 + $0x98] sm:$0xf]
        %v3232 = vld [vmem:[%s3211 + $0xa0] sm:$0xff]
        %v3233 = vld [vmem:[%s3211 + $0xa8] sm:$0xf]
        %v3234 = vld [vmem:[%s3211 + $0xb0] sm:$0xff]
        %v3235 = vld [vmem:[%s3211 + $0xb8] sm:$0xf]
        %3260 = vrot.lane.b32.xlu0 %v3212, 60
        %v3261 = vpop.permute.xlu0 %3260
        %3262 = vrot.lane.b32.xlu0 %v3213, 60
        %v3263 = vpop.permute.xlu0 %3262
        %3264 = vrot.lane.b32.xlu0 %v3214, 60
        %v3265 = vpop.permute.xlu0 %3264
        %3266 = vrot.lane.b32.xlu0 %v3215, 60
        %v3267 = vpop.permute.xlu0 %3266
        %3268 = vrot.lane.b32.xlu0 %v3216, 60
        %v3269 = vpop.permute.xlu0 %3268
        %3270 = vrot.lane.b32.xlu0 %v3217, 60
        %v3271 = vpop.permute.xlu0 %3270
        %3272 = vrot.lane.b32.xlu0 %v3218, 60
        %v3273 = vpop.permute.xlu0 %3272
        %3274 = vrot.lane.b32.xlu0 %v3219, 60
        %v3275 = vpop.permute.xlu0 %3274
        %3276 = vrot.lane.b32.xlu0 %v3220, 60
        %v3277 = vpop.permute.xlu0 %3276
        %3278 = vrot.lane.b32.xlu0 %v3221, 60
        %v3279 = vpop.permute.xlu0 %3278
        %3280 = vrot.lane.b32.xlu0 %v3222, 60
        %v3281 = vpop.permute.xlu0 %3280
        %3282 = vrot.lane.b32.xlu0 %v3223, 60
        %v3283 = vpop.permute.xlu0 %3282
        %3284 = vrot.lane.b32.xlu0 %v3224, 60
        %v3285 = vpop.permute.xlu0 %3284
        %3286 = vrot.lane.b32.xlu0 %v3225, 60
        %v3287 = vpop.permute.xlu0 %3286
        %3288 = vrot.lane.b32.xlu0 %v3226, 60
        %v3289 = vpop.permute.xlu0 %3288
        %3290 = vrot.lane.b32.xlu0 %v3227, 60
        %v3291 = vpop.permute.xlu0 %3290
        %3292 = vrot.lane.b32.xlu0 %v3228, 60
        %v3293 = vpop.permute.xlu0 %3292
        %3294 = vrot.lane.b32.xlu0 %v3229, 60
        %v3295 = vpop.permute.xlu0 %3294
        %3296 = vrot.lane.b32.xlu0 %v3230, 60
        %v3297 = vpop.permute.xlu0 %3296
        %3298 = vrot.lane.b32.xlu0 %v3231, 60
        %v3299 = vpop.permute.xlu0 %3298
        %3300 = vrot.lane.b32.xlu0 %v3232, 60
        %v3301 = vpop.permute.xlu0 %3300
        %3302 = vrot.lane.b32.xlu0 %v3233, 60
        %v3303 = vpop.permute.xlu0 %3302
        %3304 = vrot.lane.b32.xlu0 %v3234, 60
        %v3305 = vpop.permute.xlu0 %3304
        %3306 = vrot.lane.b32.xlu0 %v3235, 60
        %v3307 = vpop.permute.xlu0 %3306
        %vm3332 = vcmask 515552
        %3333 = vst.msk [vmem:[#allocation2] sm:$0xff] %vm3332, %v3261
        %vm3334 = vcmask 511456
        %3335 = vst.msk [vmem:[#allocation2 + $0x8] sm:$0xf] %vm3334, %v3263
        %3336 = vst.msk [vmem:[#allocation2 + $0x10] sm:$0xff] %vm3332, %v3265
        %3337 = vst.msk [vmem:[#allocation2 + $0x18] sm:$0xf] %vm3334, %v3267
        %3338 = vst.msk [vmem:[#allocation2 + $0x20] sm:$0xff] %vm3332, %v3269
        %3339 = vst.msk [vmem:[#allocation2 + $0x28] sm:$0xf] %vm3334, %v3271
        %3340 = vst.msk [vmem:[#allocation2 + $0x30] sm:$0xff] %vm3332, %v3273
        %3341 = vst.msk [vmem:[#allocation2 + $0x38] sm:$0xf] %vm3334, %v3275
        %3342 = vst.msk [vmem:[#allocation2 + $0x40] sm:$0xff] %vm3332, %v3277
        %3343 = vst.msk [vmem:[#allocation2 + $0x48] sm:$0xf] %vm3334, %v3279
        %3344 = vst.msk [vmem:[#allocation2 + $0x50] sm:$0xff] %vm3332, %v3281
        %3345 = vst.msk [vmem:[#allocation2 + $0x58] sm:$0xf] %vm3334, %v3283
        %3346 = vst.msk [vmem:[#allocation2 + $0x60] sm:$0xff] %vm3332, %v3285
        %3347 = vst.msk [vmem:[#allocation2 + $0x68] sm:$0xf] %vm3334, %v3287
        %3348 = vst.msk [vmem:[#allocation2 + $0x70] sm:$0xff] %vm3332, %v3289
        %3349 = vst.msk [vmem:[#allocation2 + $0x78] sm:$0xf] %vm3334, %v3291
        %3350 = vst.msk [vmem:[#allocation2 + $0x80] sm:$0xff] %vm3332, %v3293
        %3351 = vst.msk [vmem:[#allocation2 + $0x88] sm:$0xf] %vm3334, %v3295
        %3352 = vst.msk [vmem:[#allocation2 + $0x90] sm:$0xff] %vm3332, %v3297
        %3353 = vst.msk [vmem:[#allocation2 + $0x98] sm:$0xf] %vm3334, %v3299
        %3354 = vst.msk [vmem:[#allocation2 + $0xa0] sm:$0xff] %vm3332, %v3301
        %3355 = vst.msk [vmem:[#allocation2 + $0xa8] sm:$0xf] %vm3334, %v3303
        %3356 = vst.msk [vmem:[#allocation2 + $0xb0] sm:$0xff] %vm3332, %v3305
        %3357 = vst.msk [vmem:[#allocation2 + $0xb8] sm:$0xf] %vm3334, %v3307
        %v3358 = vld [vmem:[%s3211 + $0x1] sm:$0xff]
        %v3359 = vld [vmem:[%s3211 + $0x9] sm:$0xf]
        %v3360 = vld [vmem:[%s3211 + $0x11] sm:$0xff]
        %v3361 = vld [vmem:[%s3211 + $0x19] sm:$0xf]
        %v3362 = vld [vmem:[%s3211 + $0x21] sm:$0xff]
        %v3363 = vld [vmem:[%s3211 + $0x29] sm:$0xf]
        %v3364 = vld [vmem:[%s3211 + $0x31] sm:$0xff]
        %v3365 = vld [vmem:[%s3211 + $0x39] sm:$0xf]
        %v3366 = vld [vmem:[%s3211 + $0x41] sm:$0xff]
        %v3367 = vld [vmem:[%s3211 + $0x49] sm:$0xf]
        %v3368 = vld [vmem:[%s3211 + $0x51] sm:$0xff]
        %v3369 = vld [vmem:[%s3211 + $0x59] sm:$0xf]
        %v3370 = vld [vmem:[%s3211 + $0x61] sm:$0xff]
        %v3371 = vld [vmem:[%s3211 + $0x69] sm:$0xf]
        %v3372 = vld [vmem:[%s3211 + $0x71] sm:$0xff]
        %v3373 = vld [vmem:[%s3211 + $0x79] sm:$0xf]
        %v3374 = vld [vmem:[%s3211 + $0x81] sm:$0xff]
        %v3375 = vld [vmem:[%s3211 + $0x89] sm:$0xf]
        %v3376 = vld [vmem:[%s3211 + $0x91] sm:$0xff]
        %v3377 = vld [vmem:[%s3211 + $0x99] sm:$0xf]
        %v3378 = vld [vmem:[%s3211 + $0xa1] sm:$0xff]
        %v3379 = vld [vmem:[%s3211 + $0xa9] sm:$0xf]
        %v3380 = vld [vmem:[%s3211 + $0xb1] sm:$0xff]
        %v3381 = vld [vmem:[%s3211 + $0xb9] sm:$0xf]
        %3406 = vrot.lane.b32.xlu0 %v3358, 63
        %v3407 = vpop.permute.xlu0 %3406
        %3408 = vrot.lane.b32.xlu0 %v3359, 63
        %v3409 = vpop.permute.xlu0 %3408
        %3410 = vrot.lane.b32.xlu0 %v3360, 63
        %v3411 = vpop.permute.xlu0 %3410
        %3412 = vrot.lane.b32.xlu0 %v3361, 63
        %v3413 = vpop.permute.xlu0 %3412
        %3414 = vrot.lane.b32.xlu0 %v3362, 63
        %v3415 = vpop.permute.xlu0 %3414
        %3416 = vrot.lane.b32.xlu0 %v3363, 63
        %v3417 = vpop.permute.xlu0 %3416
        %3418 = vrot.lane.b32.xlu0 %v3364, 63
        %v3419 = vpop.permute.xlu0 %3418
        %3420 = vrot.lane.b32.xlu0 %v3365, 63
        %v3421 = vpop.permute.xlu0 %3420
        %3422 = vrot.lane.b32.xlu0 %v3366, 63
        %v3423 = vpop.permute.xlu0 %3422
        %3424 = vrot.lane.b32.xlu0 %v3367, 63
        %v3425 = vpop.permute.xlu0 %3424
        %3426 = vrot.lane.b32.xlu0 %v3368, 63
        %v3427 = vpop.permute.xlu0 %3426
        %3428 = vrot.lane.b32.xlu0 %v3369, 63
        %v3429 = vpop.permute.xlu0 %3428
        %3430 = vrot.lane.b32.xlu0 %v3370, 63
        %v3431 = vpop.permute.xlu0 %3430
        %3432 = vrot.lane.b32.xlu0 %v3371, 63
        %v3433 = vpop.permute.xlu0 %3432
        %3434 = vrot.lane.b32.xlu0 %v3372, 63
        %v3435 = vpop.permute.xlu0 %3434
        %3436 = vrot.lane.b32.xlu0 %v3373, 63
        %v3437 = vpop.permute.xlu0 %3436
        %3438 = vrot.lane.b32.xlu0 %v3374, 63
        %v3439 = vpop.permute.xlu0 %3438
        %3440 = vrot.lane.b32.xlu0 %v3375, 63
        %v3441 = vpop.permute.xlu0 %3440
        %3442 = vrot.lane.b32.xlu0 %v3376, 63
        %v3443 = vpop.permute.xlu0 %3442
        %3444 = vrot.lane.b32.xlu0 %v3377, 63
        %v3445 = vpop.permute.xlu0 %3444
        %3446 = vrot.lane.b32.xlu0 %v3378, 63
        %v3447 = vpop.permute.xlu0 %3446
        %3448 = vrot.lane.b32.xlu0 %v3379, 63
        %v3449 = vpop.permute.xlu0 %3448
        %3450 = vrot.lane.b32.xlu0 %v3380, 63
        %v3451 = vpop.permute.xlu0 %3450
        %3452 = vrot.lane.b32.xlu0 %v3381, 63
        %v3453 = vpop.permute.xlu0 %3452
        %vm3478 = vcmask 540152
        %3479 = vst.msk [vmem:[#allocation2] sm:$0xff] %vm3478, %v3407
        %vm3480 = vcmask 536056
        %3481 = vst.msk [vmem:[#allocation2 + $0x8] sm:$0xf] %vm3480, %v3409
        %3482 = vst.msk [vmem:[#allocation2 + $0x10] sm:$0xff] %vm3478, %v3411
        %3483 = vst.msk [vmem:[#allocation2 + $0x18] sm:$0xf] %vm3480, %v3413
        %3484 = vst.msk [vmem:[#allocation2 + $0x20] sm:$0xff] %vm3478, %v3415
        %3485 = vst.msk [vmem:[#allocation2 + $0x28] sm:$0xf] %vm3480, %v3417
        %3486 = vst.msk [vmem:[#allocation2 + $0x30] sm:$0xff] %vm3478, %v3419
        %3487 = vst.msk [vmem:[#allocation2 + $0x38] sm:$0xf] %vm3480, %v3421
        %3488 = vst.msk [vmem:[#allocation2 + $0x40] sm:$0xff] %vm3478, %v3423
        %3489 = vst.msk [vmem:[#allocation2 + $0x48] sm:$0xf] %vm3480, %v3425
        %3490 = vst.msk [vmem:[#allocation2 + $0x50] sm:$0xff] %vm3478, %v3427
        %3491 = vst.msk [vmem:[#allocation2 + $0x58] sm:$0xf] %vm3480, %v3429
        %3492 = vst.msk [vmem:[#allocation2 + $0x60] sm:$0xff] %vm3478, %v3431
        %3493 = vst.msk [vmem:[#allocation2 + $0x68] sm:$0xf] %vm3480, %v3433
        %3494 = vst.msk [vmem:[#allocation2 + $0x70] sm:$0xff] %vm3478, %v3435
        %3495 = vst.msk [vmem:[#allocation2 + $0x78] sm:$0xf] %vm3480, %v3437
        %3496 = vst.msk [vmem:[#allocation2 + $0x80] sm:$0xff] %vm3478, %v3439
        %3497 = vst.msk [vmem:[#allocation2 + $0x88] sm:$0xf] %vm3480, %v3441
        %3498 = vst.msk [vmem:[#allocation2 + $0x90] sm:$0xff] %vm3478, %v3443
        %3499 = vst.msk [vmem:[#allocation2 + $0x98] sm:$0xf] %vm3480, %v3445
        %3500 = vst.msk [vmem:[#allocation2 + $0xa0] sm:$0xff] %vm3478, %v3447
        %3501 = vst.msk [vmem:[#allocation2 + $0xa8] sm:$0xf] %vm3480, %v3449
        %3502 = vst.msk [vmem:[#allocation2 + $0xb0] sm:$0xff] %vm3478, %v3451
        %3503 = vst.msk [vmem:[#allocation2 + $0xb8] sm:$0xf] %vm3480, %v3453
        %v3504 = vld [vmem:[%s3211 + $0x2] sm:$0xff]
        %v3505 = vld [vmem:[%s3211 + $0xa] sm:$0xf]
        %v3506 = vld [vmem:[%s3211 + $0x12] sm:$0xff]
        %v3507 = vld [vmem:[%s3211 + $0x1a] sm:$0xf]
        %v3508 = vld [vmem:[%s3211 + $0x22] sm:$0xff]
        %v3509 = vld [vmem:[%s3211 + $0x2a] sm:$0xf]
        %v3510 = vld [vmem:[%s3211 + $0x32] sm:$0xff]
        %v3511 = vld [vmem:[%s3211 + $0x3a] sm:$0xf]
        %v3512 = vld [vmem:[%s3211 + $0x42] sm:$0xff]
        %v3513 = vld [vmem:[%s3211 + $0x4a] sm:$0xf]
        %v3514 = vld [vmem:[%s3211 + $0x52] sm:$0xff]
        %v3515 = vld [vmem:[%s3211 + $0x5a] sm:$0xf]
        %v3516 = vld [vmem:[%s3211 + $0x62] sm:$0xff]
        %v3517 = vld [vmem:[%s3211 + $0x6a] sm:$0xf]
        %v3518 = vld [vmem:[%s3211 + $0x72] sm:$0xff]
        %v3519 = vld [vmem:[%s3211 + $0x7a] sm:$0xf]
        %v3520 = vld [vmem:[%s3211 + $0x82] sm:$0xff]
        %v3521 = vld [vmem:[%s3211 + $0x8a] sm:$0xf]
        %v3522 = vld [vmem:[%s3211 + $0x92] sm:$0xff]
        %v3523 = vld [vmem:[%s3211 + $0x9a] sm:$0xf]
        %v3524 = vld [vmem:[%s3211 + $0xa2] sm:$0xff]
        %v3525 = vld [vmem:[%s3211 + $0xaa] sm:$0xf]
        %v3526 = vld [vmem:[%s3211 + $0xb2] sm:$0xff]
        %v3527 = vld [vmem:[%s3211 + $0xba] sm:$0xf]
        %3552 = vrot.lane.b32.xlu0 %v3504, 66
        %v3553 = vpop.permute.xlu0 %3552
        %3554 = vrot.lane.b32.xlu0 %v3505, 66
        %v3555 = vpop.permute.xlu0 %3554
        %3556 = vrot.lane.b32.xlu0 %v3506, 66
        %v3557 = vpop.permute.xlu0 %3556
        %3558 = vrot.lane.b32.xlu0 %v3507, 66
        %v3559 = vpop.permute.xlu0 %3558
        %3560 = vrot.lane.b32.xlu0 %v3508, 66
        %v3561 = vpop.permute.xlu0 %3560
        %3562 = vrot.lane.b32.xlu0 %v3509, 66
        %v3563 = vpop.permute.xlu0 %3562
        %3564 = vrot.lane.b32.xlu0 %v3510, 66
        %v3565 = vpop.permute.xlu0 %3564
        %3566 = vrot.lane.b32.xlu0 %v3511, 66
        %v3567 = vpop.permute.xlu0 %3566
        %3568 = vrot.lane.b32.xlu0 %v3512, 66
        %v3569 = vpop.permute.xlu0 %3568
        %3570 = vrot.lane.b32.xlu0 %v3513, 66
        %v3571 = vpop.permute.xlu0 %3570
        %3572 = vrot.lane.b32.xlu0 %v3514, 66
        %v3573 = vpop.permute.xlu0 %3572
        %3574 = vrot.lane.b32.xlu0 %v3515, 66
        %v3575 = vpop.permute.xlu0 %3574
        %3576 = vrot.lane.b32.xlu0 %v3516, 66
        %v3577 = vpop.permute.xlu0 %3576
        %3578 = vrot.lane.b32.xlu0 %v3517, 66
        %v3579 = vpop.permute.xlu0 %3578
        %3580 = vrot.lane.b32.xlu0 %v3518, 66
        %v3581 = vpop.permute.xlu0 %3580
        %3582 = vrot.lane.b32.xlu0 %v3519, 66
        %v3583 = vpop.permute.xlu0 %3582
        %3584 = vrot.lane.b32.xlu0 %v3520, 66
        %v3585 = vpop.permute.xlu0 %3584
        %3586 = vrot.lane.b32.xlu0 %v3521, 66
        %v3587 = vpop.permute.xlu0 %3586
        %3588 = vrot.lane.b32.xlu0 %v3522, 66
        %v3589 = vpop.permute.xlu0 %3588
        %3590 = vrot.lane.b32.xlu0 %v3523, 66
        %v3591 = vpop.permute.xlu0 %3590
        %3592 = vrot.lane.b32.xlu0 %v3524, 66
        %v3593 = vpop.permute.xlu0 %3592
        %3594 = vrot.lane.b32.xlu0 %v3525, 66
        %v3595 = vpop.permute.xlu0 %3594
        %3596 = vrot.lane.b32.xlu0 %v3526, 66
        %v3597 = vpop.permute.xlu0 %3596
        %3598 = vrot.lane.b32.xlu0 %v3527, 66
        %v3599 = vpop.permute.xlu0 %3598
        %vm3624 = vcmask 564752
        %3625 = vst.msk [vmem:[#allocation2] sm:$0xff] %vm3624, %v3553
        %vm3626 = vcmask 560656
        %3627 = vst.msk [vmem:[#allocation2 + $0x8] sm:$0xf] %vm3626, %v3555
        %3628 = vst.msk [vmem:[#allocation2 + $0x10] sm:$0xff] %vm3624, %v3557
        %3629 = vst.msk [vmem:[#allocation2 + $0x18] sm:$0xf] %vm3626, %v3559
        %3630 = vst.msk [vmem:[#allocation2 + $0x20] sm:$0xff] %vm3624, %v3561
        %3631 = vst.msk [vmem:[#allocation2 + $0x28] sm:$0xf] %vm3626, %v3563
        %3632 = vst.msk [vmem:[#allocation2 + $0x30] sm:$0xff] %vm3624, %v3565
        %3633 = vst.msk [vmem:[#allocation2 + $0x38] sm:$0xf] %vm3626, %v3567
        %3634 = vst.msk [vmem:[#allocation2 + $0x40] sm:$0xff] %vm3624, %v3569
        %3635 = vst.msk [vmem:[#allocation2 + $0x48] sm:$0xf] %vm3626, %v3571
        %3636 = vst.msk [vmem:[#allocation2 + $0x50] sm:$0xff] %vm3624, %v3573
        %3637 = vst.msk [vmem:[#allocation2 + $0x58] sm:$0xf] %vm3626, %v3575
        %3638 = vst.msk [vmem:[#allocation2 + $0x60] sm:$0xff] %vm3624, %v3577
        %3639 = vst.msk [vmem:[#allocation2 + $0x68] sm:$0xf] %vm3626, %v3579
        %3640 = vst.msk [vmem:[#allocation2 + $0x70] sm:$0xff] %vm3624, %v3581
        %3641 = vst.msk [vmem:[#allocation2 + $0x78] sm:$0xf] %vm3626, %v3583
        %3642 = vst.msk [vmem:[#allocation2 + $0x80] sm:$0xff] %vm3624, %v3585
        %3643 = vst.msk [vmem:[#allocation2 + $0x88] sm:$0xf] %vm3626, %v3587
        %3644 = vst.msk [vmem:[#allocation2 + $0x90] sm:$0xff] %vm3624, %v3589
        %3645 = vst.msk [vmem:[#allocation2 + $0x98] sm:$0xf] %vm3626, %v3591
        %3646 = vst.msk [vmem:[#allocation2 + $0xa0] sm:$0xff] %vm3624, %v3593
        %3647 = vst.msk [vmem:[#allocation2 + $0xa8] sm:$0xf] %vm3626, %v3595
        %3648 = vst.msk [vmem:[#allocation2 + $0xb0] sm:$0xff] %vm3624, %v3597
        %3649 = vst.msk [vmem:[#allocation2 + $0xb8] sm:$0xf] %vm3626, %v3599
        %v3650 = vld [vmem:[%s3211 + $0x3] sm:$0xff]
        %v3651 = vld [vmem:[%s3211 + $0xb] sm:$0xf]
        %v3652 = vld [vmem:[%s3211 + $0x13] sm:$0xff]
        %v3653 = vld [vmem:[%s3211 + $0x1b] sm:$0xf]
        %v3654 = vld [vmem:[%s3211 + $0x23] sm:$0xff]
        %v3655 = vld [vmem:[%s3211 + $0x2b] sm:$0xf]
        %v3656 = vld [vmem:[%s3211 + $0x33] sm:$0xff]
        %v3657 = vld [vmem:[%s3211 + $0x3b] sm:$0xf]
        %v3658 = vld [vmem:[%s3211 + $0x43] sm:$0xff]
        %v3659 = vld [vmem:[%s3211 + $0x4b] sm:$0xf]
        %v3660 = vld [vmem:[%s3211 + $0x53] sm:$0xff]
        %v3661 = vld [vmem:[%s3211 + $0x5b] sm:$0xf]
        %v3662 = vld [vmem:[%s3211 + $0x63] sm:$0xff]
        %v3663 = vld [vmem:[%s3211 + $0x6b] sm:$0xf]
        %v3664 = vld [vmem:[%s3211 + $0x73] sm:$0xff]
        %v3665 = vld [vmem:[%s3211 + $0x7b] sm:$0xf]
        %v3666 = vld [vmem:[%s3211 + $0x83] sm:$0xff]
        %v3667 = vld [vmem:[%s3211 + $0x8b] sm:$0xf]
        %v3668 = vld [vmem:[%s3211 + $0x93] sm:$0xff]
        %v3669 = vld [vmem:[%s3211 + $0x9b] sm:$0xf]
        %v3670 = vld [vmem:[%s3211 + $0xa3] sm:$0xff]
        %v3671 = vld [vmem:[%s3211 + $0xab] sm:$0xf]
        %v3672 = vld [vmem:[%s3211 + $0xb3] sm:$0xff]
        %v3673 = vld [vmem:[%s3211 + $0xbb] sm:$0xf]
        %3698 = vrot.lane.b32.xlu0 %v3650, 69
        %v3699 = vpop.permute.xlu0 %3698
        %3700 = vrot.lane.b32.xlu0 %v3651, 69
        %v3701 = vpop.permute.xlu0 %3700
        %3702 = vrot.lane.b32.xlu0 %v3652, 69
        %v3703 = vpop.permute.xlu0 %3702
        %3704 = vrot.lane.b32.xlu0 %v3653, 69
        %v3705 = vpop.permute.xlu0 %3704
        %3706 = vrot.lane.b32.xlu0 %v3654, 69
        %v3707 = vpop.permute.xlu0 %3706
        %3708 = vrot.lane.b32.xlu0 %v3655, 69
        %v3709 = vpop.permute.xlu0 %3708
        %3710 = vrot.lane.b32.xlu0 %v3656, 69
        %v3711 = vpop.permute.xlu0 %3710
        %3712 = vrot.lane.b32.xlu0 %v3657, 69
        %v3713 = vpop.permute.xlu0 %3712
        %3714 = vrot.lane.b32.xlu0 %v3658, 69
        %v3715 = vpop.permute.xlu0 %3714
        %3716 = vrot.lane.b32.xlu0 %v3659, 69
        %v3717 = vpop.permute.xlu0 %3716
        %3718 = vrot.lane.b32.xlu0 %v3660, 69
        %v3719 = vpop.permute.xlu0 %3718
        %3720 = vrot.lane.b32.xlu0 %v3661, 69
        %v3721 = vpop.permute.xlu0 %3720
        %3722 = vrot.lane.b32.xlu0 %v3662, 69
        %v3723 = vpop.permute.xlu0 %3722
        %3724 = vrot.lane.b32.xlu0 %v3663, 69
        %v3725 = vpop.permute.xlu0 %3724
        %3726 = vrot.lane.b32.xlu0 %v3664, 69
        %v3727 = vpop.permute.xlu0 %3726
        %3728 = vrot.lane.b32.xlu0 %v3665, 69
        %v3729 = vpop.permute.xlu0 %3728
        %3730 = vrot.lane.b32.xlu0 %v3666, 69
        %v3731 = vpop.permute.xlu0 %3730
        %3732 = vrot.lane.b32.xlu0 %v3667, 69
        %v3733 = vpop.permute.xlu0 %3732
        %3734 = vrot.lane.b32.xlu0 %v3668, 69
        %v3735 = vpop.permute.xlu0 %3734
        %3736 = vrot.lane.b32.xlu0 %v3669, 69
        %v3737 = vpop.permute.xlu0 %3736
        %3738 = vrot.lane.b32.xlu0 %v3670, 69
        %v3739 = vpop.permute.xlu0 %3738
        %3740 = vrot.lane.b32.xlu0 %v3671, 69
        %v3741 = vpop.permute.xlu0 %3740
        %3742 = vrot.lane.b32.xlu0 %v3672, 69
        %v3743 = vpop.permute.xlu0 %3742
        %3744 = vrot.lane.b32.xlu0 %v3673, 69
        %v3745 = vpop.permute.xlu0 %3744
        %vm3770 = vcmask 589352
        %3771 = vst.msk [vmem:[#allocation2] sm:$0xff] %vm3770, %v3699
        %vm3772 = vcmask 585256
        %3773 = vst.msk [vmem:[#allocation2 + $0x8] sm:$0xf] %vm3772, %v3701
        %3774 = vst.msk [vmem:[#allocation2 + $0x10] sm:$0xff] %vm3770, %v3703
        %3775 = vst.msk [vmem:[#allocation2 + $0x18] sm:$0xf] %vm3772, %v3705
        %3776 = vst.msk [vmem:[#allocation2 + $0x20] sm:$0xff] %vm3770, %v3707
        %3777 = vst.msk [vmem:[#allocation2 + $0x28] sm:$0xf] %vm3772, %v3709
        %3778 = vst.msk [vmem:[#allocation2 + $0x30] sm:$0xff] %vm3770, %v3711
        %3779 = vst.msk [vmem:[#allocation2 + $0x38] sm:$0xf] %vm3772, %v3713
        %3780 = vst.msk [vmem:[#allocation2 + $0x40] sm:$0xff] %vm3770, %v3715
        %3781 = vst.msk [vmem:[#allocation2 + $0x48] sm:$0xf] %vm3772, %v3717
        %3782 = vst.msk [vmem:[#allocation2 + $0x50] sm:$0xff] %vm3770, %v3719
        %3783 = vst.msk [vmem:[#allocation2 + $0x58] sm:$0xf] %vm3772, %v3721
        %3784 = vst.msk [vmem:[#allocation2 + $0x60] sm:$0xff] %vm3770, %v3723
        %3785 = vst.msk [vmem:[#allocation2 + $0x68] sm:$0xf] %vm3772, %v3725
        %3786 = vst.msk [vmem:[#allocation2 + $0x70] sm:$0xff] %vm3770, %v3727
        %3787 = vst.msk [vmem:[#allocation2 + $0x78] sm:$0xf] %vm3772, %v3729
        %3788 = vst.msk [vmem:[#allocation2 + $0x80] sm:$0xff] %vm3770, %v3731
        %3789 = vst.msk [vmem:[#allocation2 + $0x88] sm:$0xf] %vm3772, %v3733
        %3790 = vst.msk [vmem:[#allocation2 + $0x90] sm:$0xff] %vm3770, %v3735
        %3791 = vst.msk [vmem:[#allocation2 + $0x98] sm:$0xf] %vm3772, %v3737
        %3792 = vst.msk [vmem:[#allocation2 + $0xa0] sm:$0xff] %vm3770, %v3739
        %3793 = vst.msk [vmem:[#allocation2 + $0xa8] sm:$0xf] %vm3772, %v3741
        %3794 = vst.msk [vmem:[#allocation2 + $0xb0] sm:$0xff] %vm3770, %v3743
        %3795 = vst.msk [vmem:[#allocation2 + $0xb8] sm:$0xf] %vm3772, %v3745
        %v3796 = vld [vmem:[%s3211 + $0x4] sm:$0xff]
        %v3797 = vld [vmem:[%s3211 + $0xc] sm:$0xf]
        %v3798 = vld [vmem:[%s3211 + $0x14] sm:$0xff]
        %v3799 = vld [vmem:[%s3211 + $0x1c] sm:$0xf]
        %v3800 = vld [vmem:[%s3211 + $0x24] sm:$0xff]
        %v3801 = vld [vmem:[%s3211 + $0x2c] sm:$0xf]
        %v3802 = vld [vmem:[%s3211 + $0x34] sm:$0xff]
        %v3803 = vld [vmem:[%s3211 + $0x3c] sm:$0xf]
        %v3804 = vld [vmem:[%s3211 + $0x44] sm:$0xff]
        %v3805 = vld [vmem:[%s3211 + $0x4c] sm:$0xf]
        %v3806 = vld [vmem:[%s3211 + $0x54] sm:$0xff]
        %v3807 = vld [vmem:[%s3211 + $0x5c] sm:$0xf]
        %v3808 = vld [vmem:[%s3211 + $0x64] sm:$0xff]
        %v3809 = vld [vmem:[%s3211 + $0x6c] sm:$0xf]
        %v3810 = vld [vmem:[%s3211 + $0x74] sm:$0xff]
        %v3811 = vld [vmem:[%s3211 + $0x7c] sm:$0xf]
        %v3812 = vld [vmem:[%s3211 + $0x84] sm:$0xff]
        %v3813 = vld [vmem:[%s3211 + $0x8c] sm:$0xf]
        %v3814 = vld [vmem:[%s3211 + $0x94] sm:$0xff]
        %v3815 = vld [vmem:[%s3211 + $0x9c] sm:$0xf]
        %v3816 = vld [vmem:[%s3211 + $0xa4] sm:$0xff]
        %v3817 = vld [vmem:[%s3211 + $0xac] sm:$0xf]
        %v3818 = vld [vmem:[%s3211 + $0xb4] sm:$0xff]
        %v3819 = vld [vmem:[%s3211 + $0xbc] sm:$0xf]
        %3844 = vrot.lane.b32.xlu0 %v3796, 72
        %v3845 = vpop.permute.xlu0 %3844
        %3846 = vrot.lane.b32.xlu0 %v3797, 72
        %v3847 = vpop.permute.xlu0 %3846
        %3848 = vrot.lane.b32.xlu0 %v3798, 72
        %v3849 = vpop.permute.xlu0 %3848
        %3850 = vrot.lane.b32.xlu0 %v3799, 72
        %v3851 = vpop.permute.xlu0 %3850
        %3852 = vrot.lane.b32.xlu0 %v3800, 72
        %v3853 = vpop.permute.xlu0 %3852
        %3854 = vrot.lane.b32.xlu0 %v3801, 72
        %v3855 = vpop.permute.xlu0 %3854
        %3856 = vrot.lane.b32.xlu0 %v3802, 72
        %v3857 = vpop.permute.xlu0 %3856
        %3858 = vrot.lane.b32.xlu0 %v3803, 72
        %v3859 = vpop.permute.xlu0 %3858
        %3860 = vrot.lane.b32.xlu0 %v3804, 72
        %v3861 = vpop.permute.xlu0 %3860
        %3862 = vrot.lane.b32.xlu0 %v3805, 72
        %v3863 = vpop.permute.xlu0 %3862
        %3864 = vrot.lane.b32.xlu0 %v3806, 72
        %v3865 = vpop.permute.xlu0 %3864
        %3866 = vrot.lane.b32.xlu0 %v3807, 72
        %v3867 = vpop.permute.xlu0 %3866
        %3868 = vrot.lane.b32.xlu0 %v3808, 72
        %v3869 = vpop.permute.xlu0 %3868
        %3870 = vrot.lane.b32.xlu0 %v3809, 72
        %v3871 = vpop.permute.xlu0 %3870
        %3872 = vrot.lane.b32.xlu0 %v3810, 72
        %v3873 = vpop.permute.xlu0 %3872
        %3874 = vrot.lane.b32.xlu0 %v3811, 72
        %v3875 = vpop.permute.xlu0 %3874
        %3876 = vrot.lane.b32.xlu0 %v3812, 72
        %v3877 = vpop.permute.xlu0 %3876
        %3878 = vrot.lane.b32.xlu0 %v3813, 72
        %v3879 = vpop.permute.xlu0 %3878
        %3880 = vrot.lane.b32.xlu0 %v3814, 72
        %v3881 = vpop.permute.xlu0 %3880
        %3882 = vrot.lane.b32.xlu0 %v3815, 72
        %v3883 = vpop.permute.xlu0 %3882
        %3884 = vrot.lane.b32.xlu0 %v3816, 72
        %v3885 = vpop.permute.xlu0 %3884
        %3886 = vrot.lane.b32.xlu0 %v3817, 72
        %v3887 = vpop.permute.xlu0 %3886
        %3888 = vrot.lane.b32.xlu0 %v3818, 72
        %v3889 = vpop.permute.xlu0 %3888
        %3890 = vrot.lane.b32.xlu0 %v3819, 72
        %v3891 = vpop.permute.xlu0 %3890
        %vm3916 = vcmask 613952
        %3917 = vst.msk [vmem:[#allocation2] sm:$0xff] %vm3916, %v3845
        %vm3918 = vcmask 609856
        %3919 = vst.msk [vmem:[#allocation2 + $0x8] sm:$0xf] %vm3918, %v3847
        %3920 = vst.msk [vmem:[#allocation2 + $0x10] sm:$0xff] %vm3916, %v3849
        %3921 = vst.msk [vmem:[#allocation2 + $0x18] sm:$0xf] %vm3918, %v3851
        %3922 = vst.msk [vmem:[#allocation2 + $0x20] sm:$0xff] %vm3916, %v3853
        %3923 = vst.msk [vmem:[#allocation2 + $0x28] sm:$0xf] %vm3918, %v3855
        %3924 = vst.msk [vmem:[#allocation2 + $0x30] sm:$0xff] %vm3916, %v3857
        %3925 = vst.msk [vmem:[#allocation2 + $0x38] sm:$0xf] %vm3918, %v3859
        %3926 = vst.msk [vmem:[#allocation2 + $0x40] sm:$0xff] %vm3916, %v3861
        %3927 = vst.msk [vmem:[#allocation2 + $0x48] sm:$0xf] %vm3918, %v3863
        %3928 = vst.msk [vmem:[#allocation2 + $0x50] sm:$0xff] %vm3916, %v3865
        %3929 = vst.msk [vmem:[#allocation2 + $0x58] sm:$0xf] %vm3918, %v3867
        %3930 = vst.msk [vmem:[#allocation2 + $0x60] sm:$0xff] %vm3916, %v3869
        %3931 = vst.msk [vmem:[#allocation2 + $0x68] sm:$0xf] %vm3918, %v3871
        %3932 = vst.msk [vmem:[#allocation2 + $0x70] sm:$0xff] %vm3916, %v3873
        %3933 = vst.msk [vmem:[#allocation2 + $0x78] sm:$0xf] %vm3918, %v3875
        %3934 = vst.msk [vmem:[#allocation2 + $0x80] sm:$0xff] %vm3916, %v3877
        %3935 = vst.msk [vmem:[#allocation2 + $0x88] sm:$0xf] %vm3918, %v3879
        %3936 = vst.msk [vmem:[#allocation2 + $0x90] sm:$0xff] %vm3916, %v3881
        %3937 = vst.msk [vmem:[#allocation2 + $0x98] sm:$0xf] %vm3918, %v3883
        %3938 = vst.msk [vmem:[#allocation2 + $0xa0] sm:$0xff] %vm3916, %v3885
        %3939 = vst.msk [vmem:[#allocation2 + $0xa8] sm:$0xf] %vm3918, %v3887
        %3940 = vst.msk [vmem:[#allocation2 + $0xb0] sm:$0xff] %vm3916, %v3889
        %3941 = vst.msk [vmem:[#allocation2 + $0xb8] sm:$0xf] %vm3918, %v3891
        %v3942 = vld [vmem:[%s1] sm:$0xff]
        %v3943 = vld [vmem:[%s1 + $0x8] sm:$0xff]
        %v3944 = vld [vmem:[%s1 + $0x10] sm:$0xff]
        %v3945 = vld [vmem:[%s1 + $0x18] sm:$0xff]
        %v3946 = vld [vmem:[%s1 + $0x20] sm:$0xff]
        %v3947 = vld [vmem:[%s1 + $0x28] sm:$0xff]
        %v3948 = vld [vmem:[%s1 + $0x30] sm:$0xff]
        %v3949 = vld [vmem:[%s1 + $0x38] sm:$0xff]
        %v3950 = vld [vmem:[%s1 + $0x40] sm:$0xff]
        %v3951 = vld [vmem:[%s1 + $0x48] sm:$0x7]
        %v3952 = vld [vmem:[%s2] sm:$0x1]
        %v3953 = vld [vmem:[#allocation2] sm:$0xff]
        %v3954 = vld [vmem:[#allocation2 + $0x8] sm:$0xf]
        %v3956 = vlaneseq
        %v3957 = vshrl.u32 %v3956, 7
        %v3958 = vsub.s32 0, %v3957
        %v3959 = vrot.slane %v3952, %v3958
        %vm3961 = vcmask 613376
        %v3963 = vsel %vm3961, %v3953, 0
        %v3966 = vsel %vm3961, %v3954, 0
        %vm3968 = vcmask 1042432
        %v3970 = vsel %vm3968, %v3951, 0
        %3972 = vmatprep.subr.mxu0 0.0
        %3973 = vmatpush1.msra.mxu0 %v3942
        %3974 = vmatprep.subr.mxu0 0.0
        %3975 = vmatpush1.msra.mxu0 %v3943
        %3976 = vmatprep.subr.mxu0 0.0
        %3977 = vmatpush1.msra.mxu0 %v3944
        %3978 = vmatprep.subr.mxu0 0.0
        %3979 = vmatpush1.msra.mxu0 %v3945
        %3980 = vmatprep.subr.mxu0 0.0
        %3981 = vmatpush1.msra.mxu0 %v3946
        %3982 = vmatprep.subr.mxu0 0.0
        %3983 = vmatpush1.msra.mxu0 %v3947
        %3984 = vmatprep.subr.mxu0 0.0
        %3985 = vmatpush1.msra.mxu0 %v3948
        %3986 = vmatprep.subr.mxu0 0.0
        %3987 = vmatpush1.msra.mxu0 %v3949
        %3988 = vmatprep.subr.mxu0 0.0
        %3989 = vmatpush1.msra.mxu0 %v3950
        %3990 = vmatprep.subr.mxu0 0.0
        %3991 = vmatpush1.msra.mxu0 %v3970
        %3992 = vmatprep.subr.mxu0 0.0
        %3993 = vmatpush1.msra.mxu0 0.0
        %3994 = vmatprep.subr.mxu0 0.0
        %3995 = vmatpush1.msra.mxu0 0.0
        %3996 = vmatprep.subr.mxu0 0.0
        %3997 = vmatpush1.msra.mxu0 0.0
        %3998 = vmatprep.subr.mxu0 0.0
        %3999 = vmatpush1.msra.mxu0 0.0
        %4000 = vmatprep.subr.mxu0 0.0
        %4001 = vmatpush1.msra.mxu0 0.0
        %4002 = vmatprep.subr.mxu0 0.0
        %4003 = vmatpush1.msra.mxu0 0.0
        %4004 = vmatprep.subr.mxu0 0.0
        %4005 = vmatpush1.msra.mxu0 0.0
        %4006 = vmatprep.subr.mxu0 0.0
        %4007 = vmatpush1.msra.mxu0 0.0
        %4008 = vmatprep.subr.mxu0 0.0
        %4009 = vmatpush1.msra.mxu0 0.0
        %4010 = vmatprep.subr.mxu0 0.0
        %4011 = vmatpush1.msra.mxu0 0.0
        %4012 = vmatprep.subr.mxu0 0.0
        %4013 = vmatpush1.msra.mxu0 0.0
        %4014 = vmatprep.subr.mxu0 0.0
        %4015 = vmatpush1.msra.mxu0 0.0
        %4016 = vmatprep.subr.mxu0 0.0
        %4017 = vmatpush1.msra.mxu0 0.0
        %4018 = vmatprep.subr.mxu0 0.0
        %4019 = vmatpush1.msra.mxu0 0.0
        %4020 = vmatprep.subr.mxu0 0.0
        %4021 = vmatpush1.msra.mxu0 0.0
        %4022 = vmatprep.subr.mxu0 0.0
        %4023 = vmatpush1.msra.mxu0 0.0
        %4024 = vmatprep.subr.mxu0 0.0
        %4025 = vmatpush1.msra.mxu0 0.0
        %4026 = vmatprep.subr.mxu0 0.0
        %4027 = vmatpush1.msra.mxu0 0.0
        %4028 = vmatprep.subr.mxu0 0.0
        %4029 = vmatpush1.msra.mxu0 0.0
        %4030 = vmatprep.subr.mxu0 0.0
        %4031 = vmatpush1.msra.mxu0 0.0
        %4032 = vmatprep.subr.mxu0 0.0
        %4033 = vmatpush1.msra.mxu0 0.0
        %4034 = vmatprep.subr.mxu0 0.0
        %4035 = vmatpush1.msra.mxu0 0.0
        %4036 = vmatprep.mubr.f32.mxu0 0.0
        %4037 = vmatmul.mubr.f32.gmra.mrb[0].mxu0 %v3963
        %v4038 = vpop.f32.mrb[0].mxu0
        %v4039 = vadd.f32 %v3959, %v4038
        %v4040 = vpop.f32.mrb[0].mxu0
        %4041 = vmatprep.mubr.f32.mxu0 0.0
        %4042 = vmatmul.mubr.f32.gmra.mrb[0].mxu0 %v3966
        %v4043 = vpop.f32.mrb[0].mxu0
        %v4044 = vadd.f32 %v3959, %v4043
        %v4045 = vpop.f32.mrb[0].mxu0
        %4046 = vdwg.mxu0
        %v4047 = vmax.f32 %v4039, 0.0
        %v4048 = vmax.f32 %v4044, 0.0
        %s4049 = scalar_lea.vmem [#allocation2], 16
        %v4050 = vld [vmem:[%s4049] sm:$0xff]
        %v4051 = vld [vmem:[%s4049 + $0x8] sm:$0xf]
        %v4053 = vsel %vm3961, %v4050, 0
        %v4056 = vsel %vm3961, %v4051, 0
        %4058 = vmatprep.subr.mxu0 0.0
        %4059 = vmatpush1.msra.mxu0 %v3942
        %4060 = vmatprep.subr.mxu0 0.0
        %4061 = vmatpush1.msra.mxu0 %v3943
        %4062 = vmatprep.subr.mxu0 0.0
        %4063 = vmatpush1.msra.mxu0 %v3944
        %4064 = vmatprep.subr.mxu0 0.0
        %4065 = vmatpush1.msra.mxu0 %v3945
        %4066 = vmatprep.subr.mxu0 0.0
        %4067 = vmatpush1.msra.mxu0 %v3946
        %4068 = vmatprep.subr.mxu0 0.0
        %4069 = vmatpush1.msra.mxu0 %v3947
        %4070 = vmatprep.subr.mxu0 0.0
        %4071 = vmatpush1.msra.mxu0 %v3948
        %4072 = vmatprep.subr.mxu0 0.0
        %4073 = vmatpush1.msra.mxu0 %v3949
        %4074 = vmatprep.subr.mxu0 0.0
        %4075 = vmatpush1.msra.mxu0 %v3950
        %4076 = vmatprep.subr.mxu0 0.0
        %4077 = vmatpush1.msra.mxu0 %v3970
        %4078 = vmatprep.subr.mxu0 0.0
        %4079 = vmatpush1.msra.mxu0 0.0
        %4080 = vmatprep.subr.mxu0 0.0
        %4081 = vmatpush1.msra.mxu0 0.0
        %4082 = vmatprep.subr.mxu0 0.0
        %4083 = vmatpush1.msra.mxu0 0.0
        %4084 = vmatprep.subr.mxu0 0.0
        %4085 = vmatpush1.msra.mxu0 0.0
        %4086 = vmatprep.subr.mxu0 0.0
        %4087 = vmatpush1.msra.mxu0 0.0
        %4088 = vmatprep.subr.mxu0 0.0
        %4089 = vmatpush1.msra.mxu0 0.0
        %4090 = vmatprep.subr.mxu0 0.0
        %4091 = vmatpush1.msra.mxu0 0.0
        %4092 = vmatprep.subr.mxu0 0.0
        %4093 = vmatpush1.msra.mxu0 0.0
        %4094 = vmatprep.subr.mxu0 0.0
        %4095 = vmatpush1.msra.mxu0 0.0
        %4096 = vmatprep.subr.mxu0 0.0
        %4097 = vmatpush1.msra.mxu0 0.0
        %4098 = vmatprep.subr.mxu0 0.0
        %4099 = vmatpush1.msra.mxu0 0.0
        %4100 = vmatprep.subr.mxu0 0.0
        %4101 = vmatpush1.msra.mxu0 0.0
        %4102 = vmatprep.subr.mxu0 0.0
        %4103 = vmatpush1.msra.mxu0 0.0
        %4104 = vmatprep.subr.mxu0 0.0
        %4105 = vmatpush1.msra.mxu0 0.0
        %4106 = vmatprep.subr.mxu0 0.0
        %4107 = vmatpush1.msra.mxu0 0.0
        %4108 = vmatprep.subr.mxu0 0.0
        %4109 = vmatpush1.msra.mxu0 0.0
        %4110 = vmatprep.subr.mxu0 0.0
        %4111 = vmatpush1.msra.mxu0 0.0
        %4112 = vmatprep.subr.mxu0 0.0
        %4113 = vmatpush1.msra.mxu0 0.0
        %4114 = vmatprep.subr.mxu0 0.0
        %4115 = vmatpush1.msra.mxu0 0.0
        %4116 = vmatprep.subr.mxu0 0.0
        %4117 = vmatpush1.msra.mxu0 0.0
        %4118 = vmatprep.subr.mxu0 0.0
        %4119 = vmatpush1.msra.mxu0 0.0
        %4120 = vmatprep.subr.mxu0 0.0
        %4121 = vmatpush1.msra.mxu0 0.0
        %4122 = vmatprep.mubr.f32.mxu0 0.0
        %4123 = vmatmul.mubr.f32.gmra.mrb[0].mxu0 %v4053
        %v4124 = vpop.f32.mrb[0].mxu0
        %v4125 = vadd.f32 %v3959, %v4124
        %v4126 = vpop.f32.mrb[0].mxu0
        %4127 = vmatprep.mubr.f32.mxu0 0.0
        %4128 = vmatmul.mubr.f32.gmra.mrb[0].mxu0 %v4056
        %v4129 = vpop.f32.mrb[0].mxu0
        %v4130 = vadd.f32 %v3959, %v4129
        %v4131 = vpop.f32.mrb[0].mxu0
        %4132 = vdwg.mxu0
        %v4133 = vmax.f32 %v4125, 0.0
        %v4134 = vmax.f32 %v4130, 0.0
        %v4135 = vmax.f32 %v4047, %v4133
        %v4136 = vmax.f32 %v4048, %v4134
        %vm4137 = vcmask 64512
        %4138 = vst.msk [vmem:[#allocation3] sm:$0xff] %vm4137, %v4135
        %vm4139 = vcmask 60416
        %4140 = vst.msk [vmem:[#allocation3 + $0x8] sm:$0xf] %vm4139, %v4136
        %s4141 = scalar_lea.vmem [#allocation2], 32
        %v4142 = vld [vmem:[%s4141] sm:$0xff]
        %v4143 = vld [vmem:[%s4141 + $0x8] sm:$0xf]
        %v4145 = vsel %vm3961, %v4142, 0
        %v4148 = vsel %vm3961, %v4143, 0
        %4150 = vmatprep.subr.mxu0 0.0
        %4151 = vmatpush1.msra.mxu0 %v3942
        %4152 = vmatprep.subr.mxu0 0.0
        %4153 = vmatpush1.msra.mxu0 %v3943
        %4154 = vmatprep.subr.mxu0 0.0
        %4155 = vmatpush1.msra.mxu0 %v3944
        %4156 = vmatprep.subr.mxu0 0.0
        %4157 = vmatpush1.msra.mxu0 %v3945
        %4158 = vmatprep.subr.mxu0 0.0
        %4159 = vmatpush1.msra.mxu0 %v3946
        %4160 = vmatprep.subr.mxu0 0.0
        %4161 = vmatpush1.msra.mxu0 %v3947
        %4162 = vmatprep.subr.mxu0 0.0
        %4163 = vmatpush1.msra.mxu0 %v3948
        %4164 = vmatprep.subr.mxu0 0.0
        %4165 = vmatpush1.msra.mxu0 %v3949
        %4166 = vmatprep.subr.mxu0 0.0
        %4167 = vmatpush1.msra.mxu0 %v3950
        %4168 = vmatprep.subr.mxu0 0.0
        %4169 = vmatpush1.msra.mxu0 %v3970
        %4170 = vmatprep.subr.mxu0 0.0
        %4171 = vmatpush1.msra.mxu0 0.0
        %4172 = vmatprep.subr.mxu0 0.0
        %4173 = vmatpush1.msra.mxu0 0.0
        %4174 = vmatprep.subr.mxu0 0.0
        %4175 = vmatpush1.msra.mxu0 0.0
        %4176 = vmatprep.subr.mxu0 0.0
        %4177 = vmatpush1.msra.mxu0 0.0
        %4178 = vmatprep.subr.mxu0 0.0
        %4179 = vmatpush1.msra.mxu0 0.0
        %4180 = vmatprep.subr.mxu0 0.0
        %4181 = vmatpush1.msra.mxu0 0.0
        %4182 = vmatprep.subr.mxu0 0.0
        %4183 = vmatpush1.msra.mxu0 0.0
        %4184 = vmatprep.subr.mxu0 0.0
        %4185 = vmatpush1.msra.mxu0 0.0
        %4186 = vmatprep.subr.mxu0 0.0
        %4187 = vmatpush1.msra.mxu0 0.0
        %4188 = vmatprep.subr.mxu0 0.0
        %4189 = vmatpush1.msra.mxu0 0.0
        %4190 = vmatprep.subr.mxu0 0.0
        %4191 = vmatpush1.msra.mxu0 0.0
        %4192 = vmatprep.subr.mxu0 0.0
        %4193 = vmatpush1.msra.mxu0 0.0
        %4194 = vmatprep.subr.mxu0 0.0
        %4195 = vmatpush1.msra.mxu0 0.0
        %4196 = vmatprep.subr.mxu0 0.0
        %4197 = vmatpush1.msra.mxu0 0.0
        %4198 = vmatprep.subr.mxu0 0.0
        %4199 = vmatpush1.msra.mxu0 0.0
        %4200 = vmatprep.subr.mxu0 0.0
        %4201 = vmatpush1.msra.mxu0 0.0
        %4202 = vmatprep.subr.mxu0 0.0
        %4203 = vmatpush1.msra.mxu0 0.0
        %4204 = vmatprep.subr.mxu0 0.0
        %4205 = vmatpush1.msra.mxu0 0.0
        %4206 = vmatprep.subr.mxu0 0.0
        %4207 = vmatpush1.msra.mxu0 0.0
        %4208 = vmatprep.subr.mxu0 0.0
        %4209 = vmatpush1.msra.mxu0 0.0
        %4210 = vmatprep.subr.mxu0 0.0
        %4211 = vmatpush1.msra.mxu0 0.0
        %4212 = vmatprep.subr.mxu0 0.0
        %4213 = vmatpush1.msra.mxu0 0.0
        %4214 = vmatprep.mubr.f32.mxu0 0.0
        %4215 = vmatmul.mubr.f32.gmra.mrb[0].mxu0 %v4145
        %v4216 = vpop.f32.mrb[0].mxu0
        %v4217 = vadd.f32 %v3959, %v4216
        %v4218 = vpop.f32.mrb[0].mxu0
        %4219 = vmatprep.mubr.f32.mxu0 0.0
        %4220 = vmatmul.mubr.f32.gmra.mrb[0].mxu0 %v4148
        %v4221 = vpop.f32.mrb[0].mxu0
        %v4222 = vadd.f32 %v3959, %v4221
        %v4223 = vpop.f32.mrb[0].mxu0
        %4224 = vdwg.mxu0
        %v4225 = vmax.f32 %v4217, 0.0
        %v4226 = vmax.f32 %v4222, 0.0
        %s4227 = scalar_lea.vmem [#allocation2], 48
        %v4228 = vld [vmem:[%s4227] sm:$0xff]
        %v4229 = vld [vmem:[%s4227 + $0x8] sm:$0xf]
        %v4231 = vsel %vm3961, %v4228, 0
        %v4234 = vsel %vm3961, %v4229, 0
        %4236 = vmatprep.subr.mxu0 0.0
        %4237 = vmatpush1.msra.mxu0 %v3942
        %4238 = vmatprep.subr.mxu0 0.0
        %4239 = vmatpush1.msra.mxu0 %v3943
        %4240 = vmatprep.subr.mxu0 0.0
        %4241 = vmatpush1.msra.mxu0 %v3944
        %4242 = vmatprep.subr.mxu0 0.0
        %4243 = vmatpush1.msra.mxu0 %v3945
        %4244 = vmatprep.subr.mxu0 0.0
        %4245 = vmatpush1.msra.mxu0 %v3946
        %4246 = vmatprep.subr.mxu0 0.0
        %4247 = vmatpush1.msra.mxu0 %v3947
        %4248 = vmatprep.subr.mxu0 0.0
        %4249 = vmatpush1.msra.mxu0 %v3948
        %4250 = vmatprep.subr.mxu0 0.0
        %4251 = vmatpush1.msra.mxu0 %v3949
        %4252 = vmatprep.subr.mxu0 0.0
        %4253 = vmatpush1.msra.mxu0 %v3950
        %4254 = vmatprep.subr.mxu0 0.0
        %4255 = vmatpush1.msra.mxu0 %v3970
        %4256 = vmatprep.subr.mxu0 0.0
        %4257 = vmatpush1.msra.mxu0 0.0
        %4258 = vmatprep.subr.mxu0 0.0
        %4259 = vmatpush1.msra.mxu0 0.0
        %4260 = vmatprep.subr.mxu0 0.0
        %4261 = vmatpush1.msra.mxu0 0.0
        %4262 = vmatprep.subr.mxu0 0.0
        %4263 = vmatpush1.msra.mxu0 0.0
        %4264 = vmatprep.subr.mxu0 0.0
        %4265 = vmatpush1.msra.mxu0 0.0
        %4266 = vmatprep.subr.mxu0 0.0
        %4267 = vmatpush1.msra.mxu0 0.0
        %4268 = vmatprep.subr.mxu0 0.0
        %4269 = vmatpush1.msra.mxu0 0.0
        %4270 = vmatprep.subr.mxu0 0.0
        %4271 = vmatpush1.msra.mxu0 0.0
        %4272 = vmatprep.subr.mxu0 0.0
        %4273 = vmatpush1.msra.mxu0 0.0
        %4274 = vmatprep.subr.mxu0 0.0
        %4275 = vmatpush1.msra.mxu0 0.0
        %4276 = vmatprep.subr.mxu0 0.0
        %4277 = vmatpush1.msra.mxu0 0.0
        %4278 = vmatprep.subr.mxu0 0.0
        %4279 = vmatpush1.msra.mxu0 0.0
        %4280 = vmatprep.subr.mxu0 0.0
        %4281 = vmatpush1.msra.mxu0 0.0
        %4282 = vmatprep.subr.mxu0 0.0
        %4283 = vmatpush1.msra.mxu0 0.0
        %4284 = vmatprep.subr.mxu0 0.0
        %4285 = vmatpush1.msra.mxu0 0.0
        %4286 = vmatprep.subr.mxu0 0.0
        %4287 = vmatpush1.msra.mxu0 0.0
        %4288 = vmatprep.subr.mxu0 0.0
        %4289 = vmatpush1.msra.mxu0 0.0
        %4290 = vmatprep.subr.mxu0 0.0
        %4291 = vmatpush1.msra.mxu0 0.0
        %4292 = vmatprep.subr.mxu0 0.0
        %4293 = vmatpush1.msra.mxu0 0.0
        %4294 = vmatprep.subr.mxu0 0.0
        %4295 = vmatpush1.msra.mxu0 0.0
        %4296 = vmatprep.subr.mxu0 0.0
        %4297 = vmatpush1.msra.mxu0 0.0
        %4298 = vmatprep.subr.mxu0 0.0
        %4299 = vmatpush1.msra.mxu0 0.0
        %4300 = vmatprep.mubr.f32.mxu0 0.0
        %4301 = vmatmul.mubr.f32.gmra.mrb[0].mxu0 %v4231
        %v4302 = vpop.f32.mrb[0].mxu0
        %v4303 = vadd.f32 %v3959, %v4302
        %v4304 = vpop.f32.mrb[0].mxu0
        %4305 = vmatprep.mubr.f32.mxu0 0.0
        %4306 = vmatmul.mubr.f32.gmra.mrb[0].mxu0 %v4234
        %v4307 = vpop.f32.mrb[0].mxu0
        %v4308 = vadd.f32 %v3959, %v4307
        %v4309 = vpop.f32.mrb[0].mxu0
        %4310 = vdwg.mxu0
        %v4311 = vmax.f32 %v4303, 0.0
        %v4312 = vmax.f32 %v4308, 0.0
        %v4313 = vmax.f32 %v4225, %v4311
        %v4314 = vmax.f32 %v4226, %v4312
        %s4315 = scalar_lea.vmem [#allocation3], 16
        %4316 = vst.msk [vmem:[%s4315] sm:$0xff] %vm4137, %v4313
        %4317 = vst.msk [vmem:[%s4315 + $0x8] sm:$0xf] %vm4139, %v4314
        %s4318 = scalar_lea.vmem [#allocation2], 64
        %v4319 = vld [vmem:[%s4318] sm:$0xff]
        %v4320 = vld [vmem:[%s4318 + $0x8] sm:$0xf]
        %v4322 = vsel %vm3961, %v4319, 0
        %v4325 = vsel %vm3961, %v4320, 0
        %4327 = vmatprep.subr.mxu0 0.0
        %4328 = vmatpush1.msra.mxu0 %v3942
        %4329 = vmatprep.subr.mxu0 0.0
        %4330 = vmatpush1.msra.mxu0 %v3943
        %4331 = vmatprep.subr.mxu0 0.0
        %4332 = vmatpush1.msra.mxu0 %v3944
        %4333 = vmatprep.subr.mxu0 0.0
        %4334 = vmatpush1.msra.mxu0 %v3945
        %4335 = vmatprep.subr.mxu0 0.0
        %4336 = vmatpush1.msra.mxu0 %v3946
        %4337 = vmatprep.subr.mxu0 0.0
        %4338 = vmatpush1.msra.mxu0 %v3947
        %4339 = vmatprep.subr.mxu0 0.0
        %4340 = vmatpush1.msra.mxu0 %v3948
        %4341 = vmatprep.subr.mxu0 0.0
        %4342 = vmatpush1.msra.mxu0 %v3949
        %4343 = vmatprep.subr.mxu0 0.0
        %4344 = vmatpush1.msra.mxu0 %v3950
        %4345 = vmatprep.subr.mxu0 0.0
        %4346 = vmatpush1.msra.mxu0 %v3970
        %4347 = vmatprep.subr.mxu0 0.0
        %4348 = vmatpush1.msra.mxu0 0.0
        %4349 = vmatprep.subr.mxu0 0.0
        %4350 = vmatpush1.msra.mxu0 0.0
        %4351 = vmatprep.subr.mxu0 0.0
        %4352 = vmatpush1.msra.mxu0 0.0
        %4353 = vmatprep.subr.mxu0 0.0
        %4354 = vmatpush1.msra.mxu0 0.0
        %4355 = vmatprep.subr.mxu0 0.0
        %4356 = vmatpush1.msra.mxu0 0.0
        %4357 = vmatprep.subr.mxu0 0.0
        %4358 = vmatpush1.msra.mxu0 0.0
        %4359 = vmatprep.subr.mxu0 0.0
        %4360 = vmatpush1.msra.mxu0 0.0
        %4361 = vmatprep.subr.mxu0 0.0
        %4362 = vmatpush1.msra.mxu0 0.0
        %4363 = vmatprep.subr.mxu0 0.0
        %4364 = vmatpush1.msra.mxu0 0.0
        %4365 = vmatprep.subr.mxu0 0.0
        %4366 = vmatpush1.msra.mxu0 0.0
        %4367 = vmatprep.subr.mxu0 0.0
        %4368 = vmatpush1.msra.mxu0 0.0
        %4369 = vmatprep.subr.mxu0 0.0
        %4370 = vmatpush1.msra.mxu0 0.0
        %4371 = vmatprep.subr.mxu0 0.0
        %4372 = vmatpush1.msra.mxu0 0.0
        %4373 = vmatprep.subr.mxu0 0.0
        %4374 = vmatpush1.msra.mxu0 0.0
        %4375 = vmatprep.subr.mxu0 0.0
        %4376 = vmatpush1.msra.mxu0 0.0
        %4377 = vmatprep.subr.mxu0 0.0
        %4378 = vmatpush1.msra.mxu0 0.0
        %4379 = vmatprep.subr.mxu0 0.0
        %4380 = vmatpush1.msra.mxu0 0.0
        %4381 = vmatprep.subr.mxu0 0.0
        %4382 = vmatpush1.msra.mxu0 0.0
        %4383 = vmatprep.subr.mxu0 0.0
        %4384 = vmatpush1.msra.mxu0 0.0
        %4385 = vmatprep.subr.mxu0 0.0
        %4386 = vmatpush1.msra.mxu0 0.0
        %4387 = vmatprep.subr.mxu0 0.0
        %4388 = vmatpush1.msra.mxu0 0.0
        %4389 = vmatprep.subr.mxu0 0.0
        %4390 = vmatpush1.msra.mxu0 0.0
        %4391 = vmatprep.mubr.f32.mxu0 0.0
        %4392 = vmatmul.mubr.f32.gmra.mrb[0].mxu0 %v4322
        %v4393 = vpop.f32.mrb[0].mxu0
        %v4394 = vadd.f32 %v3959, %v4393
        %v4395 = vpop.f32.mrb[0].mxu0
        %4396 = vmatprep.mubr.f32.mxu0 0.0
        %4397 = vmatmul.mubr.f32.gmra.mrb[0].mxu0 %v4325
        %v4398 = vpop.f32.mrb[0].mxu0
        %v4399 = vadd.f32 %v3959, %v4398
        %v4400 = vpop.f32.mrb[0].mxu0
        %4401 = vdwg.mxu0
        %v4402 = vmax.f32 %v4394, 0.0
        %v4403 = vmax.f32 %v4399, 0.0
        %s4404 = scalar_lea.vmem [#allocation2], 80
        %v4405 = vld [vmem:[%s4404] sm:$0xff]
        %v4406 = vld [vmem:[%s4404 + $0x8] sm:$0xf]
        %v4408 = vsel %vm3961, %v4405, 0
        %v4411 = vsel %vm3961, %v4406, 0
        %4413 = vmatprep.subr.mxu0 0.0
        %4414 = vmatpush1.msra.mxu0 %v3942
        %4415 = vmatprep.subr.mxu0 0.0
        %4416 = vmatpush1.msra.mxu0 %v3943
        %4417 = vmatprep.subr.mxu0 0.0
        %4418 = vmatpush1.msra.mxu0 %v3944
        %4419 = vmatprep.subr.mxu0 0.0
        %4420 = vmatpush1.msra.mxu0 %v3945
        %4421 = vmatprep.subr.mxu0 0.0
        %4422 = vmatpush1.msra.mxu0 %v3946
        %4423 = vmatprep.subr.mxu0 0.0
        %4424 = vmatpush1.msra.mxu0 %v3947
        %4425 = vmatprep.subr.mxu0 0.0
        %4426 = vmatpush1.msra.mxu0 %v3948
        %4427 = vmatprep.subr.mxu0 0.0
        %4428 = vmatpush1.msra.mxu0 %v3949
        %4429 = vmatprep.subr.mxu0 0.0
        %4430 = vmatpush1.msra.mxu0 %v3950
        %4431 = vmatprep.subr.mxu0 0.0
        %4432 = vmatpush1.msra.mxu0 %v3970
        %4433 = vmatprep.subr.mxu0 0.0
        %4434 = vmatpush1.msra.mxu0 0.0
        %4435 = vmatprep.subr.mxu0 0.0
        %4436 = vmatpush1.msra.mxu0 0.0
        %4437 = vmatprep.subr.mxu0 0.0
        %4438 = vmatpush1.msra.mxu0 0.0
        %4439 = vmatprep.subr.mxu0 0.0
        %4440 = vmatpush1.msra.mxu0 0.0
        %4441 = vmatprep.subr.mxu0 0.0
        %4442 = vmatpush1.msra.mxu0 0.0
        %4443 = vmatprep.subr.mxu0 0.0
        %4444 = vmatpush1.msra.mxu0 0.0
        %4445 = vmatprep.subr.mxu0 0.0
        %4446 = vmatpush1.msra.mxu0 0.0
        %4447 = vmatprep.subr.mxu0 0.0
        %4448 = vmatpush1.msra.mxu0 0.0
        %4449 = vmatprep.subr.mxu0 0.0
        %4450 = vmatpush1.msra.mxu0 0.0
        %4451 = vmatprep.subr.mxu0 0.0
        %4452 = vmatpush1.msra.mxu0 0.0
        %4453 = vmatprep.subr.mxu0 0.0
        %4454 = vmatpush1.msra.mxu0 0.0
        %4455 = vmatprep.subr.mxu0 0.0
        %4456 = vmatpush1.msra.mxu0 0.0
        %4457 = vmatprep.subr.mxu0 0.0
        %4458 = vmatpush1.msra.mxu0 0.0
        %4459 = vmatprep.subr.mxu0 0.0
        %4460 = vmatpush1.msra.mxu0 0.0
        %4461 = vmatprep.subr.mxu0 0.0
        %4462 = vmatpush1.msra.mxu0 0.0
        %4463 = vmatprep.subr.mxu0 0.0
        %4464 = vmatpush1.msra.mxu0 0.0
        %4465 = vmatprep.subr.mxu0 0.0
        %4466 = vmatpush1.msra.mxu0 0.0
        %4467 = vmatprep.subr.mxu0 0.0
        %4468 = vmatpush1.msra.mxu0 0.0
        %4469 = vmatprep.subr.mxu0 0.0
        %4470 = vmatpush1.msra.mxu0 0.0
        %4471 = vmatprep.subr.mxu0 0.0
        %4472 = vmatpush1.msra.mxu0 0.0
        %4473 = vmatprep.subr.mxu0 0.0
        %4474 = vmatpush1.msra.mxu0 0.0
        %4475 = vmatprep.subr.mxu0 0.0
        %4476 = vmatpush1.msra.mxu0 0.0
        %4477 = vmatprep.mubr.f32.mxu0 0.0
        %4478 = vmatmul.mubr.f32.gmra.mrb[0].mxu0 %v4408
        %v4479 = vpop.f32.mrb[0].mxu0
        %v4480 = vadd.f32 %v3959, %v4479
        %v4481 = vpop.f32.mrb[0].mxu0
        %4482 = vmatprep.mubr.f32.mxu0 0.0
        %4483 = vmatmul.mubr.f32.gmra.mrb[0].mxu0 %v4411
        %v4484 = vpop.f32.mrb[0].mxu0
        %v4485 = vadd.f32 %v3959, %v4484
        %v4486 = vpop.f32.mrb[0].mxu0
        %4487 = vdwg.mxu0
        %v4488 = vmax.f32 %v4480, 0.0
        %v4489 = vmax.f32 %v4485, 0.0
        %v4490 = vmax.f32 %v4402, %v4488
        %v4491 = vmax.f32 %v4403, %v4489
        %s4492 = scalar_lea.vmem [#allocation3], 32
        %4493 = vst.msk [vmem:[%s4492] sm:$0xff] %vm4137, %v4490
        %4494 = vst.msk [vmem:[%s4492 + $0x8] sm:$0xf] %vm4139, %v4491
        %s4495 = scalar_lea.vmem [#allocation2], 96
        %v4496 = vld [vmem:[%s4495] sm:$0xff]
        %v4497 = vld [vmem:[%s4495 + $0x8] sm:$0xf]
        %v4499 = vsel %vm3961, %v4496, 0
        %v4502 = vsel %vm3961, %v4497, 0
        %4504 = vmatprep.subr.mxu0 0.0
        %4505 = vmatpush1.msra.mxu0 %v3942
        %4506 = vmatprep.subr.mxu0 0.0
        %4507 = vmatpush1.msra.mxu0 %v3943
        %4508 = vmatprep.subr.mxu0 0.0
        %4509 = vmatpush1.msra.mxu0 %v3944
        %4510 = vmatprep.subr.mxu0 0.0
        %4511 = vmatpush1.msra.mxu0 %v3945
        %4512 = vmatprep.subr.mxu0 0.0
        %4513 = vmatpush1.msra.mxu0 %v3946
        %4514 = vmatprep.subr.mxu0 0.0
        %4515 = vmatpush1.msra.mxu0 %v3947
        %4516 = vmatprep.subr.mxu0 0.0
        %4517 = vmatpush1.msra.mxu0 %v3948
        %4518 = vmatprep.subr.mxu0 0.0
        %4519 = vmatpush1.msra.mxu0 %v3949
        %4520 = vmatprep.subr.mxu0 0.0
        %4521 = vmatpush1.msra.mxu0 %v3950
        %4522 = vmatprep.subr.mxu0 0.0
        %4523 = vmatpush1.msra.mxu0 %v3970
        %4524 = vmatprep.subr.mxu0 0.0
        %4525 = vmatpush1.msra.mxu0 0.0
        %4526 = vmatprep.subr.mxu0 0.0
        %4527 = vmatpush1.msra.mxu0 0.0
        %4528 = vmatprep.subr.mxu0 0.0
        %4529 = vmatpush1.msra.mxu0 0.0
        %4530 = vmatprep.subr.mxu0 0.0
        %4531 = vmatpush1.msra.mxu0 0.0
        %4532 = vmatprep.subr.mxu0 0.0
        %4533 = vmatpush1.msra.mxu0 0.0
        %4534 = vmatprep.subr.mxu0 0.0
        %4535 = vmatpush1.msra.mxu0 0.0
        %4536 = vmatprep.subr.mxu0 0.0
        %4537 = vmatpush1.msra.mxu0 0.0
        %4538 = vmatprep.subr.mxu0 0.0
        %4539 = vmatpush1.msra.mxu0 0.0
        %4540 = vmatprep.subr.mxu0 0.0
        %4541 = vmatpush1.msra.mxu0 0.0
        %4542 = vmatprep.subr.mxu0 0.0
        %4543 = vmatpush1.msra.mxu0 0.0
        %4544 = vmatprep.subr.mxu0 0.0
        %4545 = vmatpush1.msra.mxu0 0.0
        %4546 = vmatprep.subr.mxu0 0.0
        %4547 = vmatpush1.msra.mxu0 0.0
        %4548 = vmatprep.subr.mxu0 0.0
        %4549 = vmatpush1.msra.mxu0 0.0
        %4550 = vmatprep.subr.mxu0 0.0
        %4551 = vmatpush1.msra.mxu0 0.0
        %4552 = vmatprep.subr.mxu0 0.0
        %4553 = vmatpush1.msra.mxu0 0.0
        %4554 = vmatprep.subr.mxu0 0.0
        %4555 = vmatpush1.msra.mxu0 0.0
        %4556 = vmatprep.subr.mxu0 0.0
        %4557 = vmatpush1.msra.mxu0 0.0
        %4558 = vmatprep.subr.mxu0 0.0
        %4559 = vmatpush1.msra.mxu0 0.0
        %4560 = vmatprep.subr.mxu0 0.0
        %4561 = vmatpush1.msra.mxu0 0.0
        %4562 = vmatprep.subr.mxu0 0.0
        %4563 = vmatpush1.msra.mxu0 0.0
        %4564 = vmatprep.subr.mxu0 0.0
        %4565 = vmatpush1.msra.mxu0 0.0
        %4566 = vmatprep.subr.mxu0 0.0
        %4567 = vmatpush1.msra.mxu0 0.0
        %4568 = vmatprep.mubr.f32.mxu0 0.0
        %4569 = vmatmul.mubr.f32.gmra.mrb[0].mxu0 %v4499
        %v4570 = vpop.f32.mrb[0].mxu0
        %v4571 = vadd.f32 %v3959, %v4570
        %v4572 = vpop.f32.mrb[0].mxu0
        %4573 = vmatprep.mubr.f32.mxu0 0.0
        %4574 = vmatmul.mubr.f32.gmra.mrb[0].mxu0 %v4502
        %v4575 = vpop.f32.mrb[0].mxu0
        %v4576 = vadd.f32 %v3959, %v4575
        %v4577 = vpop.f32.mrb[0].mxu0
        %4578 = vdwg.mxu0
        %v4579 = vmax.f32 %v4571, 0.0
        %v4580 = vmax.f32 %v4576, 0.0
        %s4581 = scalar_lea.vmem [#allocation2], 112
        %v4582 = vld [vmem:[%s4581] sm:$0xff]
        %v4583 = vld [vmem:[%s4581 + $0x8] sm:$0xf]
        %v4585 = vsel %vm3961, %v4582, 0
        %v4588 = vsel %vm3961, %v4583, 0
        %4590 = vmatprep.subr.mxu0 0.0
        %4591 = vmatpush1.msra.mxu0 %v3942
        %4592 = vmatprep.subr.mxu0 0.0
        %4593 = vmatpush1.msra.mxu0 %v3943
        %4594 = vmatprep.subr.mxu0 0.0
        %4595 = vmatpush1.msra.mxu0 %v3944
        %4596 = vmatprep.subr.mxu0 0.0
        %4597 = vmatpush1.msra.mxu0 %v3945
        %4598 = vmatprep.subr.mxu0 0.0
        %4599 = vmatpush1.msra.mxu0 %v3946
        %4600 = vmatprep.subr.mxu0 0.0
        %4601 = vmatpush1.msra.mxu0 %v3947
        %4602 = vmatprep.subr.mxu0 0.0
        %4603 = vmatpush1.msra.mxu0 %v3948
        %4604 = vmatprep.subr.mxu0 0.0
        %4605 = vmatpush1.msra.mxu0 %v3949
        %4606 = vmatprep.subr.mxu0 0.0
        %4607 = vmatpush1.msra.mxu0 %v3950
        %4608 = vmatprep.subr.mxu0 0.0
        %4609 = vmatpush1.msra.mxu0 %v3970
        %4610 = vmatprep.subr.mxu0 0.0
        %4611 = vmatpush1.msra.mxu0 0.0
        %4612 = vmatprep.subr.mxu0 0.0
        %4613 = vmatpush1.msra.mxu0 0.0
        %4614 = vmatprep.subr.mxu0 0.0
        %4615 = vmatpush1.msra.mxu0 0.0
        %4616 = vmatprep.subr.mxu0 0.0
        %4617 = vmatpush1.msra.mxu0 0.0
        %4618 = vmatprep.subr.mxu0 0.0
        %4619 = vmatpush1.msra.mxu0 0.0
        %4620 = vmatprep.subr.mxu0 0.0
        %4621 = vmatpush1.msra.mxu0 0.0
        %4622 = vmatprep.subr.mxu0 0.0
        %4623 = vmatpush1.msra.mxu0 0.0
        %4624 = vmatprep.subr.mxu0 0.0
        %4625 = vmatpush1.msra.mxu0 0.0
        %4626 = vmatprep.subr.mxu0 0.0
        %4627 = vmatpush1.msra.mxu0 0.0
        %4628 = vmatprep.subr.mxu0 0.0
        %4629 = vmatpush1.msra.mxu0 0.0
        %4630 = vmatprep.subr.mxu0 0.0
        %4631 = vmatpush1.msra.mxu0 0.0
        %4632 = vmatprep.subr.mxu0 0.0
        %4633 = vmatpush1.msra.mxu0 0.0
        %4634 = vmatprep.subr.mxu0 0.0
        %4635 = vmatpush1.msra.mxu0 0.0
        %4636 = vmatprep.subr.mxu0 0.0
        %4637 = vmatpush1.msra.mxu0 0.0
        %4638 = vmatprep.subr.mxu0 0.0
        %4639 = vmatpush1.msra.mxu0 0.0
        %4640 = vmatprep.subr.mxu0 0.0
        %4641 = vmatpush1.msra.mxu0 0.0
        %4642 = vmatprep.subr.mxu0 0.0
        %4643 = vmatpush1.msra.mxu0 0.0
        %4644 = vmatprep.subr.mxu0 0.0
        %4645 = vmatpush1.msra.mxu0 0.0
        %4646 = vmatprep.subr.mxu0 0.0
        %4647 = vmatpush1.msra.mxu0 0.0
        %4648 = vmatprep.subr.mxu0 0.0
        %4649 = vmatpush1.msra.mxu0 0.0
        %4650 = vmatprep.subr.mxu0 0.0
        %4651 = vmatpush1.msra.mxu0 0.0
        %4652 = vmatprep.subr.mxu0 0.0
        %4653 = vmatpush1.msra.mxu0 0.0
        %4654 = vmatprep.mubr.f32.mxu0 0.0
        %4655 = vmatmul.mubr.f32.gmra.mrb[0].mxu0 %v4585
        %v4656 = vpop.f32.mrb[0].mxu0
        %v4657 = vadd.f32 %v3959, %v4656
        %v4658 = vpop.f32.mrb[0].mxu0
        %4659 = vmatprep.mubr.f32.mxu0 0.0
        %4660 = vmatmul.mubr.f32.gmra.mrb[0].mxu0 %v4588
        %v4661 = vpop.f32.mrb[0].mxu0
        %v4662 = vadd.f32 %v3959, %v4661
        %v4663 = vpop.f32.mrb[0].mxu0
        %4664 = vdwg.mxu0
        %v4665 = vmax.f32 %v4657, 0.0
        %v4666 = vmax.f32 %v4662, 0.0
        %v4667 = vmax.f32 %v4579, %v4665
        %v4668 = vmax.f32 %v4580, %v4666
        %s4669 = scalar_lea.vmem [#allocation3], 48
        %4670 = vst.msk [vmem:[%s4669] sm:$0xff] %vm4137, %v4667
        %4671 = vst.msk [vmem:[%s4669 + $0x8] sm:$0xf] %vm4139, %v4668
        %s4672 = scalar_lea.vmem [#allocation2], 128
        %v4673 = vld [vmem:[%s4672] sm:$0xff]
        %v4674 = vld [vmem:[%s4672 + $0x8] sm:$0xf]
        %v4676 = vsel %vm3961, %v4673, 0
        %v4679 = vsel %vm3961, %v4674, 0
        %4681 = vmatprep.subr.mxu0 0.0
        %4682 = vmatpush1.msra.mxu0 %v3942
        %4683 = vmatprep.subr.mxu0 0.0
        %4684 = vmatpush1.msra.mxu0 %v3943
        %4685 = vmatprep.subr.mxu0 0.0
        %4686 = vmatpush1.msra.mxu0 %v3944
        %4687 = vmatprep.subr.mxu0 0.0
        %4688 = vmatpush1.msra.mxu0 %v3945
        %4689 = vmatprep.subr.mxu0 0.0
        %4690 = vmatpush1.msra.mxu0 %v3946
        %4691 = vmatprep.subr.mxu0 0.0
        %4692 = vmatpush1.msra.mxu0 %v3947
        %4693 = vmatprep.subr.mxu0 0.0
        %4694 = vmatpush1.msra.mxu0 %v3948
        %4695 = vmatprep.subr.mxu0 0.0
        %4696 = vmatpush1.msra.mxu0 %v3949
        %4697 = vmatprep.subr.mxu0 0.0
        %4698 = vmatpush1.msra.mxu0 %v3950
        %4699 = vmatprep.subr.mxu0 0.0
        %4700 = vmatpush1.msra.mxu0 %v3970
        %4701 = vmatprep.subr.mxu0 0.0
        %4702 = vmatpush1.msra.mxu0 0.0
        %4703 = vmatprep.subr.mxu0 0.0
        %4704 = vmatpush1.msra.mxu0 0.0
        %4705 = vmatprep.subr.mxu0 0.0
        %4706 = vmatpush1.msra.mxu0 0.0
        %4707 = vmatprep.subr.mxu0 0.0
        %4708 = vmatpush1.msra.mxu0 0.0
        %4709 = vmatprep.subr.mxu0 0.0
        %4710 = vmatpush1.msra.mxu0 0.0
        %4711 = vmatprep.subr.mxu0 0.0
        %4712 = vmatpush1.msra.mxu0 0.0
        %4713 = vmatprep.subr.mxu0 0.0
        %4714 = vmatpush1.msra.mxu0 0.0
        %4715 = vmatprep.subr.mxu0 0.0
        %4716 = vmatpush1.msra.mxu0 0.0
        %4717 = vmatprep.subr.mxu0 0.0
        %4718 = vmatpush1.msra.mxu0 0.0
        %4719 = vmatprep.subr.mxu0 0.0
        %4720 = vmatpush1.msra.mxu0 0.0
        %4721 = vmatprep.subr.mxu0 0.0
        %4722 = vmatpush1.msra.mxu0 0.0
        %4723 = vmatprep.subr.mxu0 0.0
        %4724 = vmatpush1.msra.mxu0 0.0
        %4725 = vmatprep.subr.mxu0 0.0
        %4726 = vmatpush1.msra.mxu0 0.0
        %4727 = vmatprep.subr.mxu0 0.0
        %4728 = vmatpush1.msra.mxu0 0.0
        %4729 = vmatprep.subr.mxu0 0.0
        %4730 = vmatpush1.msra.mxu0 0.0
        %4731 = vmatprep.subr.mxu0 0.0
        %4732 = vmatpush1.msra.mxu0 0.0
        %4733 = vmatprep.subr.mxu0 0.0
        %4734 = vmatpush1.msra.mxu0 0.0
        %4735 = vmatprep.subr.mxu0 0.0
        %4736 = vmatpush1.msra.mxu0 0.0
        %4737 = vmatprep.subr.mxu0 0.0
        %4738 = vmatpush1.msra.mxu0 0.0
        %4739 = vmatprep.subr.mxu0 0.0
        %4740 = vmatpush1.msra.mxu0 0.0
        %4741 = vmatprep.subr.mxu0 0.0
        %4742 = vmatpush1.msra.mxu0 0.0
        %4743 = vmatprep.subr.mxu0 0.0
        %4744 = vmatpush1.msra.mxu0 0.0
        %4745 = vmatprep.mubr.f32.mxu0 0.0
        %4746 = vmatmul.mubr.f32.gmra.mrb[0].mxu0 %v4676
        %v4747 = vpop.f32.mrb[0].mxu0
        %v4748 = vadd.f32 %v3959, %v4747
        %v4749 = vpop.f32.mrb[0].mxu0
        %4750 = vmatprep.mubr.f32.mxu0 0.0
        %4751 = vmatmul.mubr.f32.gmra.mrb[0].mxu0 %v4679
        %v4752 = vpop.f32.mrb[0].mxu0
        %v4753 = vadd.f32 %v3959, %v4752
        %v4754 = vpop.f32.mrb[0].mxu0
        %4755 = vdwg.mxu0
        %v4756 = vmax.f32 %v4748, 0.0
        %v4757 = vmax.f32 %v4753, 0.0
        %s4758 = scalar_lea.vmem [#allocation2], 144
        %v4759 = vld [vmem:[%s4758] sm:$0xff]
        %v4760 = vld [vmem:[%s4758 + $0x8] sm:$0xf]
        %v4762 = vsel %vm3961, %v4759, 0
        %v4765 = vsel %vm3961, %v4760, 0
        %4767 = vmatprep.subr.mxu0 0.0
        %4768 = vmatpush1.msra.mxu0 %v3942
        %4769 = vmatprep.subr.mxu0 0.0
        %4770 = vmatpush1.msra.mxu0 %v3943
        %4771 = vmatprep.subr.mxu0 0.0
        %4772 = vmatpush1.msra.mxu0 %v3944
        %4773 = vmatprep.subr.mxu0 0.0
        %4774 = vmatpush1.msra.mxu0 %v3945
        %4775 = vmatprep.subr.mxu0 0.0
        %4776 = vmatpush1.msra.mxu0 %v3946
        %4777 = vmatprep.subr.mxu0 0.0
        %4778 = vmatpush1.msra.mxu0 %v3947
        %4779 = vmatprep.subr.mxu0 0.0
        %4780 = vmatpush1.msra.mxu0 %v3948
        %4781 = vmatprep.subr.mxu0 0.0
        %4782 = vmatpush1.msra.mxu0 %v3949
        %4783 = vmatprep.subr.mxu0 0.0
        %4784 = vmatpush1.msra.mxu0 %v3950
        %4785 = vmatprep.subr.mxu0 0.0
        %4786 = vmatpush1.msra.mxu0 %v3970
        %4787 = vmatprep.subr.mxu0 0.0
        %4788 = vmatpush1.msra.mxu0 0.0
        %4789 = vmatprep.subr.mxu0 0.0
        %4790 = vmatpush1.msra.mxu0 0.0
        %4791 = vmatprep.subr.mxu0 0.0
        %4792 = vmatpush1.msra.mxu0 0.0
        %4793 = vmatprep.subr.mxu0 0.0
        %4794 = vmatpush1.msra.mxu0 0.0
        %4795 = vmatprep.subr.mxu0 0.0
        %4796 = vmatpush1.msra.mxu0 0.0
        %4797 = vmatprep.subr.mxu0 0.0
        %4798 = vmatpush1.msra.mxu0 0.0
        %4799 = vmatprep.subr.mxu0 0.0
        %4800 = vmatpush1.msra.mxu0 0.0
        %4801 = vmatprep.subr.mxu0 0.0
        %4802 = vmatpush1.msra.mxu0 0.0
        %4803 = vmatprep.subr.mxu0 0.0
        %4804 = vmatpush1.msra.mxu0 0.0
        %4805 = vmatprep.subr.mxu0 0.0
        %4806 = vmatpush1.msra.mxu0 0.0
        %4807 = vmatprep.subr.mxu0 0.0
        %4808 = vmatpush1.msra.mxu0 0.0
        %4809 = vmatprep.subr.mxu0 0.0
        %4810 = vmatpush1.msra.mxu0 0.0
        %4811 = vmatprep.subr.mxu0 0.0
        %4812 = vmatpush1.msra.mxu0 0.0
        %4813 = vmatprep.subr.mxu0 0.0
        %4814 = vmatpush1.msra.mxu0 0.0
        %4815 = vmatprep.subr.mxu0 0.0
        %4816 = vmatpush1.msra.mxu0 0.0
        %4817 = vmatprep.subr.mxu0 0.0
        %4818 = vmatpush1.msra.mxu0 0.0
        %4819 = vmatprep.subr.mxu0 0.0
        %4820 = vmatpush1.msra.mxu0 0.0
        %4821 = vmatprep.subr.mxu0 0.0
        %4822 = vmatpush1.msra.mxu0 0.0
        %4823 = vmatprep.subr.mxu0 0.0
        %4824 = vmatpush1.msra.mxu0 0.0
        %4825 = vmatprep.subr.mxu0 0.0
        %4826 = vmatpush1.msra.mxu0 0.0
        %4827 = vmatprep.subr.mxu0 0.0
        %4828 = vmatpush1.msra.mxu0 0.0
        %4829 = vmatprep.subr.mxu0 0.0
        %4830 = vmatpush1.msra.mxu0 0.0
        %4831 = vmatprep.mubr.f32.mxu0 0.0
        %4832 = vmatmul.mubr.f32.gmra.mrb[0].mxu0 %v4762
        %v4833 = vpop.f32.mrb[0].mxu0
        %v4834 = vadd.f32 %v3959, %v4833
        %v4835 = vpop.f32.mrb[0].mxu0
        %4836 = vmatprep.mubr.f32.mxu0 0.0
        %4837 = vmatmul.mubr.f32.gmra.mrb[0].mxu0 %v4765
        %v4838 = vpop.f32.mrb[0].mxu0
        %v4839 = vadd.f32 %v3959, %v4838
        %v4840 = vpop.f32.mrb[0].mxu0
        %4841 = vdwg.mxu0
        %v4842 = vmax.f32 %v4834, 0.0
        %v4843 = vmax.f32 %v4839, 0.0
        %v4844 = vmax.f32 %v4756, %v4842
        %v4845 = vmax.f32 %v4757, %v4843
        %s4846 = scalar_lea.vmem [#allocation3], 64
        %4847 = vst.msk [vmem:[%s4846] sm:$0xff] %vm4137, %v4844
        %4848 = vst.msk [vmem:[%s4846 + $0x8] sm:$0xf] %vm4139, %v4845
        %s4849 = scalar_lea.vmem [#allocation2], 160
        %v4850 = vld [vmem:[%s4849] sm:$0xff]
        %v4851 = vld [vmem:[%s4849 + $0x8] sm:$0xf]
        %v4853 = vsel %vm3961, %v4850, 0
        %v4856 = vsel %vm3961, %v4851, 0
        %4858 = vmatprep.subr.mxu0 0.0
        %4859 = vmatpush1.msra.mxu0 %v3942
        %4860 = vmatprep.subr.mxu0 0.0
        %4861 = vmatpush1.msra.mxu0 %v3943
        %4862 = vmatprep.subr.mxu0 0.0
        %4863 = vmatpush1.msra.mxu0 %v3944
        %4864 = vmatprep.subr.mxu0 0.0
        %4865 = vmatpush1.msra.mxu0 %v3945
        %4866 = vmatprep.subr.mxu0 0.0
        %4867 = vmatpush1.msra.mxu0 %v3946
        %4868 = vmatprep.subr.mxu0 0.0
        %4869 = vmatpush1.msra.mxu0 %v3947
        %4870 = vmatprep.subr.mxu0 0.0
        %4871 = vmatpush1.msra.mxu0 %v3948
        %4872 = vmatprep.subr.mxu0 0.0
        %4873 = vmatpush1.msra.mxu0 %v3949
        %4874 = vmatprep.subr.mxu0 0.0
        %4875 = vmatpush1.msra.mxu0 %v3950
        %4876 = vmatprep.subr.mxu0 0.0
        %4877 = vmatpush1.msra.mxu0 %v3970
        %4878 = vmatprep.subr.mxu0 0.0
        %4879 = vmatpush1.msra.mxu0 0.0
        %4880 = vmatprep.subr.mxu0 0.0
        %4881 = vmatpush1.msra.mxu0 0.0
        %4882 = vmatprep.subr.mxu0 0.0
        %4883 = vmatpush1.msra.mxu0 0.0
        %4884 = vmatprep.subr.mxu0 0.0
        %4885 = vmatpush1.msra.mxu0 0.0
        %4886 = vmatprep.subr.mxu0 0.0
        %4887 = vmatpush1.msra.mxu0 0.0
        %4888 = vmatprep.subr.mxu0 0.0
        %4889 = vmatpush1.msra.mxu0 0.0
        %4890 = vmatprep.subr.mxu0 0.0
        %4891 = vmatpush1.msra.mxu0 0.0
        %4892 = vmatprep.subr.mxu0 0.0
        %4893 = vmatpush1.msra.mxu0 0.0
        %4894 = vmatprep.subr.mxu0 0.0
        %4895 = vmatpush1.msra.mxu0 0.0
        %4896 = vmatprep.subr.mxu0 0.0
        %4897 = vmatpush1.msra.mxu0 0.0
        %4898 = vmatprep.subr.mxu0 0.0
        %4899 = vmatpush1.msra.mxu0 0.0
        %4900 = vmatprep.subr.mxu0 0.0
        %4901 = vmatpush1.msra.mxu0 0.0
        %4902 = vmatprep.subr.mxu0 0.0
        %4903 = vmatpush1.msra.mxu0 0.0
        %4904 = vmatprep.subr.mxu0 0.0
        %4905 = vmatpush1.msra.mxu0 0.0
        %4906 = vmatprep.subr.mxu0 0.0
        %4907 = vmatpush1.msra.mxu0 0.0
        %4908 = vmatprep.subr.mxu0 0.0
        %4909 = vmatpush1.msra.mxu0 0.0
        %4910 = vmatprep.subr.mxu0 0.0
        %4911 = vmatpush1.msra.mxu0 0.0
        %4912 = vmatprep.subr.mxu0 0.0
        %4913 = vmatpush1.msra.mxu0 0.0
        %4914 = vmatprep.subr.mxu0 0.0
        %4915 = vmatpush1.msra.mxu0 0.0
        %4916 = vmatprep.subr.mxu0 0.0
        %4917 = vmatpush1.msra.mxu0 0.0
        %4918 = vmatprep.subr.mxu0 0.0
        %4919 = vmatpush1.msra.mxu0 0.0
        %4920 = vmatprep.subr.mxu0 0.0
        %4921 = vmatpush1.msra.mxu0 0.0
        %4922 = vmatprep.mubr.f32.mxu0 0.0
        %4923 = vmatmul.mubr.f32.gmra.mrb[0].mxu0 %v4853
        %v4924 = vpop.f32.mrb[0].mxu0
        %v4925 = vadd.f32 %v3959, %v4924
        %v4926 = vpop.f32.mrb[0].mxu0
        %4927 = vmatprep.mubr.f32.mxu0 0.0
        %4928 = vmatmul.mubr.f32.gmra.mrb[0].mxu0 %v4856
        %v4929 = vpop.f32.mrb[0].mxu0
        %v4930 = vadd.f32 %v3959, %v4929
        %v4931 = vpop.f32.mrb[0].mxu0
        %4932 = vdwg.mxu0
        %v4933 = vmax.f32 %v4925, 0.0
        %v4934 = vmax.f32 %v4930, 0.0
        %s4935 = scalar_lea.vmem [#allocation2], 176
        %v4936 = vld [vmem:[%s4935] sm:$0xff]
        %v4937 = vld [vmem:[%s4935 + $0x8] sm:$0xf]
        %v4939 = vsel %vm3961, %v4936, 0
        %v4942 = vsel %vm3961, %v4937, 0
        %4944 = vmatprep.subr.mxu0 0.0
        %4945 = vmatpush1.msra.mxu0 %v3942
        %4946 = vmatprep.subr.mxu0 0.0
        %4947 = vmatpush1.msra.mxu0 %v3943
        %4948 = vmatprep.subr.mxu0 0.0
        %4949 = vmatpush1.msra.mxu0 %v3944
        %4950 = vmatprep.subr.mxu0 0.0
        %4951 = vmatpush1.msra.mxu0 %v3945
        %4952 = vmatprep.subr.mxu0 0.0
        %4953 = vmatpush1.msra.mxu0 %v3946
        %4954 = vmatprep.subr.mxu0 0.0
        %4955 = vmatpush1.msra.mxu0 %v3947
        %4956 = vmatprep.subr.mxu0 0.0
        %4957 = vmatpush1.msra.mxu0 %v3948
        %4958 = vmatprep.subr.mxu0 0.0
        %4959 = vmatpush1.msra.mxu0 %v3949
        %4960 = vmatprep.subr.mxu0 0.0
        %4961 = vmatpush1.msra.mxu0 %v3950
        %4962 = vmatprep.subr.mxu0 0.0
        %4963 = vmatpush1.msra.mxu0 %v3970
        %4964 = vmatprep.subr.mxu0 0.0
        %4965 = vmatpush1.msra.mxu0 0.0
        %4966 = vmatprep.subr.mxu0 0.0
        %4967 = vmatpush1.msra.mxu0 0.0
        %4968 = vmatprep.subr.mxu0 0.0
        %4969 = vmatpush1.msra.mxu0 0.0
        %4970 = vmatprep.subr.mxu0 0.0
        %4971 = vmatpush1.msra.mxu0 0.0
        %4972 = vmatprep.subr.mxu0 0.0
        %4973 = vmatpush1.msra.mxu0 0.0
        %4974 = vmatprep.subr.mxu0 0.0
        %4975 = vmatpush1.msra.mxu0 0.0
        %4976 = vmatprep.subr.mxu0 0.0
        %4977 = vmatpush1.msra.mxu0 0.0
        %4978 = vmatprep.subr.mxu0 0.0
        %4979 = vmatpush1.msra.mxu0 0.0
        %4980 = vmatprep.subr.mxu0 0.0
        %4981 = vmatpush1.msra.mxu0 0.0
        %4982 = vmatprep.subr.mxu0 0.0
        %4983 = vmatpush1.msra.mxu0 0.0
        %4984 = vmatprep.subr.mxu0 0.0
        %4985 = vmatpush1.msra.mxu0 0.0
        %4986 = vmatprep.subr.mxu0 0.0
        %4987 = vmatpush1.msra.mxu0 0.0
        %4988 = vmatprep.subr.mxu0 0.0
        %4989 = vmatpush1.msra.mxu0 0.0
        %4990 = vmatprep.subr.mxu0 0.0
        %4991 = vmatpush1.msra.mxu0 0.0
        %4992 = vmatprep.subr.mxu0 0.0
        %4993 = vmatpush1.msra.mxu0 0.0
        %4994 = vmatprep.subr.mxu0 0.0
        %4995 = vmatpush1.msra.mxu0 0.0
        %4996 = vmatprep.subr.mxu0 0.0
        %4997 = vmatpush1.msra.mxu0 0.0
        %4998 = vmatprep.subr.mxu0 0.0
        %4999 = vmatpush1.msra.mxu0 0.0
        %5000 = vmatprep.subr.mxu0 0.0
        %5001 = vmatpush1.msra.mxu0 0.0
        %5002 = vmatprep.subr.mxu0 0.0
        %5003 = vmatpush1.msra.mxu0 0.0
        %5004 = vmatprep.subr.mxu0 0.0
        %5005 = vmatpush1.msra.mxu0 0.0
        %5006 = vmatprep.subr.mxu0 0.0
        %5007 = vmatpush1.msra.mxu0 0.0
        %5008 = vmatprep.mubr.f32.mxu0 0.0
        %5009 = vmatmul.mubr.f32.gmra.mrb[0].mxu0 %v4939
        %v5010 = vpop.f32.mrb[0].mxu0
        %v5011 = vadd.f32 %v3959, %v5010
        %v5012 = vpop.f32.mrb[0].mxu0
        %5013 = vmatprep.mubr.f32.mxu0 0.0
        %5014 = vmatmul.mubr.f32.gmra.mrb[0].mxu0 %v4942
        %v5015 = vpop.f32.mrb[0].mxu0
        %v5016 = vadd.f32 %v3959, %v5015
        %v5017 = vpop.f32.mrb[0].mxu0
        %5018 = vdwg.mxu0
        %v5019 = vmax.f32 %v5011, 0.0
        %v5020 = vmax.f32 %v5016, 0.0
        %v5021 = vmax.f32 %v4933, %v5019
        %v5022 = vmax.f32 %v4934, %v5020
        %s5023 = scalar_lea.vmem [#allocation3], 80
        %5024 = vst.msk [vmem:[%s5023] sm:$0xff] %vm4137, %v5021
        %5025 = vst.msk [vmem:[%s5023 + $0x8] sm:$0xf] %vm4139, %v5022
        %v5026 = vld [vmem:[#allocation3] sm:$0x3]
        %v5027 = vld [vmem:[#allocation3 + $0x10] sm:$0x3]
        %v5028 = vld [vmem:[#allocation3 + $0x20] sm:$0x3]
        %v5029 = vld [vmem:[#allocation3 + $0x30] sm:$0x3]
        %v5030 = vld [vmem:[#allocation3 + $0x40] sm:$0x3]
        %v5031 = vld [vmem:[#allocation3 + $0x50] sm:$0x3]
        %vm5032 = vcmask 58368
        %v5033 = vsel %vm5032, %v5026, -inf
        %v5034 = vrot.slane %v5033, 4
        %v5035 = vmax.f32 %v5033, %v5034
        %v5036 = vrot.slane %v5035, 2
        %v5037 = vmax.f32 %v5035, %v5036
        %v5038 = vrot.slane %v5037, 1
        %v5039 = vmax.f32 %v5037, %v5038
        %v5040 = vsel %vm5032, %v5027, -inf
        %v5041 = vrot.slane %v5040, 4
        %v5042 = vmax.f32 %v5040, %v5041
        %v5043 = vrot.slane %v5042, 2
        %v5044 = vmax.f32 %v5042, %v5043
        %v5045 = vrot.slane %v5044, 1
        %v5046 = vmax.f32 %v5044, %v5045
        %v5047 = vsel %vm5032, %v5028, -inf
        %v5048 = vrot.slane %v5047, 4
        %v5049 = vmax.f32 %v5047, %v5048
        %v5050 = vrot.slane %v5049, 2
        %v5051 = vmax.f32 %v5049, %v5050
        %v5052 = vrot.slane %v5051, 1
        %v5053 = vmax.f32 %v5051, %v5052
        %v5054 = vsel %vm5032, %v5029, -inf
        %v5055 = vrot.slane %v5054, 4
        %v5056 = vmax.f32 %v5054, %v5055
        %v5057 = vrot.slane %v5056, 2
        %v5058 = vmax.f32 %v5056, %v5057
        %v5059 = vrot.slane %v5058, 1
        %v5060 = vmax.f32 %v5058, %v5059
        %v5061 = vsel %vm5032, %v5030, -inf
        %v5062 = vrot.slane %v5061, 4
        %v5063 = vmax.f32 %v5061, %v5062
        %v5064 = vrot.slane %v5063, 2
        %v5065 = vmax.f32 %v5063, %v5064
        %v5066 = vrot.slane %v5065, 1
        %v5067 = vmax.f32 %v5065, %v5066
        %v5068 = vsel %vm5032, %v5031, -inf
        %v5069 = vrot.slane %v5068, 4
        %v5070 = vmax.f32 %v5068, %v5069
        %v5071 = vrot.slane %v5070, 2
        %v5072 = vmax.f32 %v5070, %v5071
        %v5073 = vrot.slane %v5072, 1
        %v5074 = vmax.f32 %v5072, %v5073
        %vm5075 = vcmask 57344
        %5076 = vst.msk [vmem:[#allocation4] sm:$0x1] %vm5075, %v5039
        %5077 = vst.msk [vmem:[#allocation4 + $0x8] sm:$0x1] %vm5075, %v5046
        %5078 = vst.msk [vmem:[#allocation4 + $0x10] sm:$0x1] %vm5075, %v5053
        %5079 = vst.msk [vmem:[#allocation4 + $0x18] sm:$0x1] %vm5075, %v5060
        %5080 = vst.msk [vmem:[#allocation4 + $0x20] sm:$0x1] %vm5075, %v5067
        %5081 = vst.msk [vmem:[#allocation4 + $0x28] sm:$0x1] %vm5075, %v5074
        %v5082 = vld [vmem:[#allocation3 + $0x2] sm:$0x3]
        %v5083 = vld [vmem:[#allocation3 + $0x12] sm:$0x3]
        %v5084 = vld [vmem:[#allocation3 + $0x22] sm:$0x3]
        %v5085 = vld [vmem:[#allocation3 + $0x32] sm:$0x3]
        %v5086 = vld [vmem:[#allocation3 + $0x42] sm:$0x3]
        %v5087 = vld [vmem:[#allocation3 + $0x52] sm:$0x3]
        %v5088 = vsel %vm5032, %v5082, -inf
        %v5089 = vrot.slane %v5088, 4
        %v5090 = vmax.f32 %v5088, %v5089
        %v5091 = vrot.slane %v5090, 2
        %v5092 = vmax.f32 %v5090, %v5091
        %v5093 = vrot.slane %v5092, 1
        %v5094 = vmax.f32 %v5092, %v5093
        %v5095 = vsel %vm5032, %v5083, -inf
        %v5096 = vrot.slane %v5095, 4
        %v5097 = vmax.f32 %v5095, %v5096
        %v5098 = vrot.slane %v5097, 2
        %v5099 = vmax.f32 %v5097, %v5098
        %v5100 = vrot.slane %v5099, 1
        %v5101 = vmax.f32 %v5099, %v5100
        %v5102 = vsel %vm5032, %v5084, -inf
        %v5103 = vrot.slane %v5102, 4
        %v5104 = vmax.f32 %v5102, %v5103
        %v5105 = vrot.slane %v5104, 2
        %v5106 = vmax.f32 %v5104, %v5105
        %v5107 = vrot.slane %v5106, 1
        %v5108 = vmax.f32 %v5106, %v5107
        %v5109 = vsel %vm5032, %v5085, -inf
        %v5110 = vrot.slane %v5109, 4
        %v5111 = vmax.f32 %v5109, %v5110
        %v5112 = vrot.slane %v5111, 2
        %v5113 = vmax.f32 %v5111, %v5112
        %v5114 = vrot.slane %v5113, 1
        %v5115 = vmax.f32 %v5113, %v5114
        %v5116 = vsel %vm5032, %v5086, -inf
        %v5117 = vrot.slane %v5116, 4
        %v5118 = vmax.f32 %v5116, %v5117
        %v5119 = vrot.slane %v5118, 2
        %v5120 = vmax.f32 %v5118, %v5119
        %v5121 = vrot.slane %v5120, 1
        %v5122 = vmax.f32 %v5120, %v5121
        %v5123 = vsel %vm5032, %v5087, -inf
        %v5124 = vrot.slane %v5123, 4
        %v5125 = vmax.f32 %v5123, %v5124
        %v5126 = vrot.slane %v5125, 2
        %v5127 = vmax.f32 %v5125, %v5126
        %v5128 = vrot.slane %v5127, 1
        %v5129 = vmax.f32 %v5127, %v5128
        %5130 = vst.msk [vmem:[#allocation4 + $0x1] sm:$0x1] %vm5075, %v5094
        %5131 = vst.msk [vmem:[#allocation4 + $0x9] sm:$0x1] %vm5075, %v5101
        %5132 = vst.msk [vmem:[#allocation4 + $0x11] sm:$0x1] %vm5075, %v5108
        %5133 = vst.msk [vmem:[#allocation4 + $0x19] sm:$0x1] %vm5075, %v5115
        %5134 = vst.msk [vmem:[#allocation4 + $0x21] sm:$0x1] %vm5075, %v5122
        %5135 = vst.msk [vmem:[#allocation4 + $0x29] sm:$0x1] %vm5075, %v5129
        %v5136 = vld [vmem:[#allocation3 + $0x4] sm:$0x3]
        %v5137 = vld [vmem:[#allocation3 + $0x14] sm:$0x3]
        %v5138 = vld [vmem:[#allocation3 + $0x24] sm:$0x3]
        %v5139 = vld [vmem:[#allocation3 + $0x34] sm:$0x3]
        %v5140 = vld [vmem:[#allocation3 + $0x44] sm:$0x3]
        %v5141 = vld [vmem:[#allocation3 + $0x54] sm:$0x3]
        %v5142 = vsel %vm5032, %v5136, -inf
        %v5143 = vrot.slane %v5142, 4
        %v5144 = vmax.f32 %v5142, %v5143
        %v5145 = vrot.slane %v5144, 2
        %v5146 = vmax.f32 %v5144, %v5145
        %v5147 = vrot.slane %v5146, 1
        %v5148 = vmax.f32 %v5146, %v5147
        %v5149 = vsel %vm5032, %v5137, -inf
        %v5150 = vrot.slane %v5149, 4
        %v5151 = vmax.f32 %v5149, %v5150
        %v5152 = vrot.slane %v5151, 2
        %v5153 = vmax.f32 %v5151, %v5152
        %v5154 = vrot.slane %v5153, 1
        %v5155 = vmax.f32 %v5153, %v5154
        %v5156 = vsel %vm5032, %v5138, -inf
        %v5157 = vrot.slane %v5156, 4
        %v5158 = vmax.f32 %v5156, %v5157
        %v5159 = vrot.slane %v5158, 2
        %v5160 = vmax.f32 %v5158, %v5159
        %v5161 = vrot.slane %v5160, 1
        %v5162 = vmax.f32 %v5160, %v5161
        %v5163 = vsel %vm5032, %v5139, -inf
        %v5164 = vrot.slane %v5163, 4
        %v5165 = vmax.f32 %v5163, %v5164
        %v5166 = vrot.slane %v5165, 2
        %v5167 = vmax.f32 %v5165, %v5166
        %v5168 = vrot.slane %v5167, 1
        %v5169 = vmax.f32 %v5167, %v5168
        %v5170 = vsel %vm5032, %v5140, -inf
        %v5171 = vrot.slane %v5170, 4
        %v5172 = vmax.f32 %v5170, %v5171
        %v5173 = vrot.slane %v5172, 2
        %v5174 = vmax.f32 %v5172, %v5173
        %v5175 = vrot.slane %v5174, 1
        %v5176 = vmax.f32 %v5174, %v5175
        %v5177 = vsel %vm5032, %v5141, -inf
        %v5178 = vrot.slane %v5177, 4
        %v5179 = vmax.f32 %v5177, %v5178
        %v5180 = vrot.slane %v5179, 2
        %v5181 = vmax.f32 %v5179, %v5180
        %v5182 = vrot.slane %v5181, 1
        %v5183 = vmax.f32 %v5181, %v5182
        %5184 = vst.msk [vmem:[#allocation4 + $0x2] sm:$0x1] %vm5075, %v5148
        %5185 = vst.msk [vmem:[#allocation4 + $0xa] sm:$0x1] %vm5075, %v5155
        %5186 = vst.msk [vmem:[#allocation4 + $0x12] sm:$0x1] %vm5075, %v5162
        %5187 = vst.msk [vmem:[#allocation4 + $0x1a] sm:$0x1] %vm5075, %v5169
        %5188 = vst.msk [vmem:[#allocation4 + $0x22] sm:$0x1] %vm5075, %v5176
        %5189 = vst.msk [vmem:[#allocation4 + $0x2a] sm:$0x1] %vm5075, %v5183
        %v5190 = vld [vmem:[#allocation3 + $0x6] sm:$0x3]
        %v5191 = vld [vmem:[#allocation3 + $0x16] sm:$0x3]
        %v5192 = vld [vmem:[#allocation3 + $0x26] sm:$0x3]
        %v5193 = vld [vmem:[#allocation3 + $0x36] sm:$0x3]
        %v5194 = vld [vmem:[#allocation3 + $0x46] sm:$0x3]
        %v5195 = vld [vmem:[#allocation3 + $0x56] sm:$0x3]
        %v5196 = vsel %vm5032, %v5190, -inf
        %v5197 = vrot.slane %v5196, 4
        %v5198 = vmax.f32 %v5196, %v5197
        %v5199 = vrot.slane %v5198, 2
        %v5200 = vmax.f32 %v5198, %v5199
        %v5201 = vrot.slane %v5200, 1
        %v5202 = vmax.f32 %v5200, %v5201
        %v5203 = vsel %vm5032, %v5191, -inf
        %v5204 = vrot.slane %v5203, 4
        %v5205 = vmax.f32 %v5203, %v5204
        %v5206 = vrot.slane %v5205, 2
        %v5207 = vmax.f32 %v5205, %v5206
        %v5208 = vrot.slane %v5207, 1
        %v5209 = vmax.f32 %v5207, %v5208
        %v5210 = vsel %vm5032, %v5192, -inf
        %v5211 = vrot.slane %v5210, 4
        %v5212 = vmax.f32 %v5210, %v5211
        %v5213 = vrot.slane %v5212, 2
        %v5214 = vmax.f32 %v5212, %v5213
        %v5215 = vrot.slane %v5214, 1
        %v5216 = vmax.f32 %v5214, %v5215
        %v5217 = vsel %vm5032, %v5193, -inf
        %v5218 = vrot.slane %v5217, 4
        %v5219 = vmax.f32 %v5217, %v5218
        %v5220 = vrot.slane %v5219, 2
        %v5221 = vmax.f32 %v5219, %v5220
        %v5222 = vrot.slane %v5221, 1
        %v5223 = vmax.f32 %v5221, %v5222
        %v5224 = vsel %vm5032, %v5194, -inf
        %v5225 = vrot.slane %v5224, 4
        %v5226 = vmax.f32 %v5224, %v5225
        %v5227 = vrot.slane %v5226, 2
        %v5228 = vmax.f32 %v5226, %v5227
        %v5229 = vrot.slane %v5228, 1
        %v5230 = vmax.f32 %v5228, %v5229
        %v5231 = vsel %vm5032, %v5195, -inf
        %v5232 = vrot.slane %v5231, 4
        %v5233 = vmax.f32 %v5231, %v5232
        %v5234 = vrot.slane %v5233, 2
        %v5235 = vmax.f32 %v5233, %v5234
        %v5236 = vrot.slane %v5235, 1
        %v5237 = vmax.f32 %v5235, %v5236
        %5238 = vst.msk [vmem:[#allocation4 + $0x3] sm:$0x1] %vm5075, %v5202
        %5239 = vst.msk [vmem:[#allocation4 + $0xb] sm:$0x1] %vm5075, %v5209
        %5240 = vst.msk [vmem:[#allocation4 + $0x13] sm:$0x1] %vm5075, %v5216
        %5241 = vst.msk [vmem:[#allocation4 + $0x1b] sm:$0x1] %vm5075, %v5223
        %5242 = vst.msk [vmem:[#allocation4 + $0x23] sm:$0x1] %vm5075, %v5230
        %5243 = vst.msk [vmem:[#allocation4 + $0x2b] sm:$0x1] %vm5075, %v5237
        %v5244 = vld [vmem:[#allocation3 + $0x8] sm:$0x3]
        %v5245 = vld [vmem:[#allocation3 + $0x18] sm:$0x3]
        %v5246 = vld [vmem:[#allocation3 + $0x28] sm:$0x3]
        %v5247 = vld [vmem:[#allocation3 + $0x38] sm:$0x3]
        %v5248 = vld [vmem:[#allocation3 + $0x48] sm:$0x3]
        %v5249 = vld [vmem:[#allocation3 + $0x58] sm:$0x3]
        %v5250 = vsel %vm5032, %v5244, -inf
        %v5251 = vrot.slane %v5250, 4
        %v5252 = vmax.f32 %v5250, %v5251
        %v5253 = vrot.slane %v5252, 2
        %v5254 = vmax.f32 %v5252, %v5253
        %v5255 = vrot.slane %v5254, 1
        %v5256 = vmax.f32 %v5254, %v5255
        %v5257 = vsel %vm5032, %v5245, -inf
        %v5258 = vrot.slane %v5257, 4
        %v5259 = vmax.f32 %v5257, %v5258
        %v5260 = vrot.slane %v5259, 2
        %v5261 = vmax.f32 %v5259, %v5260
        %v5262 = vrot.slane %v5261, 1
        %v5263 = vmax.f32 %v5261, %v5262
        %v5264 = vsel %vm5032, %v5246, -inf
        %v5265 = vrot.slane %v5264, 4
        %v5266 = vmax.f32 %v5264, %v5265
        %v5267 = vrot.slane %v5266, 2
        %v5268 = vmax.f32 %v5266, %v5267
        %v5269 = vrot.slane %v5268, 1
        %v5270 = vmax.f32 %v5268, %v5269
        %v5271 = vsel %vm5032, %v5247, -inf
        %v5272 = vrot.slane %v5271, 4
        %v5273 = vmax.f32 %v5271, %v5272
        %v5274 = vrot.slane %v5273, 2
        %v5275 = vmax.f32 %v5273, %v5274
        %v5276 = vrot.slane %v5275, 1
        %v5277 = vmax.f32 %v5275, %v5276
        %v5278 = vsel %vm5032, %v5248, -inf
        %v5279 = vrot.slane %v5278, 4
        %v5280 = vmax.f32 %v5278, %v5279
        %v5281 = vrot.slane %v5280, 2
        %v5282 = vmax.f32 %v5280, %v5281
        %v5283 = vrot.slane %v5282, 1
        %v5284 = vmax.f32 %v5282, %v5283
        %v5285 = vsel %vm5032, %v5249, -inf
        %v5286 = vrot.slane %v5285, 4
        %v5287 = vmax.f32 %v5285, %v5286
        %v5288 = vrot.slane %v5287, 2
        %v5289 = vmax.f32 %v5287, %v5288
        %v5290 = vrot.slane %v5289, 1
        %v5291 = vmax.f32 %v5289, %v5290
        %5292 = vst.msk [vmem:[#allocation4 + $0x4] sm:$0x1] %vm5075, %v5256
        %5293 = vst.msk [vmem:[#allocation4 + $0xc] sm:$0x1] %vm5075, %v5263
        %5294 = vst.msk [vmem:[#allocation4 + $0x14] sm:$0x1] %vm5075, %v5270
        %5295 = vst.msk [vmem:[#allocation4 + $0x1c] sm:$0x1] %vm5075, %v5277
        %5296 = vst.msk [vmem:[#allocation4 + $0x24] sm:$0x1] %vm5075, %v5284
        %5297 = vst.msk [vmem:[#allocation4 + $0x2c] sm:$0x1] %vm5075, %v5291
        %v5298 = vld [vmem:[#allocation3 + $0xa] sm:$0x3]
        %v5299 = vld [vmem:[#allocation3 + $0x1a] sm:$0x3]
        %v5300 = vld [vmem:[#allocation3 + $0x2a] sm:$0x3]
        %v5301 = vld [vmem:[#allocation3 + $0x3a] sm:$0x3]
        %v5302 = vld [vmem:[#allocation3 + $0x4a] sm:$0x3]
        %v5303 = vld [vmem:[#allocation3 + $0x5a] sm:$0x3]
        %v5304 = vsel %vm5032, %v5298, -inf
        %v5305 = vrot.slane %v5304, 4
        %v5306 = vmax.f32 %v5304, %v5305
        %v5307 = vrot.slane %v5306, 2
        %v5308 = vmax.f32 %v5306, %v5307
        %v5309 = vrot.slane %v5308, 1
        %v5310 = vmax.f32 %v5308, %v5309
        %v5311 = vsel %vm5032, %v5299, -inf
        %v5312 = vrot.slane %v5311, 4
        %v5313 = vmax.f32 %v5311, %v5312
        %v5314 = vrot.slane %v5313, 2
        %v5315 = vmax.f32 %v5313, %v5314
        %v5316 = vrot.slane %v5315, 1
        %v5317 = vmax.f32 %v5315, %v5316
        %v5318 = vsel %vm5032, %v5300, -inf
        %v5319 = vrot.slane %v5318, 4
        %v5320 = vmax.f32 %v5318, %v5319
        %v5321 = vrot.slane %v5320, 2
        %v5322 = vmax.f32 %v5320, %v5321
        %v5323 = vrot.slane %v5322, 1
        %v5324 = vmax.f32 %v5322, %v5323
        %v5325 = vsel %vm5032, %v5301, -inf
        %v5326 = vrot.slane %v5325, 4
        %v5327 = vmax.f32 %v5325, %v5326
        %v5328 = vrot.slane %v5327, 2
        %v5329 = vmax.f32 %v5327, %v5328
        %v5330 = vrot.slane %v5329, 1
        %v5331 = vmax.f32 %v5329, %v5330
        %v5332 = vsel %vm5032, %v5302, -inf
        %v5333 = vrot.slane %v5332, 4
        %v5334 = vmax.f32 %v5332, %v5333
        %v5335 = vrot.slane %v5334, 2
        %v5336 = vmax.f32 %v5334, %v5335
        %v5337 = vrot.slane %v5336, 1
        %v5338 = vmax.f32 %v5336, %v5337
        %v5339 = vsel %vm5032, %v5303, -inf
        %v5340 = vrot.slane %v5339, 4
        %v5341 = vmax.f32 %v5339, %v5340
        %v5342 = vrot.slane %v5341, 2
        %v5343 = vmax.f32 %v5341, %v5342
        %v5344 = vrot.slane %v5343, 1
        %v5345 = vmax.f32 %v5343, %v5344
        %5346 = vst.msk [vmem:[#allocation4 + $0x5] sm:$0x1] %vm5075, %v5310
        %5347 = vst.msk [vmem:[#allocation4 + $0xd] sm:$0x1] %vm5075, %v5317
        %5348 = vst.msk [vmem:[#allocation4 + $0x15] sm:$0x1] %vm5075, %v5324
        %5349 = vst.msk [vmem:[#allocation4 + $0x1d] sm:$0x1] %vm5075, %v5331
        %5350 = vst.msk [vmem:[#allocation4 + $0x25] sm:$0x1] %vm5075, %v5338
        %5351 = vst.msk [vmem:[#allocation4 + $0x2d] sm:$0x1] %vm5075, %v5345
        %v5352 = vld [vmem:[#allocation4] sm:$0x3f]
        %v5353 = vld [vmem:[#allocation4 + $0x8] sm:$0x3f]
        %v5354 = vld [vmem:[#allocation4 + $0x10] sm:$0x3f]
        %v5355 = vld [vmem:[#allocation4 + $0x18] sm:$0x3f]
        %v5356 = vld [vmem:[#allocation4 + $0x20] sm:$0x3f]
        %v5357 = vld [vmem:[#allocation4 + $0x28] sm:$0x3f]
        %vm5358 = vcmask 87040
        %5359 = vst.msk [vmem:[#allocation5] sm:$0x3f] %vm5358, 0.0
        %5360 = vst.msk [vmem:[#allocation5 + $0x8] sm:$0x3f] %vm5358, 0.0
        %5361 = vst.msk [vmem:[#allocation5 + $0x10] sm:$0x3f] %vm5358, 0.0
        %5362 = vst.msk [vmem:[#allocation5 + $0x18] sm:$0x3f] %vm5358, 0.0
        %5363 = vst.msk [vmem:[#allocation5 + $0x20] sm:$0x3f] %vm5358, 0.0
        %5364 = vst.msk [vmem:[#allocation5 + $0x28] sm:$0x3f] %vm5358, 0.0
        %v5365 = vmul.f32 %v5352, %v5352
        %v5366 = vmul.f32 %v5353, %v5353
        %v5367 = vmul.f32 %v5354, %v5354
        %v5368 = vmul.f32 %v5355, %v5355
        %v5369 = vmul.f32 %v5356, %v5356
        %v5370 = vmul.f32 %v5357, %v5357
        %5377 = vrot.lane.b32.xlu0 %v5365, 2
        %v5378 = vpop.permute.xlu0 %5377
        %5379 = vrot.lane.b32.xlu0 %v5366, 2
        %v5380 = vpop.permute.xlu0 %5379
        %5381 = vrot.lane.b32.xlu0 %v5367, 2
        %v5382 = vpop.permute.xlu0 %5381
        %5383 = vrot.lane.b32.xlu0 %v5368, 2
        %v5384 = vpop.permute.xlu0 %5383
        %5385 = vrot.lane.b32.xlu0 %v5369, 2
        %v5386 = vpop.permute.xlu0 %5385
        %5387 = vrot.lane.b32.xlu0 %v5370, 2
        %v5388 = vpop.permute.xlu0 %5387
        %vm5395 = vcmask 78864
        %5396 = vst.msk [vmem:[#allocation5] sm:$0x3f] %vm5395, %v5378
        %5397 = vst.msk [vmem:[#allocation5 + $0x8] sm:$0x3f] %vm5395, %v5380
        %5398 = vst.msk [vmem:[#allocation5 + $0x10] sm:$0x3f] %vm5395, %v5382
        %5399 = vst.msk [vmem:[#allocation5 + $0x18] sm:$0x3f] %vm5395, %v5384
        %5400 = vst.msk [vmem:[#allocation5 + $0x20] sm:$0x3f] %vm5395, %v5386
        %5401 = vst.msk [vmem:[#allocation5 + $0x28] sm:$0x3f] %vm5395, %v5388
        %v5402 = vld [vmem:[#allocation5] sm:$0x3f]
        %v5403 = vld [vmem:[#allocation5 + $0x8] sm:$0x3f]
        %v5404 = vld [vmem:[#allocation5 + $0x10] sm:$0x3f]
        %v5405 = vld [vmem:[#allocation5 + $0x18] sm:$0x3f]
        %v5406 = vld [vmem:[#allocation5 + $0x20] sm:$0x3f]
        %v5407 = vld [vmem:[#allocation5 + $0x28] sm:$0x3f]
        %5414 = vrot.lane.b32.xlu0 %v5402, 127
        %v5415 = vpop.permute.xlu0 %5414
        %5416 = vrot.lane.b32.xlu0 %v5403, 127
        %v5417 = vpop.permute.xlu0 %5416
        %5418 = vrot.lane.b32.xlu0 %v5404, 127
        %v5419 = vpop.permute.xlu0 %5418
        %5420 = vrot.lane.b32.xlu0 %v5405, 127
        %v5421 = vpop.permute.xlu0 %5420
        %5422 = vrot.lane.b32.xlu0 %v5406, 127
        %v5423 = vpop.permute.xlu0 %5422
        %5424 = vrot.lane.b32.xlu0 %v5407, 127
        %v5425 = vpop.permute.xlu0 %5424
        %v5432 = vadd.f32 %v5402, %v5415
        %v5433 = vadd.f32 %v5403, %v5417
        %v5434 = vadd.f32 %v5404, %v5419
        %v5435 = vadd.f32 %v5405, %v5421
        %v5436 = vadd.f32 %v5406, %v5423
        %v5437 = vadd.f32 %v5407, %v5425
        %5438 = vrot.lane.b32.xlu0 %v5402, 126
        %v5439 = vpop.permute.xlu0 %5438
        %5440 = vrot.lane.b32.xlu0 %v5403, 126
        %v5441 = vpop.permute.xlu0 %5440
        %5442 = vrot.lane.b32.xlu0 %v5404, 126
        %v5443 = vpop.permute.xlu0 %5442
        %5444 = vrot.lane.b32.xlu0 %v5405, 126
        %v5445 = vpop.permute.xlu0 %5444
        %5446 = vrot.lane.b32.xlu0 %v5406, 126
        %v5447 = vpop.permute.xlu0 %5446
        %5448 = vrot.lane.b32.xlu0 %v5407, 126
        %v5449 = vpop.permute.xlu0 %5448
        %v5456 = vadd.f32 %v5432, %v5439
        %v5457 = vadd.f32 %v5433, %v5441
        %v5458 = vadd.f32 %v5434, %v5443
        %v5459 = vadd.f32 %v5435, %v5445
        %v5460 = vadd.f32 %v5436, %v5447
        %v5461 = vadd.f32 %v5437, %v5449
        %5462 = vrot.lane.b32.xlu0 %v5402, 125
        %v5463 = vpop.permute.xlu0 %5462
        %5464 = vrot.lane.b32.xlu0 %v5403, 125
        %v5465 = vpop.permute.xlu0 %5464
        %5466 = vrot.lane.b32.xlu0 %v5404, 125
        %v5467 = vpop.permute.xlu0 %5466
        %5468 = vrot.lane.b32.xlu0 %v5405, 125
        %v5469 = vpop.permute.xlu0 %5468
        %5470 = vrot.lane.b32.xlu0 %v5406, 125
        %v5471 = vpop.permute.xlu0 %5470
        %5472 = vrot.lane.b32.xlu0 %v5407, 125
        %v5473 = vpop.permute.xlu0 %5472
        %v5480 = vadd.f32 %v5456, %v5463
        %v5481 = vadd.f32 %v5457, %v5465
        %v5482 = vadd.f32 %v5458, %v5467
        %v5483 = vadd.f32 %v5459, %v5469
        %v5484 = vadd.f32 %v5460, %v5471
        %v5485 = vadd.f32 %v5461, %v5473
        %v5486 = vmul.f32 %v5480, 2.5e-05
        %v5487 = vmul.f32 %v5481, 2.5e-05
        %v5488 = vmul.f32 %v5482, 2.5e-05
        %v5489 = vmul.f32 %v5483, 2.5e-05
        %v5490 = vmul.f32 %v5484, 2.5e-05
        %v5491 = vmul.f32 %v5485, 2.5e-05
        %v5492 = vadd.f32 %v5486, 1.0
        %v5493 = vadd.f32 %v5487, 1.0
        %v5494 = vadd.f32 %v5488, 1.0
        %v5495 = vadd.f32 %v5489, 1.0
        %v5496 = vadd.f32 %v5490, 1.0
        %v5497 = vadd.f32 %v5491, 1.0
        %v5498 = vlog2.pop %v5492
        %v5499 = vmul.f32 %v5498, 0.6931472
        %v5500 = vlog2.pop %v5493
        %v5501 = vmul.f32 %v5500, 0.6931472
        %v5502 = vlog2.pop %v5494
        %v5503 = vmul.f32 %v5502, 0.6931472
        %v5504 = vlog2.pop %v5495
        %v5505 = vmul.f32 %v5504, 0.6931472
        %v5506 = vlog2.pop %v5496
        %v5507 = vmul.f32 %v5506, 0.6931472
        %v5508 = vlog2.pop %v5497
        %v5509 = vmul.f32 %v5508, 0.6931472
        %v5510 = vmul.f32 %v5499, -0.75
        %v5511 = vmul.f32 %v5501, -0.75
        %v5512 = vmul.f32 %v5503, -0.75
        %v5513 = vmul.f32 %v5505, -0.75
        %v5514 = vmul.f32 %v5507, -0.75
        %v5515 = vmul.f32 %v5509, -0.75
        %v5516 = vmul.f32 %v5510, 1.442695
        %v5517 = vpow.pop %v5516
        %v5518 = vmul.f32 %v5511, 1.442695
        %v5519 = vpow.pop %v5518
        %v5520 = vmul.f32 %v5512, 1.442695
        %v5521 = vpow.pop %v5520
        %v5522 = vmul.f32 %v5513, 1.442695
        %v5523 = vpow.pop %v5522
        %v5524 = vmul.f32 %v5514, 1.442695
        %v5525 = vpow.pop %v5524
        %v5526 = vmul.f32 %v5515, 1.442695
        %v5527 = vpow.pop %v5526
        %v5528 = vmul.f32 %v5352, %v5517
        %v5529 = vmul.f32 %v5353, %v5519
        %v5530 = vmul.f32 %v5354, %v5521
        %v5531 = vmul.f32 %v5355, %v5523
        %v5532 = vmul.f32 %v5356, %v5525
        %v5533 = vmul.f32 %v5357, %v5527
        %vm5534 = vcmask 62464
        %5535 = vst.msk [vmem:[#allocation4] sm:$0x3f] %vm5534, %v5528
        %5536 = vst.msk [vmem:[#allocation4 + $0x8] sm:$0x3f] %vm5534, %v5529
        %5537 = vst.msk [vmem:[#allocation4 + $0x10] sm:$0x3f] %vm5534, %v5530
        %5538 = vst.msk [vmem:[#allocation4 + $0x18] sm:$0x3f] %vm5534, %v5531
        %5539 = vst.msk [vmem:[#allocation4 + $0x20] sm:$0x3f] %vm5534, %v5532
        %5540 = vst.msk [vmem:[#allocation4 + $0x28] sm:$0x3f] %vm5534, %v5533
        %v5541 = vld [vmem:[#allocation4] sm:$0xf]
        %v5542 = vld [vmem:[#allocation4 + $0x8] sm:$0xf]
        %v5543 = vld [vmem:[#allocation4 + $0x10] sm:$0xf]
        %v5544 = vld [vmem:[#allocation4 + $0x18] sm:$0xf]
        %5545 = vst.msk [vmem:[#allocation6] sm:$0xf] %vm4139, %v5541
        %5546 = vst.msk [vmem:[#allocation6 + $0x4] sm:$0xf] %vm4139, %v5542
        %5547 = vst.msk [vmem:[#allocation6 + $0x8] sm:$0xf] %vm4139, %v5543
        %5548 = vst.msk [vmem:[#allocation6 + $0xc] sm:$0xf] %vm4139, %v5544
        %v5549 = vld [vmem:[#allocation4 + $0x1] sm:$0xf]
        %v5550 = vld [vmem:[#allocation4 + $0x9] sm:$0xf]
        %v5551 = vld [vmem:[#allocation4 + $0x11] sm:$0xf]
        %v5552 = vld [vmem:[#allocation4 + $0x19] sm:$0xf]
        %5557 = vrot.lane.b32.xlu0 %v5549, 8
        %v5558 = vpop.permute.xlu0 %5557
        %5559 = vrot.lane.b32.xlu0 %v5550, 8
        %v5560 = vpop.permute.xlu0 %5559
        %5561 = vrot.lane.b32.xlu0 %v5551, 8
        %v5562 = vpop.permute.xlu0 %5561
        %5563 = vrot.lane.b32.xlu0 %v5552, 8
        %v5564 = vpop.permute.xlu0 %5563
        %vm5569 = vcmask 126016
        %5570 = vst.msk [vmem:[#allocation6] sm:$0xf] %vm5569, %v5558
        %5571 = vst.msk [vmem:[#allocation6 + $0x4] sm:$0xf] %vm5569, %v5560
        %5572 = vst.msk [vmem:[#allocation6 + $0x8] sm:$0xf] %vm5569, %v5562
        %5573 = vst.msk [vmem:[#allocation6 + $0xc] sm:$0xf] %vm5569, %v5564
        %v5574 = vld [vmem:[#allocation4 + $0x2] sm:$0xf]
        %v5575 = vld [vmem:[#allocation4 + $0xa] sm:$0xf]
        %v5576 = vld [vmem:[#allocation4 + $0x12] sm:$0xf]
        %v5577 = vld [vmem:[#allocation4 + $0x1a] sm:$0xf]
        %5582 = vrot.lane.b32.xlu0 %v5574, 16
        %v5583 = vpop.permute.xlu0 %5582
        %5584 = vrot.lane.b32.xlu0 %v5575, 16
        %v5585 = vpop.permute.xlu0 %5584
        %5586 = vrot.lane.b32.xlu0 %v5576, 16
        %v5587 = vpop.permute.xlu0 %5586
        %5588 = vrot.lane.b32.xlu0 %v5577, 16
        %v5589 = vpop.permute.xlu0 %5588
        %vm5594 = vcmask 191616
        %5595 = vst.msk [vmem:[#allocation6] sm:$0xf] %vm5594, %v5583
        %5596 = vst.msk [vmem:[#allocation6 + $0x4] sm:$0xf] %vm5594, %v5585
        %5597 = vst.msk [vmem:[#allocation6 + $0x8] sm:$0xf] %vm5594, %v5587
        %5598 = vst.msk [vmem:[#allocation6 + $0xc] sm:$0xf] %vm5594, %v5589
        %s5599 = scalar_lea.vmem [#allocation4], 8
        %v5600 = vld [vmem:[%s5599] sm:$0xf]
        %v5601 = vld [vmem:[%s5599 + $0x8] sm:$0xf]
        %v5602 = vld [vmem:[%s5599 + $0x10] sm:$0xf]
        %v5603 = vld [vmem:[%s5599 + $0x18] sm:$0xf]
        %5608 = vrot.lane.b32.xlu0 %v5600, 24
        %v5609 = vpop.permute.xlu0 %5608
        %5610 = vrot.lane.b32.xlu0 %v5601, 24
        %v5611 = vpop.permute.xlu0 %5610
        %5612 = vrot.lane.b32.xlu0 %v5602, 24
        %v5613 = vpop.permute.xlu0 %5612
        %5614 = vrot.lane.b32.xlu0 %v5603, 24
        %v5615 = vpop.permute.xlu0 %5614
        %vm5620 = vcmask 257216
        %5621 = vst.msk [vmem:[#allocation6] sm:$0xf] %vm5620, %v5609
        %5622 = vst.msk [vmem:[#allocation6 + $0x4] sm:$0xf] %vm5620, %v5611
        %5623 = vst.msk [vmem:[#allocation6 + $0x8] sm:$0xf] %vm5620, %v5613
        %5624 = vst.msk [vmem:[#allocation6 + $0xc] sm:$0xf] %vm5620, %v5615
        %v5625 = vld [vmem:[%s5599 + $0x1] sm:$0xf]
        %v5626 = vld [vmem:[%s5599 + $0x9] sm:$0xf]
        %v5627 = vld [vmem:[%s5599 + $0x11] sm:$0xf]
        %v5628 = vld [vmem:[%s5599 + $0x19] sm:$0xf]
        %5633 = vrot.lane.b32.xlu0 %v5625, 32
        %v5634 = vpop.permute.xlu0 %5633
        %5635 = vrot.lane.b32.xlu0 %v5626, 32
        %v5636 = vpop.permute.xlu0 %5635
        %5637 = vrot.lane.b32.xlu0 %v5627, 32
        %v5638 = vpop.permute.xlu0 %5637
        %5639 = vrot.lane.b32.xlu0 %v5628, 32
        %v5640 = vpop.permute.xlu0 %5639
        %vm5645 = vcmask 322816
        %5646 = vst.msk [vmem:[#allocation6] sm:$0xf] %vm5645, %v5634
        %5647 = vst.msk [vmem:[#allocation6 + $0x4] sm:$0xf] %vm5645, %v5636
        %5648 = vst.msk [vmem:[#allocation6 + $0x8] sm:$0xf] %vm5645, %v5638
        %5649 = vst.msk [vmem:[#allocation6 + $0xc] sm:$0xf] %vm5645, %v5640
        %v5650 = vld [vmem:[%s5599 + $0x2] sm:$0xf]
        %v5651 = vld [vmem:[%s5599 + $0xa] sm:$0xf]
        %v5652 = vld [vmem:[%s5599 + $0x12] sm:$0xf]
        %v5653 = vld [vmem:[%s5599 + $0x1a] sm:$0xf]
        %5658 = vrot.lane.b32.xlu0 %v5650, 40
        %v5659 = vpop.permute.xlu0 %5658
        %5660 = vrot.lane.b32.xlu0 %v5651, 40
        %v5661 = vpop.permute.xlu0 %5660
        %5662 = vrot.lane.b32.xlu0 %v5652, 40
        %v5663 = vpop.permute.xlu0 %5662
        %5664 = vrot.lane.b32.xlu0 %v5653, 40
        %v5665 = vpop.permute.xlu0 %5664
        %vm5670 = vcmask 388416
        %5671 = vst.msk [vmem:[#allocation6] sm:$0xf] %vm5670, %v5659
        %5672 = vst.msk [vmem:[#allocation6 + $0x4] sm:$0xf] %vm5670, %v5661
        %5673 = vst.msk [vmem:[#allocation6 + $0x8] sm:$0xf] %vm5670, %v5663
        %5674 = vst.msk [vmem:[#allocation6 + $0xc] sm:$0xf] %vm5670, %v5665
        %s5675 = scalar_lea.vmem [#allocation4], 16
        %v5676 = vld [vmem:[%s5675] sm:$0xf]
        %v5677 = vld [vmem:[%s5675 + $0x8] sm:$0xf]
        %v5678 = vld [vmem:[%s5675 + $0x10] sm:$0xf]
        %v5679 = vld [vmem:[%s5675 + $0x18] sm:$0xf]
        %5684 = vrot.lane.b32.xlu0 %v5676, 48
        %v5685 = vpop.permute.xlu0 %5684
        %5686 = vrot.lane.b32.xlu0 %v5677, 48
        %v5687 = vpop.permute.xlu0 %5686
        %5688 = vrot.lane.b32.xlu0 %v5678, 48
        %v5689 = vpop.permute.xlu0 %5688
        %5690 = vrot.lane.b32.xlu0 %v5679, 48
        %v5691 = vpop.permute.xlu0 %5690
        %vm5696 = vcmask 454016
        %5697 = vst.msk [vmem:[#allocation6] sm:$0xf] %vm5696, %v5685
        %5698 = vst.msk [vmem:[#allocation6 + $0x4] sm:$0xf] %vm5696, %v5687
        %5699 = vst.msk [vmem:[#allocation6 + $0x8] sm:$0xf] %vm5696, %v5689
        %5700 = vst.msk [vmem:[#allocation6 + $0xc] sm:$0xf] %vm5696, %v5691
        %v5701 = vld [vmem:[%s5675 + $0x1] sm:$0xf]
        %v5702 = vld [vmem:[%s5675 + $0x9] sm:$0xf]
        %v5703 = vld [vmem:[%s5675 + $0x11] sm:$0xf]
        %v5704 = vld [vmem:[%s5675 + $0x19] sm:$0xf]
        %5709 = vrot.lane.b32.xlu0 %v5701, 56
        %v5710 = vpop.permute.xlu0 %5709
        %5711 = vrot.lane.b32.xlu0 %v5702, 56
        %v5712 = vpop.permute.xlu0 %5711
        %5713 = vrot.lane.b32.xlu0 %v5703, 56
        %v5714 = vpop.permute.xlu0 %5713
        %5715 = vrot.lane.b32.xlu0 %v5704, 56
        %v5716 = vpop.permute.xlu0 %5715
        %vm5721 = vcmask 519616
        %5722 = vst.msk [vmem:[#allocation6] sm:$0xf] %vm5721, %v5710
        %5723 = vst.msk [vmem:[#allocation6 + $0x4] sm:$0xf] %vm5721, %v5712
        %5724 = vst.msk [vmem:[#allocation6 + $0x8] sm:$0xf] %vm5721, %v5714
        %5725 = vst.msk [vmem:[#allocation6 + $0xc] sm:$0xf] %vm5721, %v5716
        %v5726 = vld [vmem:[%s5675 + $0x2] sm:$0xf]
        %v5727 = vld [vmem:[%s5675 + $0xa] sm:$0xf]
        %v5728 = vld [vmem:[%s5675 + $0x12] sm:$0xf]
        %v5729 = vld [vmem:[%s5675 + $0x1a] sm:$0xf]
        %5734 = vrot.lane.b32.xlu0 %v5726, 64
        %v5735 = vpop.permute.xlu0 %5734
        %5736 = vrot.lane.b32.xlu0 %v5727, 64
        %v5737 = vpop.permute.xlu0 %5736
        %5738 = vrot.lane.b32.xlu0 %v5728, 64
        %v5739 = vpop.permute.xlu0 %5738
        %5740 = vrot.lane.b32.xlu0 %v5729, 64
        %v5741 = vpop.permute.xlu0 %5740
        %vm5746 = vcmask 585216
        %5747 = vst.msk [vmem:[#allocation6] sm:$0xf] %vm5746, %v5735
        %5748 = vst.msk [vmem:[#allocation6 + $0x4] sm:$0xf] %vm5746, %v5737
        %5749 = vst.msk [vmem:[#allocation6 + $0x8] sm:$0xf] %vm5746, %v5739
        %5750 = vst.msk [vmem:[#allocation6 + $0xc] sm:$0xf] %vm5746, %v5741
        %v5751 = vld [vmem:[%s3] sm:$0xff]
        %v5752 = vld [vmem:[%s3 + $0x8] sm:$0xff]
        %v5753 = vld [vmem:[%s3 + $0x10] sm:$0xff]
        %v5754 = vld [vmem:[%s3 + $0x18] sm:$0xff]
        %v5755 = vld [vmem:[%s3 + $0x20] sm:$0xff]
        %v5756 = vld [vmem:[%s3 + $0x28] sm:$0xff]
        %v5757 = vld [vmem:[%s3 + $0x30] sm:$0xff]
        %v5758 = vld [vmem:[%s3 + $0x38] sm:$0xff]
        %v5759 = vld [vmem:[%s3 + $0x40] sm:$0xff]
        %v5760 = vld [vmem:[%s4] sm:$0x1]
        %v5761 = vld [vmem:[#allocation6] sm:$0xf]
        %v5763 = vlaneseq
        %v5764 = vshrl.u32 %v5763, 7
        %v5765 = vsub.s32 0, %v5764
        %v5766 = vrot.slane %v5760, %v5765
        %vm5768 = vcmask 588800
        %v5770 = vsel %vm5768, %v5761, 0
        %5772 = vmatprep.subr.mxu0 0.0
        %5773 = vmatpush1.msra.mxu0 %v5751
        %5774 = vmatprep.subr.mxu0 0.0
        %5775 = vmatpush1.msra.mxu0 %v5752
        %5776 = vmatprep.subr.mxu0 0.0
        %5777 = vmatpush1.msra.mxu0 %v5753
        %5778 = vmatprep.subr.mxu0 0.0
        %5779 = vmatpush1.msra.mxu0 %v5754
        %5780 = vmatprep.subr.mxu0 0.0
        %5781 = vmatpush1.msra.mxu0 %v5755
        %5782 = vmatprep.subr.mxu0 0.0
        %5783 = vmatpush1.msra.mxu0 %v5756
        %5784 = vmatprep.subr.mxu0 0.0
        %5785 = vmatpush1.msra.mxu0 %v5757
        %5786 = vmatprep.subr.mxu0 0.0
        %5787 = vmatpush1.msra.mxu0 %v5758
        %5788 = vmatprep.subr.mxu0 0.0
        %5789 = vmatpush1.msra.mxu0 %v5759
        %5790 = vmatprep.subr.mxu0 0.0
        %5791 = vmatpush1.msra.mxu0 0.0
        %5792 = vmatprep.subr.mxu0 0.0
        %5793 = vmatpush1.msra.mxu0 0.0
        %5794 = vmatprep.subr.mxu0 0.0
        %5795 = vmatpush1.msra.mxu0 0.0
        %5796 = vmatprep.subr.mxu0 0.0
        %5797 = vmatpush1.msra.mxu0 0.0
        %5798 = vmatprep.subr.mxu0 0.0
        %5799 = vmatpush1.msra.mxu0 0.0
        %5800 = vmatprep.subr.mxu0 0.0
        %5801 = vmatpush1.msra.mxu0 0.0
        %5802 = vmatprep.subr.mxu0 0.0
        %5803 = vmatpush1.msra.mxu0 0.0
        %5804 = vmatprep.subr.mxu0 0.0
        %5805 = vmatpush1.msra.mxu0 0.0
        %5806 = vmatprep.subr.mxu0 0.0
        %5807 = vmatpush1.msra.mxu0 0.0
        %5808 = vmatprep.subr.mxu0 0.0
        %5809 = vmatpush1.msra.mxu0 0.0
        %5810 = vmatprep.subr.mxu0 0.0
        %5811 = vmatpush1.msra.mxu0 0.0
        %5812 = vmatprep.subr.mxu0 0.0
        %5813 = vmatpush1.msra.mxu0 0.0
        %5814 = vmatprep.subr.mxu0 0.0
        %5815 = vmatpush1.msra.mxu0 0.0
        %5816 = vmatprep.subr.mxu0 0.0
        %5817 = vmatpush1.msra.mxu0 0.0
        %5818 = vmatprep.subr.mxu0 0.0
        %5819 = vmatpush1.msra.mxu0 0.0
        %5820 = vmatprep.subr.mxu0 0.0
        %5821 = vmatpush1.msra.mxu0 0.0
        %5822 = vmatprep.subr.mxu0 0.0
        %5823 = vmatpush1.msra.mxu0 0.0
        %5824 = vmatprep.subr.mxu0 0.0
        %5825 = vmatpush1.msra.mxu0 0.0
        %5826 = vmatprep.subr.mxu0 0.0
        %5827 = vmatpush1.msra.mxu0 0.0
        %5828 = vmatprep.subr.mxu0 0.0
        %5829 = vmatpush1.msra.mxu0 0.0
        %5830 = vmatprep.subr.mxu0 0.0
        %5831 = vmatpush1.msra.mxu0 0.0
        %5832 = vmatprep.subr.mxu0 0.0
        %5833 = vmatpush1.msra.mxu0 0.0
        %5834 = vmatprep.subr.mxu0 0.0
        %5835 = vmatpush1.msra.mxu0 0.0
        %5836 = vmatprep.mubr.f32.mxu0 0.0
        %5837 = vmatmul.mubr.f32.gmra.mrb[0].mxu0 %v5770
        %v5838 = vpop.f32.mrb[0].mxu0
        %v5839 = vadd.f32 %v5766, %v5838
        %v5840 = vpop.f32.mrb[0].mxu0
        %5841 = vdwg.mxu0
        %v5842 = vmax.f32 %v5839, 0.0
        %5843 = vst.msk [vmem:[#allocation7] sm:$0xf] %vm4139, %v5842
        %s5844 = scalar_lea.vmem [#allocation6], 4
        %v5845 = vld [vmem:[%s5844] sm:$0xf]
        %v5847 = vsel %vm5768, %v5845, 0
        %5849 = vmatprep.subr.mxu0 0.0
        %5850 = vmatpush1.msra.mxu0 %v5751
        %5851 = vmatprep.subr.mxu0 0.0
        %5852 = vmatpush1.msra.mxu0 %v5752
        %5853 = vmatprep.subr.mxu0 0.0
        %5854 = vmatpush1.msra.mxu0 %v5753
        %5855 = vmatprep.subr.mxu0 0.0
        %5856 = vmatpush1.msra.mxu0 %v5754
        %5857 = vmatprep.subr.mxu0 0.0
        %5858 = vmatpush1.msra.mxu0 %v5755
        %5859 = vmatprep.subr.mxu0 0.0
        %5860 = vmatpush1.msra.mxu0 %v5756
        %5861 = vmatprep.subr.mxu0 0.0
        %5862 = vmatpush1.msra.mxu0 %v5757
        %5863 = vmatprep.subr.mxu0 0.0
        %5864 = vmatpush1.msra.mxu0 %v5758
        %5865 = vmatprep.subr.mxu0 0.0
        %5866 = vmatpush1.msra.mxu0 %v5759
        %5867 = vmatprep.subr.mxu0 0.0
        %5868 = vmatpush1.msra.mxu0 0.0
        %5869 = vmatprep.subr.mxu0 0.0
        %5870 = vmatpush1.msra.mxu0 0.0
        %5871 = vmatprep.subr.mxu0 0.0
        %5872 = vmatpush1.msra.mxu0 0.0
        %5873 = vmatprep.subr.mxu0 0.0
        %5874 = vmatpush1.msra.mxu0 0.0
        %5875 = vmatprep.subr.mxu0 0.0
        %5876 = vmatpush1.msra.mxu0 0.0
        %5877 = vmatprep.subr.mxu0 0.0
        %5878 = vmatpush1.msra.mxu0 0.0
        %5879 = vmatprep.subr.mxu0 0.0
        %5880 = vmatpush1.msra.mxu0 0.0
        %5881 = vmatprep.subr.mxu0 0.0
        %5882 = vmatpush1.msra.mxu0 0.0
        %5883 = vmatprep.subr.mxu0 0.0
        %5884 = vmatpush1.msra.mxu0 0.0
        %5885 = vmatprep.subr.mxu0 0.0
        %5886 = vmatpush1.msra.mxu0 0.0
        %5887 = vmatprep.subr.mxu0 0.0
        %5888 = vmatpush1.msra.mxu0 0.0
        %5889 = vmatprep.subr.mxu0 0.0
        %5890 = vmatpush1.msra.mxu0 0.0
        %5891 = vmatprep.subr.mxu0 0.0
        %5892 = vmatpush1.msra.mxu0 0.0
        %5893 = vmatprep.subr.mxu0 0.0
        %5894 = vmatpush1.msra.mxu0 0.0
        %5895 = vmatprep.subr.mxu0 0.0
        %5896 = vmatpush1.msra.mxu0 0.0
        %5897 = vmatprep.subr.mxu0 0.0
        %5898 = vmatpush1.msra.mxu0 0.0
        %5899 = vmatprep.subr.mxu0 0.0
        %5900 = vmatpush1.msra.mxu0 0.0
        %5901 = vmatprep.subr.mxu0 0.0
        %5902 = vmatpush1.msra.mxu0 0.0
        %5903 = vmatprep.subr.mxu0 0.0
        %5904 = vmatpush1.msra.mxu0 0.0
        %5905 = vmatprep.subr.mxu0 0.0
        %5906 = vmatpush1.msra.mxu0 0.0
        %5907 = vmatprep.subr.mxu0 0.0
        %5908 = vmatpush1.msra.mxu0 0.0
        %5909 = vmatprep.subr.mxu0 0.0
        %5910 = vmatpush1.msra.mxu0 0.0
        %5911 = vmatprep.subr.mxu0 0.0
        %5912 = vmatpush1.msra.mxu0 0.0
        %5913 = vmatprep.mubr.f32.mxu0 0.0
        %5914 = vmatmul.mubr.f32.gmra.mrb[0].mxu0 %v5847
        %v5915 = vpop.f32.mrb[0].mxu0
        %v5916 = vadd.f32 %v5766, %v5915
        %v5917 = vpop.f32.mrb[0].mxu0
        %5918 = vdwg.mxu0
        %v5919 = vmax.f32 %v5916, 0.0
        %s5920 = scalar_lea.vmem [#allocation7], 4
        %5921 = vst.msk [vmem:[%s5920] sm:$0xf] %vm4139, %v5919
        %s5922 = scalar_lea.vmem [#allocation6], 8
        %v5923 = vld [vmem:[%s5922] sm:$0xf]
        %v5925 = vsel %vm5768, %v5923, 0
        %5927 = vmatprep.subr.mxu0 0.0
        %5928 = vmatpush1.msra.mxu0 %v5751
        %5929 = vmatprep.subr.mxu0 0.0
        %5930 = vmatpush1.msra.mxu0 %v5752
        %5931 = vmatprep.subr.mxu0 0.0
        %5932 = vmatpush1.msra.mxu0 %v5753
        %5933 = vmatprep.subr.mxu0 0.0
        %5934 = vmatpush1.msra.mxu0 %v5754
        %5935 = vmatprep.subr.mxu0 0.0
        %5936 = vmatpush1.msra.mxu0 %v5755
        %5937 = vmatprep.subr.mxu0 0.0
        %5938 = vmatpush1.msra.mxu0 %v5756
        %5939 = vmatprep.subr.mxu0 0.0
        %5940 = vmatpush1.msra.mxu0 %v5757
        %5941 = vmatprep.subr.mxu0 0.0
        %5942 = vmatpush1.msra.mxu0 %v5758
        %5943 = vmatprep.subr.mxu0 0.0
        %5944 = vmatpush1.msra.mxu0 %v5759
        %5945 = vmatprep.subr.mxu0 0.0
        %5946 = vmatpush1.msra.mxu0 0.0
        %5947 = vmatprep.subr.mxu0 0.0
        %5948 = vmatpush1.msra.mxu0 0.0
        %5949 = vmatprep.subr.mxu0 0.0
        %5950 = vmatpush1.msra.mxu0 0.0
        %5951 = vmatprep.subr.mxu0 0.0
        %5952 = vmatpush1.msra.mxu0 0.0
        %5953 = vmatprep.subr.mxu0 0.0
        %5954 = vmatpush1.msra.mxu0 0.0
        %5955 = vmatprep.subr.mxu0 0.0
        %5956 = vmatpush1.msra.mxu0 0.0
        %5957 = vmatprep.subr.mxu0 0.0
        %5958 = vmatpush1.msra.mxu0 0.0
        %5959 = vmatprep.subr.mxu0 0.0
        %5960 = vmatpush1.msra.mxu0 0.0
        %5961 = vmatprep.subr.mxu0 0.0
        %5962 = vmatpush1.msra.mxu0 0.0
        %5963 = vmatprep.subr.mxu0 0.0
        %5964 = vmatpush1.msra.mxu0 0.0
        %5965 = vmatprep.subr.mxu0 0.0
        %5966 = vmatpush1.msra.mxu0 0.0
        %5967 = vmatprep.subr.mxu0 0.0
        %5968 = vmatpush1.msra.mxu0 0.0
        %5969 = vmatprep.subr.mxu0 0.0
        %5970 = vmatpush1.msra.mxu0 0.0
        %5971 = vmatprep.subr.mxu0 0.0
        %5972 = vmatpush1.msra.mxu0 0.0
        %5973 = vmatprep.subr.mxu0 0.0
        %5974 = vmatpush1.msra.mxu0 0.0
        %5975 = vmatprep.subr.mxu0 0.0
        %5976 = vmatpush1.msra.mxu0 0.0
        %5977 = vmatprep.subr.mxu0 0.0
        %5978 = vmatpush1.msra.mxu0 0.0
        %5979 = vmatprep.subr.mxu0 0.0
        %5980 = vmatpush1.msra.mxu0 0.0
        %5981 = vmatprep.subr.mxu0 0.0
        %5982 = vmatpush1.msra.mxu0 0.0
        %5983 = vmatprep.subr.mxu0 0.0
        %5984 = vmatpush1.msra.mxu0 0.0
        %5985 = vmatprep.subr.mxu0 0.0
        %5986 = vmatpush1.msra.mxu0 0.0
        %5987 = vmatprep.subr.mxu0 0.0
        %5988 = vmatpush1.msra.mxu0 0.0
        %5989 = vmatprep.subr.mxu0 0.0
        %5990 = vmatpush1.msra.mxu0 0.0
        %5991 = vmatprep.mubr.f32.mxu0 0.0
        %5992 = vmatmul.mubr.f32.gmra.mrb[0].mxu0 %v5925
        %v5993 = vpop.f32.mrb[0].mxu0
        %v5994 = vadd.f32 %v5766, %v5993
        %v5995 = vpop.f32.mrb[0].mxu0
        %5996 = vdwg.mxu0
        %v5997 = vmax.f32 %v5994, 0.0
        %s5998 = scalar_lea.vmem [#allocation7], 8
        %5999 = vst.msk [vmem:[%s5998] sm:$0xf] %vm4139, %v5997
        %s6000 = scalar_lea.vmem [#allocation6], 12
        %v6001 = vld [vmem:[%s6000] sm:$0xf]
        %v6003 = vsel %vm5768, %v6001, 0
        %6005 = vmatprep.subr.mxu0 0.0
        %6006 = vmatpush1.msra.mxu0 %v5751
        %6007 = vmatprep.subr.mxu0 0.0
        %6008 = vmatpush1.msra.mxu0 %v5752
        %6009 = vmatprep.subr.mxu0 0.0
        %6010 = vmatpush1.msra.mxu0 %v5753
        %6011 = vmatprep.subr.mxu0 0.0
        %6012 = vmatpush1.msra.mxu0 %v5754
        %6013 = vmatprep.subr.mxu0 0.0
        %6014 = vmatpush1.msra.mxu0 %v5755
        %6015 = vmatprep.subr.mxu0 0.0
        %6016 = vmatpush1.msra.mxu0 %v5756
        %6017 = vmatprep.subr.mxu0 0.0
        %6018 = vmatpush1.msra.mxu0 %v5757
        %6019 = vmatprep.subr.mxu0 0.0
        %6020 = vmatpush1.msra.mxu0 %v5758
        %6021 = vmatprep.subr.mxu0 0.0
        %6022 = vmatpush1.msra.mxu0 %v5759
        %6023 = vmatprep.subr.mxu0 0.0
        %6024 = vmatpush1.msra.mxu0 0.0
        %6025 = vmatprep.subr.mxu0 0.0
        %6026 = vmatpush1.msra.mxu0 0.0
        %6027 = vmatprep.subr.mxu0 0.0
        %6028 = vmatpush1.msra.mxu0 0.0
        %6029 = vmatprep.subr.mxu0 0.0
        %6030 = vmatpush1.msra.mxu0 0.0
        %6031 = vmatprep.subr.mxu0 0.0
        %6032 = vmatpush1.msra.mxu0 0.0
        %6033 = vmatprep.subr.mxu0 0.0
        %6034 = vmatpush1.msra.mxu0 0.0
        %6035 = vmatprep.subr.mxu0 0.0
        %6036 = vmatpush1.msra.mxu0 0.0
        %6037 = vmatprep.subr.mxu0 0.0
        %6038 = vmatpush1.msra.mxu0 0.0
        %6039 = vmatprep.subr.mxu0 0.0
        %6040 = vmatpush1.msra.mxu0 0.0
        %6041 = vmatprep.subr.mxu0 0.0
        %6042 = vmatpush1.msra.mxu0 0.0
        %6043 = vmatprep.subr.mxu0 0.0
        %6044 = vmatpush1.msra.mxu0 0.0
        %6045 = vmatprep.subr.mxu0 0.0
        %6046 = vmatpush1.msra.mxu0 0.0
        %6047 = vmatprep.subr.mxu0 0.0
        %6048 = vmatpush1.msra.mxu0 0.0
        %6049 = vmatprep.subr.mxu0 0.0
        %6050 = vmatpush1.msra.mxu0 0.0
        %6051 = vmatprep.subr.mxu0 0.0
        %6052 = vmatpush1.msra.mxu0 0.0
        %6053 = vmatprep.subr.mxu0 0.0
        %6054 = vmatpush1.msra.mxu0 0.0
        %6055 = vmatprep.subr.mxu0 0.0
        %6056 = vmatpush1.msra.mxu0 0.0
        %6057 = vmatprep.subr.mxu0 0.0
        %6058 = vmatpush1.msra.mxu0 0.0
        %6059 = vmatprep.subr.mxu0 0.0
        %6060 = vmatpush1.msra.mxu0 0.0
        %6061 = vmatprep.subr.mxu0 0.0
        %6062 = vmatpush1.msra.mxu0 0.0
        %6063 = vmatprep.subr.mxu0 0.0
        %6064 = vmatpush1.msra.mxu0 0.0
        %6065 = vmatprep.subr.mxu0 0.0
        %6066 = vmatpush1.msra.mxu0 0.0
        %6067 = vmatprep.subr.mxu0 0.0
        %6068 = vmatpush1.msra.mxu0 0.0
        %6069 = vmatprep.mubr.f32.mxu0 0.0
        %6070 = vmatmul.mubr.f32.gmra.mrb[0].mxu0 %v6003
        %v6071 = vpop.f32.mrb[0].mxu0
        %v6072 = vadd.f32 %v5766, %v6071
        %v6073 = vpop.f32.mrb[0].mxu0
        %6074 = vdwg.mxu0
        %v6075 = vmax.f32 %v6072, 0.0
        %s6076 = scalar_lea.vmem [#allocation7], 12
        %6077 = vst.msk [vmem:[%s6076] sm:$0xf] %vm4139, %v6075
        %v6078 = vld [vmem:[#allocation7] sm:$0xf]
        %v6079 = vld [vmem:[#allocation7 + $0x4] sm:$0xf]
        %v6080 = vld [vmem:[#allocation7 + $0x8] sm:$0xf]
        %v6081 = vld [vmem:[#allocation7 + $0xc] sm:$0xf]
        %vm6082 = vcmask 84992
        %6083 = vst.msk [vmem:[#allocation8] sm:$0xf] %vm6082, 0.0
        %6084 = vst.msk [vmem:[#allocation8 + $0x4] sm:$0xf] %vm6082, 0.0
        %6085 = vst.msk [vmem:[#allocation8 + $0x8] sm:$0xf] %vm6082, 0.0
        %6086 = vst.msk [vmem:[#allocation8 + $0xc] sm:$0xf] %vm6082, 0.0
        %v6087 = vmul.f32 %v6078, %v6078
        %v6088 = vmul.f32 %v6079, %v6079
        %v6089 = vmul.f32 %v6080, %v6080
        %v6090 = vmul.f32 %v6081, %v6081
        %6095 = vrot.lane.b32.xlu0 %v6087, 2
        %v6096 = vpop.permute.xlu0 %6095
        %6097 = vrot.lane.b32.xlu0 %v6088, 2
        %v6098 = vpop.permute.xlu0 %6097
        %6099 = vrot.lane.b32.xlu0 %v6089, 2
        %v6100 = vpop.permute.xlu0 %6099
        %6101 = vrot.lane.b32.xlu0 %v6090, 2
        %v6102 = vpop.permute.xlu0 %6101
        %vm6107 = vcmask 76816
        %6108 = vst.msk [vmem:[#allocation8] sm:$0xf] %vm6107, %v6096
        %6109 = vst.msk [vmem:[#allocation8 + $0x4] sm:$0xf] %vm6107, %v6098
        %6110 = vst.msk [vmem:[#allocation8 + $0x8] sm:$0xf] %vm6107, %v6100
        %6111 = vst.msk [vmem:[#allocation8 + $0xc] sm:$0xf] %vm6107, %v6102
        %v6112 = vld [vmem:[#allocation8] sm:$0xf]
        %v6113 = vld [vmem:[#allocation8 + $0x4] sm:$0xf]
        %v6114 = vld [vmem:[#allocation8 + $0x8] sm:$0xf]
        %v6115 = vld [vmem:[#allocation8 + $0xc] sm:$0xf]
        %6120 = vrot.lane.b32.xlu0 %v6112, 127
        %v6121 = vpop.permute.xlu0 %6120
        %6122 = vrot.lane.b32.xlu0 %v6113, 127
        %v6123 = vpop.permute.xlu0 %6122
        %6124 = vrot.lane.b32.xlu0 %v6114, 127
        %v6125 = vpop.permute.xlu0 %6124
        %6126 = vrot.lane.b32.xlu0 %v6115, 127
        %v6127 = vpop.permute.xlu0 %6126
        %v6132 = vadd.f32 %v6112, %v6121
        %v6133 = vadd.f32 %v6113, %v6123
        %v6134 = vadd.f32 %v6114, %v6125
        %v6135 = vadd.f32 %v6115, %v6127
        %6136 = vrot.lane.b32.xlu0 %v6112, 126
        %v6137 = vpop.permute.xlu0 %6136
        %6138 = vrot.lane.b32.xlu0 %v6113, 126
        %v6139 = vpop.permute.xlu0 %6138
        %6140 = vrot.lane.b32.xlu0 %v6114, 126
        %v6141 = vpop.permute.xlu0 %6140
        %6142 = vrot.lane.b32.xlu0 %v6115, 126
        %v6143 = vpop.permute.xlu0 %6142
        %v6148 = vadd.f32 %v6132, %v6137
        %v6149 = vadd.f32 %v6133, %v6139
        %v6150 = vadd.f32 %v6134, %v6141
        %v6151 = vadd.f32 %v6135, %v6143
        %6152 = vrot.lane.b32.xlu0 %v6112, 125
        %v6153 = vpop.permute.xlu0 %6152
        %6154 = vrot.lane.b32.xlu0 %v6113, 125
        %v6155 = vpop.permute.xlu0 %6154
        %6156 = vrot.lane.b32.xlu0 %v6114, 125
        %v6157 = vpop.permute.xlu0 %6156
        %6158 = vrot.lane.b32.xlu0 %v6115, 125
        %v6159 = vpop.permute.xlu0 %6158
        %v6164 = vadd.f32 %v6148, %v6153
        %v6165 = vadd.f32 %v6149, %v6155
        %v6166 = vadd.f32 %v6150, %v6157
        %v6167 = vadd.f32 %v6151, %v6159
        %v6168 = vmul.f32 %v6164, 2.5e-05
        %v6169 = vmul.f32 %v6165, 2.5e-05
        %v6170 = vmul.f32 %v6166, 2.5e-05
        %v6171 = vmul.f32 %v6167, 2.5e-05
        %v6172 = vadd.f32 %v6168, 1.0
        %v6173 = vadd.f32 %v6169, 1.0
        %v6174 = vadd.f32 %v6170, 1.0
        %v6175 = vadd.f32 %v6171, 1.0
        %v6176 = vlog2.pop %v6172
        %v6177 = vmul.f32 %v6176, 0.6931472
        %v6178 = vlog2.pop %v6173
        %v6179 = vmul.f32 %v6178, 0.6931472
        %v6180 = vlog2.pop %v6174
        %v6181 = vmul.f32 %v6180, 0.6931472
        %v6182 = vlog2.pop %v6175
        %v6183 = vmul.f32 %v6182, 0.6931472
        %v6184 = vmul.f32 %v6177, -0.75
        %v6185 = vmul.f32 %v6179, -0.75
        %v6186 = vmul.f32 %v6181, -0.75
        %v6187 = vmul.f32 %v6183, -0.75
        %v6188 = vmul.f32 %v6184, 1.442695
        %v6189 = vpow.pop %v6188
        %v6190 = vmul.f32 %v6185, 1.442695
        %v6191 = vpow.pop %v6190
        %v6192 = vmul.f32 %v6186, 1.442695
        %v6193 = vpow.pop %v6192
        %v6194 = vmul.f32 %v6187, 1.442695
        %v6195 = vpow.pop %v6194
        %v6196 = vmul.f32 %v6078, %v6189
        %v6197 = vmul.f32 %v6079, %v6191
        %v6198 = vmul.f32 %v6080, %v6193
        %v6199 = vmul.f32 %v6081, %v6195
        %6200 = vst.msk [vmem:[#allocation7] sm:$0xf] %vm4139, %v6196
        %6201 = vst.msk [vmem:[#allocation7 + $0x4] sm:$0xf] %vm4139, %v6197
        %6202 = vst.msk [vmem:[#allocation7 + $0x8] sm:$0xf] %vm4139, %v6198
        %6203 = vst.msk [vmem:[#allocation7 + $0xc] sm:$0xf] %vm4139, %v6199
        %v6204 = vld [vmem:[%s6] sm:$0x1]
        %v6205 = vld [vmem:[#allocation7] sm:$0xf]
        %v6206 = vld [vmem:[%s5920] sm:$0xf]
        %v6207 = vmax.f32 %v6205, %v6206
        %v6208 = vsel %vm5032, %v6207, -inf
        %v6209 = vrot.slane %v6208, 4
        %v6210 = vmax.f32 %v6208, %v6209
        %v6211 = vrot.slane %v6210, 2
        %v6212 = vmax.f32 %v6210, %v6211
        %v6213 = vrot.slane %v6212, 1
        %v6214 = vmax.f32 %v6212, %v6213
        %v6215 = vld [vmem:[%s5] sm:$0xff]
        %v6217 = vsel %vm4137, %v6214, 0
        %6219 = vmatprep.subr.mxu0 0.0
        %6220 = vmatpush1.msra.mxu0 %v6215
        %6221 = vmatprep.subr.mxu0 0.0
        %6222 = vmatpush1.msra.mxu0 0.0
        %6223 = vmatprep.subr.mxu0 0.0
        %6224 = vmatpush1.msra.mxu0 0.0
        %6225 = vmatprep.subr.mxu0 0.0
        %6226 = vmatpush1.msra.mxu0 0.0
        %6227 = vmatprep.subr.mxu0 0.0
        %6228 = vmatpush1.msra.mxu0 0.0
        %6229 = vmatprep.subr.mxu0 0.0
        %6230 = vmatpush1.msra.mxu0 0.0
        %6231 = vmatprep.subr.mxu0 0.0
        %6232 = vmatpush1.msra.mxu0 0.0
        %6233 = vmatprep.subr.mxu0 0.0
        %6234 = vmatpush1.msra.mxu0 0.0
        %6235 = vmatprep.subr.mxu0 0.0
        %6236 = vmatpush1.msra.mxu0 0.0
        %6237 = vmatprep.subr.mxu0 0.0
        %6238 = vmatpush1.msra.mxu0 0.0
        %6239 = vmatprep.subr.mxu0 0.0
        %6240 = vmatpush1.msra.mxu0 0.0
        %6241 = vmatprep.subr.mxu0 0.0
        %6242 = vmatpush1.msra.mxu0 0.0
        %6243 = vmatprep.subr.mxu0 0.0
        %6244 = vmatpush1.msra.mxu0 0.0
        %6245 = vmatprep.subr.mxu0 0.0
        %6246 = vmatpush1.msra.mxu0 0.0
        %6247 = vmatprep.subr.mxu0 0.0
        %6248 = vmatpush1.msra.mxu0 0.0
        %6249 = vmatprep.subr.mxu0 0.0
        %6250 = vmatpush1.msra.mxu0 0.0
        %6251 = vmatprep.subr.mxu0 0.0
        %6252 = vmatpush1.msra.mxu0 0.0
        %6253 = vmatprep.subr.mxu0 0.0
        %6254 = vmatpush1.msra.mxu0 0.0
        %6255 = vmatprep.subr.mxu0 0.0
        %6256 = vmatpush1.msra.mxu0 0.0
        %6257 = vmatprep.subr.mxu0 0.0
        %6258 = vmatpush1.msra.mxu0 0.0
        %6259 = vmatprep.subr.mxu0 0.0
        %6260 = vmatpush1.msra.mxu0 0.0
        %6261 = vmatprep.subr.mxu0 0.0
        %6262 = vmatpush1.msra.mxu0 0.0
        %6263 = vmatprep.subr.mxu0 0.0
        %6264 = vmatpush1.msra.mxu0 0.0
        %6265 = vmatprep.subr.mxu0 0.0
        %6266 = vmatpush1.msra.mxu0 0.0
        %6267 = vmatprep.subr.mxu0 0.0
        %6268 = vmatpush1.msra.mxu0 0.0
        %6269 = vmatprep.subr.mxu0 0.0
        %6270 = vmatpush1.msra.mxu0 0.0
        %6271 = vmatprep.subr.mxu0 0.0
        %6272 = vmatpush1.msra.mxu0 0.0
        %6273 = vmatprep.subr.mxu0 0.0
        %6274 = vmatpush1.msra.mxu0 0.0
        %6275 = vmatprep.subr.mxu0 0.0
        %6276 = vmatpush1.msra.mxu0 0.0
        %6277 = vmatprep.subr.mxu0 0.0
        %6278 = vmatpush1.msra.mxu0 0.0
        %6279 = vmatprep.subr.mxu0 0.0
        %6280 = vmatpush1.msra.mxu0 0.0
        %6281 = vmatprep.subr.mxu0 0.0
        %6282 = vmatpush1.msra.mxu0 0.0
        %6283 = vmatprep.mubr.f32.mxu0 0.0
        %6284 = vmatmul.mubr.f32.gmra.mrb[0].mxu0 %v6217
        %v6285 = vpop.f32.mrb[0].mxu0
        %v6286 = vadd.f32 0.0, %v6285
        %v6287 = vpop.f32.mrb[0].mxu0
        %6288 = vdwg.mxu0
        %v6289 = vadd.f32 %v6204, %v6286
        %vm6290 = vcmask 60418
        %v6291 = vsel %vm6290, %v6207, -inf
        %v6292 = vrot.slane %v6291, 4
        %v6293 = vmax.f32 %v6291, %v6292
        %v6294 = vrot.slane %v6293, 2
        %v6295 = vmax.f32 %v6293, %v6294
        %v6296 = vrot.slane %v6295, 1
        %v6297 = vmax.f32 %v6295, %v6296
        %v6298 = vld [vmem:[%s5 + $0x8] sm:$0xff]
        %v6300 = vsel %vm4137, %v6297, 0
        %6302 = vmatprep.subr.mxu0 0.0
        %6303 = vmatpush1.msra.mxu0 %v6298
        %6304 = vmatprep.subr.mxu0 0.0
        %6305 = vmatpush1.msra.mxu0 0.0
        %6306 = vmatprep.subr.mxu0 0.0
        %6307 = vmatpush1.msra.mxu0 0.0
        %6308 = vmatprep.subr.mxu0 0.0
        %6309 = vmatpush1.msra.mxu0 0.0
        %6310 = vmatprep.subr.mxu0 0.0
        %6311 = vmatpush1.msra.mxu0 0.0
        %6312 = vmatprep.subr.mxu0 0.0
        %6313 = vmatpush1.msra.mxu0 0.0
        %6314 = vmatprep.subr.mxu0 0.0
        %6315 = vmatpush1.msra.mxu0 0.0
        %6316 = vmatprep.subr.mxu0 0.0
        %6317 = vmatpush1.msra.mxu0 0.0
        %6318 = vmatprep.subr.mxu0 0.0
        %6319 = vmatpush1.msra.mxu0 0.0
        %6320 = vmatprep.subr.mxu0 0.0
        %6321 = vmatpush1.msra.mxu0 0.0
        %6322 = vmatprep.subr.mxu0 0.0
        %6323 = vmatpush1.msra.mxu0 0.0
        %6324 = vmatprep.subr.mxu0 0.0
        %6325 = vmatpush1.msra.mxu0 0.0
        %6326 = vmatprep.subr.mxu0 0.0
        %6327 = vmatpush1.msra.mxu0 0.0
        %6328 = vmatprep.subr.mxu0 0.0
        %6329 = vmatpush1.msra.mxu0 0.0
        %6330 = vmatprep.subr.mxu0 0.0
        %6331 = vmatpush1.msra.mxu0 0.0
        %6332 = vmatprep.subr.mxu0 0.0
        %6333 = vmatpush1.msra.mxu0 0.0
        %6334 = vmatprep.subr.mxu0 0.0
        %6335 = vmatpush1.msra.mxu0 0.0
        %6336 = vmatprep.subr.mxu0 0.0
        %6337 = vmatpush1.msra.mxu0 0.0
        %6338 = vmatprep.subr.mxu0 0.0
        %6339 = vmatpush1.msra.mxu0 0.0
        %6340 = vmatprep.subr.mxu0 0.0
        %6341 = vmatpush1.msra.mxu0 0.0
        %6342 = vmatprep.subr.mxu0 0.0
        %6343 = vmatpush1.msra.mxu0 0.0
        %6344 = vmatprep.subr.mxu0 0.0
        %6345 = vmatpush1.msra.mxu0 0.0
        %6346 = vmatprep.subr.mxu0 0.0
        %6347 = vmatpush1.msra.mxu0 0.0
        %6348 = vmatprep.subr.mxu0 0.0
        %6349 = vmatpush1.msra.mxu0 0.0
        %6350 = vmatprep.subr.mxu0 0.0
        %6351 = vmatpush1.msra.mxu0 0.0
        %6352 = vmatprep.subr.mxu0 0.0
        %6353 = vmatpush1.msra.mxu0 0.0
        %6354 = vmatprep.subr.mxu0 0.0
        %6355 = vmatpush1.msra.mxu0 0.0
        %6356 = vmatprep.subr.mxu0 0.0
        %6357 = vmatpush1.msra.mxu0 0.0
        %6358 = vmatprep.subr.mxu0 0.0
        %6359 = vmatpush1.msra.mxu0 0.0
        %6360 = vmatprep.subr.mxu0 0.0
        %6361 = vmatpush1.msra.mxu0 0.0
        %6362 = vmatprep.subr.mxu0 0.0
        %6363 = vmatpush1.msra.mxu0 0.0
        %6364 = vmatprep.subr.mxu0 0.0
        %6365 = vmatpush1.msra.mxu0 0.0
        %6366 = vmatprep.mubr.f32.mxu0 0.0
        %6367 = vmatmul.mubr.f32.gmra.mrb[0].mxu0 %v6300
        %v6368 = vpop.f32.mrb[0].mxu0
        %v6369 = vadd.f32 0.0, %v6368
        %v6370 = vpop.f32.mrb[0].mxu0
        %6371 = vdwg.mxu0
        %v6372 = vadd.f32 %v6289, %v6369
        %v6373 = vld [vmem:[%s5998] sm:$0xf]
        %v6374 = vld [vmem:[%s6076] sm:$0xf]
        %v6375 = vmax.f32 %v6373, %v6374
        %v6376 = vsel %vm5032, %v6375, -inf
        %v6377 = vrot.slane %v6376, 4
        %v6378 = vmax.f32 %v6376, %v6377
        %v6379 = vrot.slane %v6378, 2
        %v6380 = vmax.f32 %v6378, %v6379
        %v6381 = vrot.slane %v6380, 1
        %v6382 = vmax.f32 %v6380, %v6381
        %v6383 = vld [vmem:[%s5 + $0x10] sm:$0xff]
        %v6385 = vsel %vm4137, %v6382, 0
        %6387 = vmatprep.subr.mxu0 0.0
        %6388 = vmatpush1.msra.mxu0 %v6383
        %6389 = vmatprep.subr.mxu0 0.0
        %6390 = vmatpush1.msra.mxu0 0.0
        %6391 = vmatprep.subr.mxu0 0.0
        %6392 = vmatpush1.msra.mxu0 0.0
        %6393 = vmatprep.subr.mxu0 0.0
        %6394 = vmatpush1.msra.mxu0 0.0
        %6395 = vmatprep.subr.mxu0 0.0
        %6396 = vmatpush1.msra.mxu0 0.0
        %6397 = vmatprep.subr.mxu0 0.0
        %6398 = vmatpush1.msra.mxu0 0.0
        %6399 = vmatprep.subr.mxu0 0.0
        %6400 = vmatpush1.msra.mxu0 0.0
        %6401 = vmatprep.subr.mxu0 0.0
        %6402 = vmatpush1.msra.mxu0 0.0
        %6403 = vmatprep.subr.mxu0 0.0
        %6404 = vmatpush1.msra.mxu0 0.0
        %6405 = vmatprep.subr.mxu0 0.0
        %6406 = vmatpush1.msra.mxu0 0.0
        %6407 = vmatprep.subr.mxu0 0.0
        %6408 = vmatpush1.msra.mxu0 0.0
        %6409 = vmatprep.subr.mxu0 0.0
        %6410 = vmatpush1.msra.mxu0 0.0
        %6411 = vmatprep.subr.mxu0 0.0
        %6412 = vmatpush1.msra.mxu0 0.0
        %6413 = vmatprep.subr.mxu0 0.0
        %6414 = vmatpush1.msra.mxu0 0.0
        %6415 = vmatprep.subr.mxu0 0.0
        %6416 = vmatpush1.msra.mxu0 0.0
        %6417 = vmatprep.subr.mxu0 0.0
        %6418 = vmatpush1.msra.mxu0 0.0
        %6419 = vmatprep.subr.mxu0 0.0
        %6420 = vmatpush1.msra.mxu0 0.0
        %6421 = vmatprep.subr.mxu0 0.0
        %6422 = vmatpush1.msra.mxu0 0.0
        %6423 = vmatprep.subr.mxu0 0.0
        %6424 = vmatpush1.msra.mxu0 0.0
        %6425 = vmatprep.subr.mxu0 0.0
        %6426 = vmatpush1.msra.mxu0 0.0
        %6427 = vmatprep.subr.mxu0 0.0
        %6428 = vmatpush1.msra.mxu0 0.0
        %6429 = vmatprep.subr.mxu0 0.0
        %6430 = vmatpush1.msra.mxu0 0.0
        %6431 = vmatprep.subr.mxu0 0.0
        %6432 = vmatpush1.msra.mxu0 0.0
        %6433 = vmatprep.subr.mxu0 0.0
        %6434 = vmatpush1.msra.mxu0 0.0
        %6435 = vmatprep.subr.mxu0 0.0
        %6436 = vmatpush1.msra.mxu0 0.0
        %6437 = vmatprep.subr.mxu0 0.0
        %6438 = vmatpush1.msra.mxu0 0.0
        %6439 = vmatprep.subr.mxu0 0.0
        %6440 = vmatpush1.msra.mxu0 0.0
        %6441 = vmatprep.subr.mxu0 0.0
        %6442 = vmatpush1.msra.mxu0 0.0
        %6443 = vmatprep.subr.mxu0 0.0
        %6444 = vmatpush1.msra.mxu0 0.0
        %6445 = vmatprep.subr.mxu0 0.0
        %6446 = vmatpush1.msra.mxu0 0.0
        %6447 = vmatprep.subr.mxu0 0.0
        %6448 = vmatpush1.msra.mxu0 0.0
        %6449 = vmatprep.subr.mxu0 0.0
        %6450 = vmatpush1.msra.mxu0 0.0
        %6451 = vmatprep.mubr.f32.mxu0 0.0
        %6452 = vmatmul.mubr.f32.gmra.mrb[0].mxu0 %v6385
        %v6453 = vpop.f32.mrb[0].mxu0
        %v6454 = vadd.f32 0.0, %v6453
        %v6455 = vpop.f32.mrb[0].mxu0
        %6456 = vdwg.mxu0
        %v6457 = vadd.f32 %v6372, %v6454
        %v6458 = vsel %vm6290, %v6375, -inf
        %v6459 = vrot.slane %v6458, 4
        %v6460 = vmax.f32 %v6458, %v6459
        %v6461 = vrot.slane %v6460, 2
        %v6462 = vmax.f32 %v6460, %v6461
        %v6463 = vrot.slane %v6462, 1
        %v6464 = vmax.f32 %v6462, %v6463
        %v6465 = vld [vmem:[%s5 + $0x18] sm:$0xff]
        %v6467 = vsel %vm4137, %v6464, 0
        %6469 = vmatprep.subr.mxu0 0.0
        %6470 = vmatpush1.msra.mxu0 %v6465
        %6471 = vmatprep.subr.mxu0 0.0
        %6472 = vmatpush1.msra.mxu0 0.0
        %6473 = vmatprep.subr.mxu0 0.0
        %6474 = vmatpush1.msra.mxu0 0.0
        %6475 = vmatprep.subr.mxu0 0.0
        %6476 = vmatpush1.msra.mxu0 0.0
        %6477 = vmatprep.subr.mxu0 0.0
        %6478 = vmatpush1.msra.mxu0 0.0
        %6479 = vmatprep.subr.mxu0 0.0
        %6480 = vmatpush1.msra.mxu0 0.0
        %6481 = vmatprep.subr.mxu0 0.0
        %6482 = vmatpush1.msra.mxu0 0.0
        %6483 = vmatprep.subr.mxu0 0.0
        %6484 = vmatpush1.msra.mxu0 0.0
        %6485 = vmatprep.subr.mxu0 0.0
        %6486 = vmatpush1.msra.mxu0 0.0
        %6487 = vmatprep.subr.mxu0 0.0
        %6488 = vmatpush1.msra.mxu0 0.0
        %6489 = vmatprep.subr.mxu0 0.0
        %6490 = vmatpush1.msra.mxu0 0.0
        %6491 = vmatprep.subr.mxu0 0.0
        %6492 = vmatpush1.msra.mxu0 0.0
        %6493 = vmatprep.subr.mxu0 0.0
        %6494 = vmatpush1.msra.mxu0 0.0
        %6495 = vmatprep.subr.mxu0 0.0
        %6496 = vmatpush1.msra.mxu0 0.0
        %6497 = vmatprep.subr.mxu0 0.0
        %6498 = vmatpush1.msra.mxu0 0.0
        %6499 = vmatprep.subr.mxu0 0.0
        %6500 = vmatpush1.msra.mxu0 0.0
        %6501 = vmatprep.subr.mxu0 0.0
        %6502 = vmatpush1.msra.mxu0 0.0
        %6503 = vmatprep.subr.mxu0 0.0
        %6504 = vmatpush1.msra.mxu0 0.0
        %6505 = vmatprep.subr.mxu0 0.0
        %6506 = vmatpush1.msra.mxu0 0.0
        %6507 = vmatprep.subr.mxu0 0.0
        %6508 = vmatpush1.msra.mxu0 0.0
        %6509 = vmatprep.subr.mxu0 0.0
        %6510 = vmatpush1.msra.mxu0 0.0
        %6511 = vmatprep.subr.mxu0 0.0
        %6512 = vmatpush1.msra.mxu0 0.0
        %6513 = vmatprep.subr.mxu0 0.0
        %6514 = vmatpush1.msra.mxu0 0.0
        %6515 = vmatprep.subr.mxu0 0.0
        %6516 = vmatpush1.msra.mxu0 0.0
        %6517 = vmatprep.subr.mxu0 0.0
        %6518 = vmatpush1.msra.mxu0 0.0
        %6519 = vmatprep.subr.mxu0 0.0
        %6520 = vmatpush1.msra.mxu0 0.0
        %6521 = vmatprep.subr.mxu0 0.0
        %6522 = vmatpush1.msra.mxu0 0.0
        %6523 = vmatprep.subr.mxu0 0.0
        %6524 = vmatpush1.msra.mxu0 0.0
        %6525 = vmatprep.subr.mxu0 0.0
        %6526 = vmatpush1.msra.mxu0 0.0
        %6527 = vmatprep.subr.mxu0 0.0
        %6528 = vmatpush1.msra.mxu0 0.0
        %6529 = vmatprep.subr.mxu0 0.0
        %6530 = vmatpush1.msra.mxu0 0.0
        %6531 = vmatprep.subr.mxu0 0.0
        %6532 = vmatpush1.msra.mxu0 0.0
        %6533 = vmatprep.mubr.f32.mxu0 0.0
        %6534 = vmatmul.mubr.f32.gmra.mrb[0].mxu0 %v6467
        %v6535 = vpop.f32.mrb[0].mxu0
        %v6536 = vadd.f32 0.0, %v6535
        %v6537 = vpop.f32.mrb[0].mxu0
        %6538 = vdwg.mxu0
        %v6539 = vadd.f32 %v6457, %v6536
        %v6540 = vmax.f32 %v6539, 0.0
        %v6541 = vld [vmem:[%s7] sm:$0xff]
        %v6542 = vld [vmem:[%s7 + $0x8] sm:$0xff]
        %v6543 = vld [vmem:[%s7 + $0x10] sm:$0xff]
        %v6544 = vld [vmem:[%s7 + $0x18] sm:$0xff]
        %v6545 = vld [vmem:[%s8] sm:$0x1]
        %vm6546 = vcmask 261120
        %v6548 = vsel %vm6546, %v6540, 0
        %6550 = vmatprep.subr.mxu0 0.0
        %6551 = vmatpush1.msra.mxu0 %v6541
        %6552 = vmatprep.subr.mxu0 0.0
        %6553 = vmatpush1.msra.mxu0 %v6542
        %6554 = vmatprep.subr.mxu0 0.0
        %6555 = vmatpush1.msra.mxu0 %v6543
        %6556 = vmatprep.subr.mxu0 0.0
        %6557 = vmatpush1.msra.mxu0 %v6544
        %6558 = vmatprep.subr.mxu0 0.0
        %6559 = vmatpush1.msra.mxu0 0.0
        %6560 = vmatprep.subr.mxu0 0.0
        %6561 = vmatpush1.msra.mxu0 0.0
        %6562 = vmatprep.subr.mxu0 0.0
        %6563 = vmatpush1.msra.mxu0 0.0
        %6564 = vmatprep.subr.mxu0 0.0
        %6565 = vmatpush1.msra.mxu0 0.0
        %6566 = vmatprep.subr.mxu0 0.0
        %6567 = vmatpush1.msra.mxu0 0.0
        %6568 = vmatprep.subr.mxu0 0.0
        %6569 = vmatpush1.msra.mxu0 0.0
        %6570 = vmatprep.subr.mxu0 0.0
        %6571 = vmatpush1.msra.mxu0 0.0
        %6572 = vmatprep.subr.mxu0 0.0
        %6573 = vmatpush1.msra.mxu0 0.0
        %6574 = vmatprep.subr.mxu0 0.0
        %6575 = vmatpush1.msra.mxu0 0.0
        %6576 = vmatprep.subr.mxu0 0.0
        %6577 = vmatpush1.msra.mxu0 0.0
        %6578 = vmatprep.subr.mxu0 0.0
        %6579 = vmatpush1.msra.mxu0 0.0
        %6580 = vmatprep.subr.mxu0 0.0
        %6581 = vmatpush1.msra.mxu0 0.0
        %6582 = vmatprep.subr.mxu0 0.0
        %6583 = vmatpush1.msra.mxu0 0.0
        %6584 = vmatprep.subr.mxu0 0.0
        %6585 = vmatpush1.msra.mxu0 0.0
        %6586 = vmatprep.subr.mxu0 0.0
        %6587 = vmatpush1.msra.mxu0 0.0
        %6588 = vmatprep.subr.mxu0 0.0
        %6589 = vmatpush1.msra.mxu0 0.0
        %6590 = vmatprep.subr.mxu0 0.0
        %6591 = vmatpush1.msra.mxu0 0.0
        %6592 = vmatprep.subr.mxu0 0.0
        %6593 = vmatpush1.msra.mxu0 0.0
        %6594 = vmatprep.subr.mxu0 0.0
        %6595 = vmatpush1.msra.mxu0 0.0
        %6596 = vmatprep.subr.mxu0 0.0
        %6597 = vmatpush1.msra.mxu0 0.0
        %6598 = vmatprep.subr.mxu0 0.0
        %6599 = vmatpush1.msra.mxu0 0.0
        %6600 = vmatprep.subr.mxu0 0.0
        %6601 = vmatpush1.msra.mxu0 0.0
        %6602 = vmatprep.subr.mxu0 0.0
        %6603 = vmatpush1.msra.mxu0 0.0
        %6604 = vmatprep.subr.mxu0 0.0
        %6605 = vmatpush1.msra.mxu0 0.0
        %6606 = vmatprep.subr.mxu0 0.0
        %6607 = vmatpush1.msra.mxu0 0.0
        %6608 = vmatprep.subr.mxu0 0.0
        %6609 = vmatpush1.msra.mxu0 0.0
        %6610 = vmatprep.subr.mxu0 0.0
        %6611 = vmatpush1.msra.mxu0 0.0
        %6612 = vmatprep.subr.mxu0 0.0
        %6613 = vmatpush1.msra.mxu0 0.0
        %6614 = vmatprep.mubr.f32.mxu0 0.0
        %6615 = vmatmul.mubr.f32.gmra.mrb[0].mxu0 %v6548
        %v6616 = vpop.f32.mrb[0].mxu0
        %v6617 = vadd.f32 %v6545, %v6616
        %v6618 = vpop.f32.mrb[0].mxu0
        %6619 = vdwg.mxu0
        %v6620 = vmax.f32 %v6617, 0.0
        %v6621 = vld [vmem:[%s9] sm:$0xff]
        %v6622 = vld [vmem:[%s9 + $0x8] sm:$0xff]
        %v6623 = vld [vmem:[%s10] sm:$0x1]
        %vm6624 = vcmask 130048
        %v6626 = vsel %vm6624, %v6620, 0
        %6628 = vmatprep.subr.mxu0 0.0
        %6629 = vmatpush1.msra.mxu0 %v6621
        %6630 = vmatprep.subr.mxu0 0.0
        %6631 = vmatpush1.msra.mxu0 %v6622
        %6632 = vmatprep.subr.mxu0 0.0
        %6633 = vmatpush1.msra.mxu0 0.0
        %6634 = vmatprep.subr.mxu0 0.0
        %6635 = vmatpush1.msra.mxu0 0.0
        %6636 = vmatprep.subr.mxu0 0.0
        %6637 = vmatpush1.msra.mxu0 0.0
        %6638 = vmatprep.subr.mxu0 0.0
        %6639 = vmatpush1.msra.mxu0 0.0
        %6640 = vmatprep.subr.mxu0 0.0
        %6641 = vmatpush1.msra.mxu0 0.0
        %6642 = vmatprep.subr.mxu0 0.0
        %6643 = vmatpush1.msra.mxu0 0.0
        %6644 = vmatprep.subr.mxu0 0.0
        %6645 = vmatpush1.msra.mxu0 0.0
        %6646 = vmatprep.subr.mxu0 0.0
        %6647 = vmatpush1.msra.mxu0 0.0
        %6648 = vmatprep.subr.mxu0 0.0
        %6649 = vmatpush1.msra.mxu0 0.0
        %6650 = vmatprep.subr.mxu0 0.0
        %6651 = vmatpush1.msra.mxu0 0.0
        %6652 = vmatprep.subr.mxu0 0.0
        %6653 = vmatpush1.msra.mxu0 0.0
        %6654 = vmatprep.subr.mxu0 0.0
        %6655 = vmatpush1.msra.mxu0 0.0
        %6656 = vmatprep.subr.mxu0 0.0
        %6657 = vmatpush1.msra.mxu0 0.0
        %6658 = vmatprep.subr.mxu0 0.0
        %6659 = vmatpush1.msra.mxu0 0.0
        %6660 = vmatprep.subr.mxu0 0.0
        %6661 = vmatpush1.msra.mxu0 0.0
        %6662 = vmatprep.subr.mxu0 0.0
        %6663 = vmatpush1.msra.mxu0 0.0
        %6664 = vmatprep.subr.mxu0 0.0
        %6665 = vmatpush1.msra.mxu0 0.0
        %6666 = vmatprep.subr.mxu0 0.0
        %6667 = vmatpush1.msra.mxu0 0.0
        %6668 = vmatprep.subr.mxu0 0.0
        %6669 = vmatpush1.msra.mxu0 0.0
        %6670 = vmatprep.subr.mxu0 0.0
        %6671 = vmatpush1.msra.mxu0 0.0
        %6672 = vmatprep.subr.mxu0 0.0
        %6673 = vmatpush1.msra.mxu0 0.0
        %6674 = vmatprep.subr.mxu0 0.0
        %6675 = vmatpush1.msra.mxu0 0.0
        %6676 = vmatprep.subr.mxu0 0.0
        %6677 = vmatpush1.msra.mxu0 0.0
        %6678 = vmatprep.subr.mxu0 0.0
        %6679 = vmatpush1.msra.mxu0 0.0
        %6680 = vmatprep.subr.mxu0 0.0
        %6681 = vmatpush1.msra.mxu0 0.0
        %6682 = vmatprep.subr.mxu0 0.0
        %6683 = vmatpush1.msra.mxu0 0.0
        %6684 = vmatprep.subr.mxu0 0.0
        %6685 = vmatpush1.msra.mxu0 0.0
        %6686 = vmatprep.subr.mxu0 0.0
        %6687 = vmatpush1.msra.mxu0 0.0
        %6688 = vmatprep.subr.mxu0 0.0
        %6689 = vmatpush1.msra.mxu0 0.0
        %6690 = vmatprep.subr.mxu0 0.0
        %6691 = vmatpush1.msra.mxu0 0.0
        %6692 = vmatprep.mubr.f32.mxu0 0.0
        %6693 = vmatmul.mubr.f32.gmra.mrb[0].mxu0 %v6626
        %v6694 = vpop.f32.mrb[0].mxu0
        %v6695 = vadd.f32 %v6623, %v6694
        %v6696 = vpop.f32.mrb[0].mxu0
        %6697 = vdwg.mxu0
        %vm6698 = vcmask 155648
        %v6699 = vsel %vm6698, %v6695, -inf
        %6700 = vmax.xlane.f32.xlu0 %v6699
        %v6701 = vpop.xlane.xlu0 %6700
        %v6702 = vsub.f32 %v6695, %v6701
        %v6703 = vmul.f32 %v6702, 1.442695
        %v6704 = vpow.pop %v6703
        %v6705 = vsel %vm6698, %v6704, 0.0
        %6706 = vadd.xlane.f32.xlu0 %v6705
        %v6707 = vpop.xlane.xlu0 %6706
        %v6708 = vlog2.pop %v6707
        %v6709 = vmul.f32 %v6708, 0.6931472
        %v6710 = vadd.f32 %v6709, %v6701
        %v6711 = vsub.f32 %v6695, %v6710
        %6712 = vst.msk [vmem:[%s378] sm:$0x1] %vm6698, %v6711
        %s6713 = sand.u32 %s269, 1
        %s6714 = scalar_lea.sflag [#allocation10], %s6713
        %s6715 = sand.u32 %s269, 1
        %s6716 = scalar_lea.vmem [#allocation9], %s6715
        // Predicated region
        $region65: #{cifar100net_forward.1} parent=63 // pred_check
          %p6717 = pneg %p279
        $region66: #{cifar100net_forward.1} parent=63 // pred_check_branch
          %6719 = sbr.rel (%p6717) target = $region68
        $region67: #{cifar100net_forward.1} parent=63 // pred_region
          %s6721 = ssub.s32 16, 16
          %6722 = vsyncadd %s6714, %s6721
          %s6723 = smul.addr %s25, 16
          %s6724 = scalar_lea.hbm %s11, %s6723
          %s6726 = sshll.u32 %s6716, 4
          %s6727 = int_to_ptr.vmem [resolvable:$true] %s6726
          %6729 = dma.vmem_to_hbm [thread:$0]  %s6727, 16, %s6724, %s6714
        $region68: #{cifar100net_forward.1} parent=63 // pred_fallthru
          _
      $region64: #{cifar100net_forward.1} parent=5 // pred_fallthru
        _
      %p6730 = scmp.le.s32.totalorder 2, %s20
      // Predicated region
      $region69: #{cifar100net_forward.1} parent=5 // pred_check
        %p6731 = pneg %p6730
      $region70: #{cifar100net_forward.1} parent=5 // pred_check_branch
        %6733 = sbr.rel (%p6731) target = $region72
      $region71: #{cifar100net_forward.1} parent=5 // pred_region
        %s6734 = ssub.s32 %s20, 2
        // Predicated region
        $region73: #{cifar100net_forward.1} parent=71 // pred_check
          %p6735 = pneg %p285
        $region74: #{cifar100net_forward.1} parent=71 // pred_check_branch
          %6737 = sbr.rel (%p6735) target = $region76
        $region75: #{cifar100net_forward.1} parent=71 // pred_region
          %s6738 = sand.u32 %s270, 1
          %s6739 = scalar_lea.sflag [#allocation10], %s6738
          %s6740 = sand.u32 %s270, 1
          %s6741 = scalar_lea.vmem [#allocation9], %s6740
          %6742 = dma.done %s6739, 16
        $region76: #{cifar100net_forward.1} parent=71 // pred_fallthru
          _
      $region72: #{cifar100net_forward.1} parent=5 // pred_fallthru
        _
    $region6: #{cifar100net_forward.1} parent=1 // loop_footer
      %s24 = sadd.s32 1, %s20
    $region7: #{cifar100net_forward.1} parent=1 // loop_footer_branch
      %19 = sbr.rel target = $region3
    $region8: #{cifar100net_forward.1} parent=1 // loop_exit
      _
    %6743 = vsyncpa [#allocation10], 1
    %s6744 = scalar_lea.sflag [#allocation10], 1
    %6745 = vsyncpa %s6744, 1

</llo_original>
